<compile_context>
chip_gen: v7x
topology: tpu7x:2x2x1
jax: 0.10.0
libtpu: 0.0.40
codegen_flags: <defaults>
</compile_context>

<pallas_src>
import jax
import jax.numpy as jnp
from jax.experimental import pallas as pl
from jax.experimental.pallas import tpu as pltpu

# ----------------------------- configuration -------------------------------
B         = 2
IN_CH     = 4      # C  (proj output channels / iAFF channels)
OUT_CH    = 8      # iAFF inter_channels
NUM_CLASS = 10
NUM_NODE  = 22     # V  (temporal positional encoding hard-codes 22)
NUM_FRAME = 16     # T  (ChannelAttention ratio //16 -> T must be a multiple of 16)
N_LAYERS  = 2
EPS       = 1e-5

C, CI, T, V = IN_CH, OUT_CH, NUM_FRAME, NUM_NODE
T2 = T // 2

# ---- flat scalar-parameter slab layout (SMEM) ----
OFF_PROJ_W  = 0                           # proj conv weight (C, 3, 3, 3)   -> 108
OFF_PROJ_B  = OFF_PROJ_W + C * 27         # proj conv bias   (C,)           -> 4
OFF_SCONV   = OFF_PROJ_B + C              # per-layer SpatialAttention conv -> 18 each
OFF_IAFF    = OFF_SCONV + N_LAYERS * 18   # 3 iAFF branches (local, global, local2)
IAFF_STRIDE = CI * C + CI + C * CI + C    # w1, b1, w2, b2 per branch       -> 76
N_SCALARS   = OFF_IAFF + 3 * IAFF_STRIDE  # 376


# ------------------------------ Pallas kernels -----------------------------
def _fused_pipeline_kernel(x_ref, pes_ref, pet_ref, caw_ref, sp_ref, o_ref):
    # x_ref  : (1, 3, T, V)        one sample, channel-first
    # pes/pet: (C, T, V)           positional encodings (constant across grid)
    # caw_ref: (T, 2*N_LAYERS)     ChannelAttention fc1/fc2 weights as columns
    # sp_ref : (N_SCALARS,) SMEM   flat scalar slab (proj / spatial conv / iAFF, BN-folded)
    # o_ref  : (1, C, T//2, V)     max-pooled fused features
    f32 = jnp.float32

    def pad2(a):                       # zero-pad a 2-D value by 1 on every side
        zc = jnp.zeros((a.shape[0], 1), f32)
        a = jnp.concatenate([zc, a, zc], axis=1)
        zr = jnp.zeros((1, a.shape[1]), f32)
        return jnp.concatenate([zr, a, zr], axis=0)

    def mean_all(a):                   # (T, V) -> (1, 1)
        return jnp.mean(jnp.mean(a, axis=1, keepdims=True), axis=0, keepdims=True)

    # ---- proj: Conv2d(3 -> C, 3x3, pad 1) as 108 unrolled VPU FMAs ----
    xin = x_ref[0]                                            # (3, T, V)
    xpad = [pad2(xin[cin]) for cin in range(3)]               # (T+2, V+2) each
    x_ch = [jnp.zeros((T, V), f32) + sp_ref[OFF_PROJ_B + c] for c in range(C)]
    for cin in range(3):
        for di in range(3):
            for dj in range(3):
                slab = xpad[cin][di:di + T, dj:dj + V]        # (T, V)
                for c in range(C):
                    w = sp_ref[OFF_PROJ_W + ((c * 3 + cin) * 3 + di) * 3 + dj]
                    x_ch[c] = x_ch[c] + w * slab

    # ---- positional encodings ----
    pes = pes_ref[...]
    pet = pet_ref[...]
    x_ch = [x_ch[c] + pes[c] for c in range(C)]               # x = pes(proj(x))
    y_ch = [x_ch[c] + pet[c] for c in range(C)]               # y = pet(x)

    # ---- MT_Net attention blocks ----
    for l in range(N_LAYERS):
        # SpatialAttention on x: reduce over T ("channel" in CBAM view),
        # 3x3 conv over the (V, C) map (stored here transposed as (C, V)).
        avg_cv = jnp.concatenate(
            [jnp.mean(x_ch[c], axis=0, keepdims=True) for c in range(C)], axis=0)  # (C, V)
        max_cv = jnp.concatenate(
            [jnp.max(x_ch[c], axis=0, keepdims=True) for c in range(C)], axis=0)   # (C, V)
        pa, pm = pad2(avg_cv), pad2(max_cv)                   # (C+2, V+2)
        base = OFF_SCONV + l * 18
        att = jnp.zeros((C, V), f32)
        for kh in range(3):                                   # kh walks V, kw walks C
            for kw in range(3):
                att = att + sp_ref[base + kh * 3 + kw] * pa[kw:kw + C, kh:kh + V]
                att = att + sp_ref[base + 9 + kh * 3 + kw] * pm[kw:kw + C, kh:kh + V]
        att = jax.nn.sigmoid(att)
        # relu(att * x + residual), dropout = identity in eval
        x_ch = [jnp.maximum(x_ch[c] * (1.0 + att[c:c + 1, :]), 0.0) for c in range(C)]

        # ChannelAttention on y: pool over (V, C) per frame, rank-1 MLP over T
        acc = jnp.mean(y_ch[0], axis=1, keepdims=True)
        for c in range(1, C):
            acc = acc + jnp.mean(y_ch[c], axis=1, keepdims=True)
        avg_t = acc * (1.0 / C)                               # (T, 1)
        max_t = jnp.max(y_ch[0], axis=1, keepdims=True)
        for c in range(1, C):
            max_t = jnp.maximum(max_t, jnp.max(y_ch[c], axis=1, keepdims=True))
        w1 = caw_ref[:, 2 * l:2 * l + 1]                      # (T, 1)  fc1 weight
        w2 = caw_ref[:, 2 * l + 1:2 * l + 2]                  # (T, 1)  fc2 weight

        def ca_mlp(p, w1=w1, w2=w2):                          # VPU reduce + broadcast
            h = jnp.maximum(jnp.sum(p * w1, axis=0, keepdims=True), 0.0)   # (1, 1)
            return w2 * h                                                  # (T, 1)

        att_t = jax.nn.sigmoid(ca_mlp(avg_t) + ca_mlp(max_t))              # (T, 1)
        y_ch = [jnp.maximum(y_ch[c] * (1.0 + att_t), 0.0) for c in range(C)]

    # ---- iAFF fusion (BN-folded 1x1 convs as unrolled channel FMAs) ----
    def branch_offsets(off):
        w1o = off
        b1o = w1o + CI * C
        w2o = b1o + CI
        b2o = w2o + C * CI
        return w1o, b1o, w2o, b2o

    def local_branch(z_ch, off):
        w1o, b1o, w2o, b2o = branch_offsets(off)
        h = []
        for k in range(CI):
            s = jnp.zeros((T, V), f32) + sp_ref[b1o + k]
            for c in range(C):
                s = s + sp_ref[w1o + k * C + c] * z_ch[c]
            h.append(jnp.maximum(s, 0.0))
        out = []
        for c in range(C):
            s = jnp.zeros((T, V), f32) + sp_ref[b2o + c]
            for k in range(CI):
                s = s + sp_ref[w2o + c * CI + k] * h[k]
            out.append(s)
        return out

    def global_branch(z_ch, off):
        w1o, b1o, w2o, b2o = branch_offsets(off)
        g = [mean_all(z_ch[c]) for c in range(C)]             # (1, 1) each
        h = []
        for k in range(CI):
            s = jnp.zeros((1, 1), f32) + sp_ref[b1o + k]
            for c in range(C):
                s = s + sp_ref[w1o + k * C + c] * g[c]
            h.append(jnp.maximum(s, 0.0))
        out = []
        for c in range(C):
            s = jnp.zeros((1, 1), f32) + sp_ref[b2o + c]
            for k in range(CI):
                s = s + sp_ref[w2o + c * CI + k] * h[k]
            out.append(s)
        return out

    off_local  = OFF_IAFF
    off_global = OFF_IAFF + IAFF_STRIDE
    off_local2 = OFF_IAFF + 2 * IAFF_STRIDE

    xa = [x_ch[c] + y_ch[c] for c in range(C)]
    xl = local_branch(xa, off_local)
    xg = global_branch(xa, off_global)
    wei = [jax.nn.sigmoid(xl[c] + xg[c]) for c in range(C)]
    xi = [x_ch[c] * wei[c] + y_ch[c] * (1.0 - wei[c]) for c in range(C)]
    xl2 = local_branch(xi, off_local2)
    xg2 = global_branch(xi, off_global)        # NOTE: global_att reused (matches PyTorch)
    wei2 = [jax.nn.sigmoid(xl2[c] + xg2[c]) for c in range(C)]
    z_ch = [x_ch[c] * wei2[c] + y_ch[c] * (1.0 - wei2[c]) for c in range(C)]

    # ---- MaxPool2d((2, 1)) over T + write ----
    pooled = []
    for c in range(C):
        pooled.append(jnp.concatenate(
            [jnp.max(z_ch[c][2 * i:2 * i + 2, :], axis=0, keepdims=True)
             for i in range(T2)], axis=0))                    # (T2, V)
    o_ref[0] = jnp.stack(pooled, axis=0)                      # (C, T2, V)


def _mlp_head_kernel(z_ref, w1, b1, w2, b2, w3, b3, wf, bf, o_ref):
    # z: (B, 704). wX are BN-folded (d1D = Linear + BN1d + leaky_relu(0.2)).
    def lrelu(v):
        return jnp.where(v >= 0, v, 0.2 * v)

    h = lrelu(jnp.dot(z_ref[...], w1[...], preferred_element_type=jnp.float32) + b1[...])
    h = lrelu(jnp.dot(h, w2[...], preferred_element_type=jnp.float32) + b2[...])
    h = lrelu(jnp.dot(h, w3[...], preferred_element_type=jnp.float32) + b3[...])
    o_ref[...] = jnp.dot(h, wf[...], preferred_element_type=jnp.float32) + bf[...]


# ----------------------------- full forward pass ----------------------------
def dylan_mt_net_forward(packed, x, x2=None, x3=None):
    # x: (B, T, V, 3); x2, x3 are accepted but unused (matches the PyTorch forward)
    Bb = x.shape[0]
    x_nchw = jnp.transpose(x, (0, 3, 1, 2))                   # (B, 3, T, V)

    feats = pl.pallas_call(
        _fused_pipeline_kernel,
        grid=(Bb,),
        out_shape=jax.ShapeDtypeStruct((Bb, C, T2, V), jnp.float32),
        in_specs=[
            pl.BlockSpec((1, 3, T, V), lambda b: (b, 0, 0, 0)),
            pl.BlockSpec((C, T, V), lambda b: (0, 0, 0)),
            pl.BlockSpec((C, T, V), lambda b: (0, 0, 0)),
            pl.BlockSpec((T, 2 * N_LAYERS), lambda b: (0, 0)),
            pl.BlockSpec(memory_space=pltpu.MemorySpace.SMEM),
        ],
        out_specs=pl.BlockSpec((1, C, T2, V), lambda b: (b, 0, 0, 0)),
        compiler_params=pltpu.CompilerParams(dimension_semantics=("parallel",)),
    )(x_nchw, packed['pe_s'], packed['pe_t'], packed['caw'], packed['sparams'])

    z = feats.reshape(Bb, C * T2 * V)        # free row-major collapse -> (B, 704)
    ws = packed['mlp']
    return pl.pallas_call(
        _mlp_head_kernel,
        grid=(1,),
        out_shape=jax.ShapeDtypeStruct((Bb, NUM_CLASS), jnp.float32),
        in_specs=[pl.BlockSpec(z.shape, lambda i: (0, 0))]
                 + [pl.BlockSpec(w.shape, lambda i: (0, 0)) for w in ws],
        out_specs=pl.BlockSpec((Bb, NUM_CLASS), lambda i: (0, 0)),
    )(z, *ws)


# ----------------------------- parameters (deterministic) -------------------
def init_params(key):
    keys = iter(jax.random.split(key, 128))

    def nrm(shape, s=0.1):
        return s * jax.random.normal(next(keys), shape, jnp.float32)

    def conv_bn(cin, cout):
        return dict(w=nrm((cout, cin), 0.3), b=nrm((cout,), 0.1),
                    gamma=1.0 + nrm((cout,), 0.05), beta=nrm((cout,), 0.05),
                    mean=nrm((cout,), 0.05), var=1.0 + jnp.abs(nrm((cout,), 0.1)))

    def lin_bn(din, dout):
        return dict(w=nrm((dout, din), 0.05), b=nrm((dout,), 0.05),
                    gamma=1.0 + nrm((dout,), 0.05), beta=nrm((dout,), 0.05),
                    mean=nrm((dout,), 0.05), var=1.0 + jnp.abs(nrm((dout,), 0.1)))

    p = {}
    p['proj_w'] = nrm((IN_CH, 3, 3, 3), 0.2)          # Conv2d(3 -> C, 3x3, pad 1)
    p['proj_b'] = nrm((IN_CH,), 0.1)
    # TODO(synk): utils.positionalencoding1d/2d + pe_2D are not provided in the
    # source; deterministic random buffers stand in for those sinusoidal tables.
    p['pe_s'] = nrm((1, IN_CH, NUM_FRAME, NUM_NODE), 0.1)
    p['pe_t'] = nrm((IN_CH, NUM_FRAME, NUM_NODE), 0.1)

    T16 = NUM_FRAME // 16
    p['layers'] = [dict(sconv_w=nrm((1, 2, 3, 3), 0.3),          # SpatialAttention conv
                        ca_w1=nrm((T16, NUM_FRAME), 0.3),        # ChannelAttention fc1
                        ca_w2=nrm((NUM_FRAME, T16), 0.3))        # ChannelAttention fc2
                   for _ in range(N_LAYERS)]

    p['iaff'] = {name: (conv_bn(IN_CH, OUT_CH), conv_bn(OUT_CH, IN_CH))
                 for name in ('local', 'global', 'local2')}

    D = IN_CH * NUM_NODE * NUM_FRAME // 2
    p['l1'] = lin_bn(D, 512)
    p['l2'] = lin_bn(512, 256)
    p['l3'] = lin_bn(256, 256)
    p['fc_w'] = nrm((NUM_CLASS, 256), 0.05)
    p['fc_b'] = nrm((NUM_CLASS,), 0.05)
    return p


def _fold_conv_bn(cb):
    # eval-mode BN folded into the preceding 1x1 conv: y = W'x + b'
    scale = cb['gamma'] / jnp.sqrt(cb['var'] + EPS)
    return cb['w'] * scale[:, None], (cb['b'] - cb['mean']) * scale + cb['beta']


def _fold_lin_bn(q):
    scale = q['gamma'] / jnp.sqrt(q['var'] + EPS)
    return (q['w'] * scale[:, None]).T, ((q['b'] - q['mean']) * scale + q['beta'])[None, :]


def pack_params(p):
    # one SMEM scalar slab
    sc = [p['proj_w'].reshape(-1), p['proj_b'].reshape(-1)]
    for lp in p['layers']:
        sc.append(lp['sconv_w'].reshape(-1))
    for name in ('local', 'global', 'local2'):
        c1, c2 = p['iaff'][name]
        w1, b1 = _fold_conv_bn(c1)
        w2, b2 = _fold_conv_bn(c2)
        sc += [w1.reshape(-1), b1, w2.reshape(-1), b2]
    sparams = jnp.concatenate(sc).astype(jnp.float32)
    assert int(sparams.shape[0]) == N_SCALARS, sparams.shape

    # ChannelAttention weights as (T, 1) columns packed into one VMEM slab
    cols = []
    for lp in p['layers']:
        cols.append(lp['ca_w1'].reshape(-1))
        cols.append(lp['ca_w2'].reshape(-1))
    caw = jnp.stack(cols, axis=1)                             # (T, 2*N_LAYERS)

    # BN-folded MLP head weights
    mlp = []
    for name in ('l1', 'l2', 'l3'):
        wt, b = _fold_lin_bn(p[name])
        mlp += [wt, b]
    mlp += [p['fc_w'].T, p['fc_b'][None, :]]

    return dict(sparams=sparams, caw=caw,
                pe_s=p['pe_s'][0], pe_t=p['pe_t'], mlp=tuple(mlp))


# ----------------------------------- main -----------------------------------
if __name__ == "__main__":
    key = jax.random.PRNGKey(0)
    kp, kx, k2, k3 = jax.random.split(key, 4)
    params = init_params(kp)
    packed = pack_params(params)

    x = jax.random.normal(kx, (B, NUM_FRAME, NUM_NODE, 3), jnp.float32)
    x2 = jax.random.normal(k2, (B, NUM_FRAME, NUM_NODE, 3), jnp.float32)  # unused
    x3 = jax.random.normal(k3, (B, NUM_FRAME, NUM_NODE, 3), jnp.float32)  # unused

    fwd = jax.jit(dylan_mt_net_forward)
    out = jax.block_until_ready(fwd(packed, x, x2, x3))

    assert out.shape == (B, NUM_CLASS), out.shape
    assert bool(jnp.all(jnp.isfinite(out)))
    print("KERNEL_OK")
</pallas_src>

<mosaic_0001>
module attributes {stable_mosaic.version = 11 : i64} {
  func.func @_mlp_head_kernel(%arg0: i32, %arg1: memref<2x704xf32, #tpu.memory_space<vmem>>, %arg2: memref<704x512xf32, #tpu.memory_space<vmem>>, %arg3: memref<1x512xf32, #tpu.memory_space<vmem>>, %arg4: memref<512x256xf32, #tpu.memory_space<vmem>>, %arg5: memref<1x256xf32, #tpu.memory_space<vmem>>, %arg6: memref<256x256xf32, #tpu.memory_space<vmem>>, %arg7: memref<1x256xf32, #tpu.memory_space<vmem>>, %arg8: memref<256x10xf32, #tpu.memory_space<vmem>>, %arg9: memref<1x10xf32, #tpu.memory_space<vmem>>, %arg10: memref<2x10xf32, #tpu.memory_space<vmem>>) attributes {dimension_semantics = [#tpu.dimension_semantics<arbitrary>], iteration_bounds = array<i64: 1>, scalar_prefetch = 0 : i64, scratch_operands = 0 : i64, tpu.core_type = #tpu.core_type<tc>, window_params = [{pipeline_mode = #tpu.pipeline_mode<synchronous>, transform_indices = @transform_0, window_bounds = array<i64: 2, 704>}, {pipeline_mode = #tpu.pipeline_mode<synchronous>, transform_indices = @transform_1, window_bounds = array<i64: 704, 512>}, {pipeline_mode = #tpu.pipeline_mode<synchronous>, transform_indices = @transform_2, window_bounds = array<i64: 1, 512>}, {pipeline_mode = #tpu.pipeline_mode<synchronous>, transform_indices = @transform_3, window_bounds = array<i64: 512, 256>}, {pipeline_mode = #tpu.pipeline_mode<synchronous>, transform_indices = @transform_4, window_bounds = array<i64: 1, 256>}, {pipeline_mode = #tpu.pipeline_mode<synchronous>, transform_indices = @transform_5, window_bounds = array<i64: 256, 256>}, {pipeline_mode = #tpu.pipeline_mode<synchronous>, transform_indices = @transform_6, window_bounds = array<i64: 1, 256>}, {pipeline_mode = #tpu.pipeline_mode<synchronous>, transform_indices = @transform_7, window_bounds = array<i64: 256, 10>}, {pipeline_mode = #tpu.pipeline_mode<synchronous>, transform_indices = @transform_8, window_bounds = array<i64: 1, 10>}, {pipeline_mode = #tpu.pipeline_mode<synchronous>, transform_indices = @transform_9, window_bounds = array<i64: 2, 10>}]} {
    %c0 = arith.constant 0 : index
    %c0_0 = arith.constant 0 : index
    %0 = vector.load %arg1[%c0, %c0_0] : memref<2x704xf32, #tpu.memory_space<vmem>>, vector<2x704xf32>
    %c0_1 = arith.constant 0 : index
    %c0_2 = arith.constant 0 : index
    %1 = vector.load %arg2[%c0_1, %c0_2] : memref<704x512xf32, #tpu.memory_space<vmem>>, vector<704x512xf32>
    %cst = arith.constant dense<0.000000e+00> : vector<2x512xf32>
    %2 = tpu.matmul %0, %1, %cst {dimension_numbers = #tpu.dot_dimension_numbers<[1], [0], [0], [1], [0, 0, 1, 1], [], []>} : vector<2x704xf32>, vector<704x512xf32>, vector<2x512xf32> -> vector<2x512xf32>
    %c0_3 = arith.constant 0 : index
    %c0_4 = arith.constant 0 : index
    %3 = vector.load %arg3[%c0_3, %c0_4] : memref<1x512xf32, #tpu.memory_space<vmem>>, vector<1x512xf32>
    %4 = vector.broadcast %3 : vector<1x512xf32> to vector<2x512xf32>
    %5 = arith.addf %2, %4 : vector<2x512xf32>
    %cst_5 = arith.constant 0.000000e+00 : f32
    %6 = vector.broadcast %cst_5 : f32 to vector<2x512xf32>
    %7 = arith.cmpf oge, %5, %6 : vector<2x512xf32>
    %cst_6 = arith.constant 2.000000e-01 : f32
    %8 = vector.broadcast %cst_6 : f32 to vector<2x512xf32>
    %9 = arith.mulf %8, %5 : vector<2x512xf32>
    %10 = arith.select %7, %5, %9 : vector<2x512xi1>, vector<2x512xf32>
    %c0_7 = arith.constant 0 : index
    %c0_8 = arith.constant 0 : index
    %11 = vector.load %arg4[%c0_7, %c0_8] : memref<512x256xf32, #tpu.memory_space<vmem>>, vector<512x256xf32>
    %cst_9 = arith.constant dense<0.000000e+00> : vector<2x256xf32>
    %12 = tpu.matmul %10, %11, %cst_9 {dimension_numbers = #tpu.dot_dimension_numbers<[1], [0], [0], [1], [0, 0, 1, 1], [], []>} : vector<2x512xf32>, vector<512x256xf32>, vector<2x256xf32> -> vector<2x256xf32>
    %c0_10 = arith.constant 0 : index
    %c0_11 = arith.constant 0 : index
    %13 = vector.load %arg5[%c0_10, %c0_11] : memref<1x256xf32, #tpu.memory_space<vmem>>, vector<1x256xf32>
    %14 = vector.broadcast %13 : vector<1x256xf32> to vector<2x256xf32>
    %15 = arith.addf %12, %14 : vector<2x256xf32>
    %cst_12 = arith.constant 0.000000e+00 : f32
    %16 = vector.broadcast %cst_12 : f32 to vector<2x256xf32>
    %17 = arith.cmpf oge, %15, %16 : vector<2x256xf32>
    %cst_13 = arith.constant 2.000000e-01 : f32
    %18 = vector.broadcast %cst_13 : f32 to vector<2x256xf32>
    %19 = arith.mulf %18, %15 : vector<2x256xf32>
    %20 = arith.select %17, %15, %19 : vector<2x256xi1>, vector<2x256xf32>
    %c0_14 = arith.constant 0 : index
    %c0_15 = arith.constant 0 : index
    %21 = vector.load %arg6[%c0_14, %c0_15] : memref<256x256xf32, #tpu.memory_space<vmem>>, vector<256x256xf32>
    %cst_16 = arith.constant dense<0.000000e+00> : vector<2x256xf32>
    %22 = tpu.matmul %20, %21, %cst_16 {dimension_numbers = #tpu.dot_dimension_numbers<[1], [0], [0], [1], [0, 0, 1, 1], [], []>} : vector<2x256xf32>, vector<256x256xf32>, vector<2x256xf32> -> vector<2x256xf32>
    %c0_17 = arith.constant 0 : index
    %c0_18 = arith.constant 0 : index
    %23 = vector.load %arg7[%c0_17, %c0_18] : memref<1x256xf32, #tpu.memory_space<vmem>>, vector<1x256xf32>
    %24 = vector.broadcast %23 : vector<1x256xf32> to vector<2x256xf32>
    %25 = arith.addf %22, %24 : vector<2x256xf32>
    %cst_19 = arith.constant 0.000000e+00 : f32
    %26 = vector.broadcast %cst_19 : f32 to vector<2x256xf32>
    %27 = arith.cmpf oge, %25, %26 : vector<2x256xf32>
    %cst_20 = arith.constant 2.000000e-01 : f32
    %28 = vector.broadcast %cst_20 : f32 to vector<2x256xf32>
    %29 = arith.mulf %28, %25 : vector<2x256xf32>
    %30 = arith.select %27, %25, %29 : vector<2x256xi1>, vector<2x256xf32>
    %c0_21 = arith.constant 0 : index
    %c0_22 = arith.constant 0 : index
    %31 = vector.load %arg8[%c0_21, %c0_22] : memref<256x10xf32, #tpu.memory_space<vmem>>, vector<256x10xf32>
    %cst_23 = arith.constant dense<0.000000e+00> : vector<2x10xf32>
    %32 = tpu.matmul %30, %31, %cst_23 {dimension_numbers = #tpu.dot_dimension_numbers<[1], [0], [0], [1], [0, 0, 1, 1], [], []>} : vector<2x256xf32>, vector<256x10xf32>, vector<2x10xf32> -> vector<2x10xf32>
    %c0_24 = arith.constant 0 : index
    %c0_25 = arith.constant 0 : index
    %33 = vector.load %arg9[%c0_24, %c0_25] : memref<1x10xf32, #tpu.memory_space<vmem>>, vector<1x10xf32>
    %34 = vector.broadcast %33 : vector<1x10xf32> to vector<2x10xf32>
    %35 = arith.addf %32, %34 : vector<2x10xf32>
    %c0_26 = arith.constant 0 : index
    %c0_27 = arith.constant 0 : index
    %36 = vector.load %arg10[%c0_26, %c0_27] : memref<2x10xf32, #tpu.memory_space<vmem>>, vector<2x10xf32>
    tpu.vector_store %arg10[%c0_26, %c0_27], %35 {strides = array<i32>} : memref<2x10xf32, #tpu.memory_space<vmem>>, vector<2x10xf32>,
    return
  }
  func.func @transform_0(%arg0: i32) -> (i32, i32) {
    %c0_i32 = arith.constant 0 : i32
    %c0_i32_0 = arith.constant 0 : i32
    %c0_i32_1 = arith.constant 0 : i32
    return %c0_i32, %c0_i32_0 : i32, i32
  }
  func.func @transform_1(%arg0: i32) -> (i32, i32) {
    %c0_i32 = arith.constant 0 : i32
    %c0_i32_0 = arith.constant 0 : i32
    %c0_i32_1 = arith.constant 0 : i32
    return %c0_i32, %c0_i32_0 : i32, i32
  }
  func.func @transform_2(%arg0: i32) -> (i32, i32) {
    %c0_i32 = arith.constant 0 : i32
    %c0_i32_0 = arith.constant 0 : i32
    %c0_i32_1 = arith.constant 0 : i32
    return %c0_i32, %c0_i32_0 : i32, i32
  }
  func.func @transform_3(%arg0: i32) -> (i32, i32) {
    %c0_i32 = arith.constant 0 : i32
    %c0_i32_0 = arith.constant 0 : i32
    %c0_i32_1 = arith.constant 0 : i32
    return %c0_i32, %c0_i32_0 : i32, i32
  }
  func.func @transform_4(%arg0: i32) -> (i32, i32) {
    %c0_i32 = arith.constant 0 : i32
    %c0_i32_0 = arith.constant 0 : i32
    %c0_i32_1 = arith.constant 0 : i32
    return %c0_i32, %c0_i32_0 : i32, i32
  }
  func.func @transform_5(%arg0: i32) -> (i32, i32) {
    %c0_i32 = arith.constant 0 : i32
    %c0_i32_0 = arith.constant 0 : i32
    %c0_i32_1 = arith.constant 0 : i32
    return %c0_i32, %c0_i32_0 : i32, i32
  }
  func.func @transform_6(%arg0: i32) -> (i32, i32) {
    %c0_i32 = arith.constant 0 : i32
    %c0_i32_0 = arith.constant 0 : i32
    %c0_i32_1 = arith.constant 0 : i32
    return %c0_i32, %c0_i32_0 : i32, i32
  }
  func.func @transform_7(%arg0: i32) -> (i32, i32) {
    %c0_i32 = arith.constant 0 : i32
    %c0_i32_0 = arith.constant 0 : i32
    %c0_i32_1 = arith.constant 0 : i32
    return %c0_i32, %c0_i32_0 : i32, i32
  }
  func.func @transform_8(%arg0: i32) -> (i32, i32) {
    %c0_i32 = arith.constant 0 : i32
    %c0_i32_0 = arith.constant 0 : i32
    %c0_i32_1 = arith.constant 0 : i32
    return %c0_i32, %c0_i32_0 : i32, i32
  }
  func.func @transform_9(%arg0: i32) -> (i32, i32) {
    %c0_i32 = arith.constant 0 : i32
    %c0_i32_0 = arith.constant 0 : i32
    %c0_i32_1 = arith.constant 0 : i32
    return %c0_i32, %c0_i32_0 : i32, i32
  }
}

module attributes {stable_mosaic.version = 11 : i64} {
  func.func @_fused_pipeline_kernel(%arg0: i32, %arg1: memref<1x3x16x22xf32, #tpu.memory_space<vmem>>, %arg2: memref<4x16x22xf32, #tpu.memory_space<vmem>>, %arg3: memref<4x16x22xf32, #tpu.memory_space<vmem>>, %arg4: memref<16x4xf32, #tpu.memory_space<vmem>>, %arg5: memref<376xf32, #tpu.memory_space<smem>>, %arg6: memref<1x4x8x22xf32, #tpu.memory_space<vmem>>) attributes {dimension_semantics = [#tpu.dimension_semantics<parallel>], iteration_bounds = array<i64: 2>, scalar_prefetch = 0 : i64, scratch_operands = 0 : i64, tpu.core_type = #tpu.core_type<tc>, window_params = [{transform_indices = @transform_0, window_bounds = array<i64: 1, 3, 16, 22>}, {pipeline_mode = #tpu.pipeline_mode<synchronous>, transform_indices = @transform_1, window_bounds = array<i64: 4, 16, 22>}, {pipeline_mode = #tpu.pipeline_mode<synchronous>, transform_indices = @transform_2, window_bounds = array<i64: 4, 16, 22>}, {pipeline_mode = #tpu.pipeline_mode<synchronous>, transform_indices = @transform_3, window_bounds = array<i64: 16, 4>}, {transform_indices = @transform_4, window_bounds = array<i64: 376>}, {transform_indices = @transform_5, window_bounds = array<i64: 1, 4, 8, 22>}]} {
    %c0 = arith.constant 0 : index
    %c0_0 = arith.constant 0 : index
    %c0_1 = arith.constant 0 : index
    %c0_2 = arith.constant 0 : index
    %0 = vector.load %arg1[%c0, %c0_0, %c0_1, %c0_2] : memref<1x3x16x22xf32, #tpu.memory_space<vmem>>, vector<1x3x16x22xf32>
    %1 = vector.shape_cast %0 : vector<1x3x16x22xf32> to vector<3x16x22xf32>
    %2 = vector.extract_strided_slice %1 {offsets = [0, 0, 0], sizes = [1, 16, 22], strides = [1, 1, 1]} : vector<3x16x22xf32> to vector<1x16x22xf32>
    %3 = vector.shape_cast %2 : vector<1x16x22xf32> to vector<16x22xf32>
    %cst = arith.constant 0.000000e+00 : f32
    %4 = vector.broadcast %cst : f32 to vector<16x1xf32>
    %5 = tpu.concatenate %4, %3, %4 in 1 : vector<16x1xf32>, vector<16x22xf32>, vector<16x1xf32> -> vector<16x24xf32>
    %cst_3 = arith.constant 0.000000e+00 : f32
    %6 = vector.broadcast %cst_3 : f32 to vector<1x24xf32>
    %7 = tpu.concatenate %6, %5, %6 in 0 : vector<1x24xf32>, vector<16x24xf32>, vector<1x24xf32> -> vector<18x24xf32>
    %8 = vector.extract_strided_slice %1 {offsets = [1, 0, 0], sizes = [1, 16, 22], strides = [1, 1, 1]} : vector<3x16x22xf32> to vector<1x16x22xf32>
    %9 = vector.shape_cast %8 : vector<1x16x22xf32> to vector<16x22xf32>
    %cst_4 = arith.constant 0.000000e+00 : f32
    %10 = vector.broadcast %cst_4 : f32 to vector<16x1xf32>
    %11 = tpu.concatenate %10, %9, %10 in 1 : vector<16x1xf32>, vector<16x22xf32>, vector<16x1xf32> -> vector<16x24xf32>
    %cst_5 = arith.constant 0.000000e+00 : f32
    %12 = vector.broadcast %cst_5 : f32 to vector<1x24xf32>
    %13 = tpu.concatenate %12, %11, %12 in 0 : vector<1x24xf32>, vector<16x24xf32>, vector<1x24xf32> -> vector<18x24xf32>
    %14 = vector.extract_strided_slice %1 {offsets = [2, 0, 0], sizes = [1, 16, 22], strides = [1, 1, 1]} : vector<3x16x22xf32> to vector<1x16x22xf32>
    %15 = vector.shape_cast %14 : vector<1x16x22xf32> to vector<16x22xf32>
    %cst_6 = arith.constant 0.000000e+00 : f32
    %16 = vector.broadcast %cst_6 : f32 to vector<16x1xf32>
    %17 = tpu.concatenate %16, %15, %16 in 1 : vector<16x1xf32>, vector<16x22xf32>, vector<16x1xf32> -> vector<16x24xf32>
    %cst_7 = arith.constant 0.000000e+00 : f32
    %18 = vector.broadcast %cst_7 : f32 to vector<1x24xf32>
    %19 = tpu.concatenate %18, %17, %18 in 0 : vector<1x24xf32>, vector<16x24xf32>, vector<1x24xf32> -> vector<18x24xf32>
    %cst_8 = arith.constant 0.000000e+00 : f32
    %20 = vector.broadcast %cst_8 : f32 to vector<16x22xf32>
    %c108 = arith.constant 108 : index
    %21 = memref.load %arg5[%c108] : memref<376xf32, #tpu.memory_space<smem>>
    %22 = vector.broadcast %21 : f32 to vector<16x22xf32>
    %23 = arith.addf %20, %22 : vector<16x22xf32>
    %cst_9 = arith.constant 0.000000e+00 : f32
    %24 = vector.broadcast %cst_9 : f32 to vector<16x22xf32>
    %c109 = arith.constant 109 : index
    %25 = memref.load %arg5[%c109] : memref<376xf32, #tpu.memory_space<smem>>
    %26 = vector.broadcast %25 : f32 to vector<16x22xf32>
    %27 = arith.addf %24, %26 : vector<16x22xf32>
    %cst_10 = arith.constant 0.000000e+00 : f32
    %28 = vector.broadcast %cst_10 : f32 to vector<16x22xf32>
    %c110 = arith.constant 110 : index
    %29 = memref.load %arg5[%c110] : memref<376xf32, #tpu.memory_space<smem>>
    %30 = vector.broadcast %29 : f32 to vector<16x22xf32>
    %31 = arith.addf %28, %30 : vector<16x22xf32>
    %cst_11 = arith.constant 0.000000e+00 : f32
    %32 = vector.broadcast %cst_11 : f32 to vector<16x22xf32>
    %c111 = arith.constant 111 : index
    %33 = memref.load %arg5[%c111] : memref<376xf32, #tpu.memory_space<smem>>
    %34 = vector.broadcast %33 : f32 to vector<16x22xf32>
    %35 = arith.addf %32, %34 : vector<16x22xf32>
    %36 = vector.extract_strided_slice %7 {offsets = [0, 0], sizes = [16, 22], strides = [1, 1]} : vector<18x24xf32> to vector<16x22xf32>
    %c0_12 = arith.constant 0 : index
    %37 = memref.load %arg5[%c0_12] : memref<376xf32, #tpu.memory_space<smem>>
    %38 = vector.broadcast %37 : f32 to vector<16x22xf32>
    %39 = arith.mulf %38, %36 : vector<16x22xf32>
    %40 = arith.addf %23, %39 : vector<16x22xf32>
    %c27 = arith.constant 27 : index
    %41 = memref.load %arg5[%c27] : memref<376xf32, #tpu.memory_space<smem>>
    %42 = vector.broadcast %41 : f32 to vector<16x22xf32>
    %43 = arith.mulf %42, %36 : vector<16x22xf32>
    %44 = arith.addf %27, %43 : vector<16x22xf32>
    %c54 = arith.constant 54 : index
    %45 = memref.load %arg5[%c54] : memref<376xf32, #tpu.memory_space<smem>>
    %46 = vector.broadcast %45 : f32 to vector<16x22xf32>
    %47 = arith.mulf %46, %36 : vector<16x22xf32>
    %48 = arith.addf %31, %47 : vector<16x22xf32>
    %c81 = arith.constant 81 : index
    %49 = memref.load %arg5[%c81] : memref<376xf32, #tpu.memory_space<smem>>
    %50 = vector.broadcast %49 : f32 to vector<16x22xf32>
    %51 = arith.mulf %50, %36 : vector<16x22xf32>
    %52 = arith.addf %35, %51 : vector<16x22xf32>
    %53 = vector.extract_strided_slice %7 {offsets = [0, 1], sizes = [16, 22], strides = [1, 1]} : vector<18x24xf32> to vector<16x22xf32>
    %c1 = arith.constant 1 : index
    %54 = memref.load %arg5[%c1] : memref<376xf32, #tpu.memory_space<smem>>
    %55 = vector.broadcast %54 : f32 to vector<16x22xf32>
    %56 = arith.mulf %55, %53 : vector<16x22xf32>
    %57 = arith.addf %40, %56 : vector<16x22xf32>
    %c28 = arith.constant 28 : index
    %58 = memref.load %arg5[%c28] : memref<376xf32, #tpu.memory_space<smem>>
    %59 = vector.broadcast %58 : f32 to vector<16x22xf32>
    %60 = arith.mulf %59, %53 : vector<16x22xf32>
    %61 = arith.addf %44, %60 : vector<16x22xf32>
    %c55 = arith.constant 55 : index
    %62 = memref.load %arg5[%c55] : memref<376xf32, #tpu.memory_space<smem>>
    %63 = vector.broadcast %62 : f32 to vector<16x22xf32>
    %64 = arith.mulf %63, %53 : vector<16x22xf32>
    %65 = arith.addf %48, %64 : vector<16x22xf32>
    %c82 = arith.constant 82 : index
    %66 = memref.load %arg5[%c82] : memref<376xf32, #tpu.memory_space<smem>>
    %67 = vector.broadcast %66 : f32 to vector<16x22xf32>
    %68 = arith.mulf %67, %53 : vector<16x22xf32>
    %69 = arith.addf %52, %68 : vector<16x22xf32>
    %70 = vector.extract_strided_slice %7 {offsets = [0, 2], sizes = [16, 22], strides = [1, 1]} : vector<18x24xf32> to vector<16x22xf32>
    %c2 = arith.constant 2 : index
    %71 = memref.load %arg5[%c2] : memref<376xf32, #tpu.memory_space<smem>>
    %72 = vector.broadcast %71 : f32 to vector<16x22xf32>
    %73 = arith.mulf %72, %70 : vector<16x22xf32>
    %74 = arith.addf %57, %73 : vector<16x22xf32>
    %c29 = arith.constant 29 : index
    %75 = memref.load %arg5[%c29] : memref<376xf32, #tpu.memory_space<smem>>
    %76 = vector.broadcast %75 : f32 to vector<16x22xf32>
    %77 = arith.mulf %76, %70 : vector<16x22xf32>
    %78 = arith.addf %61, %77 : vector<16x22xf32>
    %c56 = arith.constant 56 : index
    %79 = memref.load %arg5[%c56] : memref<376xf32, #tpu.memory_space<smem>>
    %80 = vector.broadcast %79 : f32 to vector<16x22xf32>
    %81 = arith.mulf %80, %70 : vector<16x22xf32>
    %82 = arith.addf %65, %81 : vector<16x22xf32>
    %c83 = arith.constant 83 : index
    %83 = memref.load %arg5[%c83] : memref<376xf32, #tpu.memory_space<smem>>
    %84 = vector.broadcast %83 : f32 to vector<16x22xf32>
    %85 = arith.mulf %84, %70 : vector<16x22xf32>
    %86 = arith.addf %69, %85 : vector<16x22xf32>
    %87 = vector.extract_strided_slice %7 {offsets = [1, 0], sizes = [16, 22], strides = [1, 1]} : vector<18x24xf32> to vector<16x22xf32>
    %c3 = arith.constant 3 : index
    %88 = memref.load %arg5[%c3] : memref<376xf32, #tpu.memory_space<smem>>
    %89 = vector.broadcast %88 : f32 to vector<16x22xf32>
    %90 = arith.mulf %89, %87 : vector<16x22xf32>
    %91 = arith.addf %74, %90 : vector<16x22xf32>
    %c30 = arith.constant 30 : index
    %92 = memref.load %arg5[%c30] : memref<376xf32, #tpu.memory_space<smem>>
    %93 = vector.broadcast %92 : f32 to vector<16x22xf32>
    %94 = arith.mulf %93, %87 : vector<16x22xf32>
    %95 = arith.addf %78, %94 : vector<16x22xf32>
    %c57 = arith.constant 57 : index
    %96 = memref.load %arg5[%c57] : memref<376xf32, #tpu.memory_space<smem>>
    %97 = vector.broadcast %96 : f32 to vector<16x22xf32>
    %98 = arith.mulf %97, %87 : vector<16x22xf32>
    %99 = arith.addf %82, %98 : vector<16x22xf32>
    %c84 = arith.constant 84 : index
    %100 = memref.load %arg5[%c84] : memref<376xf32, #tpu.memory_space<smem>>
    %101 = vector.broadcast %100 : f32 to vector<16x22xf32>
    %102 = arith.mulf %101, %87 : vector<16x22xf32>
    %103 = arith.addf %86, %102 : vector<16x22xf32>
    %104 = vector.extract_strided_slice %7 {offsets = [1, 1], sizes = [16, 22], strides = [1, 1]} : vector<18x24xf32> to vector<16x22xf32>
    %c4 = arith.constant 4 : index
    %105 = memref.load %arg5[%c4] : memref<376xf32, #tpu.memory_space<smem>>
    %106 = vector.broadcast %105 : f32 to vector<16x22xf32>
    %107 = arith.mulf %106, %104 : vector<16x22xf32>
    %108 = arith.addf %91, %107 : vector<16x22xf32>
    %c31 = arith.constant 31 : index
    %109 = memref.load %arg5[%c31] : memref<376xf32, #tpu.memory_space<smem>>
    %110 = vector.broadcast %109 : f32 to vector<16x22xf32>
    %111 = arith.mulf %110, %104 : vector<16x22xf32>
    %112 = arith.addf %95, %111 : vector<16x22xf32>
    %c58 = arith.constant 58 : index
    %113 = memref.load %arg5[%c58] : memref<376xf32, #tpu.memory_space<smem>>
    %114 = vector.broadcast %113 : f32 to vector<16x22xf32>
    %115 = arith.mulf %114, %104 : vector<16x22xf32>
    %116 = arith.addf %99, %115 : vector<16x22xf32>
    %c85 = arith.constant 85 : index
    %117 = memref.load %arg5[%c85] : memref<376xf32, #tpu.memory_space<smem>>
    %118 = vector.broadcast %117 : f32 to vector<16x22xf32>
    %119 = arith.mulf %118, %104 : vector<16x22xf32>
    %120 = arith.addf %103, %119 : vector<16x22xf32>
    %121 = vector.extract_strided_slice %7 {offsets = [1, 2], sizes = [16, 22], strides = [1, 1]} : vector<18x24xf32> to vector<16x22xf32>
    %c5 = arith.constant 5 : index
    %122 = memref.load %arg5[%c5] : memref<376xf32, #tpu.memory_space<smem>>
    %123 = vector.broadcast %122 : f32 to vector<16x22xf32>
    %124 = arith.mulf %123, %121 : vector<16x22xf32>
    %125 = arith.addf %108, %124 : vector<16x22xf32>
    %c32 = arith.constant 32 : index
    %126 = memref.load %arg5[%c32] : memref<376xf32, #tpu.memory_space<smem>>
    %127 = vector.broadcast %126 : f32 to vector<16x22xf32>
    %128 = arith.mulf %127, %121 : vector<16x22xf32>
    %129 = arith.addf %112, %128 : vector<16x22xf32>
    %c59 = arith.constant 59 : index
    %130 = memref.load %arg5[%c59] : memref<376xf32, #tpu.memory_space<smem>>
    %131 = vector.broadcast %130 : f32 to vector<16x22xf32>
    %132 = arith.mulf %131, %121 : vector<16x22xf32>
    %133 = arith.addf %116, %132 : vector<16x22xf32>
    %c86 = arith.constant 86 : index
    %134 = memref.load %arg5[%c86] : memref<376xf32, #tpu.memory_space<smem>>
    %135 = vector.broadcast %134 : f32 to vector<16x22xf32>
    %136 = arith.mulf %135, %121 : vector<16x22xf32>
    %137 = arith.addf %120, %136 : vector<16x22xf32>
    %138 = vector.extract_strided_slice %7 {offsets = [2, 0], sizes = [16, 22], strides = [1, 1]} : vector<18x24xf32> to vector<16x22xf32>
    %c6 = arith.constant 6 : index
    %139 = memref.load %arg5[%c6] : memref<376xf32, #tpu.memory_space<smem>>
    %140 = vector.broadcast %139 : f32 to vector<16x22xf32>
    %141 = arith.mulf %140, %138 : vector<16x22xf32>
    %142 = arith.addf %125, %141 : vector<16x22xf32>
    %c33 = arith.constant 33 : index
    %143 = memref.load %arg5[%c33] : memref<376xf32, #tpu.memory_space<smem>>
    %144 = vector.broadcast %143 : f32 to vector<16x22xf32>
    %145 = arith.mulf %144, %138 : vector<16x22xf32>
    %146 = arith.addf %129, %145 : vector<16x22xf32>
    %c60 = arith.constant 60 : index
    %147 = memref.load %arg5[%c60] : memref<376xf32, #tpu.memory_space<smem>>
    %148 = vector.broadcast %147 : f32 to vector<16x22xf32>
    %149 = arith.mulf %148, %138 : vector<16x22xf32>
    %150 = arith.addf %133, %149 : vector<16x22xf32>
    %c87 = arith.constant 87 : index
    %151 = memref.load %arg5[%c87] : memref<376xf32, #tpu.memory_space<smem>>
    %152 = vector.broadcast %151 : f32 to vector<16x22xf32>
    %153 = arith.mulf %152, %138 : vector<16x22xf32>
    %154 = arith.addf %137, %153 : vector<16x22xf32>
    %155 = vector.extract_strided_slice %7 {offsets = [2, 1], sizes = [16, 22], strides = [1, 1]} : vector<18x24xf32> to vector<16x22xf32>
    %c7 = arith.constant 7 : index
    %156 = memref.load %arg5[%c7] : memref<376xf32, #tpu.memory_space<smem>>
    %157 = vector.broadcast %156 : f32 to vector<16x22xf32>
    %158 = arith.mulf %157, %155 : vector<16x22xf32>
    %159 = arith.addf %142, %158 : vector<16x22xf32>
    %c34 = arith.constant 34 : index
    %160 = memref.load %arg5[%c34] : memref<376xf32, #tpu.memory_space<smem>>
    %161 = vector.broadcast %160 : f32 to vector<16x22xf32>
    %162 = arith.mulf %161, %155 : vector<16x22xf32>
    %163 = arith.addf %146, %162 : vector<16x22xf32>
    %c61 = arith.constant 61 : index
    %164 = memref.load %arg5[%c61] : memref<376xf32, #tpu.memory_space<smem>>
    %165 = vector.broadcast %164 : f32 to vector<16x22xf32>
    %166 = arith.mulf %165, %155 : vector<16x22xf32>
    %167 = arith.addf %150, %166 : vector<16x22xf32>
    %c88 = arith.constant 88 : index
    %168 = memref.load %arg5[%c88] : memref<376xf32, #tpu.memory_space<smem>>
    %169 = vector.broadcast %168 : f32 to vector<16x22xf32>
    %170 = arith.mulf %169, %155 : vector<16x22xf32>
    %171 = arith.addf %154, %170 : vector<16x22xf32>
    %172 = vector.extract_strided_slice %7 {offsets = [2, 2], sizes = [16, 22], strides = [1, 1]} : vector<18x24xf32> to vector<16x22xf32>
    %c8 = arith.constant 8 : index
    %173 = memref.load %arg5[%c8] : memref<376xf32, #tpu.memory_space<smem>>
    %174 = vector.broadcast %173 : f32 to vector<16x22xf32>
    %175 = arith.mulf %174, %172 : vector<16x22xf32>
    %176 = arith.addf %159, %175 : vector<16x22xf32>
    %c35 = arith.constant 35 : index
    %177 = memref.load %arg5[%c35] : memref<376xf32, #tpu.memory_space<smem>>
    %178 = vector.broadcast %177 : f32 to vector<16x22xf32>
    %179 = arith.mulf %178, %172 : vector<16x22xf32>
    %180 = arith.addf %163, %179 : vector<16x22xf32>
    %c62 = arith.constant 62 : index
    %181 = memref.load %arg5[%c62] : memref<376xf32, #tpu.memory_space<smem>>
    %182 = vector.broadcast %181 : f32 to vector<16x22xf32>
    %183 = arith.mulf %182, %172 : vector<16x22xf32>
    %184 = arith.addf %167, %183 : vector<16x22xf32>
    %c89 = arith.constant 89 : index
    %185 = memref.load %arg5[%c89] : memref<376xf32, #tpu.memory_space<smem>>
    %186 = vector.broadcast %185 : f32 to vector<16x22xf32>
    %187 = arith.mulf %186, %172 : vector<16x22xf32>
    %188 = arith.addf %171, %187 : vector<16x22xf32>
    %189 = vector.extract_strided_slice %13 {offsets = [0, 0], sizes = [16, 22], strides = [1, 1]} : vector<18x24xf32> to vector<16x22xf32>
    %c9 = arith.constant 9 : index
    %190 = memref.load %arg5[%c9] : memref<376xf32, #tpu.memory_space<smem>>
    %191 = vector.broadcast %190 : f32 to vector<16x22xf32>
    %192 = arith.mulf %191, %189 : vector<16x22xf32>
    %193 = arith.addf %176, %192 : vector<16x22xf32>
    %c36 = arith.constant 36 : index
    %194 = memref.load %arg5[%c36] : memref<376xf32, #tpu.memory_space<smem>>
    %195 = vector.broadcast %194 : f32 to vector<16x22xf32>
    %196 = arith.mulf %195, %189 : vector<16x22xf32>
    %197 = arith.addf %180, %196 : vector<16x22xf32>
    %c63 = arith.constant 63 : index
    %198 = memref.load %arg5[%c63] : memref<376xf32, #tpu.memory_space<smem>>
    %199 = vector.broadcast %198 : f32 to vector<16x22xf32>
    %200 = arith.mulf %199, %189 : vector<16x22xf32>
    %201 = arith.addf %184, %200 : vector<16x22xf32>
    %c90 = arith.constant 90 : index
    %202 = memref.load %arg5[%c90] : memref<376xf32, #tpu.memory_space<smem>>
    %203 = vector.broadcast %202 : f32 to vector<16x22xf32>
    %204 = arith.mulf %203, %189 : vector<16x22xf32>
    %205 = arith.addf %188, %204 : vector<16x22xf32>
    %206 = vector.extract_strided_slice %13 {offsets = [0, 1], sizes = [16, 22], strides = [1, 1]} : vector<18x24xf32> to vector<16x22xf32>
    %c10 = arith.constant 10 : index
    %207 = memref.load %arg5[%c10] : memref<376xf32, #tpu.memory_space<smem>>
    %208 = vector.broadcast %207 : f32 to vector<16x22xf32>
    %209 = arith.mulf %208, %206 : vector<16x22xf32>
    %210 = arith.addf %193, %209 : vector<16x22xf32>
    %c37 = arith.constant 37 : index
    %211 = memref.load %arg5[%c37] : memref<376xf32, #tpu.memory_space<smem>>
    %212 = vector.broadcast %211 : f32 to vector<16x22xf32>
    %213 = arith.mulf %212, %206 : vector<16x22xf32>
    %214 = arith.addf %197, %213 : vector<16x22xf32>
    %c64 = arith.constant 64 : index
    %215 = memref.load %arg5[%c64] : memref<376xf32, #tpu.memory_space<smem>>
    %216 = vector.broadcast %215 : f32 to vector<16x22xf32>
    %217 = arith.mulf %216, %206 : vector<16x22xf32>
    %218 = arith.addf %201, %217 : vector<16x22xf32>
    %c91 = arith.constant 91 : index
    %219 = memref.load %arg5[%c91] : memref<376xf32, #tpu.memory_space<smem>>
    %220 = vector.broadcast %219 : f32 to vector<16x22xf32>
    %221 = arith.mulf %220, %206 : vector<16x22xf32>
    %222 = arith.addf %205, %221 : vector<16x22xf32>
    %223 = vector.extract_strided_slice %13 {offsets = [0, 2], sizes = [16, 22], strides = [1, 1]} : vector<18x24xf32> to vector<16x22xf32>
    %c11 = arith.constant 11 : index
    %224 = memref.load %arg5[%c11] : memref<376xf32, #tpu.memory_space<smem>>
    %225 = vector.broadcast %224 : f32 to vector<16x22xf32>
    %226 = arith.mulf %225, %223 : vector<16x22xf32>
    %227 = arith.addf %210, %226 : vector<16x22xf32>
    %c38 = arith.constant 38 : index
    %228 = memref.load %arg5[%c38] : memref<376xf32, #tpu.memory_space<smem>>
    %229 = vector.broadcast %228 : f32 to vector<16x22xf32>
    %230 = arith.mulf %229, %223 : vector<16x22xf32>
    %231 = arith.addf %214, %230 : vector<16x22xf32>
    %c65 = arith.constant 65 : index
    %232 = memref.load %arg5[%c65] : memref<376xf32, #tpu.memory_space<smem>>
    %233 = vector.broadcast %232 : f32 to vector<16x22xf32>
    %234 = arith.mulf %233, %223 : vector<16x22xf32>
    %235 = arith.addf %218, %234 : vector<16x22xf32>
    %c92 = arith.constant 92 : index
    %236 = memref.load %arg5[%c92] : memref<376xf32, #tpu.memory_space<smem>>
    %237 = vector.broadcast %236 : f32 to vector<16x22xf32>
    %238 = arith.mulf %237, %223 : vector<16x22xf32>
    %239 = arith.addf %222, %238 : vector<16x22xf32>
    %240 = vector.extract_strided_slice %13 {offsets = [1, 0], sizes = [16, 22], strides = [1, 1]} : vector<18x24xf32> to vector<16x22xf32>
    %c12 = arith.constant 12 : index
    %241 = memref.load %arg5[%c12] : memref<376xf32, #tpu.memory_space<smem>>
    %242 = vector.broadcast %241 : f32 to vector<16x22xf32>
    %243 = arith.mulf %242, %240 : vector<16x22xf32>
    %244 = arith.addf %227, %243 : vector<16x22xf32>
    %c39 = arith.constant 39 : index
    %245 = memref.load %arg5[%c39] : memref<376xf32, #tpu.memory_space<smem>>
    %246 = vector.broadcast %245 : f32 to vector<16x22xf32>
    %247 = arith.mulf %246, %240 : vector<16x22xf32>
    %248 = arith.addf %231, %247 : vector<16x22xf32>
    %c66 = arith.constant 66 : index
    %249 = memref.load %arg5[%c66] : memref<376xf32, #tpu.memory_space<smem>>
    %250 = vector.broadcast %249 : f32 to vector<16x22xf32>
    %251 = arith.mulf %250, %240 : vector<16x22xf32>
    %252 = arith.addf %235, %251 : vector<16x22xf32>
    %c93 = arith.constant 93 : index
    %253 = memref.load %arg5[%c93] : memref<376xf32, #tpu.memory_space<smem>>
    %254 = vector.broadcast %253 : f32 to vector<16x22xf32>
    %255 = arith.mulf %254, %240 : vector<16x22xf32>
    %256 = arith.addf %239, %255 : vector<16x22xf32>
    %257 = vector.extract_strided_slice %13 {offsets = [1, 1], sizes = [16, 22], strides = [1, 1]} : vector<18x24xf32> to vector<16x22xf32>
    %c13 = arith.constant 13 : index
    %258 = memref.load %arg5[%c13] : memref<376xf32, #tpu.memory_space<smem>>
    %259 = vector.broadcast %258 : f32 to vector<16x22xf32>
    %260 = arith.mulf %259, %257 : vector<16x22xf32>
    %261 = arith.addf %244, %260 : vector<16x22xf32>
    %c40 = arith.constant 40 : index
    %262 = memref.load %arg5[%c40] : memref<376xf32, #tpu.memory_space<smem>>
    %263 = vector.broadcast %262 : f32 to vector<16x22xf32>
    %264 = arith.mulf %263, %257 : vector<16x22xf32>
    %265 = arith.addf %248, %264 : vector<16x22xf32>
    %c67 = arith.constant 67 : index
    %266 = memref.load %arg5[%c67] : memref<376xf32, #tpu.memory_space<smem>>
    %267 = vector.broadcast %266 : f32 to vector<16x22xf32>
    %268 = arith.mulf %267, %257 : vector<16x22xf32>
    %269 = arith.addf %252, %268 : vector<16x22xf32>
    %c94 = arith.constant 94 : index
    %270 = memref.load %arg5[%c94] : memref<376xf32, #tpu.memory_space<smem>>
    %271 = vector.broadcast %270 : f32 to vector<16x22xf32>
    %272 = arith.mulf %271, %257 : vector<16x22xf32>
    %273 = arith.addf %256, %272 : vector<16x22xf32>
    %274 = vector.extract_strided_slice %13 {offsets = [1, 2], sizes = [16, 22], strides = [1, 1]} : vector<18x24xf32> to vector<16x22xf32>
    %c14 = arith.constant 14 : index
    %275 = memref.load %arg5[%c14] : memref<376xf32, #tpu.memory_space<smem>>
    %276 = vector.broadcast %275 : f32 to vector<16x22xf32>
    %277 = arith.mulf %276, %274 : vector<16x22xf32>
    %278 = arith.addf %261, %277 : vector<16x22xf32>
    %c41 = arith.constant 41 : index
    %279 = memref.load %arg5[%c41] : memref<376xf32, #tpu.memory_space<smem>>
    %280 = vector.broadcast %279 : f32 to vector<16x22xf32>
    %281 = arith.mulf %280, %274 : vector<16x22xf32>
    %282 = arith.addf %265, %281 : vector<16x22xf32>
    %c68 = arith.constant 68 : index
    %283 = memref.load %arg5[%c68] : memref<376xf32, #tpu.memory_space<smem>>
    %284 = vector.broadcast %283 : f32 to vector<16x22xf32>
    %285 = arith.mulf %284, %274 : vector<16x22xf32>
    %286 = arith.addf %269, %285 : vector<16x22xf32>
    %c95 = arith.constant 95 : index
    %287 = memref.load %arg5[%c95] : memref<376xf32, #tpu.memory_space<smem>>
    %288 = vector.broadcast %287 : f32 to vector<16x22xf32>
    %289 = arith.mulf %288, %274 : vector<16x22xf32>
    %290 = arith.addf %273, %289 : vector<16x22xf32>
    %291 = vector.extract_strided_slice %13 {offsets = [2, 0], sizes = [16, 22], strides = [1, 1]} : vector<18x24xf32> to vector<16x22xf32>
    %c15 = arith.constant 15 : index
    %292 = memref.load %arg5[%c15] : memref<376xf32, #tpu.memory_space<smem>>
    %293 = vector.broadcast %292 : f32 to vector<16x22xf32>
    %294 = arith.mulf %293, %291 : vector<16x22xf32>
    %295 = arith.addf %278, %294 : vector<16x22xf32>
    %c42 = arith.constant 42 : index
    %296 = memref.load %arg5[%c42] : memref<376xf32, #tpu.memory_space<smem>>
    %297 = vector.broadcast %296 : f32 to vector<16x22xf32>
    %298 = arith.mulf %297, %291 : vector<16x22xf32>
    %299 = arith.addf %282, %298 : vector<16x22xf32>
    %c69 = arith.constant 69 : index
    %300 = memref.load %arg5[%c69] : memref<376xf32, #tpu.memory_space<smem>>
    %301 = vector.broadcast %300 : f32 to vector<16x22xf32>
    %302 = arith.mulf %301, %291 : vector<16x22xf32>
    %303 = arith.addf %286, %302 : vector<16x22xf32>
    %c96 = arith.constant 96 : index
    %304 = memref.load %arg5[%c96] : memref<376xf32, #tpu.memory_space<smem>>
    %305 = vector.broadcast %304 : f32 to vector<16x22xf32>
    %306 = arith.mulf %305, %291 : vector<16x22xf32>
    %307 = arith.addf %290, %306 : vector<16x22xf32>
    %308 = vector.extract_strided_slice %13 {offsets = [2, 1], sizes = [16, 22], strides = [1, 1]} : vector<18x24xf32> to vector<16x22xf32>
    %c16 = arith.constant 16 : index
    %309 = memref.load %arg5[%c16] : memref<376xf32, #tpu.memory_space<smem>>
    %310 = vector.broadcast %309 : f32 to vector<16x22xf32>
    %311 = arith.mulf %310, %308 : vector<16x22xf32>
    %312 = arith.addf %295, %311 : vector<16x22xf32>
    %c43 = arith.constant 43 : index
    %313 = memref.load %arg5[%c43] : memref<376xf32, #tpu.memory_space<smem>>
    %314 = vector.broadcast %313 : f32 to vector<16x22xf32>
    %315 = arith.mulf %314, %308 : vector<16x22xf32>
    %316 = arith.addf %299, %315 : vector<16x22xf32>
    %c70 = arith.constant 70 : index
    %317 = memref.load %arg5[%c70] : memref<376xf32, #tpu.memory_space<smem>>
    %318 = vector.broadcast %317 : f32 to vector<16x22xf32>
    %319 = arith.mulf %318, %308 : vector<16x22xf32>
    %320 = arith.addf %303, %319 : vector<16x22xf32>
    %c97 = arith.constant 97 : index
    %321 = memref.load %arg5[%c97] : memref<376xf32, #tpu.memory_space<smem>>
    %322 = vector.broadcast %321 : f32 to vector<16x22xf32>
    %323 = arith.mulf %322, %308 : vector<16x22xf32>
    %324 = arith.addf %307, %323 : vector<16x22xf32>
    %325 = vector.extract_strided_slice %13 {offsets = [2, 2], sizes = [16, 22], strides = [1, 1]} : vector<18x24xf32> to vector<16x22xf32>
    %c17 = arith.constant 17 : index
    %326 = memref.load %arg5[%c17] : memref<376xf32, #tpu.memory_space<smem>>
    %327 = vector.broadcast %326 : f32 to vector<16x22xf32>
    %328 = arith.mulf %327, %325 : vector<16x22xf32>
    %329 = arith.addf %312, %328 : vector<16x22xf32>
    %c44 = arith.constant 44 : index
    %330 = memref.load %arg5[%c44] : memref<376xf32, #tpu.memory_space<smem>>
    %331 = vector.broadcast %330 : f32 to vector<16x22xf32>
    %332 = arith.mulf %331, %325 : vector<16x22xf32>
    %333 = arith.addf %316, %332 : vector<16x22xf32>
    %c71 = arith.constant 71 : index
    %334 = memref.load %arg5[%c71] : memref<376xf32, #tpu.memory_space<smem>>
    %335 = vector.broadcast %334 : f32 to vector<16x22xf32>
    %336 = arith.mulf %335, %325 : vector<16x22xf32>
    %337 = arith.addf %320, %336 : vector<16x22xf32>
    %c98 = arith.constant 98 : index
    %338 = memref.load %arg5[%c98] : memref<376xf32, #tpu.memory_space<smem>>
    %339 = vector.broadcast %338 : f32 to vector<16x22xf32>
    %340 = arith.mulf %339, %325 : vector<16x22xf32>
    %341 = arith.addf %324, %340 : vector<16x22xf32>
    %342 = vector.extract_strided_slice %19 {offsets = [0, 0], sizes = [16, 22], strides = [1, 1]} : vector<18x24xf32> to vector<16x22xf32>
    %c18 = arith.constant 18 : index
    %343 = memref.load %arg5[%c18] : memref<376xf32, #tpu.memory_space<smem>>
    %344 = vector.broadcast %343 : f32 to vector<16x22xf32>
    %345 = arith.mulf %344, %342 : vector<16x22xf32>
    %346 = arith.addf %329, %345 : vector<16x22xf32>
    %c45 = arith.constant 45 : index
    %347 = memref.load %arg5[%c45] : memref<376xf32, #tpu.memory_space<smem>>
    %348 = vector.broadcast %347 : f32 to vector<16x22xf32>
    %349 = arith.mulf %348, %342 : vector<16x22xf32>
    %350 = arith.addf %333, %349 : vector<16x22xf32>
    %c72 = arith.constant 72 : index
    %351 = memref.load %arg5[%c72] : memref<376xf32, #tpu.memory_space<smem>>
    %352 = vector.broadcast %351 : f32 to vector<16x22xf32>
    %353 = arith.mulf %352, %342 : vector<16x22xf32>
    %354 = arith.addf %337, %353 : vector<16x22xf32>
    %c99 = arith.constant 99 : index
    %355 = memref.load %arg5[%c99] : memref<376xf32, #tpu.memory_space<smem>>
    %356 = vector.broadcast %355 : f32 to vector<16x22xf32>
    %357 = arith.mulf %356, %342 : vector<16x22xf32>
    %358 = arith.addf %341, %357 : vector<16x22xf32>
    %359 = vector.extract_strided_slice %19 {offsets = [0, 1], sizes = [16, 22], strides = [1, 1]} : vector<18x24xf32> to vector<16x22xf32>
    %c19 = arith.constant 19 : index
    %360 = memref.load %arg5[%c19] : memref<376xf32, #tpu.memory_space<smem>>
    %361 = vector.broadcast %360 : f32 to vector<16x22xf32>
    %362 = arith.mulf %361, %359 : vector<16x22xf32>
    %363 = arith.addf %346, %362 : vector<16x22xf32>
    %c46 = arith.constant 46 : index
    %364 = memref.load %arg5[%c46] : memref<376xf32, #tpu.memory_space<smem>>
    %365 = vector.broadcast %364 : f32 to vector<16x22xf32>
    %366 = arith.mulf %365, %359 : vector<16x22xf32>
    %367 = arith.addf %350, %366 : vector<16x22xf32>
    %c73 = arith.constant 73 : index
    %368 = memref.load %arg5[%c73] : memref<376xf32, #tpu.memory_space<smem>>
    %369 = vector.broadcast %368 : f32 to vector<16x22xf32>
    %370 = arith.mulf %369, %359 : vector<16x22xf32>
    %371 = arith.addf %354, %370 : vector<16x22xf32>
    %c100 = arith.constant 100 : index
    %372 = memref.load %arg5[%c100] : memref<376xf32, #tpu.memory_space<smem>>
    %373 = vector.broadcast %372 : f32 to vector<16x22xf32>
    %374 = arith.mulf %373, %359 : vector<16x22xf32>
    %375 = arith.addf %358, %374 : vector<16x22xf32>
    %376 = vector.extract_strided_slice %19 {offsets = [0, 2], sizes = [16, 22], strides = [1, 1]} : vector<18x24xf32> to vector<16x22xf32>
    %c20 = arith.constant 20 : index
    %377 = memref.load %arg5[%c20] : memref<376xf32, #tpu.memory_space<smem>>
    %378 = vector.broadcast %377 : f32 to vector<16x22xf32>
    %379 = arith.mulf %378, %376 : vector<16x22xf32>
    %380 = arith.addf %363, %379 : vector<16x22xf32>
    %c47 = arith.constant 47 : index
    %381 = memref.load %arg5[%c47] : memref<376xf32, #tpu.memory_space<smem>>
    %382 = vector.broadcast %381 : f32 to vector<16x22xf32>
    %383 = arith.mulf %382, %376 : vector<16x22xf32>
    %384 = arith.addf %367, %383 : vector<16x22xf32>
    %c74 = arith.constant 74 : index
    %385 = memref.load %arg5[%c74] : memref<376xf32, #tpu.memory_space<smem>>
    %386 = vector.broadcast %385 : f32 to vector<16x22xf32>
    %387 = arith.mulf %386, %376 : vector<16x22xf32>
    %388 = arith.addf %371, %387 : vector<16x22xf32>
    %c101 = arith.constant 101 : index
    %389 = memref.load %arg5[%c101] : memref<376xf32, #tpu.memory_space<smem>>
    %390 = vector.broadcast %389 : f32 to vector<16x22xf32>
    %391 = arith.mulf %390, %376 : vector<16x22xf32>
    %392 = arith.addf %375, %391 : vector<16x22xf32>
    %393 = vector.extract_strided_slice %19 {offsets = [1, 0], sizes = [16, 22], strides = [1, 1]} : vector<18x24xf32> to vector<16x22xf32>
    %c21 = arith.constant 21 : index
    %394 = memref.load %arg5[%c21] : memref<376xf32, #tpu.memory_space<smem>>
    %395 = vector.broadcast %394 : f32 to vector<16x22xf32>
    %396 = arith.mulf %395, %393 : vector<16x22xf32>
    %397 = arith.addf %380, %396 : vector<16x22xf32>
    %c48 = arith.constant 48 : index
    %398 = memref.load %arg5[%c48] : memref<376xf32, #tpu.memory_space<smem>>
    %399 = vector.broadcast %398 : f32 to vector<16x22xf32>
    %400 = arith.mulf %399, %393 : vector<16x22xf32>
    %401 = arith.addf %384, %400 : vector<16x22xf32>
    %c75 = arith.constant 75 : index
    %402 = memref.load %arg5[%c75] : memref<376xf32, #tpu.memory_space<smem>>
    %403 = vector.broadcast %402 : f32 to vector<16x22xf32>
    %404 = arith.mulf %403, %393 : vector<16x22xf32>
    %405 = arith.addf %388, %404 : vector<16x22xf32>
    %c102 = arith.constant 102 : index
    %406 = memref.load %arg5[%c102] : memref<376xf32, #tpu.memory_space<smem>>
    %407 = vector.broadcast %406 : f32 to vector<16x22xf32>
    %408 = arith.mulf %407, %393 : vector<16x22xf32>
    %409 = arith.addf %392, %408 : vector<16x22xf32>
    %410 = vector.extract_strided_slice %19 {offsets = [1, 1], sizes = [16, 22], strides = [1, 1]} : vector<18x24xf32> to vector<16x22xf32>
    %c22 = arith.constant 22 : index
    %411 = memref.load %arg5[%c22] : memref<376xf32, #tpu.memory_space<smem>>
    %412 = vector.broadcast %411 : f32 to vector<16x22xf32>
    %413 = arith.mulf %412, %410 : vector<16x22xf32>
    %414 = arith.addf %397, %413 : vector<16x22xf32>
    %c49 = arith.constant 49 : index
    %415 = memref.load %arg5[%c49] : memref<376xf32, #tpu.memory_space<smem>>
    %416 = vector.broadcast %415 : f32 to vector<16x22xf32>
    %417 = arith.mulf %416, %410 : vector<16x22xf32>
    %418 = arith.addf %401, %417 : vector<16x22xf32>
    %c76 = arith.constant 76 : index
    %419 = memref.load %arg5[%c76] : memref<376xf32, #tpu.memory_space<smem>>
    %420 = vector.broadcast %419 : f32 to vector<16x22xf32>
    %421 = arith.mulf %420, %410 : vector<16x22xf32>
    %422 = arith.addf %405, %421 : vector<16x22xf32>
    %c103 = arith.constant 103 : index
    %423 = memref.load %arg5[%c103] : memref<376xf32, #tpu.memory_space<smem>>
    %424 = vector.broadcast %423 : f32 to vector<16x22xf32>
    %425 = arith.mulf %424, %410 : vector<16x22xf32>
    %426 = arith.addf %409, %425 : vector<16x22xf32>
    %427 = vector.extract_strided_slice %19 {offsets = [1, 2], sizes = [16, 22], strides = [1, 1]} : vector<18x24xf32> to vector<16x22xf32>
    %c23 = arith.constant 23 : index
    %428 = memref.load %arg5[%c23] : memref<376xf32, #tpu.memory_space<smem>>
    %429 = vector.broadcast %428 : f32 to vector<16x22xf32>
    %430 = arith.mulf %429, %427 : vector<16x22xf32>
    %431 = arith.addf %414, %430 : vector<16x22xf32>
    %c50 = arith.constant 50 : index
    %432 = memref.load %arg5[%c50] : memref<376xf32, #tpu.memory_space<smem>>
    %433 = vector.broadcast %432 : f32 to vector<16x22xf32>
    %434 = arith.mulf %433, %427 : vector<16x22xf32>
    %435 = arith.addf %418, %434 : vector<16x22xf32>
    %c77 = arith.constant 77 : index
    %436 = memref.load %arg5[%c77] : memref<376xf32, #tpu.memory_space<smem>>
    %437 = vector.broadcast %436 : f32 to vector<16x22xf32>
    %438 = arith.mulf %437, %427 : vector<16x22xf32>
    %439 = arith.addf %422, %438 : vector<16x22xf32>
    %c104 = arith.constant 104 : index
    %440 = memref.load %arg5[%c104] : memref<376xf32, #tpu.memory_space<smem>>
    %441 = vector.broadcast %440 : f32 to vector<16x22xf32>
    %442 = arith.mulf %441, %427 : vector<16x22xf32>
    %443 = arith.addf %426, %442 : vector<16x22xf32>
    %444 = vector.extract_strided_slice %19 {offsets = [2, 0], sizes = [16, 22], strides = [1, 1]} : vector<18x24xf32> to vector<16x22xf32>
    %c24 = arith.constant 24 : index
    %445 = memref.load %arg5[%c24] : memref<376xf32, #tpu.memory_space<smem>>
    %446 = vector.broadcast %445 : f32 to vector<16x22xf32>
    %447 = arith.mulf %446, %444 : vector<16x22xf32>
    %448 = arith.addf %431, %447 : vector<16x22xf32>
    %c51 = arith.constant 51 : index
    %449 = memref.load %arg5[%c51] : memref<376xf32, #tpu.memory_space<smem>>
    %450 = vector.broadcast %449 : f32 to vector<16x22xf32>
    %451 = arith.mulf %450, %444 : vector<16x22xf32>
    %452 = arith.addf %435, %451 : vector<16x22xf32>
    %c78 = arith.constant 78 : index
    %453 = memref.load %arg5[%c78] : memref<376xf32, #tpu.memory_space<smem>>
    %454 = vector.broadcast %453 : f32 to vector<16x22xf32>
    %455 = arith.mulf %454, %444 : vector<16x22xf32>
    %456 = arith.addf %439, %455 : vector<16x22xf32>
    %c105 = arith.constant 105 : index
    %457 = memref.load %arg5[%c105] : memref<376xf32, #tpu.memory_space<smem>>
    %458 = vector.broadcast %457 : f32 to vector<16x22xf32>
    %459 = arith.mulf %458, %444 : vector<16x22xf32>
    %460 = arith.addf %443, %459 : vector<16x22xf32>
    %461 = vector.extract_strided_slice %19 {offsets = [2, 1], sizes = [16, 22], strides = [1, 1]} : vector<18x24xf32> to vector<16x22xf32>
    %c25 = arith.constant 25 : index
    %462 = memref.load %arg5[%c25] : memref<376xf32, #tpu.memory_space<smem>>
    %463 = vector.broadcast %462 : f32 to vector<16x22xf32>
    %464 = arith.mulf %463, %461 : vector<16x22xf32>
    %465 = arith.addf %448, %464 : vector<16x22xf32>
    %c52 = arith.constant 52 : index
    %466 = memref.load %arg5[%c52] : memref<376xf32, #tpu.memory_space<smem>>
    %467 = vector.broadcast %466 : f32 to vector<16x22xf32>
    %468 = arith.mulf %467, %461 : vector<16x22xf32>
    %469 = arith.addf %452, %468 : vector<16x22xf32>
    %c79 = arith.constant 79 : index
    %470 = memref.load %arg5[%c79] : memref<376xf32, #tpu.memory_space<smem>>
    %471 = vector.broadcast %470 : f32 to vector<16x22xf32>
    %472 = arith.mulf %471, %461 : vector<16x22xf32>
    %473 = arith.addf %456, %472 : vector<16x22xf32>
    %c106 = arith.constant 106 : index
    %474 = memref.load %arg5[%c106] : memref<376xf32, #tpu.memory_space<smem>>
    %475 = vector.broadcast %474 : f32 to vector<16x22xf32>
    %476 = arith.mulf %475, %461 : vector<16x22xf32>
    %477 = arith.addf %460, %476 : vector<16x22xf32>
    %478 = vector.extract_strided_slice %19 {offsets = [2, 2], sizes = [16, 22], strides = [1, 1]} : vector<18x24xf32> to vector<16x22xf32>
    %c26 = arith.constant 26 : index
    %479 = memref.load %arg5[%c26] : memref<376xf32, #tpu.memory_space<smem>>
    %480 = vector.broadcast %479 : f32 to vector<16x22xf32>
    %481 = arith.mulf %480, %478 : vector<16x22xf32>
    %482 = arith.addf %465, %481 : vector<16x22xf32>
    %c53 = arith.constant 53 : index
    %483 = memref.load %arg5[%c53] : memref<376xf32, #tpu.memory_space<smem>>
    %484 = vector.broadcast %483 : f32 to vector<16x22xf32>
    %485 = arith.mulf %484, %478 : vector<16x22xf32>
    %486 = arith.addf %469, %485 : vector<16x22xf32>
    %c80 = arith.constant 80 : index
    %487 = memref.load %arg5[%c80] : memref<376xf32, #tpu.memory_space<smem>>
    %488 = vector.broadcast %487 : f32 to vector<16x22xf32>
    %489 = arith.mulf %488, %478 : vector<16x22xf32>
    %490 = arith.addf %473, %489 : vector<16x22xf32>
    %c107 = arith.constant 107 : index
    %491 = memref.load %arg5[%c107] : memref<376xf32, #tpu.memory_space<smem>>
    %492 = vector.broadcast %491 : f32 to vector<16x22xf32>
    %493 = arith.mulf %492, %478 : vector<16x22xf32>
    %494 = arith.addf %477, %493 : vector<16x22xf32>
    %c0_13 = arith.constant 0 : index
    %c0_14 = arith.constant 0 : index
    %c0_15 = arith.constant 0 : index
    %495 = vector.load %arg2[%c0_13, %c0_14, %c0_15] : memref<4x16x22xf32, #tpu.memory_space<vmem>>, vector<4x16x22xf32>
    %c0_16 = arith.constant 0 : index
    %c0_17 = arith.constant 0 : index
    %c0_18 = arith.constant 0 : index
    %496 = vector.load %arg3[%c0_16, %c0_17, %c0_18] : memref<4x16x22xf32, #tpu.memory_space<vmem>>, vector<4x16x22xf32>
    %497 = vector.extract_strided_slice %495 {offsets = [0, 0, 0], sizes = [1, 16, 22], strides = [1, 1, 1]} : vector<4x16x22xf32> to vector<1x16x22xf32>
    %498 = vector.shape_cast %497 : vector<1x16x22xf32> to vector<16x22xf32>
    %499 = arith.addf %482, %498 : vector<16x22xf32>
    %500 = vector.extract_strided_slice %495 {offsets = [1, 0, 0], sizes = [1, 16, 22], strides = [1, 1, 1]} : vector<4x16x22xf32> to vector<1x16x22xf32>
    %501 = vector.shape_cast %500 : vector<1x16x22xf32> to vector<16x22xf32>
    %502 = arith.addf %486, %501 : vector<16x22xf32>
    %503 = vector.extract_strided_slice %495 {offsets = [2, 0, 0], sizes = [1, 16, 22], strides = [1, 1, 1]} : vector<4x16x22xf32> to vector<1x16x22xf32>
    %504 = vector.shape_cast %503 : vector<1x16x22xf32> to vector<16x22xf32>
    %505 = arith.addf %490, %504 : vector<16x22xf32>
    %506 = vector.extract_strided_slice %495 {offsets = [3, 0, 0], sizes = [1, 16, 22], strides = [1, 1, 1]} : vector<4x16x22xf32> to vector<1x16x22xf32>
    %507 = vector.shape_cast %506 : vector<1x16x22xf32> to vector<16x22xf32>
    %508 = arith.addf %494, %507 : vector<16x22xf32>
    %509 = vector.extract_strided_slice %496 {offsets = [0, 0, 0], sizes = [1, 16, 22], strides = [1, 1, 1]} : vector<4x16x22xf32> to vector<1x16x22xf32>
    %510 = vector.shape_cast %509 : vector<1x16x22xf32> to vector<16x22xf32>
    %511 = arith.addf %499, %510 : vector<16x22xf32>
    %512 = vector.extract_strided_slice %496 {offsets = [1, 0, 0], sizes = [1, 16, 22], strides = [1, 1, 1]} : vector<4x16x22xf32> to vector<1x16x22xf32>
    %513 = vector.shape_cast %512 : vector<1x16x22xf32> to vector<16x22xf32>
    %514 = arith.addf %502, %513 : vector<16x22xf32>
    %515 = vector.extract_strided_slice %496 {offsets = [2, 0, 0], sizes = [1, 16, 22], strides = [1, 1, 1]} : vector<4x16x22xf32> to vector<1x16x22xf32>
    %516 = vector.shape_cast %515 : vector<1x16x22xf32> to vector<16x22xf32>
    %517 = arith.addf %505, %516 : vector<16x22xf32>
    %518 = vector.extract_strided_slice %496 {offsets = [3, 0, 0], sizes = [1, 16, 22], strides = [1, 1, 1]} : vector<4x16x22xf32> to vector<1x16x22xf32>
    %519 = vector.shape_cast %518 : vector<1x16x22xf32> to vector<16x22xf32>
    %520 = arith.addf %508, %519 : vector<16x22xf32>
    %cst_19 = arith.constant dense<0.000000e+00> : vector<22xf32>
    %521 = vector.multi_reduction <add>, %499, %cst_19 [0] : vector<16x22xf32> to vector<22xf32>
    %522 = vector.shape_cast %521 : vector<22xf32> to vector<1x22xf32>
    %cst_20 = arith.constant 1.600000e+01 : f32
    %523 = vector.broadcast %cst_20 : f32 to vector<1x22xf32>
    %524 = arith.divf %522, %523 : vector<1x22xf32>
    %cst_21 = arith.constant dense<0.000000e+00> : vector<22xf32>
    %525 = vector.multi_reduction <add>, %502, %cst_21 [0] : vector<16x22xf32> to vector<22xf32>
    %526 = vector.shape_cast %525 : vector<22xf32> to vector<1x22xf32>
    %cst_22 = arith.constant 1.600000e+01 : f32
    %527 = vector.broadcast %cst_22 : f32 to vector<1x22xf32>
    %528 = arith.divf %526, %527 : vector<1x22xf32>
    %cst_23 = arith.constant dense<0.000000e+00> : vector<22xf32>
    %529 = vector.multi_reduction <add>, %505, %cst_23 [0] : vector<16x22xf32> to vector<22xf32>
    %530 = vector.shape_cast %529 : vector<22xf32> to vector<1x22xf32>
    %cst_24 = arith.constant 1.600000e+01 : f32
    %531 = vector.broadcast %cst_24 : f32 to vector<1x22xf32>
    %532 = arith.divf %530, %531 : vector<1x22xf32>
    %cst_25 = arith.constant dense<0.000000e+00> : vector<22xf32>
    %533 = vector.multi_reduction <add>, %508, %cst_25 [0] : vector<16x22xf32> to vector<22xf32>
    %534 = vector.shape_cast %533 : vector<22xf32> to vector<1x22xf32>
    %cst_26 = arith.constant 1.600000e+01 : f32
    %535 = vector.broadcast %cst_26 : f32 to vector<1x22xf32>
    %536 = arith.divf %534, %535 : vector<1x22xf32>
    %537 = tpu.concatenate %524, %528, %532, %536 in 0 : vector<1x22xf32>, vector<1x22xf32>, vector<1x22xf32>, vector<1x22xf32> -> vector<4x22xf32>
    %cst_27 = arith.constant dense<0xFF800000> : vector<22xf32>
    %538 = vector.multi_reduction <maximumf>, %499, %cst_27 [0] : vector<16x22xf32> to vector<22xf32>
    %539 = vector.shape_cast %538 : vector<22xf32> to vector<1x22xf32>
    %cst_28 = arith.constant dense<0xFF800000> : vector<22xf32>
    %540 = vector.multi_reduction <maximumf>, %502, %cst_28 [0] : vector<16x22xf32> to vector<22xf32>
    %541 = vector.shape_cast %540 : vector<22xf32> to vector<1x22xf32>
    %cst_29 = arith.constant dense<0xFF800000> : vector<22xf32>
    %542 = vector.multi_reduction <maximumf>, %505, %cst_29 [0] : vector<16x22xf32> to vector<22xf32>
    %543 = vector.shape_cast %542 : vector<22xf32> to vector<1x22xf32>
    %cst_30 = arith.constant dense<0xFF800000> : vector<22xf32>
    %544 = vector.multi_reduction <maximumf>, %508, %cst_30 [0] : vector<16x22xf32> to vector<22xf32>
    %545 = vector.shape_cast %544 : vector<22xf32> to vector<1x22xf32>
    %546 = tpu.concatenate %539, %541, %543, %545 in 0 : vector<1x22xf32>, vector<1x22xf32>, vector<1x22xf32>, vector<1x22xf32> -> vector<4x22xf32>
    %cst_31 = arith.constant 0.000000e+00 : f32
    %547 = vector.broadcast %cst_31 : f32 to vector<4x1xf32>
    %548 = tpu.concatenate %547, %537, %547 in 1 : vector<4x1xf32>, vector<4x22xf32>, vector<4x1xf32> -> vector<4x24xf32>
    %cst_32 = arith.constant 0.000000e+00 : f32
    %549 = vector.broadcast %cst_32 : f32 to vector<1x24xf32>
    %550 = tpu.concatenate %549, %548, %549 in 0 : vector<1x24xf32>, vector<4x24xf32>, vector<1x24xf32> -> vector<6x24xf32>
    %cst_33 = arith.constant 0.000000e+00 : f32
    %551 = vector.broadcast %cst_33 : f32 to vector<4x1xf32>
    %552 = tpu.concatenate %551, %546, %551 in 1 : vector<4x1xf32>, vector<4x22xf32>, vector<4x1xf32> -> vector<4x24xf32>
    %cst_34 = arith.constant 0.000000e+00 : f32
    %553 = vector.broadcast %cst_34 : f32 to vector<1x24xf32>
    %554 = tpu.concatenate %553, %552, %553 in 0 : vector<1x24xf32>, vector<4x24xf32>, vector<1x24xf32> -> vector<6x24xf32>
    %cst_35 = arith.constant 0.000000e+00 : f32
    %555 = vector.broadcast %cst_35 : f32 to vector<4x22xf32>
    %c112 = arith.constant 112 : index
    %556 = memref.load %arg5[%c112] : memref<376xf32, #tpu.memory_space<smem>>
    %557 = vector.extract_strided_slice %550 {offsets = [0, 0], sizes = [4, 22], strides = [1, 1]} : vector<6x24xf32> to vector<4x22xf32>
    %558 = vector.broadcast %556 : f32 to vector<4x22xf32>
    %559 = arith.mulf %558, %557 : vector<4x22xf32>
    %560 = arith.addf %555, %559 : vector<4x22xf32>
    %c121 = arith.constant 121 : index
    %561 = memref.load %arg5[%c121] : memref<376xf32, #tpu.memory_space<smem>>
    %562 = vector.extract_strided_slice %554 {offsets = [0, 0], sizes = [4, 22], strides = [1, 1]} : vector<6x24xf32> to vector<4x22xf32>
    %563 = vector.broadcast %561 : f32 to vector<4x22xf32>
    %564 = arith.mulf %563, %562 : vector<4x22xf32>
    %565 = arith.addf %560, %564 : vector<4x22xf32>
    %c113 = arith.constant 113 : index
    %566 = memref.load %arg5[%c113] : memref<376xf32, #tpu.memory_space<smem>>
    %567 = vector.extract_strided_slice %550 {offsets = [1, 0], sizes = [4, 22], strides = [1, 1]} : vector<6x24xf32> to vector<4x22xf32>
    %568 = vector.broadcast %566 : f32 to vector<4x22xf32>
    %569 = arith.mulf %568, %567 : vector<4x22xf32>
    %570 = arith.addf %565, %569 : vector<4x22xf32>
    %c122 = arith.constant 122 : index
    %571 = memref.load %arg5[%c122] : memref<376xf32, #tpu.memory_space<smem>>
    %572 = vector.extract_strided_slice %554 {offsets = [1, 0], sizes = [4, 22], strides = [1, 1]} : vector<6x24xf32> to vector<4x22xf32>
    %573 = vector.broadcast %571 : f32 to vector<4x22xf32>
    %574 = arith.mulf %573, %572 : vector<4x22xf32>
    %575 = arith.addf %570, %574 : vector<4x22xf32>
    %c114 = arith.constant 114 : index
    %576 = memref.load %arg5[%c114] : memref<376xf32, #tpu.memory_space<smem>>
    %577 = vector.extract_strided_slice %550 {offsets = [2, 0], sizes = [4, 22], strides = [1, 1]} : vector<6x24xf32> to vector<4x22xf32>
    %578 = vector.broadcast %576 : f32 to vector<4x22xf32>
    %579 = arith.mulf %578, %577 : vector<4x22xf32>
    %580 = arith.addf %575, %579 : vector<4x22xf32>
    %c123 = arith.constant 123 : index
    %581 = memref.load %arg5[%c123] : memref<376xf32, #tpu.memory_space<smem>>
    %582 = vector.extract_strided_slice %554 {offsets = [2, 0], sizes = [4, 22], strides = [1, 1]} : vector<6x24xf32> to vector<4x22xf32>
    %583 = vector.broadcast %581 : f32 to vector<4x22xf32>
    %584 = arith.mulf %583, %582 : vector<4x22xf32>
    %585 = arith.addf %580, %584 : vector<4x22xf32>
    %c115 = arith.constant 115 : index
    %586 = memref.load %arg5[%c115] : memref<376xf32, #tpu.memory_space<smem>>
    %587 = vector.extract_strided_slice %550 {offsets = [0, 1], sizes = [4, 22], strides = [1, 1]} : vector<6x24xf32> to vector<4x22xf32>
    %588 = vector.broadcast %586 : f32 to vector<4x22xf32>
    %589 = arith.mulf %588, %587 : vector<4x22xf32>
    %590 = arith.addf %585, %589 : vector<4x22xf32>
    %c124 = arith.constant 124 : index
    %591 = memref.load %arg5[%c124] : memref<376xf32, #tpu.memory_space<smem>>
    %592 = vector.extract_strided_slice %554 {offsets = [0, 1], sizes = [4, 22], strides = [1, 1]} : vector<6x24xf32> to vector<4x22xf32>
    %593 = vector.broadcast %591 : f32 to vector<4x22xf32>
    %594 = arith.mulf %593, %592 : vector<4x22xf32>
    %595 = arith.addf %590, %594 : vector<4x22xf32>
    %c116 = arith.constant 116 : index
    %596 = memref.load %arg5[%c116] : memref<376xf32, #tpu.memory_space<smem>>
    %597 = vector.extract_strided_slice %550 {offsets = [1, 1], sizes = [4, 22], strides = [1, 1]} : vector<6x24xf32> to vector<4x22xf32>
    %598 = vector.broadcast %596 : f32 to vector<4x22xf32>
    %599 = arith.mulf %598, %597 : vector<4x22xf32>
    %600 = arith.addf %595, %599 : vector<4x22xf32>
    %c125 = arith.constant 125 : index
    %601 = memref.load %arg5[%c125] : memref<376xf32, #tpu.memory_space<smem>>
    %602 = vector.extract_strided_slice %554 {offsets = [1, 1], sizes = [4, 22], strides = [1, 1]} : vector<6x24xf32> to vector<4x22xf32>
    %603 = vector.broadcast %601 : f32 to vector<4x22xf32>
    %604 = arith.mulf %603, %602 : vector<4x22xf32>
    %605 = arith.addf %600, %604 : vector<4x22xf32>
    %c117 = arith.constant 117 : index
    %606 = memref.load %arg5[%c117] : memref<376xf32, #tpu.memory_space<smem>>
    %607 = vector.extract_strided_slice %550 {offsets = [2, 1], sizes = [4, 22], strides = [1, 1]} : vector<6x24xf32> to vector<4x22xf32>
    %608 = vector.broadcast %606 : f32 to vector<4x22xf32>
    %609 = arith.mulf %608, %607 : vector<4x22xf32>
    %610 = arith.addf %605, %609 : vector<4x22xf32>
    %c126 = arith.constant 126 : index
    %611 = memref.load %arg5[%c126] : memref<376xf32, #tpu.memory_space<smem>>
    %612 = vector.extract_strided_slice %554 {offsets = [2, 1], sizes = [4, 22], strides = [1, 1]} : vector<6x24xf32> to vector<4x22xf32>
    %613 = vector.broadcast %611 : f32 to vector<4x22xf32>
    %614 = arith.mulf %613, %612 : vector<4x22xf32>
    %615 = arith.addf %610, %614 : vector<4x22xf32>
    %c118 = arith.constant 118 : index
    %616 = memref.load %arg5[%c118] : memref<376xf32, #tpu.memory_space<smem>>
    %617 = vector.extract_strided_slice %550 {offsets = [0, 2], sizes = [4, 22], strides = [1, 1]} : vector<6x24xf32> to vector<4x22xf32>
    %618 = vector.broadcast %616 : f32 to vector<4x22xf32>
    %619 = arith.mulf %618, %617 : vector<4x22xf32>
    %620 = arith.addf %615, %619 : vector<4x22xf32>
    %c127 = arith.constant 127 : index
    %621 = memref.load %arg5[%c127] : memref<376xf32, #tpu.memory_space<smem>>
    %622 = vector.extract_strided_slice %554 {offsets = [0, 2], sizes = [4, 22], strides = [1, 1]} : vector<6x24xf32> to vector<4x22xf32>
    %623 = vector.broadcast %621 : f32 to vector<4x22xf32>
    %624 = arith.mulf %623, %622 : vector<4x22xf32>
    %625 = arith.addf %620, %624 : vector<4x22xf32>
    %c119 = arith.constant 119 : index
    %626 = memref.load %arg5[%c119] : memref<376xf32, #tpu.memory_space<smem>>
    %627 = vector.extract_strided_slice %550 {offsets = [1, 2], sizes = [4, 22], strides = [1, 1]} : vector<6x24xf32> to vector<4x22xf32>
    %628 = vector.broadcast %626 : f32 to vector<4x22xf32>
    %629 = arith.mulf %628, %627 : vector<4x22xf32>
    %630 = arith.addf %625, %629 : vector<4x22xf32>
    %c128 = arith.constant 128 : index
    %631 = memref.load %arg5[%c128] : memref<376xf32, #tpu.memory_space<smem>>
    %632 = vector.extract_strided_slice %554 {offsets = [1, 2], sizes = [4, 22], strides = [1, 1]} : vector<6x24xf32> to vector<4x22xf32>
    %633 = vector.broadcast %631 : f32 to vector<4x22xf32>
    %634 = arith.mulf %633, %632 : vector<4x22xf32>
    %635 = arith.addf %630, %634 : vector<4x22xf32>
    %c120 = arith.constant 120 : index
    %636 = memref.load %arg5[%c120] : memref<376xf32, #tpu.memory_space<smem>>
    %637 = vector.extract_strided_slice %550 {offsets = [2, 2], sizes = [4, 22], strides = [1, 1]} : vector<6x24xf32> to vector<4x22xf32>
    %638 = vector.broadcast %636 : f32 to vector<4x22xf32>
    %639 = arith.mulf %638, %637 : vector<4x22xf32>
    %640 = arith.addf %635, %639 : vector<4x22xf32>
    %c129 = arith.constant 129 : index
    %641 = memref.load %arg5[%c129] : memref<376xf32, #tpu.memory_space<smem>>
    %642 = vector.extract_strided_slice %554 {offsets = [2, 2], sizes = [4, 22], strides = [1, 1]} : vector<6x24xf32> to vector<4x22xf32>
    %643 = vector.broadcast %641 : f32 to vector<4x22xf32>
    %644 = arith.mulf %643, %642 : vector<4x22xf32>
    %645 = arith.addf %640, %644 : vector<4x22xf32>
    %646 = arith.negf %645 : vector<4x22xf32>
    %647 = math.exp %646 : vector<4x22xf32>
    %cst_36 = arith.constant 1.000000e+00 : f32
    %648 = vector.broadcast %cst_36 : f32 to vector<4x22xf32>
    %649 = arith.addf %648, %647 : vector<4x22xf32>
    %650 = arith.divf %648, %649 : vector<4x22xf32>
    %651 = vector.extract_strided_slice %650 {offsets = [0, 0], sizes = [1, 22], strides = [1, 1]} : vector<4x22xf32> to vector<1x22xf32>
    %cst_37 = arith.constant 1.000000e+00 : f32
    %652 = vector.broadcast %cst_37 : f32 to vector<1x22xf32>
    %653 = arith.addf %652, %651 : vector<1x22xf32>
    %654 = vector.broadcast %653 : vector<1x22xf32> to vector<16x22xf32>
    %655 = arith.mulf %499, %654 : vector<16x22xf32>
    %cst_38 = arith.constant 0.000000e+00 : f32
    %656 = vector.broadcast %cst_38 : f32 to vector<16x22xf32>
    %657 = arith.maximumf %655, %656 : vector<16x22xf32>
    %658 = vector.extract_strided_slice %650 {offsets = [1, 0], sizes = [1, 22], strides = [1, 1]} : vector<4x22xf32> to vector<1x22xf32>
    %cst_39 = arith.constant 1.000000e+00 : f32
    %659 = vector.broadcast %cst_39 : f32 to vector<1x22xf32>
    %660 = arith.addf %659, %658 : vector<1x22xf32>
    %661 = vector.broadcast %660 : vector<1x22xf32> to vector<16x22xf32>
    %662 = arith.mulf %502, %661 : vector<16x22xf32>
    %cst_40 = arith.constant 0.000000e+00 : f32
    %663 = vector.broadcast %cst_40 : f32 to vector<16x22xf32>
    %664 = arith.maximumf %662, %663 : vector<16x22xf32>
    %665 = vector.extract_strided_slice %650 {offsets = [2, 0], sizes = [1, 22], strides = [1, 1]} : vector<4x22xf32> to vector<1x22xf32>
    %cst_41 = arith.constant 1.000000e+00 : f32
    %666 = vector.broadcast %cst_41 : f32 to vector<1x22xf32>
    %667 = arith.addf %666, %665 : vector<1x22xf32>
    %668 = vector.broadcast %667 : vector<1x22xf32> to vector<16x22xf32>
    %669 = arith.mulf %505, %668 : vector<16x22xf32>
    %cst_42 = arith.constant 0.000000e+00 : f32
    %670 = vector.broadcast %cst_42 : f32 to vector<16x22xf32>
    %671 = arith.maximumf %669, %670 : vector<16x22xf32>
    %672 = vector.extract_strided_slice %650 {offsets = [3, 0], sizes = [1, 22], strides = [1, 1]} : vector<4x22xf32> to vector<1x22xf32>
    %cst_43 = arith.constant 1.000000e+00 : f32
    %673 = vector.broadcast %cst_43 : f32 to vector<1x22xf32>
    %674 = arith.addf %673, %672 : vector<1x22xf32>
    %675 = vector.broadcast %674 : vector<1x22xf32> to vector<16x22xf32>
    %676 = arith.mulf %508, %675 : vector<16x22xf32>
    %cst_44 = arith.constant 0.000000e+00 : f32
    %677 = vector.broadcast %cst_44 : f32 to vector<16x22xf32>
    %678 = arith.maximumf %676, %677 : vector<16x22xf32>
    %cst_45 = arith.constant dense<0.000000e+00> : vector<16xf32>
    %679 = vector.multi_reduction <add>, %511, %cst_45 [1] : vector<16x22xf32> to vector<16xf32>
    %680 = vector.shape_cast %679 : vector<16xf32> to vector<16x1xf32>
    %cst_46 = arith.constant 2.200000e+01 : f32
    %681 = vector.broadcast %cst_46 : f32 to vector<16x1xf32>
    %682 = arith.divf %680, %681 : vector<16x1xf32>
    %cst_47 = arith.constant dense<0.000000e+00> : vector<16xf32>
    %683 = vector.multi_reduction <add>, %514, %cst_47 [1] : vector<16x22xf32> to vector<16xf32>
    %684 = vector.shape_cast %683 : vector<16xf32> to vector<16x1xf32>
    %cst_48 = arith.constant 2.200000e+01 : f32
    %685 = vector.broadcast %cst_48 : f32 to vector<16x1xf32>
    %686 = arith.divf %684, %685 : vector<16x1xf32>
    %687 = arith.addf %682, %686 : vector<16x1xf32>
    %cst_49 = arith.constant dense<0.000000e+00> : vector<16xf32>
    %688 = vector.multi_reduction <add>, %517, %cst_49 [1] : vector<16x22xf32> to vector<16xf32>
    %689 = vector.shape_cast %688 : vector<16xf32> to vector<16x1xf32>
    %cst_50 = arith.constant 2.200000e+01 : f32
    %690 = vector.broadcast %cst_50 : f32 to vector<16x1xf32>
    %691 = arith.divf %689, %690 : vector<16x1xf32>
    %692 = arith.addf %687, %691 : vector<16x1xf32>
    %cst_51 = arith.constant dense<0.000000e+00> : vector<16xf32>
    %693 = vector.multi_reduction <add>, %520, %cst_51 [1] : vector<16x22xf32> to vector<16xf32>
    %694 = vector.shape_cast %693 : vector<16xf32> to vector<16x1xf32>
    %cst_52 = arith.constant 2.200000e+01 : f32
    %695 = vector.broadcast %cst_52 : f32 to vector<16x1xf32>
    %696 = arith.divf %694, %695 : vector<16x1xf32>
    %697 = arith.addf %692, %696 : vector<16x1xf32>
    %cst_53 = arith.constant 2.500000e-01 : f32
    %698 = vector.broadcast %cst_53 : f32 to vector<16x1xf32>
    %699 = arith.mulf %697, %698 : vector<16x1xf32>
    %cst_54 = arith.constant dense<0xFF800000> : vector<16xf32>
    %700 = vector.multi_reduction <maximumf>, %511, %cst_54 [1] : vector<16x22xf32> to vector<16xf32>
    %701 = vector.shape_cast %700 : vector<16xf32> to vector<16x1xf32>
    %cst_55 = arith.constant dense<0xFF800000> : vector<16xf32>
    %702 = vector.multi_reduction <maximumf>, %514, %cst_55 [1] : vector<16x22xf32> to vector<16xf32>
    %703 = vector.shape_cast %702 : vector<16xf32> to vector<16x1xf32>
    %704 = arith.maximumf %701, %703 : vector<16x1xf32>
    %cst_56 = arith.constant dense<0xFF800000> : vector<16xf32>
    %705 = vector.multi_reduction <maximumf>, %517, %cst_56 [1] : vector<16x22xf32> to vector<16xf32>
    %706 = vector.shape_cast %705 : vector<16xf32> to vector<16x1xf32>
    %707 = arith.maximumf %704, %706 : vector<16x1xf32>
    %cst_57 = arith.constant dense<0xFF800000> : vector<16xf32>
    %708 = vector.multi_reduction <maximumf>, %520, %cst_57 [1] : vector<16x22xf32> to vector<16xf32>
    %709 = vector.shape_cast %708 : vector<16xf32> to vector<16x1xf32>
    %710 = arith.maximumf %707, %709 : vector<16x1xf32>
    %c0_58 = arith.constant 0 : index
    %c0_59 = arith.constant 0 : index
    %711 = vector.load %arg4[%c0_58, %c0_59] : memref<16x4xf32, #tpu.memory_space<vmem>>, vector<16x1xf32>
    %c0_60 = arith.constant 0 : index
    %c1_61 = arith.constant 1 : index
    %712 = vector.load %arg4[%c0_60, %c1_61] : memref<16x4xf32, #tpu.memory_space<vmem>>, vector<16x1xf32>
    %713 = arith.mulf %699, %711 : vector<16x1xf32>
    %cst_62 = arith.constant dense<0.000000e+00> : vector<1xf32>
    %714 = vector.multi_reduction <add>, %713, %cst_62 [0] : vector<16x1xf32> to vector<1xf32>
    %715 = vector.shape_cast %714 : vector<1xf32> to vector<1x1xf32>
    %cst_63 = arith.constant 0.000000e+00 : f32
    %716 = vector.broadcast %cst_63 : f32 to vector<1x1xf32>
    %717 = arith.maximumf %715, %716 : vector<1x1xf32>
    %718 = vector.broadcast %717 : vector<1x1xf32> to vector<16x1xf32>
    %719 = arith.mulf %712, %718 : vector<16x1xf32>
    %720 = arith.mulf %710, %711 : vector<16x1xf32>
    %cst_64 = arith.constant dense<0.000000e+00> : vector<1xf32>
    %721 = vector.multi_reduction <add>, %720, %cst_64 [0] : vector<16x1xf32> to vector<1xf32>
    %722 = vector.shape_cast %721 : vector<1xf32> to vector<1x1xf32>
    %cst_65 = arith.constant 0.000000e+00 : f32
    %723 = vector.broadcast %cst_65 : f32 to vector<1x1xf32>
    %724 = arith.maximumf %722, %723 : vector<1x1xf32>
    %725 = vector.broadcast %724 : vector<1x1xf32> to vector<16x1xf32>
    %726 = arith.mulf %712, %725 : vector<16x1xf32>
    %727 = arith.addf %719, %726 : vector<16x1xf32>
    %728 = arith.negf %727 : vector<16x1xf32>
    %729 = math.exp %728 : vector<16x1xf32>
    %cst_66 = arith.constant 1.000000e+00 : f32
    %730 = vector.broadcast %cst_66 : f32 to vector<16x1xf32>
    %731 = arith.addf %730, %729 : vector<16x1xf32>
    %732 = arith.divf %730, %731 : vector<16x1xf32>
    %cst_67 = arith.constant 1.000000e+00 : f32
    %733 = vector.broadcast %cst_67 : f32 to vector<16x1xf32>
    %734 = arith.addf %733, %732 : vector<16x1xf32>
    %735 = vector.broadcast %734 : vector<16x1xf32> to vector<16x22xf32>
    %736 = arith.mulf %511, %735 : vector<16x22xf32>
    %cst_68 = arith.constant 0.000000e+00 : f32
    %737 = vector.broadcast %cst_68 : f32 to vector<16x22xf32>
    %738 = arith.maximumf %736, %737 : vector<16x22xf32>
    %cst_69 = arith.constant 1.000000e+00 : f32
    %739 = vector.broadcast %cst_69 : f32 to vector<16x1xf32>
    %740 = arith.addf %739, %732 : vector<16x1xf32>
    %741 = vector.broadcast %740 : vector<16x1xf32> to vector<16x22xf32>
    %742 = arith.mulf %514, %741 : vector<16x22xf32>
    %cst_70 = arith.constant 0.000000e+00 : f32
    %743 = vector.broadcast %cst_70 : f32 to vector<16x22xf32>
    %744 = arith.maximumf %742, %743 : vector<16x22xf32>
    %cst_71 = arith.constant 1.000000e+00 : f32
    %745 = vector.broadcast %cst_71 : f32 to vector<16x1xf32>
    %746 = arith.addf %745, %732 : vector<16x1xf32>
    %747 = vector.broadcast %746 : vector<16x1xf32> to vector<16x22xf32>
    %748 = arith.mulf %517, %747 : vector<16x22xf32>
    %cst_72 = arith.constant 0.000000e+00 : f32
    %749 = vector.broadcast %cst_72 : f32 to vector<16x22xf32>
    %750 = arith.maximumf %748, %749 : vector<16x22xf32>
    %cst_73 = arith.constant 1.000000e+00 : f32
    %751 = vector.broadcast %cst_73 : f32 to vector<16x1xf32>
    %752 = arith.addf %751, %732 : vector<16x1xf32>
    %753 = vector.broadcast %752 : vector<16x1xf32> to vector<16x22xf32>
    %754 = arith.mulf %520, %753 : vector<16x22xf32>
    %cst_74 = arith.constant 0.000000e+00 : f32
    %755 = vector.broadcast %cst_74 : f32 to vector<16x22xf32>
    %756 = arith.maximumf %754, %755 : vector<16x22xf32>
    %cst_75 = arith.constant dense<0.000000e+00> : vector<22xf32>
    %757 = vector.multi_reduction <add>, %657, %cst_75 [0] : vector<16x22xf32> to vector<22xf32>
    %758 = vector.shape_cast %757 : vector<22xf32> to vector<1x22xf32>
    %cst_76 = arith.constant 1.600000e+01 : f32
    %759 = vector.broadcast %cst_76 : f32 to vector<1x22xf32>
    %760 = arith.divf %758, %759 : vector<1x22xf32>
    %cst_77 = arith.constant dense<0.000000e+00> : vector<22xf32>
    %761 = vector.multi_reduction <add>, %664, %cst_77 [0] : vector<16x22xf32> to vector<22xf32>
    %762 = vector.shape_cast %761 : vector<22xf32> to vector<1x22xf32>
    %cst_78 = arith.constant 1.600000e+01 : f32
    %763 = vector.broadcast %cst_78 : f32 to vector<1x22xf32>
    %764 = arith.divf %762, %763 : vector<1x22xf32>
    %cst_79 = arith.constant dense<0.000000e+00> : vector<22xf32>
    %765 = vector.multi_reduction <add>, %671, %cst_79 [0] : vector<16x22xf32> to vector<22xf32>
    %766 = vector.shape_cast %765 : vector<22xf32> to vector<1x22xf32>
    %cst_80 = arith.constant 1.600000e+01 : f32
    %767 = vector.broadcast %cst_80 : f32 to vector<1x22xf32>
    %768 = arith.divf %766, %767 : vector<1x22xf32>
    %cst_81 = arith.constant dense<0.000000e+00> : vector<22xf32>
    %769 = vector.multi_reduction <add>, %678, %cst_81 [0] : vector<16x22xf32> to vector<22xf32>
    %770 = vector.shape_cast %769 : vector<22xf32> to vector<1x22xf32>
    %cst_82 = arith.constant 1.600000e+01 : f32
    %771 = vector.broadcast %cst_82 : f32 to vector<1x22xf32>
    %772 = arith.divf %770, %771 : vector<1x22xf32>
    %773 = tpu.concatenate %760, %764, %768, %772 in 0 : vector<1x22xf32>, vector<1x22xf32>, vector<1x22xf32>, vector<1x22xf32> -> vector<4x22xf32>
    %cst_83 = arith.constant dense<0xFF800000> : vector<22xf32>
    %774 = vector.multi_reduction <maximumf>, %657, %cst_83 [0] : vector<16x22xf32> to vector<22xf32>
    %775 = vector.shape_cast %774 : vector<22xf32> to vector<1x22xf32>
    %cst_84 = arith.constant dense<0xFF800000> : vector<22xf32>
    %776 = vector.multi_reduction <maximumf>, %664, %cst_84 [0] : vector<16x22xf32> to vector<22xf32>
    %777 = vector.shape_cast %776 : vector<22xf32> to vector<1x22xf32>
    %cst_85 = arith.constant dense<0xFF800000> : vector<22xf32>
    %778 = vector.multi_reduction <maximumf>, %671, %cst_85 [0] : vector<16x22xf32> to vector<22xf32>
    %779 = vector.shape_cast %778 : vector<22xf32> to vector<1x22xf32>
    %cst_86 = arith.constant dense<0xFF800000> : vector<22xf32>
    %780 = vector.multi_reduction <maximumf>, %678, %cst_86 [0] : vector<16x22xf32> to vector<22xf32>
    %781 = vector.shape_cast %780 : vector<22xf32> to vector<1x22xf32>
    %782 = tpu.concatenate %775, %777, %779, %781 in 0 : vector<1x22xf32>, vector<1x22xf32>, vector<1x22xf32>, vector<1x22xf32> -> vector<4x22xf32>
    %cst_87 = arith.constant 0.000000e+00 : f32
    %783 = vector.broadcast %cst_87 : f32 to vector<4x1xf32>
    %784 = tpu.concatenate %783, %773, %783 in 1 : vector<4x1xf32>, vector<4x22xf32>, vector<4x1xf32> -> vector<4x24xf32>
    %cst_88 = arith.constant 0.000000e+00 : f32
    %785 = vector.broadcast %cst_88 : f32 to vector<1x24xf32>
    %786 = tpu.concatenate %785, %784, %785 in 0 : vector<1x24xf32>, vector<4x24xf32>, vector<1x24xf32> -> vector<6x24xf32>
    %cst_89 = arith.constant 0.000000e+00 : f32
    %787 = vector.broadcast %cst_89 : f32 to vector<4x1xf32>
    %788 = tpu.concatenate %787, %782, %787 in 1 : vector<4x1xf32>, vector<4x22xf32>, vector<4x1xf32> -> vector<4x24xf32>
    %cst_90 = arith.constant 0.000000e+00 : f32
    %789 = vector.broadcast %cst_90 : f32 to vector<1x24xf32>
    %790 = tpu.concatenate %789, %788, %789 in 0 : vector<1x24xf32>, vector<4x24xf32>, vector<1x24xf32> -> vector<6x24xf32>
    %cst_91 = arith.constant 0.000000e+00 : f32
    %791 = vector.broadcast %cst_91 : f32 to vector<4x22xf32>
    %c130 = arith.constant 130 : index
    %792 = memref.load %arg5[%c130] : memref<376xf32, #tpu.memory_space<smem>>
    %793 = vector.extract_strided_slice %786 {offsets = [0, 0], sizes = [4, 22], strides = [1, 1]} : vector<6x24xf32> to vector<4x22xf32>
    %794 = vector.broadcast %792 : f32 to vector<4x22xf32>
    %795 = arith.mulf %794, %793 : vector<4x22xf32>
    %796 = arith.addf %791, %795 : vector<4x22xf32>
    %c139 = arith.constant 139 : index
    %797 = memref.load %arg5[%c139] : memref<376xf32, #tpu.memory_space<smem>>
    %798 = vector.extract_strided_slice %790 {offsets = [0, 0], sizes = [4, 22], strides = [1, 1]} : vector<6x24xf32> to vector<4x22xf32>
    %799 = vector.broadcast %797 : f32 to vector<4x22xf32>
    %800 = arith.mulf %799, %798 : vector<4x22xf32>
    %801 = arith.addf %796, %800 : vector<4x22xf32>
    %c131 = arith.constant 131 : index
    %802 = memref.load %arg5[%c131] : memref<376xf32, #tpu.memory_space<smem>>
    %803 = vector.extract_strided_slice %786 {offsets = [1, 0], sizes = [4, 22], strides = [1, 1]} : vector<6x24xf32> to vector<4x22xf32>
    %804 = vector.broadcast %802 : f32 to vector<4x22xf32>
    %805 = arith.mulf %804, %803 : vector<4x22xf32>
    %806 = arith.addf %801, %805 : vector<4x22xf32>
    %c140 = arith.constant 140 : index
    %807 = memref.load %arg5[%c140] : memref<376xf32, #tpu.memory_space<smem>>
    %808 = vector.extract_strided_slice %790 {offsets = [1, 0], sizes = [4, 22], strides = [1, 1]} : vector<6x24xf32> to vector<4x22xf32>
    %809 = vector.broadcast %807 : f32 to vector<4x22xf32>
    %810 = arith.mulf %809, %808 : vector<4x22xf32>
    %811 = arith.addf %806, %810 : vector<4x22xf32>
    %c132 = arith.constant 132 : index
    %812 = memref.load %arg5[%c132] : memref<376xf32, #tpu.memory_space<smem>>
    %813 = vector.extract_strided_slice %786 {offsets = [2, 0], sizes = [4, 22], strides = [1, 1]} : vector<6x24xf32> to vector<4x22xf32>
    %814 = vector.broadcast %812 : f32 to vector<4x22xf32>
    %815 = arith.mulf %814, %813 : vector<4x22xf32>
    %816 = arith.addf %811, %815 : vector<4x22xf32>
    %c141 = arith.constant 141 : index
    %817 = memref.load %arg5[%c141] : memref<376xf32, #tpu.memory_space<smem>>
    %818 = vector.extract_strided_slice %790 {offsets = [2, 0], sizes = [4, 22], strides = [1, 1]} : vector<6x24xf32> to vector<4x22xf32>
    %819 = vector.broadcast %817 : f32 to vector<4x22xf32>
    %820 = arith.mulf %819, %818 : vector<4x22xf32>
    %821 = arith.addf %816, %820 : vector<4x22xf32>
    %c133 = arith.constant 133 : index
    %822 = memref.load %arg5[%c133] : memref<376xf32, #tpu.memory_space<smem>>
    %823 = vector.extract_strided_slice %786 {offsets = [0, 1], sizes = [4, 22], strides = [1, 1]} : vector<6x24xf32> to vector<4x22xf32>
    %824 = vector.broadcast %822 : f32 to vector<4x22xf32>
    %825 = arith.mulf %824, %823 : vector<4x22xf32>
    %826 = arith.addf %821, %825 : vector<4x22xf32>
    %c142 = arith.constant 142 : index
    %827 = memref.load %arg5[%c142] : memref<376xf32, #tpu.memory_space<smem>>
    %828 = vector.extract_strided_slice %790 {offsets = [0, 1], sizes = [4, 22], strides = [1, 1]} : vector<6x24xf32> to vector<4x22xf32>
    %829 = vector.broadcast %827 : f32 to vector<4x22xf32>
    %830 = arith.mulf %829, %828 : vector<4x22xf32>
    %831 = arith.addf %826, %830 : vector<4x22xf32>
    %c134 = arith.constant 134 : index
    %832 = memref.load %arg5[%c134] : memref<376xf32, #tpu.memory_space<smem>>
    %833 = vector.extract_strided_slice %786 {offsets = [1, 1], sizes = [4, 22], strides = [1, 1]} : vector<6x24xf32> to vector<4x22xf32>
    %834 = vector.broadcast %832 : f32 to vector<4x22xf32>
    %835 = arith.mulf %834, %833 : vector<4x22xf32>
    %836 = arith.addf %831, %835 : vector<4x22xf32>
    %c143 = arith.constant 143 : index
    %837 = memref.load %arg5[%c143] : memref<376xf32, #tpu.memory_space<smem>>
    %838 = vector.extract_strided_slice %790 {offsets = [1, 1], sizes = [4, 22], strides = [1, 1]} : vector<6x24xf32> to vector<4x22xf32>
    %839 = vector.broadcast %837 : f32 to vector<4x22xf32>
    %840 = arith.mulf %839, %838 : vector<4x22xf32>
    %841 = arith.addf %836, %840 : vector<4x22xf32>
    %c135 = arith.constant 135 : index
    %842 = memref.load %arg5[%c135] : memref<376xf32, #tpu.memory_space<smem>>
    %843 = vector.extract_strided_slice %786 {offsets = [2, 1], sizes = [4, 22], strides = [1, 1]} : vector<6x24xf32> to vector<4x22xf32>
    %844 = vector.broadcast %842 : f32 to vector<4x22xf32>
    %845 = arith.mulf %844, %843 : vector<4x22xf32>
    %846 = arith.addf %841, %845 : vector<4x22xf32>
    %c144 = arith.constant 144 : index
    %847 = memref.load %arg5[%c144] : memref<376xf32, #tpu.memory_space<smem>>
    %848 = vector.extract_strided_slice %790 {offsets = [2, 1], sizes = [4, 22], strides = [1, 1]} : vector<6x24xf32> to vector<4x22xf32>
    %849 = vector.broadcast %847 : f32 to vector<4x22xf32>
    %850 = arith.mulf %849, %848 : vector<4x22xf32>
    %851 = arith.addf %846, %850 : vector<4x22xf32>
    %c136 = arith.constant 136 : index
    %852 = memref.load %arg5[%c136] : memref<376xf32, #tpu.memory_space<smem>>
    %853 = vector.extract_strided_slice %786 {offsets = [0, 2], sizes = [4, 22], strides = [1, 1]} : vector<6x24xf32> to vector<4x22xf32>
    %854 = vector.broadcast %852 : f32 to vector<4x22xf32>
    %855 = arith.mulf %854, %853 : vector<4x22xf32>
    %856 = arith.addf %851, %855 : vector<4x22xf32>
    %c145 = arith.constant 145 : index
    %857 = memref.load %arg5[%c145] : memref<376xf32, #tpu.memory_space<smem>>
    %858 = vector.extract_strided_slice %790 {offsets = [0, 2], sizes = [4, 22], strides = [1, 1]} : vector<6x24xf32> to vector<4x22xf32>
    %859 = vector.broadcast %857 : f32 to vector<4x22xf32>
    %860 = arith.mulf %859, %858 : vector<4x22xf32>
    %861 = arith.addf %856, %860 : vector<4x22xf32>
    %c137 = arith.constant 137 : index
    %862 = memref.load %arg5[%c137] : memref<376xf32, #tpu.memory_space<smem>>
    %863 = vector.extract_strided_slice %786 {offsets = [1, 2], sizes = [4, 22], strides = [1, 1]} : vector<6x24xf32> to vector<4x22xf32>
    %864 = vector.broadcast %862 : f32 to vector<4x22xf32>
    %865 = arith.mulf %864, %863 : vector<4x22xf32>
    %866 = arith.addf %861, %865 : vector<4x22xf32>
    %c146 = arith.constant 146 : index
    %867 = memref.load %arg5[%c146] : memref<376xf32, #tpu.memory_space<smem>>
    %868 = vector.extract_strided_slice %790 {offsets = [1, 2], sizes = [4, 22], strides = [1, 1]} : vector<6x24xf32> to vector<4x22xf32>
    %869 = vector.broadcast %867 : f32 to vector<4x22xf32>
    %870 = arith.mulf %869, %868 : vector<4x22xf32>
    %871 = arith.addf %866, %870 : vector<4x22xf32>
    %c138 = arith.constant 138 : index
    %872 = memref.load %arg5[%c138] : memref<376xf32, #tpu.memory_space<smem>>
    %873 = vector.extract_strided_slice %786 {offsets = [2, 2], sizes = [4, 22], strides = [1, 1]} : vector<6x24xf32> to vector<4x22xf32>
    %874 = vector.broadcast %872 : f32 to vector<4x22xf32>
    %875 = arith.mulf %874, %873 : vector<4x22xf32>
    %876 = arith.addf %871, %875 : vector<4x22xf32>
    %c147 = arith.constant 147 : index
    %877 = memref.load %arg5[%c147] : memref<376xf32, #tpu.memory_space<smem>>
    %878 = vector.extract_strided_slice %790 {offsets = [2, 2], sizes = [4, 22], strides = [1, 1]} : vector<6x24xf32> to vector<4x22xf32>
    %879 = vector.broadcast %877 : f32 to vector<4x22xf32>
    %880 = arith.mulf %879, %878 : vector<4x22xf32>
    %881 = arith.addf %876, %880 : vector<4x22xf32>
    %882 = arith.negf %881 : vector<4x22xf32>
    %883 = math.exp %882 : vector<4x22xf32>
    %cst_92 = arith.constant 1.000000e+00 : f32
    %884 = vector.broadcast %cst_92 : f32 to vector<4x22xf32>
    %885 = arith.addf %884, %883 : vector<4x22xf32>
    %886 = arith.divf %884, %885 : vector<4x22xf32>
    %887 = vector.extract_strided_slice %886 {offsets = [0, 0], sizes = [1, 22], strides = [1, 1]} : vector<4x22xf32> to vector<1x22xf32>
    %cst_93 = arith.constant 1.000000e+00 : f32
    %888 = vector.broadcast %cst_93 : f32 to vector<1x22xf32>
    %889 = arith.addf %888, %887 : vector<1x22xf32>
    %890 = vector.broadcast %889 : vector<1x22xf32> to vector<16x22xf32>
    %891 = arith.mulf %657, %890 : vector<16x22xf32>
    %cst_94 = arith.constant 0.000000e+00 : f32
    %892 = vector.broadcast %cst_94 : f32 to vector<16x22xf32>
    %893 = arith.maximumf %891, %892 : vector<16x22xf32>
    %894 = vector.extract_strided_slice %886 {offsets = [1, 0], sizes = [1, 22], strides = [1, 1]} : vector<4x22xf32> to vector<1x22xf32>
    %cst_95 = arith.constant 1.000000e+00 : f32
    %895 = vector.broadcast %cst_95 : f32 to vector<1x22xf32>
    %896 = arith.addf %895, %894 : vector<1x22xf32>
    %897 = vector.broadcast %896 : vector<1x22xf32> to vector<16x22xf32>
    %898 = arith.mulf %664, %897 : vector<16x22xf32>
    %cst_96 = arith.constant 0.000000e+00 : f32
    %899 = vector.broadcast %cst_96 : f32 to vector<16x22xf32>
    %900 = arith.maximumf %898, %899 : vector<16x22xf32>
    %901 = vector.extract_strided_slice %886 {offsets = [2, 0], sizes = [1, 22], strides = [1, 1]} : vector<4x22xf32> to vector<1x22xf32>
    %cst_97 = arith.constant 1.000000e+00 : f32
    %902 = vector.broadcast %cst_97 : f32 to vector<1x22xf32>
    %903 = arith.addf %902, %901 : vector<1x22xf32>
    %904 = vector.broadcast %903 : vector<1x22xf32> to vector<16x22xf32>
    %905 = arith.mulf %671, %904 : vector<16x22xf32>
    %cst_98 = arith.constant 0.000000e+00 : f32
    %906 = vector.broadcast %cst_98 : f32 to vector<16x22xf32>
    %907 = arith.maximumf %905, %906 : vector<16x22xf32>
    %908 = vector.extract_strided_slice %886 {offsets = [3, 0], sizes = [1, 22], strides = [1, 1]} : vector<4x22xf32> to vector<1x22xf32>
    %cst_99 = arith.constant 1.000000e+00 : f32
    %909 = vector.broadcast %cst_99 : f32 to vector<1x22xf32>
    %910 = arith.addf %909, %908 : vector<1x22xf32>
    %911 = vector.broadcast %910 : vector<1x22xf32> to vector<16x22xf32>
    %912 = arith.mulf %678, %911 : vector<16x22xf32>
    %cst_100 = arith.constant 0.000000e+00 : f32
    %913 = vector.broadcast %cst_100 : f32 to vector<16x22xf32>
    %914 = arith.maximumf %912, %913 : vector<16x22xf32>
    %cst_101 = arith.constant dense<0.000000e+00> : vector<16xf32>
    %915 = vector.multi_reduction <add>, %738, %cst_101 [1] : vector<16x22xf32> to vector<16xf32>
    %916 = vector.shape_cast %915 : vector<16xf32> to vector<16x1xf32>
    %cst_102 = arith.constant 2.200000e+01 : f32
    %917 = vector.broadcast %cst_102 : f32 to vector<16x1xf32>
    %918 = arith.divf %916, %917 : vector<16x1xf32>
    %cst_103 = arith.constant dense<0.000000e+00> : vector<16xf32>
    %919 = vector.multi_reduction <add>, %744, %cst_103 [1] : vector<16x22xf32> to vector<16xf32>
    %920 = vector.shape_cast %919 : vector<16xf32> to vector<16x1xf32>
    %cst_104 = arith.constant 2.200000e+01 : f32
    %921 = vector.broadcast %cst_104 : f32 to vector<16x1xf32>
    %922 = arith.divf %920, %921 : vector<16x1xf32>
    %923 = arith.addf %918, %922 : vector<16x1xf32>
    %cst_105 = arith.constant dense<0.000000e+00> : vector<16xf32>
    %924 = vector.multi_reduction <add>, %750, %cst_105 [1] : vector<16x22xf32> to vector<16xf32>
    %925 = vector.shape_cast %924 : vector<16xf32> to vector<16x1xf32>
    %cst_106 = arith.constant 2.200000e+01 : f32
    %926 = vector.broadcast %cst_106 : f32 to vector<16x1xf32>
    %927 = arith.divf %925, %926 : vector<16x1xf32>
    %928 = arith.addf %923, %927 : vector<16x1xf32>
    %cst_107 = arith.constant dense<0.000000e+00> : vector<16xf32>
    %929 = vector.multi_reduction <add>, %756, %cst_107 [1] : vector<16x22xf32> to vector<16xf32>
    %930 = vector.shape_cast %929 : vector<16xf32> to vector<16x1xf32>
    %cst_108 = arith.constant 2.200000e+01 : f32
    %931 = vector.broadcast %cst_108 : f32 to vector<16x1xf32>
    %932 = arith.divf %930, %931 : vector<16x1xf32>
    %933 = arith.addf %928, %932 : vector<16x1xf32>
    %cst_109 = arith.constant 2.500000e-01 : f32
    %934 = vector.broadcast %cst_109 : f32 to vector<16x1xf32>
    %935 = arith.mulf %933, %934 : vector<16x1xf32>
    %cst_110 = arith.constant dense<0xFF800000> : vector<16xf32>
    %936 = vector.multi_reduction <maximumf>, %738, %cst_110 [1] : vector<16x22xf32> to vector<16xf32>
    %937 = vector.shape_cast %936 : vector<16xf32> to vector<16x1xf32>
    %cst_111 = arith.constant dense<0xFF800000> : vector<16xf32>
    %938 = vector.multi_reduction <maximumf>, %744, %cst_111 [1] : vector<16x22xf32> to vector<16xf32>
    %939 = vector.shape_cast %938 : vector<16xf32> to vector<16x1xf32>
    %940 = arith.maximumf %937, %939 : vector<16x1xf32>
    %cst_112 = arith.constant dense<0xFF800000> : vector<16xf32>
    %941 = vector.multi_reduction <maximumf>, %750, %cst_112 [1] : vector<16x22xf32> to vector<16xf32>
    %942 = vector.shape_cast %941 : vector<16xf32> to vector<16x1xf32>
    %943 = arith.maximumf %940, %942 : vector<16x1xf32>
    %cst_113 = arith.constant dense<0xFF800000> : vector<16xf32>
    %944 = vector.multi_reduction <maximumf>, %756, %cst_113 [1] : vector<16x22xf32> to vector<16xf32>
    %945 = vector.shape_cast %944 : vector<16xf32> to vector<16x1xf32>
    %946 = arith.maximumf %943, %945 : vector<16x1xf32>
    %c0_114 = arith.constant 0 : index
    %c2_115 = arith.constant 2 : index
    %947 = vector.load %arg4[%c0_114, %c2_115] : memref<16x4xf32, #tpu.memory_space<vmem>>, vector<16x1xf32>
    %c0_116 = arith.constant 0 : index
    %c3_117 = arith.constant 3 : index
    %948 = vector.load %arg4[%c0_116, %c3_117] : memref<16x4xf32, #tpu.memory_space<vmem>>, vector<16x1xf32>
    %949 = arith.mulf %935, %947 : vector<16x1xf32>
    %cst_118 = arith.constant dense<0.000000e+00> : vector<1xf32>
    %950 = vector.multi_reduction <add>, %949, %cst_118 [0] : vector<16x1xf32> to vector<1xf32>
    %951 = vector.shape_cast %950 : vector<1xf32> to vector<1x1xf32>
    %cst_119 = arith.constant 0.000000e+00 : f32
    %952 = vector.broadcast %cst_119 : f32 to vector<1x1xf32>
    %953 = arith.maximumf %951, %952 : vector<1x1xf32>
    %954 = vector.broadcast %953 : vector<1x1xf32> to vector<16x1xf32>
    %955 = arith.mulf %948, %954 : vector<16x1xf32>
    %956 = arith.mulf %946, %947 : vector<16x1xf32>
    %cst_120 = arith.constant dense<0.000000e+00> : vector<1xf32>
    %957 = vector.multi_reduction <add>, %956, %cst_120 [0] : vector<16x1xf32> to vector<1xf32>
    %958 = vector.shape_cast %957 : vector<1xf32> to vector<1x1xf32>
    %cst_121 = arith.constant 0.000000e+00 : f32
    %959 = vector.broadcast %cst_121 : f32 to vector<1x1xf32>
    %960 = arith.maximumf %958, %959 : vector<1x1xf32>
    %961 = vector.broadcast %960 : vector<1x1xf32> to vector<16x1xf32>
    %962 = arith.mulf %948, %961 : vector<16x1xf32>
    %963 = arith.addf %955, %962 : vector<16x1xf32>
    %964 = arith.negf %963 : vector<16x1xf32>
    %965 = math.exp %964 : vector<16x1xf32>
    %cst_122 = arith.constant 1.000000e+00 : f32
    %966 = vector.broadcast %cst_122 : f32 to vector<16x1xf32>
    %967 = arith.addf %966, %965 : vector<16x1xf32>
    %968 = arith.divf %966, %967 : vector<16x1xf32>
    %cst_123 = arith.constant 1.000000e+00 : f32
    %969 = vector.broadcast %cst_123 : f32 to vector<16x1xf32>
    %970 = arith.addf %969, %968 : vector<16x1xf32>
    %971 = vector.broadcast %970 : vector<16x1xf32> to vector<16x22xf32>
    %972 = arith.mulf %738, %971 : vector<16x22xf32>
    %cst_124 = arith.constant 0.000000e+00 : f32
    %973 = vector.broadcast %cst_124 : f32 to vector<16x22xf32>
    %974 = arith.maximumf %972, %973 : vector<16x22xf32>
    %cst_125 = arith.constant 1.000000e+00 : f32
    %975 = vector.broadcast %cst_125 : f32 to vector<16x1xf32>
    %976 = arith.addf %975, %968 : vector<16x1xf32>
    %977 = vector.broadcast %976 : vector<16x1xf32> to vector<16x22xf32>
    %978 = arith.mulf %744, %977 : vector<16x22xf32>
    %cst_126 = arith.constant 0.000000e+00 : f32
    %979 = vector.broadcast %cst_126 : f32 to vector<16x22xf32>
    %980 = arith.maximumf %978, %979 : vector<16x22xf32>
    %cst_127 = arith.constant 1.000000e+00 : f32
    %981 = vector.broadcast %cst_127 : f32 to vector<16x1xf32>
    %982 = arith.addf %981, %968 : vector<16x1xf32>
    %983 = vector.broadcast %982 : vector<16x1xf32> to vector<16x22xf32>
    %984 = arith.mulf %750, %983 : vector<16x22xf32>
    %cst_128 = arith.constant 0.000000e+00 : f32
    %985 = vector.broadcast %cst_128 : f32 to vector<16x22xf32>
    %986 = arith.maximumf %984, %985 : vector<16x22xf32>
    %cst_129 = arith.constant 1.000000e+00 : f32
    %987 = vector.broadcast %cst_129 : f32 to vector<16x1xf32>
    %988 = arith.addf %987, %968 : vector<16x1xf32>
    %989 = vector.broadcast %988 : vector<16x1xf32> to vector<16x22xf32>
    %990 = arith.mulf %756, %989 : vector<16x22xf32>
    %cst_130 = arith.constant 0.000000e+00 : f32
    %991 = vector.broadcast %cst_130 : f32 to vector<16x22xf32>
    %992 = arith.maximumf %990, %991 : vector<16x22xf32>
    %993 = arith.addf %893, %974 : vector<16x22xf32>
    %994 = arith.addf %900, %980 : vector<16x22xf32>
    %995 = arith.addf %907, %986 : vector<16x22xf32>
    %996 = arith.addf %914, %992 : vector<16x22xf32>
    %cst_131 = arith.constant 0.000000e+00 : f32
    %997 = vector.broadcast %cst_131 : f32 to vector<16x22xf32>
    %c180 = arith.constant 180 : index
    %998 = memref.load %arg5[%c180] : memref<376xf32, #tpu.memory_space<smem>>
    %999 = vector.broadcast %998 : f32 to vector<16x22xf32>
    %1000 = arith.addf %997, %999 : vector<16x22xf32>
    %c148 = arith.constant 148 : index
    %1001 = memref.load %arg5[%c148] : memref<376xf32, #tpu.memory_space<smem>>
    %1002 = vector.broadcast %1001 : f32 to vector<16x22xf32>
    %1003 = arith.mulf %1002, %993 : vector<16x22xf32>
    %1004 = arith.addf %1000, %1003 : vector<16x22xf32>
    %c149 = arith.constant 149 : index
    %1005 = memref.load %arg5[%c149] : memref<376xf32, #tpu.memory_space<smem>>
    %1006 = vector.broadcast %1005 : f32 to vector<16x22xf32>
    %1007 = arith.mulf %1006, %994 : vector<16x22xf32>
    %1008 = arith.addf %1004, %1007 : vector<16x22xf32>
    %c150 = arith.constant 150 : index
    %1009 = memref.load %arg5[%c150] : memref<376xf32, #tpu.memory_space<smem>>
    %1010 = vector.broadcast %1009 : f32 to vector<16x22xf32>
    %1011 = arith.mulf %1010, %995 : vector<16x22xf32>
    %1012 = arith.addf %1008, %1011 : vector<16x22xf32>
    %c151 = arith.constant 151 : index
    %1013 = memref.load %arg5[%c151] : memref<376xf32, #tpu.memory_space<smem>>
    %1014 = vector.broadcast %1013 : f32 to vector<16x22xf32>
    %1015 = arith.mulf %1014, %996 : vector<16x22xf32>
    %1016 = arith.addf %1012, %1015 : vector<16x22xf32>
    %cst_132 = arith.constant 0.000000e+00 : f32
    %1017 = vector.broadcast %cst_132 : f32 to vector<16x22xf32>
    %1018 = arith.maximumf %1016, %1017 : vector<16x22xf32>
    %cst_133 = arith.constant 0.000000e+00 : f32
    %1019 = vector.broadcast %cst_133 : f32 to vector<16x22xf32>
    %c181 = arith.constant 181 : index
    %1020 = memref.load %arg5[%c181] : memref<376xf32, #tpu.memory_space<smem>>
    %1021 = vector.broadcast %1020 : f32 to vector<16x22xf32>
    %1022 = arith.addf %1019, %1021 : vector<16x22xf32>
    %c152 = arith.constant 152 : index
    %1023 = memref.load %arg5[%c152] : memref<376xf32, #tpu.memory_space<smem>>
    %1024 = vector.broadcast %1023 : f32 to vector<16x22xf32>
    %1025 = arith.mulf %1024, %993 : vector<16x22xf32>
    %1026 = arith.addf %1022, %1025 : vector<16x22xf32>
    %c153 = arith.constant 153 : index
    %1027 = memref.load %arg5[%c153] : memref<376xf32, #tpu.memory_space<smem>>
    %1028 = vector.broadcast %1027 : f32 to vector<16x22xf32>
    %1029 = arith.mulf %1028, %994 : vector<16x22xf32>
    %1030 = arith.addf %1026, %1029 : vector<16x22xf32>
    %c154 = arith.constant 154 : index
    %1031 = memref.load %arg5[%c154] : memref<376xf32, #tpu.memory_space<smem>>
    %1032 = vector.broadcast %1031 : f32 to vector<16x22xf32>
    %1033 = arith.mulf %1032, %995 : vector<16x22xf32>
    %1034 = arith.addf %1030, %1033 : vector<16x22xf32>
    %c155 = arith.constant 155 : index
    %1035 = memref.load %arg5[%c155] : memref<376xf32, #tpu.memory_space<smem>>
    %1036 = vector.broadcast %1035 : f32 to vector<16x22xf32>
    %1037 = arith.mulf %1036, %996 : vector<16x22xf32>
    %1038 = arith.addf %1034, %1037 : vector<16x22xf32>
    %cst_134 = arith.constant 0.000000e+00 : f32
    %1039 = vector.broadcast %cst_134 : f32 to vector<16x22xf32>
    %1040 = arith.maximumf %1038, %1039 : vector<16x22xf32>
    %cst_135 = arith.constant 0.000000e+00 : f32
    %1041 = vector.broadcast %cst_135 : f32 to vector<16x22xf32>
    %c182 = arith.constant 182 : index
    %1042 = memref.load %arg5[%c182] : memref<376xf32, #tpu.memory_space<smem>>
    %1043 = vector.broadcast %1042 : f32 to vector<16x22xf32>
    %1044 = arith.addf %1041, %1043 : vector<16x22xf32>
    %c156 = arith.constant 156 : index
    %1045 = memref.load %arg5[%c156] : memref<376xf32, #tpu.memory_space<smem>>
    %1046 = vector.broadcast %1045 : f32 to vector<16x22xf32>
    %1047 = arith.mulf %1046, %993 : vector<16x22xf32>
    %1048 = arith.addf %1044, %1047 : vector<16x22xf32>
    %c157 = arith.constant 157 : index
    %1049 = memref.load %arg5[%c157] : memref<376xf32, #tpu.memory_space<smem>>
    %1050 = vector.broadcast %1049 : f32 to vector<16x22xf32>
    %1051 = arith.mulf %1050, %994 : vector<16x22xf32>
    %1052 = arith.addf %1048, %1051 : vector<16x22xf32>
    %c158 = arith.constant 158 : index
    %1053 = memref.load %arg5[%c158] : memref<376xf32, #tpu.memory_space<smem>>
    %1054 = vector.broadcast %1053 : f32 to vector<16x22xf32>
    %1055 = arith.mulf %1054, %995 : vector<16x22xf32>
    %1056 = arith.addf %1052, %1055 : vector<16x22xf32>
    %c159 = arith.constant 159 : index
    %1057 = memref.load %arg5[%c159] : memref<376xf32, #tpu.memory_space<smem>>
    %1058 = vector.broadcast %1057 : f32 to vector<16x22xf32>
    %1059 = arith.mulf %1058, %996 : vector<16x22xf32>
    %1060 = arith.addf %1056, %1059 : vector<16x22xf32>
    %cst_136 = arith.constant 0.000000e+00 : f32
    %1061 = vector.broadcast %cst_136 : f32 to vector<16x22xf32>
    %1062 = arith.maximumf %1060, %1061 : vector<16x22xf32>
    %cst_137 = arith.constant 0.000000e+00 : f32
    %1063 = vector.broadcast %cst_137 : f32 to vector<16x22xf32>
    %c183 = arith.constant 183 : index
    %1064 = memref.load %arg5[%c183] : memref<376xf32, #tpu.memory_space<smem>>
    %1065 = vector.broadcast %1064 : f32 to vector<16x22xf32>
    %1066 = arith.addf %1063, %1065 : vector<16x22xf32>
    %c160 = arith.constant 160 : index
    %1067 = memref.load %arg5[%c160] : memref<376xf32, #tpu.memory_space<smem>>
    %1068 = vector.broadcast %1067 : f32 to vector<16x22xf32>
    %1069 = arith.mulf %1068, %993 : vector<16x22xf32>
    %1070 = arith.addf %1066, %1069 : vector<16x22xf32>
    %c161 = arith.constant 161 : index
    %1071 = memref.load %arg5[%c161] : memref<376xf32, #tpu.memory_space<smem>>
    %1072 = vector.broadcast %1071 : f32 to vector<16x22xf32>
    %1073 = arith.mulf %1072, %994 : vector<16x22xf32>
    %1074 = arith.addf %1070, %1073 : vector<16x22xf32>
    %c162 = arith.constant 162 : index
    %1075 = memref.load %arg5[%c162] : memref<376xf32, #tpu.memory_space<smem>>
    %1076 = vector.broadcast %1075 : f32 to vector<16x22xf32>
    %1077 = arith.mulf %1076, %995 : vector<16x22xf32>
    %1078 = arith.addf %1074, %1077 : vector<16x22xf32>
    %c163 = arith.constant 163 : index
    %1079 = memref.load %arg5[%c163] : memref<376xf32, #tpu.memory_space<smem>>
    %1080 = vector.broadcast %1079 : f32 to vector<16x22xf32>
    %1081 = arith.mulf %1080, %996 : vector<16x22xf32>
    %1082 = arith.addf %1078, %1081 : vector<16x22xf32>
    %cst_138 = arith.constant 0.000000e+00 : f32
    %1083 = vector.broadcast %cst_138 : f32 to vector<16x22xf32>
    %1084 = arith.maximumf %1082, %1083 : vector<16x22xf32>
    %cst_139 = arith.constant 0.000000e+00 : f32
    %1085 = vector.broadcast %cst_139 : f32 to vector<16x22xf32>
    %c184 = arith.constant 184 : index
    %1086 = memref.load %arg5[%c184] : memref<376xf32, #tpu.memory_space<smem>>
    %1087 = vector.broadcast %1086 : f32 to vector<16x22xf32>
    %1088 = arith.addf %1085, %1087 : vector<16x22xf32>
    %c164 = arith.constant 164 : index
    %1089 = memref.load %arg5[%c164] : memref<376xf32, #tpu.memory_space<smem>>
    %1090 = vector.broadcast %1089 : f32 to vector<16x22xf32>
    %1091 = arith.mulf %1090, %993 : vector<16x22xf32>
    %1092 = arith.addf %1088, %1091 : vector<16x22xf32>
    %c165 = arith.constant 165 : index
    %1093 = memref.load %arg5[%c165] : memref<376xf32, #tpu.memory_space<smem>>
    %1094 = vector.broadcast %1093 : f32 to vector<16x22xf32>
    %1095 = arith.mulf %1094, %994 : vector<16x22xf32>
    %1096 = arith.addf %1092, %1095 : vector<16x22xf32>
    %c166 = arith.constant 166 : index
    %1097 = memref.load %arg5[%c166] : memref<376xf32, #tpu.memory_space<smem>>
    %1098 = vector.broadcast %1097 : f32 to vector<16x22xf32>
    %1099 = arith.mulf %1098, %995 : vector<16x22xf32>
    %1100 = arith.addf %1096, %1099 : vector<16x22xf32>
    %c167 = arith.constant 167 : index
    %1101 = memref.load %arg5[%c167] : memref<376xf32, #tpu.memory_space<smem>>
    %1102 = vector.broadcast %1101 : f32 to vector<16x22xf32>
    %1103 = arith.mulf %1102, %996 : vector<16x22xf32>
    %1104 = arith.addf %1100, %1103 : vector<16x22xf32>
    %cst_140 = arith.constant 0.000000e+00 : f32
    %1105 = vector.broadcast %cst_140 : f32 to vector<16x22xf32>
    %1106 = arith.maximumf %1104, %1105 : vector<16x22xf32>
    %cst_141 = arith.constant 0.000000e+00 : f32
    %1107 = vector.broadcast %cst_141 : f32 to vector<16x22xf32>
    %c185 = arith.constant 185 : index
    %1108 = memref.load %arg5[%c185] : memref<376xf32, #tpu.memory_space<smem>>
    %1109 = vector.broadcast %1108 : f32 to vector<16x22xf32>
    %1110 = arith.addf %1107, %1109 : vector<16x22xf32>
    %c168 = arith.constant 168 : index
    %1111 = memref.load %arg5[%c168] : memref<376xf32, #tpu.memory_space<smem>>
    %1112 = vector.broadcast %1111 : f32 to vector<16x22xf32>
    %1113 = arith.mulf %1112, %993 : vector<16x22xf32>
    %1114 = arith.addf %1110, %1113 : vector<16x22xf32>
    %c169 = arith.constant 169 : index
    %1115 = memref.load %arg5[%c169] : memref<376xf32, #tpu.memory_space<smem>>
    %1116 = vector.broadcast %1115 : f32 to vector<16x22xf32>
    %1117 = arith.mulf %1116, %994 : vector<16x22xf32>
    %1118 = arith.addf %1114, %1117 : vector<16x22xf32>
    %c170 = arith.constant 170 : index
    %1119 = memref.load %arg5[%c170] : memref<376xf32, #tpu.memory_space<smem>>
    %1120 = vector.broadcast %1119 : f32 to vector<16x22xf32>
    %1121 = arith.mulf %1120, %995 : vector<16x22xf32>
    %1122 = arith.addf %1118, %1121 : vector<16x22xf32>
    %c171 = arith.constant 171 : index
    %1123 = memref.load %arg5[%c171] : memref<376xf32, #tpu.memory_space<smem>>
    %1124 = vector.broadcast %1123 : f32 to vector<16x22xf32>
    %1125 = arith.mulf %1124, %996 : vector<16x22xf32>
    %1126 = arith.addf %1122, %1125 : vector<16x22xf32>
    %cst_142 = arith.constant 0.000000e+00 : f32
    %1127 = vector.broadcast %cst_142 : f32 to vector<16x22xf32>
    %1128 = arith.maximumf %1126, %1127 : vector<16x22xf32>
    %cst_143 = arith.constant 0.000000e+00 : f32
    %1129 = vector.broadcast %cst_143 : f32 to vector<16x22xf32>
    %c186 = arith.constant 186 : index
    %1130 = memref.load %arg5[%c186] : memref<376xf32, #tpu.memory_space<smem>>
    %1131 = vector.broadcast %1130 : f32 to vector<16x22xf32>
    %1132 = arith.addf %1129, %1131 : vector<16x22xf32>
    %c172 = arith.constant 172 : index
    %1133 = memref.load %arg5[%c172] : memref<376xf32, #tpu.memory_space<smem>>
    %1134 = vector.broadcast %1133 : f32 to vector<16x22xf32>
    %1135 = arith.mulf %1134, %993 : vector<16x22xf32>
    %1136 = arith.addf %1132, %1135 : vector<16x22xf32>
    %c173 = arith.constant 173 : index
    %1137 = memref.load %arg5[%c173] : memref<376xf32, #tpu.memory_space<smem>>
    %1138 = vector.broadcast %1137 : f32 to vector<16x22xf32>
    %1139 = arith.mulf %1138, %994 : vector<16x22xf32>
    %1140 = arith.addf %1136, %1139 : vector<16x22xf32>
    %c174 = arith.constant 174 : index
    %1141 = memref.load %arg5[%c174] : memref<376xf32, #tpu.memory_space<smem>>
    %1142 = vector.broadcast %1141 : f32 to vector<16x22xf32>
    %1143 = arith.mulf %1142, %995 : vector<16x22xf32>
    %1144 = arith.addf %1140, %1143 : vector<16x22xf32>
    %c175 = arith.constant 175 : index
    %1145 = memref.load %arg5[%c175] : memref<376xf32, #tpu.memory_space<smem>>
    %1146 = vector.broadcast %1145 : f32 to vector<16x22xf32>
    %1147 = arith.mulf %1146, %996 : vector<16x22xf32>
    %1148 = arith.addf %1144, %1147 : vector<16x22xf32>
    %cst_144 = arith.constant 0.000000e+00 : f32
    %1149 = vector.broadcast %cst_144 : f32 to vector<16x22xf32>
    %1150 = arith.maximumf %1148, %1149 : vector<16x22xf32>
    %cst_145 = arith.constant 0.000000e+00 : f32
    %1151 = vector.broadcast %cst_145 : f32 to vector<16x22xf32>
    %c187 = arith.constant 187 : index
    %1152 = memref.load %arg5[%c187] : memref<376xf32, #tpu.memory_space<smem>>
    %1153 = vector.broadcast %1152 : f32 to vector<16x22xf32>
    %1154 = arith.addf %1151, %1153 : vector<16x22xf32>
    %c176 = arith.constant 176 : index
    %1155 = memref.load %arg5[%c176] : memref<376xf32, #tpu.memory_space<smem>>
    %1156 = vector.broadcast %1155 : f32 to vector<16x22xf32>
    %1157 = arith.mulf %1156, %993 : vector<16x22xf32>
    %1158 = arith.addf %1154, %1157 : vector<16x22xf32>
    %c177 = arith.constant 177 : index
    %1159 = memref.load %arg5[%c177] : memref<376xf32, #tpu.memory_space<smem>>
    %1160 = vector.broadcast %1159 : f32 to vector<16x22xf32>
    %1161 = arith.mulf %1160, %994 : vector<16x22xf32>
    %1162 = arith.addf %1158, %1161 : vector<16x22xf32>
    %c178 = arith.constant 178 : index
    %1163 = memref.load %arg5[%c178] : memref<376xf32, #tpu.memory_space<smem>>
    %1164 = vector.broadcast %1163 : f32 to vector<16x22xf32>
    %1165 = arith.mulf %1164, %995 : vector<16x22xf32>
    %1166 = arith.addf %1162, %1165 : vector<16x22xf32>
    %c179 = arith.constant 179 : index
    %1167 = memref.load %arg5[%c179] : memref<376xf32, #tpu.memory_space<smem>>
    %1168 = vector.broadcast %1167 : f32 to vector<16x22xf32>
    %1169 = arith.mulf %1168, %996 : vector<16x22xf32>
    %1170 = arith.addf %1166, %1169 : vector<16x22xf32>
    %cst_146 = arith.constant 0.000000e+00 : f32
    %1171 = vector.broadcast %cst_146 : f32 to vector<16x22xf32>
    %1172 = arith.maximumf %1170, %1171 : vector<16x22xf32>
    %cst_147 = arith.constant 0.000000e+00 : f32
    %1173 = vector.broadcast %cst_147 : f32 to vector<16x22xf32>
    %c220 = arith.constant 220 : index
    %1174 = memref.load %arg5[%c220] : memref<376xf32, #tpu.memory_space<smem>>
    %1175 = vector.broadcast %1174 : f32 to vector<16x22xf32>
    %1176 = arith.addf %1173, %1175 : vector<16x22xf32>
    %c188 = arith.constant 188 : index
    %1177 = memref.load %arg5[%c188] : memref<376xf32, #tpu.memory_space<smem>>
    %1178 = vector.broadcast %1177 : f32 to vector<16x22xf32>
    %1179 = arith.mulf %1178, %1018 : vector<16x22xf32>
    %1180 = arith.addf %1176, %1179 : vector<16x22xf32>
    %c189 = arith.constant 189 : index
    %1181 = memref.load %arg5[%c189] : memref<376xf32, #tpu.memory_space<smem>>
    %1182 = vector.broadcast %1181 : f32 to vector<16x22xf32>
    %1183 = arith.mulf %1182, %1040 : vector<16x22xf32>
    %1184 = arith.addf %1180, %1183 : vector<16x22xf32>
    %c190 = arith.constant 190 : index
    %1185 = memref.load %arg5[%c190] : memref<376xf32, #tpu.memory_space<smem>>
    %1186 = vector.broadcast %1185 : f32 to vector<16x22xf32>
    %1187 = arith.mulf %1186, %1062 : vector<16x22xf32>
    %1188 = arith.addf %1184, %1187 : vector<16x22xf32>
    %c191 = arith.constant 191 : index
    %1189 = memref.load %arg5[%c191] : memref<376xf32, #tpu.memory_space<smem>>
    %1190 = vector.broadcast %1189 : f32 to vector<16x22xf32>
    %1191 = arith.mulf %1190, %1084 : vector<16x22xf32>
    %1192 = arith.addf %1188, %1191 : vector<16x22xf32>
    %c192 = arith.constant 192 : index
    %1193 = memref.load %arg5[%c192] : memref<376xf32, #tpu.memory_space<smem>>
    %1194 = vector.broadcast %1193 : f32 to vector<16x22xf32>
    %1195 = arith.mulf %1194, %1106 : vector<16x22xf32>
    %1196 = arith.addf %1192, %1195 : vector<16x22xf32>
    %c193 = arith.constant 193 : index
    %1197 = memref.load %arg5[%c193] : memref<376xf32, #tpu.memory_space<smem>>
    %1198 = vector.broadcast %1197 : f32 to vector<16x22xf32>
    %1199 = arith.mulf %1198, %1128 : vector<16x22xf32>
    %1200 = arith.addf %1196, %1199 : vector<16x22xf32>
    %c194 = arith.constant 194 : index
    %1201 = memref.load %arg5[%c194] : memref<376xf32, #tpu.memory_space<smem>>
    %1202 = vector.broadcast %1201 : f32 to vector<16x22xf32>
    %1203 = arith.mulf %1202, %1150 : vector<16x22xf32>
    %1204 = arith.addf %1200, %1203 : vector<16x22xf32>
    %c195 = arith.constant 195 : index
    %1205 = memref.load %arg5[%c195] : memref<376xf32, #tpu.memory_space<smem>>
    %1206 = vector.broadcast %1205 : f32 to vector<16x22xf32>
    %1207 = arith.mulf %1206, %1172 : vector<16x22xf32>
    %1208 = arith.addf %1204, %1207 : vector<16x22xf32>
    %cst_148 = arith.constant 0.000000e+00 : f32
    %1209 = vector.broadcast %cst_148 : f32 to vector<16x22xf32>
    %c221 = arith.constant 221 : index
    %1210 = memref.load %arg5[%c221] : memref<376xf32, #tpu.memory_space<smem>>
    %1211 = vector.broadcast %1210 : f32 to vector<16x22xf32>
    %1212 = arith.addf %1209, %1211 : vector<16x22xf32>
    %c196 = arith.constant 196 : index
    %1213 = memref.load %arg5[%c196] : memref<376xf32, #tpu.memory_space<smem>>
    %1214 = vector.broadcast %1213 : f32 to vector<16x22xf32>
    %1215 = arith.mulf %1214, %1018 : vector<16x22xf32>
    %1216 = arith.addf %1212, %1215 : vector<16x22xf32>
    %c197 = arith.constant 197 : index
    %1217 = memref.load %arg5[%c197] : memref<376xf32, #tpu.memory_space<smem>>
    %1218 = vector.broadcast %1217 : f32 to vector<16x22xf32>
    %1219 = arith.mulf %1218, %1040 : vector<16x22xf32>
    %1220 = arith.addf %1216, %1219 : vector<16x22xf32>
    %c198 = arith.constant 198 : index
    %1221 = memref.load %arg5[%c198] : memref<376xf32, #tpu.memory_space<smem>>
    %1222 = vector.broadcast %1221 : f32 to vector<16x22xf32>
    %1223 = arith.mulf %1222, %1062 : vector<16x22xf32>
    %1224 = arith.addf %1220, %1223 : vector<16x22xf32>
    %c199 = arith.constant 199 : index
    %1225 = memref.load %arg5[%c199] : memref<376xf32, #tpu.memory_space<smem>>
    %1226 = vector.broadcast %1225 : f32 to vector<16x22xf32>
    %1227 = arith.mulf %1226, %1084 : vector<16x22xf32>
    %1228 = arith.addf %1224, %1227 : vector<16x22xf32>
    %c200 = arith.constant 200 : index
    %1229 = memref.load %arg5[%c200] : memref<376xf32, #tpu.memory_space<smem>>
    %1230 = vector.broadcast %1229 : f32 to vector<16x22xf32>
    %1231 = arith.mulf %1230, %1106 : vector<16x22xf32>
    %1232 = arith.addf %1228, %1231 : vector<16x22xf32>
    %c201 = arith.constant 201 : index
    %1233 = memref.load %arg5[%c201] : memref<376xf32, #tpu.memory_space<smem>>
    %1234 = vector.broadcast %1233 : f32 to vector<16x22xf32>
    %1235 = arith.mulf %1234, %1128 : vector<16x22xf32>
    %1236 = arith.addf %1232, %1235 : vector<16x22xf32>
    %c202 = arith.constant 202 : index
    %1237 = memref.load %arg5[%c202] : memref<376xf32, #tpu.memory_space<smem>>
    %1238 = vector.broadcast %1237 : f32 to vector<16x22xf32>
    %1239 = arith.mulf %1238, %1150 : vector<16x22xf32>
    %1240 = arith.addf %1236, %1239 : vector<16x22xf32>
    %c203 = arith.constant 203 : index
    %1241 = memref.load %arg5[%c203] : memref<376xf32, #tpu.memory_space<smem>>
    %1242 = vector.broadcast %1241 : f32 to vector<16x22xf32>
    %1243 = arith.mulf %1242, %1172 : vector<16x22xf32>
    %1244 = arith.addf %1240, %1243 : vector<16x22xf32>
    %cst_149 = arith.constant 0.000000e+00 : f32
    %1245 = vector.broadcast %cst_149 : f32 to vector<16x22xf32>
    %c222 = arith.constant 222 : index
    %1246 = memref.load %arg5[%c222] : memref<376xf32, #tpu.memory_space<smem>>
    %1247 = vector.broadcast %1246 : f32 to vector<16x22xf32>
    %1248 = arith.addf %1245, %1247 : vector<16x22xf32>
    %c204 = arith.constant 204 : index
    %1249 = memref.load %arg5[%c204] : memref<376xf32, #tpu.memory_space<smem>>
    %1250 = vector.broadcast %1249 : f32 to vector<16x22xf32>
    %1251 = arith.mulf %1250, %1018 : vector<16x22xf32>
    %1252 = arith.addf %1248, %1251 : vector<16x22xf32>
    %c205 = arith.constant 205 : index
    %1253 = memref.load %arg5[%c205] : memref<376xf32, #tpu.memory_space<smem>>
    %1254 = vector.broadcast %1253 : f32 to vector<16x22xf32>
    %1255 = arith.mulf %1254, %1040 : vector<16x22xf32>
    %1256 = arith.addf %1252, %1255 : vector<16x22xf32>
    %c206 = arith.constant 206 : index
    %1257 = memref.load %arg5[%c206] : memref<376xf32, #tpu.memory_space<smem>>
    %1258 = vector.broadcast %1257 : f32 to vector<16x22xf32>
    %1259 = arith.mulf %1258, %1062 : vector<16x22xf32>
    %1260 = arith.addf %1256, %1259 : vector<16x22xf32>
    %c207 = arith.constant 207 : index
    %1261 = memref.load %arg5[%c207] : memref<376xf32, #tpu.memory_space<smem>>
    %1262 = vector.broadcast %1261 : f32 to vector<16x22xf32>
    %1263 = arith.mulf %1262, %1084 : vector<16x22xf32>
    %1264 = arith.addf %1260, %1263 : vector<16x22xf32>
    %c208 = arith.constant 208 : index
    %1265 = memref.load %arg5[%c208] : memref<376xf32, #tpu.memory_space<smem>>
    %1266 = vector.broadcast %1265 : f32 to vector<16x22xf32>
    %1267 = arith.mulf %1266, %1106 : vector<16x22xf32>
    %1268 = arith.addf %1264, %1267 : vector<16x22xf32>
    %c209 = arith.constant 209 : index
    %1269 = memref.load %arg5[%c209] : memref<376xf32, #tpu.memory_space<smem>>
    %1270 = vector.broadcast %1269 : f32 to vector<16x22xf32>
    %1271 = arith.mulf %1270, %1128 : vector<16x22xf32>
    %1272 = arith.addf %1268, %1271 : vector<16x22xf32>
    %c210 = arith.constant 210 : index
    %1273 = memref.load %arg5[%c210] : memref<376xf32, #tpu.memory_space<smem>>
    %1274 = vector.broadcast %1273 : f32 to vector<16x22xf32>
    %1275 = arith.mulf %1274, %1150 : vector<16x22xf32>
    %1276 = arith.addf %1272, %1275 : vector<16x22xf32>
    %c211 = arith.constant 211 : index
    %1277 = memref.load %arg5[%c211] : memref<376xf32, #tpu.memory_space<smem>>
    %1278 = vector.broadcast %1277 : f32 to vector<16x22xf32>
    %1279 = arith.mulf %1278, %1172 : vector<16x22xf32>
    %1280 = arith.addf %1276, %1279 : vector<16x22xf32>
    %cst_150 = arith.constant 0.000000e+00 : f32
    %1281 = vector.broadcast %cst_150 : f32 to vector<16x22xf32>
    %c223 = arith.constant 223 : index
    %1282 = memref.load %arg5[%c223] : memref<376xf32, #tpu.memory_space<smem>>
    %1283 = vector.broadcast %1282 : f32 to vector<16x22xf32>
    %1284 = arith.addf %1281, %1283 : vector<16x22xf32>
    %c212 = arith.constant 212 : index
    %1285 = memref.load %arg5[%c212] : memref<376xf32, #tpu.memory_space<smem>>
    %1286 = vector.broadcast %1285 : f32 to vector<16x22xf32>
    %1287 = arith.mulf %1286, %1018 : vector<16x22xf32>
    %1288 = arith.addf %1284, %1287 : vector<16x22xf32>
    %c213 = arith.constant 213 : index
    %1289 = memref.load %arg5[%c213] : memref<376xf32, #tpu.memory_space<smem>>
    %1290 = vector.broadcast %1289 : f32 to vector<16x22xf32>
    %1291 = arith.mulf %1290, %1040 : vector<16x22xf32>
    %1292 = arith.addf %1288, %1291 : vector<16x22xf32>
    %c214 = arith.constant 214 : index
    %1293 = memref.load %arg5[%c214] : memref<376xf32, #tpu.memory_space<smem>>
    %1294 = vector.broadcast %1293 : f32 to vector<16x22xf32>
    %1295 = arith.mulf %1294, %1062 : vector<16x22xf32>
    %1296 = arith.addf %1292, %1295 : vector<16x22xf32>
    %c215 = arith.constant 215 : index
    %1297 = memref.load %arg5[%c215] : memref<376xf32, #tpu.memory_space<smem>>
    %1298 = vector.broadcast %1297 : f32 to vector<16x22xf32>
    %1299 = arith.mulf %1298, %1084 : vector<16x22xf32>
    %1300 = arith.addf %1296, %1299 : vector<16x22xf32>
    %c216 = arith.constant 216 : index
    %1301 = memref.load %arg5[%c216] : memref<376xf32, #tpu.memory_space<smem>>
    %1302 = vector.broadcast %1301 : f32 to vector<16x22xf32>
    %1303 = arith.mulf %1302, %1106 : vector<16x22xf32>
    %1304 = arith.addf %1300, %1303 : vector<16x22xf32>
    %c217 = arith.constant 217 : index
    %1305 = memref.load %arg5[%c217] : memref<376xf32, #tpu.memory_space<smem>>
    %1306 = vector.broadcast %1305 : f32 to vector<16x22xf32>
    %1307 = arith.mulf %1306, %1128 : vector<16x22xf32>
    %1308 = arith.addf %1304, %1307 : vector<16x22xf32>
    %c218 = arith.constant 218 : index
    %1309 = memref.load %arg5[%c218] : memref<376xf32, #tpu.memory_space<smem>>
    %1310 = vector.broadcast %1309 : f32 to vector<16x22xf32>
    %1311 = arith.mulf %1310, %1150 : vector<16x22xf32>
    %1312 = arith.addf %1308, %1311 : vector<16x22xf32>
    %c219 = arith.constant 219 : index
    %1313 = memref.load %arg5[%c219] : memref<376xf32, #tpu.memory_space<smem>>
    %1314 = vector.broadcast %1313 : f32 to vector<16x22xf32>
    %1315 = arith.mulf %1314, %1172 : vector<16x22xf32>
    %1316 = arith.addf %1312, %1315 : vector<16x22xf32>
    %cst_151 = arith.constant dense<0.000000e+00> : vector<16xf32>
    %1317 = vector.multi_reduction <add>, %993, %cst_151 [1] : vector<16x22xf32> to vector<16xf32>
    %1318 = vector.shape_cast %1317 : vector<16xf32> to vector<16x1xf32>
    %cst_152 = arith.constant 2.200000e+01 : f32
    %1319 = vector.broadcast %cst_152 : f32 to vector<16x1xf32>
    %1320 = arith.divf %1318, %1319 : vector<16x1xf32>
    %cst_153 = arith.constant dense<0.000000e+00> : vector<1xf32>
    %1321 = vector.multi_reduction <add>, %1320, %cst_153 [0] : vector<16x1xf32> to vector<1xf32>
    %1322 = vector.shape_cast %1321 : vector<1xf32> to vector<1x1xf32>
    %cst_154 = arith.constant 1.600000e+01 : f32
    %1323 = vector.broadcast %cst_154 : f32 to vector<1x1xf32>
    %1324 = arith.divf %1322, %1323 : vector<1x1xf32>
    %cst_155 = arith.constant dense<0.000000e+00> : vector<16xf32>
    %1325 = vector.multi_reduction <add>, %994, %cst_155 [1] : vector<16x22xf32> to vector<16xf32>
    %1326 = vector.shape_cast %1325 : vector<16xf32> to vector<16x1xf32>
    %cst_156 = arith.constant 2.200000e+01 : f32
    %1327 = vector.broadcast %cst_156 : f32 to vector<16x1xf32>
    %1328 = arith.divf %1326, %1327 : vector<16x1xf32>
    %cst_157 = arith.constant dense<0.000000e+00> : vector<1xf32>
    %1329 = vector.multi_reduction <add>, %1328, %cst_157 [0] : vector<16x1xf32> to vector<1xf32>
    %1330 = vector.shape_cast %1329 : vector<1xf32> to vector<1x1xf32>
    %cst_158 = arith.constant 1.600000e+01 : f32
    %1331 = vector.broadcast %cst_158 : f32 to vector<1x1xf32>
    %1332 = arith.divf %1330, %1331 : vector<1x1xf32>
    %cst_159 = arith.constant dense<0.000000e+00> : vector<16xf32>
    %1333 = vector.multi_reduction <add>, %995, %cst_159 [1] : vector<16x22xf32> to vector<16xf32>
    %1334 = vector.shape_cast %1333 : vector<16xf32> to vector<16x1xf32>
    %cst_160 = arith.constant 2.200000e+01 : f32
    %1335 = vector.broadcast %cst_160 : f32 to vector<16x1xf32>
    %1336 = arith.divf %1334, %1335 : vector<16x1xf32>
    %cst_161 = arith.constant dense<0.000000e+00> : vector<1xf32>
    %1337 = vector.multi_reduction <add>, %1336, %cst_161 [0] : vector<16x1xf32> to vector<1xf32>
    %1338 = vector.shape_cast %1337 : vector<1xf32> to vector<1x1xf32>
    %cst_162 = arith.constant 1.600000e+01 : f32
    %1339 = vector.broadcast %cst_162 : f32 to vector<1x1xf32>
    %1340 = arith.divf %1338, %1339 : vector<1x1xf32>
    %cst_163 = arith.constant dense<0.000000e+00> : vector<16xf32>
    %1341 = vector.multi_reduction <add>, %996, %cst_163 [1] : vector<16x22xf32> to vector<16xf32>
    %1342 = vector.shape_cast %1341 : vector<16xf32> to vector<16x1xf32>
    %cst_164 = arith.constant 2.200000e+01 : f32
    %1343 = vector.broadcast %cst_164 : f32 to vector<16x1xf32>
    %1344 = arith.divf %1342, %1343 : vector<16x1xf32>
    %cst_165 = arith.constant dense<0.000000e+00> : vector<1xf32>
    %1345 = vector.multi_reduction <add>, %1344, %cst_165 [0] : vector<16x1xf32> to vector<1xf32>
    %1346 = vector.shape_cast %1345 : vector<1xf32> to vector<1x1xf32>
    %cst_166 = arith.constant 1.600000e+01 : f32
    %1347 = vector.broadcast %cst_166 : f32 to vector<1x1xf32>
    %1348 = arith.divf %1346, %1347 : vector<1x1xf32>
    %cst_167 = arith.constant 0.000000e+00 : f32
    %1349 = vector.broadcast %cst_167 : f32 to vector<1x1xf32>
    %c256 = arith.constant 256 : index
    %1350 = memref.load %arg5[%c256] : memref<376xf32, #tpu.memory_space<smem>>
    %1351 = vector.broadcast %1350 : f32 to vector<1x1xf32>
    %1352 = arith.addf %1349, %1351 : vector<1x1xf32>
    %c224 = arith.constant 224 : index
    %1353 = memref.load %arg5[%c224] : memref<376xf32, #tpu.memory_space<smem>>
    %1354 = vector.broadcast %1353 : f32 to vector<1x1xf32>
    %1355 = arith.mulf %1354, %1324 : vector<1x1xf32>
    %1356 = arith.addf %1352, %1355 : vector<1x1xf32>
    %c225 = arith.constant 225 : index
    %1357 = memref.load %arg5[%c225] : memref<376xf32, #tpu.memory_space<smem>>
    %1358 = vector.broadcast %1357 : f32 to vector<1x1xf32>
    %1359 = arith.mulf %1358, %1332 : vector<1x1xf32>
    %1360 = arith.addf %1356, %1359 : vector<1x1xf32>
    %c226 = arith.constant 226 : index
    %1361 = memref.load %arg5[%c226] : memref<376xf32, #tpu.memory_space<smem>>
    %1362 = vector.broadcast %1361 : f32 to vector<1x1xf32>
    %1363 = arith.mulf %1362, %1340 : vector<1x1xf32>
    %1364 = arith.addf %1360, %1363 : vector<1x1xf32>
    %c227 = arith.constant 227 : index
    %1365 = memref.load %arg5[%c227] : memref<376xf32, #tpu.memory_space<smem>>
    %1366 = vector.broadcast %1365 : f32 to vector<1x1xf32>
    %1367 = arith.mulf %1366, %1348 : vector<1x1xf32>
    %1368 = arith.addf %1364, %1367 : vector<1x1xf32>
    %cst_168 = arith.constant 0.000000e+00 : f32
    %1369 = vector.broadcast %cst_168 : f32 to vector<1x1xf32>
    %1370 = arith.maximumf %1368, %1369 : vector<1x1xf32>
    %cst_169 = arith.constant 0.000000e+00 : f32
    %1371 = vector.broadcast %cst_169 : f32 to vector<1x1xf32>
    %c257 = arith.constant 257 : index
    %1372 = memref.load %arg5[%c257] : memref<376xf32, #tpu.memory_space<smem>>
    %1373 = vector.broadcast %1372 : f32 to vector<1x1xf32>
    %1374 = arith.addf %1371, %1373 : vector<1x1xf32>
    %c228 = arith.constant 228 : index
    %1375 = memref.load %arg5[%c228] : memref<376xf32, #tpu.memory_space<smem>>
    %1376 = vector.broadcast %1375 : f32 to vector<1x1xf32>
    %1377 = arith.mulf %1376, %1324 : vector<1x1xf32>
    %1378 = arith.addf %1374, %1377 : vector<1x1xf32>
    %c229 = arith.constant 229 : index
    %1379 = memref.load %arg5[%c229] : memref<376xf32, #tpu.memory_space<smem>>
    %1380 = vector.broadcast %1379 : f32 to vector<1x1xf32>
    %1381 = arith.mulf %1380, %1332 : vector<1x1xf32>
    %1382 = arith.addf %1378, %1381 : vector<1x1xf32>
    %c230 = arith.constant 230 : index
    %1383 = memref.load %arg5[%c230] : memref<376xf32, #tpu.memory_space<smem>>
    %1384 = vector.broadcast %1383 : f32 to vector<1x1xf32>
    %1385 = arith.mulf %1384, %1340 : vector<1x1xf32>
    %1386 = arith.addf %1382, %1385 : vector<1x1xf32>
    %c231 = arith.constant 231 : index
    %1387 = memref.load %arg5[%c231] : memref<376xf32, #tpu.memory_space<smem>>
    %1388 = vector.broadcast %1387 : f32 to vector<1x1xf32>
    %1389 = arith.mulf %1388, %1348 : vector<1x1xf32>
    %1390 = arith.addf %1386, %1389 : vector<1x1xf32>
    %cst_170 = arith.constant 0.000000e+00 : f32
    %1391 = vector.broadcast %cst_170 : f32 to vector<1x1xf32>
    %1392 = arith.maximumf %1390, %1391 : vector<1x1xf32>
    %cst_171 = arith.constant 0.000000e+00 : f32
    %1393 = vector.broadcast %cst_171 : f32 to vector<1x1xf32>
    %c258 = arith.constant 258 : index
    %1394 = memref.load %arg5[%c258] : memref<376xf32, #tpu.memory_space<smem>>
    %1395 = vector.broadcast %1394 : f32 to vector<1x1xf32>
    %1396 = arith.addf %1393, %1395 : vector<1x1xf32>
    %c232 = arith.constant 232 : index
    %1397 = memref.load %arg5[%c232] : memref<376xf32, #tpu.memory_space<smem>>
    %1398 = vector.broadcast %1397 : f32 to vector<1x1xf32>
    %1399 = arith.mulf %1398, %1324 : vector<1x1xf32>
    %1400 = arith.addf %1396, %1399 : vector<1x1xf32>
    %c233 = arith.constant 233 : index
    %1401 = memref.load %arg5[%c233] : memref<376xf32, #tpu.memory_space<smem>>
    %1402 = vector.broadcast %1401 : f32 to vector<1x1xf32>
    %1403 = arith.mulf %1402, %1332 : vector<1x1xf32>
    %1404 = arith.addf %1400, %1403 : vector<1x1xf32>
    %c234 = arith.constant 234 : index
    %1405 = memref.load %arg5[%c234] : memref<376xf32, #tpu.memory_space<smem>>
    %1406 = vector.broadcast %1405 : f32 to vector<1x1xf32>
    %1407 = arith.mulf %1406, %1340 : vector<1x1xf32>
    %1408 = arith.addf %1404, %1407 : vector<1x1xf32>
    %c235 = arith.constant 235 : index
    %1409 = memref.load %arg5[%c235] : memref<376xf32, #tpu.memory_space<smem>>
    %1410 = vector.broadcast %1409 : f32 to vector<1x1xf32>
    %1411 = arith.mulf %1410, %1348 : vector<1x1xf32>
    %1412 = arith.addf %1408, %1411 : vector<1x1xf32>
    %cst_172 = arith.constant 0.000000e+00 : f32
    %1413 = vector.broadcast %cst_172 : f32 to vector<1x1xf32>
    %1414 = arith.maximumf %1412, %1413 : vector<1x1xf32>
    %cst_173 = arith.constant 0.000000e+00 : f32
    %1415 = vector.broadcast %cst_173 : f32 to vector<1x1xf32>
    %c259 = arith.constant 259 : index
    %1416 = memref.load %arg5[%c259] : memref<376xf32, #tpu.memory_space<smem>>
    %1417 = vector.broadcast %1416 : f32 to vector<1x1xf32>
    %1418 = arith.addf %1415, %1417 : vector<1x1xf32>
    %c236 = arith.constant 236 : index
    %1419 = memref.load %arg5[%c236] : memref<376xf32, #tpu.memory_space<smem>>
    %1420 = vector.broadcast %1419 : f32 to vector<1x1xf32>
    %1421 = arith.mulf %1420, %1324 : vector<1x1xf32>
    %1422 = arith.addf %1418, %1421 : vector<1x1xf32>
    %c237 = arith.constant 237 : index
    %1423 = memref.load %arg5[%c237] : memref<376xf32, #tpu.memory_space<smem>>
    %1424 = vector.broadcast %1423 : f32 to vector<1x1xf32>
    %1425 = arith.mulf %1424, %1332 : vector<1x1xf32>
    %1426 = arith.addf %1422, %1425 : vector<1x1xf32>
    %c238 = arith.constant 238 : index
    %1427 = memref.load %arg5[%c238] : memref<376xf32, #tpu.memory_space<smem>>
    %1428 = vector.broadcast %1427 : f32 to vector<1x1xf32>
    %1429 = arith.mulf %1428, %1340 : vector<1x1xf32>
    %1430 = arith.addf %1426, %1429 : vector<1x1xf32>
    %c239 = arith.constant 239 : index
    %1431 = memref.load %arg5[%c239] : memref<376xf32, #tpu.memory_space<smem>>
    %1432 = vector.broadcast %1431 : f32 to vector<1x1xf32>
    %1433 = arith.mulf %1432, %1348 : vector<1x1xf32>
    %1434 = arith.addf %1430, %1433 : vector<1x1xf32>
    %cst_174 = arith.constant 0.000000e+00 : f32
    %1435 = vector.broadcast %cst_174 : f32 to vector<1x1xf32>
    %1436 = arith.maximumf %1434, %1435 : vector<1x1xf32>
    %cst_175 = arith.constant 0.000000e+00 : f32
    %1437 = vector.broadcast %cst_175 : f32 to vector<1x1xf32>
    %c260 = arith.constant 260 : index
    %1438 = memref.load %arg5[%c260] : memref<376xf32, #tpu.memory_space<smem>>
    %1439 = vector.broadcast %1438 : f32 to vector<1x1xf32>
    %1440 = arith.addf %1437, %1439 : vector<1x1xf32>
    %c240 = arith.constant 240 : index
    %1441 = memref.load %arg5[%c240] : memref<376xf32, #tpu.memory_space<smem>>
    %1442 = vector.broadcast %1441 : f32 to vector<1x1xf32>
    %1443 = arith.mulf %1442, %1324 : vector<1x1xf32>
    %1444 = arith.addf %1440, %1443 : vector<1x1xf32>
    %c241 = arith.constant 241 : index
    %1445 = memref.load %arg5[%c241] : memref<376xf32, #tpu.memory_space<smem>>
    %1446 = vector.broadcast %1445 : f32 to vector<1x1xf32>
    %1447 = arith.mulf %1446, %1332 : vector<1x1xf32>
    %1448 = arith.addf %1444, %1447 : vector<1x1xf32>
    %c242 = arith.constant 242 : index
    %1449 = memref.load %arg5[%c242] : memref<376xf32, #tpu.memory_space<smem>>
    %1450 = vector.broadcast %1449 : f32 to vector<1x1xf32>
    %1451 = arith.mulf %1450, %1340 : vector<1x1xf32>
    %1452 = arith.addf %1448, %1451 : vector<1x1xf32>
    %c243 = arith.constant 243 : index
    %1453 = memref.load %arg5[%c243] : memref<376xf32, #tpu.memory_space<smem>>
    %1454 = vector.broadcast %1453 : f32 to vector<1x1xf32>
    %1455 = arith.mulf %1454, %1348 : vector<1x1xf32>
    %1456 = arith.addf %1452, %1455 : vector<1x1xf32>
    %cst_176 = arith.constant 0.000000e+00 : f32
    %1457 = vector.broadcast %cst_176 : f32 to vector<1x1xf32>
    %1458 = arith.maximumf %1456, %1457 : vector<1x1xf32>
    %cst_177 = arith.constant 0.000000e+00 : f32
    %1459 = vector.broadcast %cst_177 : f32 to vector<1x1xf32>
    %c261 = arith.constant 261 : index
    %1460 = memref.load %arg5[%c261] : memref<376xf32, #tpu.memory_space<smem>>
    %1461 = vector.broadcast %1460 : f32 to vector<1x1xf32>
    %1462 = arith.addf %1459, %1461 : vector<1x1xf32>
    %c244 = arith.constant 244 : index
    %1463 = memref.load %arg5[%c244] : memref<376xf32, #tpu.memory_space<smem>>
    %1464 = vector.broadcast %1463 : f32 to vector<1x1xf32>
    %1465 = arith.mulf %1464, %1324 : vector<1x1xf32>
    %1466 = arith.addf %1462, %1465 : vector<1x1xf32>
    %c245 = arith.constant 245 : index
    %1467 = memref.load %arg5[%c245] : memref<376xf32, #tpu.memory_space<smem>>
    %1468 = vector.broadcast %1467 : f32 to vector<1x1xf32>
    %1469 = arith.mulf %1468, %1332 : vector<1x1xf32>
    %1470 = arith.addf %1466, %1469 : vector<1x1xf32>
    %c246 = arith.constant 246 : index
    %1471 = memref.load %arg5[%c246] : memref<376xf32, #tpu.memory_space<smem>>
    %1472 = vector.broadcast %1471 : f32 to vector<1x1xf32>
    %1473 = arith.mulf %1472, %1340 : vector<1x1xf32>
    %1474 = arith.addf %1470, %1473 : vector<1x1xf32>
    %c247 = arith.constant 247 : index
    %1475 = memref.load %arg5[%c247] : memref<376xf32, #tpu.memory_space<smem>>
    %1476 = vector.broadcast %1475 : f32 to vector<1x1xf32>
    %1477 = arith.mulf %1476, %1348 : vector<1x1xf32>
    %1478 = arith.addf %1474, %1477 : vector<1x1xf32>
    %cst_178 = arith.constant 0.000000e+00 : f32
    %1479 = vector.broadcast %cst_178 : f32 to vector<1x1xf32>
    %1480 = arith.maximumf %1478, %1479 : vector<1x1xf32>
    %cst_179 = arith.constant 0.000000e+00 : f32
    %1481 = vector.broadcast %cst_179 : f32 to vector<1x1xf32>
    %c262 = arith.constant 262 : index
    %1482 = memref.load %arg5[%c262] : memref<376xf32, #tpu.memory_space<smem>>
    %1483 = vector.broadcast %1482 : f32 to vector<1x1xf32>
    %1484 = arith.addf %1481, %1483 : vector<1x1xf32>
    %c248 = arith.constant 248 : index
    %1485 = memref.load %arg5[%c248] : memref<376xf32, #tpu.memory_space<smem>>
    %1486 = vector.broadcast %1485 : f32 to vector<1x1xf32>
    %1487 = arith.mulf %1486, %1324 : vector<1x1xf32>
    %1488 = arith.addf %1484, %1487 : vector<1x1xf32>
    %c249 = arith.constant 249 : index
    %1489 = memref.load %arg5[%c249] : memref<376xf32, #tpu.memory_space<smem>>
    %1490 = vector.broadcast %1489 : f32 to vector<1x1xf32>
    %1491 = arith.mulf %1490, %1332 : vector<1x1xf32>
    %1492 = arith.addf %1488, %1491 : vector<1x1xf32>
    %c250 = arith.constant 250 : index
    %1493 = memref.load %arg5[%c250] : memref<376xf32, #tpu.memory_space<smem>>
    %1494 = vector.broadcast %1493 : f32 to vector<1x1xf32>
    %1495 = arith.mulf %1494, %1340 : vector<1x1xf32>
    %1496 = arith.addf %1492, %1495 : vector<1x1xf32>
    %c251 = arith.constant 251 : index
    %1497 = memref.load %arg5[%c251] : memref<376xf32, #tpu.memory_space<smem>>
    %1498 = vector.broadcast %1497 : f32 to vector<1x1xf32>
    %1499 = arith.mulf %1498, %1348 : vector<1x1xf32>
    %1500 = arith.addf %1496, %1499 : vector<1x1xf32>
    %cst_180 = arith.constant 0.000000e+00 : f32
    %1501 = vector.broadcast %cst_180 : f32 to vector<1x1xf32>
    %1502 = arith.maximumf %1500, %1501 : vector<1x1xf32>
    %cst_181 = arith.constant 0.000000e+00 : f32
    %1503 = vector.broadcast %cst_181 : f32 to vector<1x1xf32>
    %c263 = arith.constant 263 : index
    %1504 = memref.load %arg5[%c263] : memref<376xf32, #tpu.memory_space<smem>>
    %1505 = vector.broadcast %1504 : f32 to vector<1x1xf32>
    %1506 = arith.addf %1503, %1505 : vector<1x1xf32>
    %c252 = arith.constant 252 : index
    %1507 = memref.load %arg5[%c252] : memref<376xf32, #tpu.memory_space<smem>>
    %1508 = vector.broadcast %1507 : f32 to vector<1x1xf32>
    %1509 = arith.mulf %1508, %1324 : vector<1x1xf32>
    %1510 = arith.addf %1506, %1509 : vector<1x1xf32>
    %c253 = arith.constant 253 : index
    %1511 = memref.load %arg5[%c253] : memref<376xf32, #tpu.memory_space<smem>>
    %1512 = vector.broadcast %1511 : f32 to vector<1x1xf32>
    %1513 = arith.mulf %1512, %1332 : vector<1x1xf32>
    %1514 = arith.addf %1510, %1513 : vector<1x1xf32>
    %c254 = arith.constant 254 : index
    %1515 = memref.load %arg5[%c254] : memref<376xf32, #tpu.memory_space<smem>>
    %1516 = vector.broadcast %1515 : f32 to vector<1x1xf32>
    %1517 = arith.mulf %1516, %1340 : vector<1x1xf32>
    %1518 = arith.addf %1514, %1517 : vector<1x1xf32>
    %c255 = arith.constant 255 : index
    %1519 = memref.load %arg5[%c255] : memref<376xf32, #tpu.memory_space<smem>>
    %1520 = vector.broadcast %1519 : f32 to vector<1x1xf32>
    %1521 = arith.mulf %1520, %1348 : vector<1x1xf32>
    %1522 = arith.addf %1518, %1521 : vector<1x1xf32>
    %cst_182 = arith.constant 0.000000e+00 : f32
    %1523 = vector.broadcast %cst_182 : f32 to vector<1x1xf32>
    %1524 = arith.maximumf %1522, %1523 : vector<1x1xf32>
    %cst_183 = arith.constant 0.000000e+00 : f32
    %1525 = vector.broadcast %cst_183 : f32 to vector<1x1xf32>
    %c296 = arith.constant 296 : index
    %1526 = memref.load %arg5[%c296] : memref<376xf32, #tpu.memory_space<smem>>
    %1527 = vector.broadcast %1526 : f32 to vector<1x1xf32>
    %1528 = arith.addf %1525, %1527 : vector<1x1xf32>
    %c264 = arith.constant 264 : index
    %1529 = memref.load %arg5[%c264] : memref<376xf32, #tpu.memory_space<smem>>
    %1530 = vector.broadcast %1529 : f32 to vector<1x1xf32>
    %1531 = arith.mulf %1530, %1370 : vector<1x1xf32>
    %1532 = arith.addf %1528, %1531 : vector<1x1xf32>
    %c265 = arith.constant 265 : index
    %1533 = memref.load %arg5[%c265] : memref<376xf32, #tpu.memory_space<smem>>
    %1534 = vector.broadcast %1533 : f32 to vector<1x1xf32>
    %1535 = arith.mulf %1534, %1392 : vector<1x1xf32>
    %1536 = arith.addf %1532, %1535 : vector<1x1xf32>
    %c266 = arith.constant 266 : index
    %1537 = memref.load %arg5[%c266] : memref<376xf32, #tpu.memory_space<smem>>
    %1538 = vector.broadcast %1537 : f32 to vector<1x1xf32>
    %1539 = arith.mulf %1538, %1414 : vector<1x1xf32>
    %1540 = arith.addf %1536, %1539 : vector<1x1xf32>
    %c267 = arith.constant 267 : index
    %1541 = memref.load %arg5[%c267] : memref<376xf32, #tpu.memory_space<smem>>
    %1542 = vector.broadcast %1541 : f32 to vector<1x1xf32>
    %1543 = arith.mulf %1542, %1436 : vector<1x1xf32>
    %1544 = arith.addf %1540, %1543 : vector<1x1xf32>
    %c268 = arith.constant 268 : index
    %1545 = memref.load %arg5[%c268] : memref<376xf32, #tpu.memory_space<smem>>
    %1546 = vector.broadcast %1545 : f32 to vector<1x1xf32>
    %1547 = arith.mulf %1546, %1458 : vector<1x1xf32>
    %1548 = arith.addf %1544, %1547 : vector<1x1xf32>
    %c269 = arith.constant 269 : index
    %1549 = memref.load %arg5[%c269] : memref<376xf32, #tpu.memory_space<smem>>
    %1550 = vector.broadcast %1549 : f32 to vector<1x1xf32>
    %1551 = arith.mulf %1550, %1480 : vector<1x1xf32>
    %1552 = arith.addf %1548, %1551 : vector<1x1xf32>
    %c270 = arith.constant 270 : index
    %1553 = memref.load %arg5[%c270] : memref<376xf32, #tpu.memory_space<smem>>
    %1554 = vector.broadcast %1553 : f32 to vector<1x1xf32>
    %1555 = arith.mulf %1554, %1502 : vector<1x1xf32>
    %1556 = arith.addf %1552, %1555 : vector<1x1xf32>
    %c271 = arith.constant 271 : index
    %1557 = memref.load %arg5[%c271] : memref<376xf32, #tpu.memory_space<smem>>
    %1558 = vector.broadcast %1557 : f32 to vector<1x1xf32>
    %1559 = arith.mulf %1558, %1524 : vector<1x1xf32>
    %1560 = arith.addf %1556, %1559 : vector<1x1xf32>
    %cst_184 = arith.constant 0.000000e+00 : f32
    %1561 = vector.broadcast %cst_184 : f32 to vector<1x1xf32>
    %c297 = arith.constant 297 : index
    %1562 = memref.load %arg5[%c297] : memref<376xf32, #tpu.memory_space<smem>>
    %1563 = vector.broadcast %1562 : f32 to vector<1x1xf32>
    %1564 = arith.addf %1561, %1563 : vector<1x1xf32>
    %c272 = arith.constant 272 : index
    %1565 = memref.load %arg5[%c272] : memref<376xf32, #tpu.memory_space<smem>>
    %1566 = vector.broadcast %1565 : f32 to vector<1x1xf32>
    %1567 = arith.mulf %1566, %1370 : vector<1x1xf32>
    %1568 = arith.addf %1564, %1567 : vector<1x1xf32>
    %c273 = arith.constant 273 : index
    %1569 = memref.load %arg5[%c273] : memref<376xf32, #tpu.memory_space<smem>>
    %1570 = vector.broadcast %1569 : f32 to vector<1x1xf32>
    %1571 = arith.mulf %1570, %1392 : vector<1x1xf32>
    %1572 = arith.addf %1568, %1571 : vector<1x1xf32>
    %c274 = arith.constant 274 : index
    %1573 = memref.load %arg5[%c274] : memref<376xf32, #tpu.memory_space<smem>>
    %1574 = vector.broadcast %1573 : f32 to vector<1x1xf32>
    %1575 = arith.mulf %1574, %1414 : vector<1x1xf32>
    %1576 = arith.addf %1572, %1575 : vector<1x1xf32>
    %c275 = arith.constant 275 : index
    %1577 = memref.load %arg5[%c275] : memref<376xf32, #tpu.memory_space<smem>>
    %1578 = vector.broadcast %1577 : f32 to vector<1x1xf32>
    %1579 = arith.mulf %1578, %1436 : vector<1x1xf32>
    %1580 = arith.addf %1576, %1579 : vector<1x1xf32>
    %c276 = arith.constant 276 : index
    %1581 = memref.load %arg5[%c276] : memref<376xf32, #tpu.memory_space<smem>>
    %1582 = vector.broadcast %1581 : f32 to vector<1x1xf32>
    %1583 = arith.mulf %1582, %1458 : vector<1x1xf32>
    %1584 = arith.addf %1580, %1583 : vector<1x1xf32>
    %c277 = arith.constant 277 : index
    %1585 = memref.load %arg5[%c277] : memref<376xf32, #tpu.memory_space<smem>>
    %1586 = vector.broadcast %1585 : f32 to vector<1x1xf32>
    %1587 = arith.mulf %1586, %1480 : vector<1x1xf32>
    %1588 = arith.addf %1584, %1587 : vector<1x1xf32>
    %c278 = arith.constant 278 : index
    %1589 = memref.load %arg5[%c278] : memref<376xf32, #tpu.memory_space<smem>>
    %1590 = vector.broadcast %1589 : f32 to vector<1x1xf32>
    %1591 = arith.mulf %1590, %1502 : vector<1x1xf32>
    %1592 = arith.addf %1588, %1591 : vector<1x1xf32>
    %c279 = arith.constant 279 : index
    %1593 = memref.load %arg5[%c279] : memref<376xf32, #tpu.memory_space<smem>>
    %1594 = vector.broadcast %1593 : f32 to vector<1x1xf32>
    %1595 = arith.mulf %1594, %1524 : vector<1x1xf32>
    %1596 = arith.addf %1592, %1595 : vector<1x1xf32>
    %cst_185 = arith.constant 0.000000e+00 : f32
    %1597 = vector.broadcast %cst_185 : f32 to vector<1x1xf32>
    %c298 = arith.constant 298 : index
    %1598 = memref.load %arg5[%c298] : memref<376xf32, #tpu.memory_space<smem>>
    %1599 = vector.broadcast %1598 : f32 to vector<1x1xf32>
    %1600 = arith.addf %1597, %1599 : vector<1x1xf32>
    %c280 = arith.constant 280 : index
    %1601 = memref.load %arg5[%c280] : memref<376xf32, #tpu.memory_space<smem>>
    %1602 = vector.broadcast %1601 : f32 to vector<1x1xf32>
    %1603 = arith.mulf %1602, %1370 : vector<1x1xf32>
    %1604 = arith.addf %1600, %1603 : vector<1x1xf32>
    %c281 = arith.constant 281 : index
    %1605 = memref.load %arg5[%c281] : memref<376xf32, #tpu.memory_space<smem>>
    %1606 = vector.broadcast %1605 : f32 to vector<1x1xf32>
    %1607 = arith.mulf %1606, %1392 : vector<1x1xf32>
    %1608 = arith.addf %1604, %1607 : vector<1x1xf32>
    %c282 = arith.constant 282 : index
    %1609 = memref.load %arg5[%c282] : memref<376xf32, #tpu.memory_space<smem>>
    %1610 = vector.broadcast %1609 : f32 to vector<1x1xf32>
    %1611 = arith.mulf %1610, %1414 : vector<1x1xf32>
    %1612 = arith.addf %1608, %1611 : vector<1x1xf32>
    %c283 = arith.constant 283 : index
    %1613 = memref.load %arg5[%c283] : memref<376xf32, #tpu.memory_space<smem>>
    %1614 = vector.broadcast %1613 : f32 to vector<1x1xf32>
    %1615 = arith.mulf %1614, %1436 : vector<1x1xf32>
    %1616 = arith.addf %1612, %1615 : vector<1x1xf32>
    %c284 = arith.constant 284 : index
    %1617 = memref.load %arg5[%c284] : memref<376xf32, #tpu.memory_space<smem>>
    %1618 = vector.broadcast %1617 : f32 to vector<1x1xf32>
    %1619 = arith.mulf %1618, %1458 : vector<1x1xf32>
    %1620 = arith.addf %1616, %1619 : vector<1x1xf32>
    %c285 = arith.constant 285 : index
    %1621 = memref.load %arg5[%c285] : memref<376xf32, #tpu.memory_space<smem>>
    %1622 = vector.broadcast %1621 : f32 to vector<1x1xf32>
    %1623 = arith.mulf %1622, %1480 : vector<1x1xf32>
    %1624 = arith.addf %1620, %1623 : vector<1x1xf32>
    %c286 = arith.constant 286 : index
    %1625 = memref.load %arg5[%c286] : memref<376xf32, #tpu.memory_space<smem>>
    %1626 = vector.broadcast %1625 : f32 to vector<1x1xf32>
    %1627 = arith.mulf %1626, %1502 : vector<1x1xf32>
    %1628 = arith.addf %1624, %1627 : vector<1x1xf32>
    %c287 = arith.constant 287 : index
    %1629 = memref.load %arg5[%c287] : memref<376xf32, #tpu.memory_space<smem>>
    %1630 = vector.broadcast %1629 : f32 to vector<1x1xf32>
    %1631 = arith.mulf %1630, %1524 : vector<1x1xf32>
    %1632 = arith.addf %1628, %1631 : vector<1x1xf32>
    %cst_186 = arith.constant 0.000000e+00 : f32
    %1633 = vector.broadcast %cst_186 : f32 to vector<1x1xf32>
    %c299 = arith.constant 299 : index
    %1634 = memref.load %arg5[%c299] : memref<376xf32, #tpu.memory_space<smem>>
    %1635 = vector.broadcast %1634 : f32 to vector<1x1xf32>
    %1636 = arith.addf %1633, %1635 : vector<1x1xf32>
    %c288 = arith.constant 288 : index
    %1637 = memref.load %arg5[%c288] : memref<376xf32, #tpu.memory_space<smem>>
    %1638 = vector.broadcast %1637 : f32 to vector<1x1xf32>
    %1639 = arith.mulf %1638, %1370 : vector<1x1xf32>
    %1640 = arith.addf %1636, %1639 : vector<1x1xf32>
    %c289 = arith.constant 289 : index
    %1641 = memref.load %arg5[%c289] : memref<376xf32, #tpu.memory_space<smem>>
    %1642 = vector.broadcast %1641 : f32 to vector<1x1xf32>
    %1643 = arith.mulf %1642, %1392 : vector<1x1xf32>
    %1644 = arith.addf %1640, %1643 : vector<1x1xf32>
    %c290 = arith.constant 290 : index
    %1645 = memref.load %arg5[%c290] : memref<376xf32, #tpu.memory_space<smem>>
    %1646 = vector.broadcast %1645 : f32 to vector<1x1xf32>
    %1647 = arith.mulf %1646, %1414 : vector<1x1xf32>
    %1648 = arith.addf %1644, %1647 : vector<1x1xf32>
    %c291 = arith.constant 291 : index
    %1649 = memref.load %arg5[%c291] : memref<376xf32, #tpu.memory_space<smem>>
    %1650 = vector.broadcast %1649 : f32 to vector<1x1xf32>
    %1651 = arith.mulf %1650, %1436 : vector<1x1xf32>
    %1652 = arith.addf %1648, %1651 : vector<1x1xf32>
    %c292 = arith.constant 292 : index
    %1653 = memref.load %arg5[%c292] : memref<376xf32, #tpu.memory_space<smem>>
    %1654 = vector.broadcast %1653 : f32 to vector<1x1xf32>
    %1655 = arith.mulf %1654, %1458 : vector<1x1xf32>
    %1656 = arith.addf %1652, %1655 : vector<1x1xf32>
    %c293 = arith.constant 293 : index
    %1657 = memref.load %arg5[%c293] : memref<376xf32, #tpu.memory_space<smem>>
    %1658 = vector.broadcast %1657 : f32 to vector<1x1xf32>
    %1659 = arith.mulf %1658, %1480 : vector<1x1xf32>
    %1660 = arith.addf %1656, %1659 : vector<1x1xf32>
    %c294 = arith.constant 294 : index
    %1661 = memref.load %arg5[%c294] : memref<376xf32, #tpu.memory_space<smem>>
    %1662 = vector.broadcast %1661 : f32 to vector<1x1xf32>
    %1663 = arith.mulf %1662, %1502 : vector<1x1xf32>
    %1664 = arith.addf %1660, %1663 : vector<1x1xf32>
    %c295 = arith.constant 295 : index
    %1665 = memref.load %arg5[%c295] : memref<376xf32, #tpu.memory_space<smem>>
    %1666 = vector.broadcast %1665 : f32 to vector<1x1xf32>
    %1667 = arith.mulf %1666, %1524 : vector<1x1xf32>
    %1668 = arith.addf %1664, %1667 : vector<1x1xf32>
    %1669 = vector.broadcast %1560 : vector<1x1xf32> to vector<16x22xf32>
    %1670 = arith.addf %1208, %1669 : vector<16x22xf32>
    %1671 = arith.negf %1670 : vector<16x22xf32>
    %1672 = math.exp %1671 : vector<16x22xf32>
    %cst_187 = arith.constant 1.000000e+00 : f32
    %1673 = vector.broadcast %cst_187 : f32 to vector<16x22xf32>
    %1674 = arith.addf %1673, %1672 : vector<16x22xf32>
    %1675 = arith.divf %1673, %1674 : vector<16x22xf32>
    %1676 = vector.broadcast %1596 : vector<1x1xf32> to vector<16x22xf32>
    %1677 = arith.addf %1244, %1676 : vector<16x22xf32>
    %1678 = arith.negf %1677 : vector<16x22xf32>
    %1679 = math.exp %1678 : vector<16x22xf32>
    %cst_188 = arith.constant 1.000000e+00 : f32
    %1680 = vector.broadcast %cst_188 : f32 to vector<16x22xf32>
    %1681 = arith.addf %1680, %1679 : vector<16x22xf32>
    %1682 = arith.divf %1680, %1681 : vector<16x22xf32>
    %1683 = vector.broadcast %1632 : vector<1x1xf32> to vector<16x22xf32>
    %1684 = arith.addf %1280, %1683 : vector<16x22xf32>
    %1685 = arith.negf %1684 : vector<16x22xf32>
    %1686 = math.exp %1685 : vector<16x22xf32>
    %cst_189 = arith.constant 1.000000e+00 : f32
    %1687 = vector.broadcast %cst_189 : f32 to vector<16x22xf32>
    %1688 = arith.addf %1687, %1686 : vector<16x22xf32>
    %1689 = arith.divf %1687, %1688 : vector<16x22xf32>
    %1690 = vector.broadcast %1668 : vector<1x1xf32> to vector<16x22xf32>
    %1691 = arith.addf %1316, %1690 : vector<16x22xf32>
    %1692 = arith.negf %1691 : vector<16x22xf32>
    %1693 = math.exp %1692 : vector<16x22xf32>
    %cst_190 = arith.constant 1.000000e+00 : f32
    %1694 = vector.broadcast %cst_190 : f32 to vector<16x22xf32>
    %1695 = arith.addf %1694, %1693 : vector<16x22xf32>
    %1696 = arith.divf %1694, %1695 : vector<16x22xf32>
    %1697 = arith.mulf %893, %1675 : vector<16x22xf32>
    %cst_191 = arith.constant 1.000000e+00 : f32
    %1698 = vector.broadcast %cst_191 : f32 to vector<16x22xf32>
    %1699 = arith.subf %1698, %1675 : vector<16x22xf32>
    %1700 = arith.mulf %974, %1699 : vector<16x22xf32>
    %1701 = arith.addf %1697, %1700 : vector<16x22xf32>
    %1702 = arith.mulf %900, %1682 : vector<16x22xf32>
    %cst_192 = arith.constant 1.000000e+00 : f32
    %1703 = vector.broadcast %cst_192 : f32 to vector<16x22xf32>
    %1704 = arith.subf %1703, %1682 : vector<16x22xf32>
    %1705 = arith.mulf %980, %1704 : vector<16x22xf32>
    %1706 = arith.addf %1702, %1705 : vector<16x22xf32>
    %1707 = arith.mulf %907, %1689 : vector<16x22xf32>
    %cst_193 = arith.constant 1.000000e+00 : f32
    %1708 = vector.broadcast %cst_193 : f32 to vector<16x22xf32>
    %1709 = arith.subf %1708, %1689 : vector<16x22xf32>
    %1710 = arith.mulf %986, %1709 : vector<16x22xf32>
    %1711 = arith.addf %1707, %1710 : vector<16x22xf32>
    %1712 = arith.mulf %914, %1696 : vector<16x22xf32>
    %cst_194 = arith.constant 1.000000e+00 : f32
    %1713 = vector.broadcast %cst_194 : f32 to vector<16x22xf32>
    %1714 = arith.subf %1713, %1696 : vector<16x22xf32>
    %1715 = arith.mulf %992, %1714 : vector<16x22xf32>
    %1716 = arith.addf %1712, %1715 : vector<16x22xf32>
    %cst_195 = arith.constant 0.000000e+00 : f32
    %1717 = vector.broadcast %cst_195 : f32 to vector<16x22xf32>
    %c332 = arith.constant 332 : index
    %1718 = memref.load %arg5[%c332] : memref<376xf32, #tpu.memory_space<smem>>
    %1719 = vector.broadcast %1718 : f32 to vector<16x22xf32>
    %1720 = arith.addf %1717, %1719 : vector<16x22xf32>
    %c300 = arith.constant 300 : index
    %1721 = memref.load %arg5[%c300] : memref<376xf32, #tpu.memory_space<smem>>
    %1722 = vector.broadcast %1721 : f32 to vector<16x22xf32>
    %1723 = arith.mulf %1722, %1701 : vector<16x22xf32>
    %1724 = arith.addf %1720, %1723 : vector<16x22xf32>
    %c301 = arith.constant 301 : index
    %1725 = memref.load %arg5[%c301] : memref<376xf32, #tpu.memory_space<smem>>
    %1726 = vector.broadcast %1725 : f32 to vector<16x22xf32>
    %1727 = arith.mulf %1726, %1706 : vector<16x22xf32>
    %1728 = arith.addf %1724, %1727 : vector<16x22xf32>
    %c302 = arith.constant 302 : index
    %1729 = memref.load %arg5[%c302] : memref<376xf32, #tpu.memory_space<smem>>
    %1730 = vector.broadcast %1729 : f32 to vector<16x22xf32>
    %1731 = arith.mulf %1730, %1711 : vector<16x22xf32>
    %1732 = arith.addf %1728, %1731 : vector<16x22xf32>
    %c303 = arith.constant 303 : index
    %1733 = memref.load %arg5[%c303] : memref<376xf32, #tpu.memory_space<smem>>
    %1734 = vector.broadcast %1733 : f32 to vector<16x22xf32>
    %1735 = arith.mulf %1734, %1716 : vector<16x22xf32>
    %1736 = arith.addf %1732, %1735 : vector<16x22xf32>
    %cst_196 = arith.constant 0.000000e+00 : f32
    %1737 = vector.broadcast %cst_196 : f32 to vector<16x22xf32>
    %1738 = arith.maximumf %1736, %1737 : vector<16x22xf32>
    %cst_197 = arith.constant 0.000000e+00 : f32
    %1739 = vector.broadcast %cst_197 : f32 to vector<16x22xf32>
    %c333 = arith.constant 333 : index
    %1740 = memref.load %arg5[%c333] : memref<376xf32, #tpu.memory_space<smem>>
    %1741 = vector.broadcast %1740 : f32 to vector<16x22xf32>
    %1742 = arith.addf %1739, %1741 : vector<16x22xf32>
    %c304 = arith.constant 304 : index
    %1743 = memref.load %arg5[%c304] : memref<376xf32, #tpu.memory_space<smem>>
    %1744 = vector.broadcast %1743 : f32 to vector<16x22xf32>
    %1745 = arith.mulf %1744, %1701 : vector<16x22xf32>
    %1746 = arith.addf %1742, %1745 : vector<16x22xf32>
    %c305 = arith.constant 305 : index
    %1747 = memref.load %arg5[%c305] : memref<376xf32, #tpu.memory_space<smem>>
    %1748 = vector.broadcast %1747 : f32 to vector<16x22xf32>
    %1749 = arith.mulf %1748, %1706 : vector<16x22xf32>
    %1750 = arith.addf %1746, %1749 : vector<16x22xf32>
    %c306 = arith.constant 306 : index
    %1751 = memref.load %arg5[%c306] : memref<376xf32, #tpu.memory_space<smem>>
    %1752 = vector.broadcast %1751 : f32 to vector<16x22xf32>
    %1753 = arith.mulf %1752, %1711 : vector<16x22xf32>
    %1754 = arith.addf %1750, %1753 : vector<16x22xf32>
    %c307 = arith.constant 307 : index
    %1755 = memref.load %arg5[%c307] : memref<376xf32, #tpu.memory_space<smem>>
    %1756 = vector.broadcast %1755 : f32 to vector<16x22xf32>
    %1757 = arith.mulf %1756, %1716 : vector<16x22xf32>
    %1758 = arith.addf %1754, %1757 : vector<16x22xf32>
    %cst_198 = arith.constant 0.000000e+00 : f32
    %1759 = vector.broadcast %cst_198 : f32 to vector<16x22xf32>
    %1760 = arith.maximumf %1758, %1759 : vector<16x22xf32>
    %cst_199 = arith.constant 0.000000e+00 : f32
    %1761 = vector.broadcast %cst_199 : f32 to vector<16x22xf32>
    %c334 = arith.constant 334 : index
    %1762 = memref.load %arg5[%c334] : memref<376xf32, #tpu.memory_space<smem>>
    %1763 = vector.broadcast %1762 : f32 to vector<16x22xf32>
    %1764 = arith.addf %1761, %1763 : vector<16x22xf32>
    %c308 = arith.constant 308 : index
    %1765 = memref.load %arg5[%c308] : memref<376xf32, #tpu.memory_space<smem>>
    %1766 = vector.broadcast %1765 : f32 to vector<16x22xf32>
    %1767 = arith.mulf %1766, %1701 : vector<16x22xf32>
    %1768 = arith.addf %1764, %1767 : vector<16x22xf32>
    %c309 = arith.constant 309 : index
    %1769 = memref.load %arg5[%c309] : memref<376xf32, #tpu.memory_space<smem>>
    %1770 = vector.broadcast %1769 : f32 to vector<16x22xf32>
    %1771 = arith.mulf %1770, %1706 : vector<16x22xf32>
    %1772 = arith.addf %1768, %1771 : vector<16x22xf32>
    %c310 = arith.constant 310 : index
    %1773 = memref.load %arg5[%c310] : memref<376xf32, #tpu.memory_space<smem>>
    %1774 = vector.broadcast %1773 : f32 to vector<16x22xf32>
    %1775 = arith.mulf %1774, %1711 : vector<16x22xf32>
    %1776 = arith.addf %1772, %1775 : vector<16x22xf32>
    %c311 = arith.constant 311 : index
    %1777 = memref.load %arg5[%c311] : memref<376xf32, #tpu.memory_space<smem>>
    %1778 = vector.broadcast %1777 : f32 to vector<16x22xf32>
    %1779 = arith.mulf %1778, %1716 : vector<16x22xf32>
    %1780 = arith.addf %1776, %1779 : vector<16x22xf32>
    %cst_200 = arith.constant 0.000000e+00 : f32
    %1781 = vector.broadcast %cst_200 : f32 to vector<16x22xf32>
    %1782 = arith.maximumf %1780, %1781 : vector<16x22xf32>
    %cst_201 = arith.constant 0.000000e+00 : f32
    %1783 = vector.broadcast %cst_201 : f32 to vector<16x22xf32>
    %c335 = arith.constant 335 : index
    %1784 = memref.load %arg5[%c335] : memref<376xf32, #tpu.memory_space<smem>>
    %1785 = vector.broadcast %1784 : f32 to vector<16x22xf32>
    %1786 = arith.addf %1783, %1785 : vector<16x22xf32>
    %c312 = arith.constant 312 : index
    %1787 = memref.load %arg5[%c312] : memref<376xf32, #tpu.memory_space<smem>>
    %1788 = vector.broadcast %1787 : f32 to vector<16x22xf32>
    %1789 = arith.mulf %1788, %1701 : vector<16x22xf32>
    %1790 = arith.addf %1786, %1789 : vector<16x22xf32>
    %c313 = arith.constant 313 : index
    %1791 = memref.load %arg5[%c313] : memref<376xf32, #tpu.memory_space<smem>>
    %1792 = vector.broadcast %1791 : f32 to vector<16x22xf32>
    %1793 = arith.mulf %1792, %1706 : vector<16x22xf32>
    %1794 = arith.addf %1790, %1793 : vector<16x22xf32>
    %c314 = arith.constant 314 : index
    %1795 = memref.load %arg5[%c314] : memref<376xf32, #tpu.memory_space<smem>>
    %1796 = vector.broadcast %1795 : f32 to vector<16x22xf32>
    %1797 = arith.mulf %1796, %1711 : vector<16x22xf32>
    %1798 = arith.addf %1794, %1797 : vector<16x22xf32>
    %c315 = arith.constant 315 : index
    %1799 = memref.load %arg5[%c315] : memref<376xf32, #tpu.memory_space<smem>>
    %1800 = vector.broadcast %1799 : f32 to vector<16x22xf32>
    %1801 = arith.mulf %1800, %1716 : vector<16x22xf32>
    %1802 = arith.addf %1798, %1801 : vector<16x22xf32>
    %cst_202 = arith.constant 0.000000e+00 : f32
    %1803 = vector.broadcast %cst_202 : f32 to vector<16x22xf32>
    %1804 = arith.maximumf %1802, %1803 : vector<16x22xf32>
    %cst_203 = arith.constant 0.000000e+00 : f32
    %1805 = vector.broadcast %cst_203 : f32 to vector<16x22xf32>
    %c336 = arith.constant 336 : index
    %1806 = memref.load %arg5[%c336] : memref<376xf32, #tpu.memory_space<smem>>
    %1807 = vector.broadcast %1806 : f32 to vector<16x22xf32>
    %1808 = arith.addf %1805, %1807 : vector<16x22xf32>
    %c316 = arith.constant 316 : index
    %1809 = memref.load %arg5[%c316] : memref<376xf32, #tpu.memory_space<smem>>
    %1810 = vector.broadcast %1809 : f32 to vector<16x22xf32>
    %1811 = arith.mulf %1810, %1701 : vector<16x22xf32>
    %1812 = arith.addf %1808, %1811 : vector<16x22xf32>
    %c317 = arith.constant 317 : index
    %1813 = memref.load %arg5[%c317] : memref<376xf32, #tpu.memory_space<smem>>
    %1814 = vector.broadcast %1813 : f32 to vector<16x22xf32>
    %1815 = arith.mulf %1814, %1706 : vector<16x22xf32>
    %1816 = arith.addf %1812, %1815 : vector<16x22xf32>
    %c318 = arith.constant 318 : index
    %1817 = memref.load %arg5[%c318] : memref<376xf32, #tpu.memory_space<smem>>
    %1818 = vector.broadcast %1817 : f32 to vector<16x22xf32>
    %1819 = arith.mulf %1818, %1711 : vector<16x22xf32>
    %1820 = arith.addf %1816, %1819 : vector<16x22xf32>
    %c319 = arith.constant 319 : index
    %1821 = memref.load %arg5[%c319] : memref<376xf32, #tpu.memory_space<smem>>
    %1822 = vector.broadcast %1821 : f32 to vector<16x22xf32>
    %1823 = arith.mulf %1822, %1716 : vector<16x22xf32>
    %1824 = arith.addf %1820, %1823 : vector<16x22xf32>
    %cst_204 = arith.constant 0.000000e+00 : f32
    %1825 = vector.broadcast %cst_204 : f32 to vector<16x22xf32>
    %1826 = arith.maximumf %1824, %1825 : vector<16x22xf32>
    %cst_205 = arith.constant 0.000000e+00 : f32
    %1827 = vector.broadcast %cst_205 : f32 to vector<16x22xf32>
    %c337 = arith.constant 337 : index
    %1828 = memref.load %arg5[%c337] : memref<376xf32, #tpu.memory_space<smem>>
    %1829 = vector.broadcast %1828 : f32 to vector<16x22xf32>
    %1830 = arith.addf %1827, %1829 : vector<16x22xf32>
    %c320 = arith.constant 320 : index
    %1831 = memref.load %arg5[%c320] : memref<376xf32, #tpu.memory_space<smem>>
    %1832 = vector.broadcast %1831 : f32 to vector<16x22xf32>
    %1833 = arith.mulf %1832, %1701 : vector<16x22xf32>
    %1834 = arith.addf %1830, %1833 : vector<16x22xf32>
    %c321 = arith.constant 321 : index
    %1835 = memref.load %arg5[%c321] : memref<376xf32, #tpu.memory_space<smem>>
    %1836 = vector.broadcast %1835 : f32 to vector<16x22xf32>
    %1837 = arith.mulf %1836, %1706 : vector<16x22xf32>
    %1838 = arith.addf %1834, %1837 : vector<16x22xf32>
    %c322 = arith.constant 322 : index
    %1839 = memref.load %arg5[%c322] : memref<376xf32, #tpu.memory_space<smem>>
    %1840 = vector.broadcast %1839 : f32 to vector<16x22xf32>
    %1841 = arith.mulf %1840, %1711 : vector<16x22xf32>
    %1842 = arith.addf %1838, %1841 : vector<16x22xf32>
    %c323 = arith.constant 323 : index
    %1843 = memref.load %arg5[%c323] : memref<376xf32, #tpu.memory_space<smem>>
    %1844 = vector.broadcast %1843 : f32 to vector<16x22xf32>
    %1845 = arith.mulf %1844, %1716 : vector<16x22xf32>
    %1846 = arith.addf %1842, %1845 : vector<16x22xf32>
    %cst_206 = arith.constant 0.000000e+00 : f32
    %1847 = vector.broadcast %cst_206 : f32 to vector<16x22xf32>
    %1848 = arith.maximumf %1846, %1847 : vector<16x22xf32>
    %cst_207 = arith.constant 0.000000e+00 : f32
    %1849 = vector.broadcast %cst_207 : f32 to vector<16x22xf32>
    %c338 = arith.constant 338 : index
    %1850 = memref.load %arg5[%c338] : memref<376xf32, #tpu.memory_space<smem>>
    %1851 = vector.broadcast %1850 : f32 to vector<16x22xf32>
    %1852 = arith.addf %1849, %1851 : vector<16x22xf32>
    %c324 = arith.constant 324 : index
    %1853 = memref.load %arg5[%c324] : memref<376xf32, #tpu.memory_space<smem>>
    %1854 = vector.broadcast %1853 : f32 to vector<16x22xf32>
    %1855 = arith.mulf %1854, %1701 : vector<16x22xf32>
    %1856 = arith.addf %1852, %1855 : vector<16x22xf32>
    %c325 = arith.constant 325 : index
    %1857 = memref.load %arg5[%c325] : memref<376xf32, #tpu.memory_space<smem>>
    %1858 = vector.broadcast %1857 : f32 to vector<16x22xf32>
    %1859 = arith.mulf %1858, %1706 : vector<16x22xf32>
    %1860 = arith.addf %1856, %1859 : vector<16x22xf32>
    %c326 = arith.constant 326 : index
    %1861 = memref.load %arg5[%c326] : memref<376xf32, #tpu.memory_space<smem>>
    %1862 = vector.broadcast %1861 : f32 to vector<16x22xf32>
    %1863 = arith.mulf %1862, %1711 : vector<16x22xf32>
    %1864 = arith.addf %1860, %1863 : vector<16x22xf32>
    %c327 = arith.constant 327 : index
    %1865 = memref.load %arg5[%c327] : memref<376xf32, #tpu.memory_space<smem>>
    %1866 = vector.broadcast %1865 : f32 to vector<16x22xf32>
    %1867 = arith.mulf %1866, %1716 : vector<16x22xf32>
    %1868 = arith.addf %1864, %1867 : vector<16x22xf32>
    %cst_208 = arith.constant 0.000000e+00 : f32
    %1869 = vector.broadcast %cst_208 : f32 to vector<16x22xf32>
    %1870 = arith.maximumf %1868, %1869 : vector<16x22xf32>
    %cst_209 = arith.constant 0.000000e+00 : f32
    %1871 = vector.broadcast %cst_209 : f32 to vector<16x22xf32>
    %c339 = arith.constant 339 : index
    %1872 = memref.load %arg5[%c339] : memref<376xf32, #tpu.memory_space<smem>>
    %1873 = vector.broadcast %1872 : f32 to vector<16x22xf32>
    %1874 = arith.addf %1871, %1873 : vector<16x22xf32>
    %c328 = arith.constant 328 : index
    %1875 = memref.load %arg5[%c328] : memref<376xf32, #tpu.memory_space<smem>>
    %1876 = vector.broadcast %1875 : f32 to vector<16x22xf32>
    %1877 = arith.mulf %1876, %1701 : vector<16x22xf32>
    %1878 = arith.addf %1874, %1877 : vector<16x22xf32>
    %c329 = arith.constant 329 : index
    %1879 = memref.load %arg5[%c329] : memref<376xf32, #tpu.memory_space<smem>>
    %1880 = vector.broadcast %1879 : f32 to vector<16x22xf32>
    %1881 = arith.mulf %1880, %1706 : vector<16x22xf32>
    %1882 = arith.addf %1878, %1881 : vector<16x22xf32>
    %c330 = arith.constant 330 : index
    %1883 = memref.load %arg5[%c330] : memref<376xf32, #tpu.memory_space<smem>>
    %1884 = vector.broadcast %1883 : f32 to vector<16x22xf32>
    %1885 = arith.mulf %1884, %1711 : vector<16x22xf32>
    %1886 = arith.addf %1882, %1885 : vector<16x22xf32>
    %c331 = arith.constant 331 : index
    %1887 = memref.load %arg5[%c331] : memref<376xf32, #tpu.memory_space<smem>>
    %1888 = vector.broadcast %1887 : f32 to vector<16x22xf32>
    %1889 = arith.mulf %1888, %1716 : vector<16x22xf32>
    %1890 = arith.addf %1886, %1889 : vector<16x22xf32>
    %cst_210 = arith.constant 0.000000e+00 : f32
    %1891 = vector.broadcast %cst_210 : f32 to vector<16x22xf32>
    %1892 = arith.maximumf %1890, %1891 : vector<16x22xf32>
    %cst_211 = arith.constant 0.000000e+00 : f32
    %1893 = vector.broadcast %cst_211 : f32 to vector<16x22xf32>
    %c372 = arith.constant 372 : index
    %1894 = memref.load %arg5[%c372] : memref<376xf32, #tpu.memory_space<smem>>
    %1895 = vector.broadcast %1894 : f32 to vector<16x22xf32>
    %1896 = arith.addf %1893, %1895 : vector<16x22xf32>
    %c340 = arith.constant 340 : index
    %1897 = memref.load %arg5[%c340] : memref<376xf32, #tpu.memory_space<smem>>
    %1898 = vector.broadcast %1897 : f32 to vector<16x22xf32>
    %1899 = arith.mulf %1898, %1738 : vector<16x22xf32>
    %1900 = arith.addf %1896, %1899 : vector<16x22xf32>
    %c341 = arith.constant 341 : index
    %1901 = memref.load %arg5[%c341] : memref<376xf32, #tpu.memory_space<smem>>
    %1902 = vector.broadcast %1901 : f32 to vector<16x22xf32>
    %1903 = arith.mulf %1902, %1760 : vector<16x22xf32>
    %1904 = arith.addf %1900, %1903 : vector<16x22xf32>
    %c342 = arith.constant 342 : index
    %1905 = memref.load %arg5[%c342] : memref<376xf32, #tpu.memory_space<smem>>
    %1906 = vector.broadcast %1905 : f32 to vector<16x22xf32>
    %1907 = arith.mulf %1906, %1782 : vector<16x22xf32>
    %1908 = arith.addf %1904, %1907 : vector<16x22xf32>
    %c343 = arith.constant 343 : index
    %1909 = memref.load %arg5[%c343] : memref<376xf32, #tpu.memory_space<smem>>
    %1910 = vector.broadcast %1909 : f32 to vector<16x22xf32>
    %1911 = arith.mulf %1910, %1804 : vector<16x22xf32>
    %1912 = arith.addf %1908, %1911 : vector<16x22xf32>
    %c344 = arith.constant 344 : index
    %1913 = memref.load %arg5[%c344] : memref<376xf32, #tpu.memory_space<smem>>
    %1914 = vector.broadcast %1913 : f32 to vector<16x22xf32>
    %1915 = arith.mulf %1914, %1826 : vector<16x22xf32>
    %1916 = arith.addf %1912, %1915 : vector<16x22xf32>
    %c345 = arith.constant 345 : index
    %1917 = memref.load %arg5[%c345] : memref<376xf32, #tpu.memory_space<smem>>
    %1918 = vector.broadcast %1917 : f32 to vector<16x22xf32>
    %1919 = arith.mulf %1918, %1848 : vector<16x22xf32>
    %1920 = arith.addf %1916, %1919 : vector<16x22xf32>
    %c346 = arith.constant 346 : index
    %1921 = memref.load %arg5[%c346] : memref<376xf32, #tpu.memory_space<smem>>
    %1922 = vector.broadcast %1921 : f32 to vector<16x22xf32>
    %1923 = arith.mulf %1922, %1870 : vector<16x22xf32>
    %1924 = arith.addf %1920, %1923 : vector<16x22xf32>
    %c347 = arith.constant 347 : index
    %1925 = memref.load %arg5[%c347] : memref<376xf32, #tpu.memory_space<smem>>
    %1926 = vector.broadcast %1925 : f32 to vector<16x22xf32>
    %1927 = arith.mulf %1926, %1892 : vector<16x22xf32>
    %1928 = arith.addf %1924, %1927 : vector<16x22xf32>
    %cst_212 = arith.constant 0.000000e+00 : f32
    %1929 = vector.broadcast %cst_212 : f32 to vector<16x22xf32>
    %c373 = arith.constant 373 : index
    %1930 = memref.load %arg5[%c373] : memref<376xf32, #tpu.memory_space<smem>>
    %1931 = vector.broadcast %1930 : f32 to vector<16x22xf32>
    %1932 = arith.addf %1929, %1931 : vector<16x22xf32>
    %c348 = arith.constant 348 : index
    %1933 = memref.load %arg5[%c348] : memref<376xf32, #tpu.memory_space<smem>>
    %1934 = vector.broadcast %1933 : f32 to vector<16x22xf32>
    %1935 = arith.mulf %1934, %1738 : vector<16x22xf32>
    %1936 = arith.addf %1932, %1935 : vector<16x22xf32>
    %c349 = arith.constant 349 : index
    %1937 = memref.load %arg5[%c349] : memref<376xf32, #tpu.memory_space<smem>>
    %1938 = vector.broadcast %1937 : f32 to vector<16x22xf32>
    %1939 = arith.mulf %1938, %1760 : vector<16x22xf32>
    %1940 = arith.addf %1936, %1939 : vector<16x22xf32>
    %c350 = arith.constant 350 : index
    %1941 = memref.load %arg5[%c350] : memref<376xf32, #tpu.memory_space<smem>>
    %1942 = vector.broadcast %1941 : f32 to vector<16x22xf32>
    %1943 = arith.mulf %1942, %1782 : vector<16x22xf32>
    %1944 = arith.addf %1940, %1943 : vector<16x22xf32>
    %c351 = arith.constant 351 : index
    %1945 = memref.load %arg5[%c351] : memref<376xf32, #tpu.memory_space<smem>>
    %1946 = vector.broadcast %1945 : f32 to vector<16x22xf32>
    %1947 = arith.mulf %1946, %1804 : vector<16x22xf32>
    %1948 = arith.addf %1944, %1947 : vector<16x22xf32>
    %c352 = arith.constant 352 : index
    %1949 = memref.load %arg5[%c352] : memref<376xf32, #tpu.memory_space<smem>>
    %1950 = vector.broadcast %1949 : f32 to vector<16x22xf32>
    %1951 = arith.mulf %1950, %1826 : vector<16x22xf32>
    %1952 = arith.addf %1948, %1951 : vector<16x22xf32>
    %c353 = arith.constant 353 : index
    %1953 = memref.load %arg5[%c353] : memref<376xf32, #tpu.memory_space<smem>>
    %1954 = vector.broadcast %1953 : f32 to vector<16x22xf32>
    %1955 = arith.mulf %1954, %1848 : vector<16x22xf32>
    %1956 = arith.addf %1952, %1955 : vector<16x22xf32>
    %c354 = arith.constant 354 : index
    %1957 = memref.load %arg5[%c354] : memref<376xf32, #tpu.memory_space<smem>>
    %1958 = vector.broadcast %1957 : f32 to vector<16x22xf32>
    %1959 = arith.mulf %1958, %1870 : vector<16x22xf32>
    %1960 = arith.addf %1956, %1959 : vector<16x22xf32>
    %c355 = arith.constant 355 : index
    %1961 = memref.load %arg5[%c355] : memref<376xf32, #tpu.memory_space<smem>>
    %1962 = vector.broadcast %1961 : f32 to vector<16x22xf32>
    %1963 = arith.mulf %1962, %1892 : vector<16x22xf32>
    %1964 = arith.addf %1960, %1963 : vector<16x22xf32>
    %cst_213 = arith.constant 0.000000e+00 : f32
    %1965 = vector.broadcast %cst_213 : f32 to vector<16x22xf32>
    %c374 = arith.constant 374 : index
    %1966 = memref.load %arg5[%c374] : memref<376xf32, #tpu.memory_space<smem>>
    %1967 = vector.broadcast %1966 : f32 to vector<16x22xf32>
    %1968 = arith.addf %1965, %1967 : vector<16x22xf32>
    %c356 = arith.constant 356 : index
    %1969 = memref.load %arg5[%c356] : memref<376xf32, #tpu.memory_space<smem>>
    %1970 = vector.broadcast %1969 : f32 to vector<16x22xf32>
    %1971 = arith.mulf %1970, %1738 : vector<16x22xf32>
    %1972 = arith.addf %1968, %1971 : vector<16x22xf32>
    %c357 = arith.constant 357 : index
    %1973 = memref.load %arg5[%c357] : memref<376xf32, #tpu.memory_space<smem>>
    %1974 = vector.broadcast %1973 : f32 to vector<16x22xf32>
    %1975 = arith.mulf %1974, %1760 : vector<16x22xf32>
    %1976 = arith.addf %1972, %1975 : vector<16x22xf32>
    %c358 = arith.constant 358 : index
    %1977 = memref.load %arg5[%c358] : memref<376xf32, #tpu.memory_space<smem>>
    %1978 = vector.broadcast %1977 : f32 to vector<16x22xf32>
    %1979 = arith.mulf %1978, %1782 : vector<16x22xf32>
    %1980 = arith.addf %1976, %1979 : vector<16x22xf32>
    %c359 = arith.constant 359 : index
    %1981 = memref.load %arg5[%c359] : memref<376xf32, #tpu.memory_space<smem>>
    %1982 = vector.broadcast %1981 : f32 to vector<16x22xf32>
    %1983 = arith.mulf %1982, %1804 : vector<16x22xf32>
    %1984 = arith.addf %1980, %1983 : vector<16x22xf32>
    %c360 = arith.constant 360 : index
    %1985 = memref.load %arg5[%c360] : memref<376xf32, #tpu.memory_space<smem>>
    %1986 = vector.broadcast %1985 : f32 to vector<16x22xf32>
    %1987 = arith.mulf %1986, %1826 : vector<16x22xf32>
    %1988 = arith.addf %1984, %1987 : vector<16x22xf32>
    %c361 = arith.constant 361 : index
    %1989 = memref.load %arg5[%c361] : memref<376xf32, #tpu.memory_space<smem>>
    %1990 = vector.broadcast %1989 : f32 to vector<16x22xf32>
    %1991 = arith.mulf %1990, %1848 : vector<16x22xf32>
    %1992 = arith.addf %1988, %1991 : vector<16x22xf32>
    %c362 = arith.constant 362 : index
    %1993 = memref.load %arg5[%c362] : memref<376xf32, #tpu.memory_space<smem>>
    %1994 = vector.broadcast %1993 : f32 to vector<16x22xf32>
    %1995 = arith.mulf %1994, %1870 : vector<16x22xf32>
    %1996 = arith.addf %1992, %1995 : vector<16x22xf32>
    %c363 = arith.constant 363 : index
    %1997 = memref.load %arg5[%c363] : memref<376xf32, #tpu.memory_space<smem>>
    %1998 = vector.broadcast %1997 : f32 to vector<16x22xf32>
    %1999 = arith.mulf %1998, %1892 : vector<16x22xf32>
    %2000 = arith.addf %1996, %1999 : vector<16x22xf32>
    %cst_214 = arith.constant 0.000000e+00 : f32
    %2001 = vector.broadcast %cst_214 : f32 to vector<16x22xf32>
    %c375 = arith.constant 375 : index
    %2002 = memref.load %arg5[%c375] : memref<376xf32, #tpu.memory_space<smem>>
    %2003 = vector.broadcast %2002 : f32 to vector<16x22xf32>
    %2004 = arith.addf %2001, %2003 : vector<16x22xf32>
    %c364 = arith.constant 364 : index
    %2005 = memref.load %arg5[%c364] : memref<376xf32, #tpu.memory_space<smem>>
    %2006 = vector.broadcast %2005 : f32 to vector<16x22xf32>
    %2007 = arith.mulf %2006, %1738 : vector<16x22xf32>
    %2008 = arith.addf %2004, %2007 : vector<16x22xf32>
    %c365 = arith.constant 365 : index
    %2009 = memref.load %arg5[%c365] : memref<376xf32, #tpu.memory_space<smem>>
    %2010 = vector.broadcast %2009 : f32 to vector<16x22xf32>
    %2011 = arith.mulf %2010, %1760 : vector<16x22xf32>
    %2012 = arith.addf %2008, %2011 : vector<16x22xf32>
    %c366 = arith.constant 366 : index
    %2013 = memref.load %arg5[%c366] : memref<376xf32, #tpu.memory_space<smem>>
    %2014 = vector.broadcast %2013 : f32 to vector<16x22xf32>
    %2015 = arith.mulf %2014, %1782 : vector<16x22xf32>
    %2016 = arith.addf %2012, %2015 : vector<16x22xf32>
    %c367 = arith.constant 367 : index
    %2017 = memref.load %arg5[%c367] : memref<376xf32, #tpu.memory_space<smem>>
    %2018 = vector.broadcast %2017 : f32 to vector<16x22xf32>
    %2019 = arith.mulf %2018, %1804 : vector<16x22xf32>
    %2020 = arith.addf %2016, %2019 : vector<16x22xf32>
    %c368 = arith.constant 368 : index
    %2021 = memref.load %arg5[%c368] : memref<376xf32, #tpu.memory_space<smem>>
    %2022 = vector.broadcast %2021 : f32 to vector<16x22xf32>
    %2023 = arith.mulf %2022, %1826 : vector<16x22xf32>
    %2024 = arith.addf %2020, %2023 : vector<16x22xf32>
    %c369 = arith.constant 369 : index
    %2025 = memref.load %arg5[%c369] : memref<376xf32, #tpu.memory_space<smem>>
    %2026 = vector.broadcast %2025 : f32 to vector<16x22xf32>
    %2027 = arith.mulf %2026, %1848 : vector<16x22xf32>
    %2028 = arith.addf %2024, %2027 : vector<16x22xf32>
    %c370 = arith.constant 370 : index
    %2029 = memref.load %arg5[%c370] : memref<376xf32, #tpu.memory_space<smem>>
    %2030 = vector.broadcast %2029 : f32 to vector<16x22xf32>
    %2031 = arith.mulf %2030, %1870 : vector<16x22xf32>
    %2032 = arith.addf %2028, %2031 : vector<16x22xf32>
    %c371 = arith.constant 371 : index
    %2033 = memref.load %arg5[%c371] : memref<376xf32, #tpu.memory_space<smem>>
    %2034 = vector.broadcast %2033 : f32 to vector<16x22xf32>
    %2035 = arith.mulf %2034, %1892 : vector<16x22xf32>
    %2036 = arith.addf %2032, %2035 : vector<16x22xf32>
    %cst_215 = arith.constant dense<0.000000e+00> : vector<16xf32>
    %2037 = vector.multi_reduction <add>, %1701, %cst_215 [1] : vector<16x22xf32> to vector<16xf32>
    %2038 = vector.shape_cast %2037 : vector<16xf32> to vector<16x1xf32>
    %cst_216 = arith.constant 2.200000e+01 : f32
    %2039 = vector.broadcast %cst_216 : f32 to vector<16x1xf32>
    %2040 = arith.divf %2038, %2039 : vector<16x1xf32>
    %cst_217 = arith.constant dense<0.000000e+00> : vector<1xf32>
    %2041 = vector.multi_reduction <add>, %2040, %cst_217 [0] : vector<16x1xf32> to vector<1xf32>
    %2042 = vector.shape_cast %2041 : vector<1xf32> to vector<1x1xf32>
    %cst_218 = arith.constant 1.600000e+01 : f32
    %2043 = vector.broadcast %cst_218 : f32 to vector<1x1xf32>
    %2044 = arith.divf %2042, %2043 : vector<1x1xf32>
    %cst_219 = arith.constant dense<0.000000e+00> : vector<16xf32>
    %2045 = vector.multi_reduction <add>, %1706, %cst_219 [1] : vector<16x22xf32> to vector<16xf32>
    %2046 = vector.shape_cast %2045 : vector<16xf32> to vector<16x1xf32>
    %cst_220 = arith.constant 2.200000e+01 : f32
    %2047 = vector.broadcast %cst_220 : f32 to vector<16x1xf32>
    %2048 = arith.divf %2046, %2047 : vector<16x1xf32>
    %cst_221 = arith.constant dense<0.000000e+00> : vector<1xf32>
    %2049 = vector.multi_reduction <add>, %2048, %cst_221 [0] : vector<16x1xf32> to vector<1xf32>
    %2050 = vector.shape_cast %2049 : vector<1xf32> to vector<1x1xf32>
    %cst_222 = arith.constant 1.600000e+01 : f32
    %2051 = vector.broadcast %cst_222 : f32 to vector<1x1xf32>
    %2052 = arith.divf %2050, %2051 : vector<1x1xf32>
    %cst_223 = arith.constant dense<0.000000e+00> : vector<16xf32>
    %2053 = vector.multi_reduction <add>, %1711, %cst_223 [1] : vector<16x22xf32> to vector<16xf32>
    %2054 = vector.shape_cast %2053 : vector<16xf32> to vector<16x1xf32>
    %cst_224 = arith.constant 2.200000e+01 : f32
    %2055 = vector.broadcast %cst_224 : f32 to vector<16x1xf32>
    %2056 = arith.divf %2054, %2055 : vector<16x1xf32>
    %cst_225 = arith.constant dense<0.000000e+00> : vector<1xf32>
    %2057 = vector.multi_reduction <add>, %2056, %cst_225 [0] : vector<16x1xf32> to vector<1xf32>
    %2058 = vector.shape_cast %2057 : vector<1xf32> to vector<1x1xf32>
    %cst_226 = arith.constant 1.600000e+01 : f32
    %2059 = vector.broadcast %cst_226 : f32 to vector<1x1xf32>
    %2060 = arith.divf %2058, %2059 : vector<1x1xf32>
    %cst_227 = arith.constant dense<0.000000e+00> : vector<16xf32>
    %2061 = vector.multi_reduction <add>, %1716, %cst_227 [1] : vector<16x22xf32> to vector<16xf32>
    %2062 = vector.shape_cast %2061 : vector<16xf32> to vector<16x1xf32>
    %cst_228 = arith.constant 2.200000e+01 : f32
    %2063 = vector.broadcast %cst_228 : f32 to vector<16x1xf32>
    %2064 = arith.divf %2062, %2063 : vector<16x1xf32>
    %cst_229 = arith.constant dense<0.000000e+00> : vector<1xf32>
    %2065 = vector.multi_reduction <add>, %2064, %cst_229 [0] : vector<16x1xf32> to vector<1xf32>
    %2066 = vector.shape_cast %2065 : vector<1xf32> to vector<1x1xf32>
    %cst_230 = arith.constant 1.600000e+01 : f32
    %2067 = vector.broadcast %cst_230 : f32 to vector<1x1xf32>
    %2068 = arith.divf %2066, %2067 : vector<1x1xf32>
    %cst_231 = arith.constant 0.000000e+00 : f32
    %2069 = vector.broadcast %cst_231 : f32 to vector<1x1xf32>
    %c256_232 = arith.constant 256 : index
    %2070 = memref.load %arg5[%c256_232] : memref<376xf32, #tpu.memory_space<smem>>
    %2071 = vector.broadcast %2070 : f32 to vector<1x1xf32>
    %2072 = arith.addf %2069, %2071 : vector<1x1xf32>
    %c224_233 = arith.constant 224 : index
    %2073 = memref.load %arg5[%c224_233] : memref<376xf32, #tpu.memory_space<smem>>
    %2074 = vector.broadcast %2073 : f32 to vector<1x1xf32>
    %2075 = arith.mulf %2074, %2044 : vector<1x1xf32>
    %2076 = arith.addf %2072, %2075 : vector<1x1xf32>
    %c225_234 = arith.constant 225 : index
    %2077 = memref.load %arg5[%c225_234] : memref<376xf32, #tpu.memory_space<smem>>
    %2078 = vector.broadcast %2077 : f32 to vector<1x1xf32>
    %2079 = arith.mulf %2078, %2052 : vector<1x1xf32>
    %2080 = arith.addf %2076, %2079 : vector<1x1xf32>
    %c226_235 = arith.constant 226 : index
    %2081 = memref.load %arg5[%c226_235] : memref<376xf32, #tpu.memory_space<smem>>
    %2082 = vector.broadcast %2081 : f32 to vector<1x1xf32>
    %2083 = arith.mulf %2082, %2060 : vector<1x1xf32>
    %2084 = arith.addf %2080, %2083 : vector<1x1xf32>
    %c227_236 = arith.constant 227 : index
    %2085 = memref.load %arg5[%c227_236] : memref<376xf32, #tpu.memory_space<smem>>
    %2086 = vector.broadcast %2085 : f32 to vector<1x1xf32>
    %2087 = arith.mulf %2086, %2068 : vector<1x1xf32>
    %2088 = arith.addf %2084, %2087 : vector<1x1xf32>
    %cst_237 = arith.constant 0.000000e+00 : f32
    %2089 = vector.broadcast %cst_237 : f32 to vector<1x1xf32>
    %2090 = arith.maximumf %2088, %2089 : vector<1x1xf32>
    %cst_238 = arith.constant 0.000000e+00 : f32
    %2091 = vector.broadcast %cst_238 : f32 to vector<1x1xf32>
    %c257_239 = arith.constant 257 : index
    %2092 = memref.load %arg5[%c257_239] : memref<376xf32, #tpu.memory_space<smem>>
    %2093 = vector.broadcast %2092 : f32 to vector<1x1xf32>
    %2094 = arith.addf %2091, %2093 : vector<1x1xf32>
    %c228_240 = arith.constant 228 : index
    %2095 = memref.load %arg5[%c228_240] : memref<376xf32, #tpu.memory_space<smem>>
    %2096 = vector.broadcast %2095 : f32 to vector<1x1xf32>
    %2097 = arith.mulf %2096, %2044 : vector<1x1xf32>
    %2098 = arith.addf %2094, %2097 : vector<1x1xf32>
    %c229_241 = arith.constant 229 : index
    %2099 = memref.load %arg5[%c229_241] : memref<376xf32, #tpu.memory_space<smem>>
    %2100 = vector.broadcast %2099 : f32 to vector<1x1xf32>
    %2101 = arith.mulf %2100, %2052 : vector<1x1xf32>
    %2102 = arith.addf %2098, %2101 : vector<1x1xf32>
    %c230_242 = arith.constant 230 : index
    %2103 = memref.load %arg5[%c230_242] : memref<376xf32, #tpu.memory_space<smem>>
    %2104 = vector.broadcast %2103 : f32 to vector<1x1xf32>
    %2105 = arith.mulf %2104, %2060 : vector<1x1xf32>
    %2106 = arith.addf %2102, %2105 : vector<1x1xf32>
    %c231_243 = arith.constant 231 : index
    %2107 = memref.load %arg5[%c231_243] : memref<376xf32, #tpu.memory_space<smem>>
    %2108 = vector.broadcast %2107 : f32 to vector<1x1xf32>
    %2109 = arith.mulf %2108, %2068 : vector<1x1xf32>
    %2110 = arith.addf %2106, %2109 : vector<1x1xf32>
    %cst_244 = arith.constant 0.000000e+00 : f32
    %2111 = vector.broadcast %cst_244 : f32 to vector<1x1xf32>
    %2112 = arith.maximumf %2110, %2111 : vector<1x1xf32>
    %cst_245 = arith.constant 0.000000e+00 : f32
    %2113 = vector.broadcast %cst_245 : f32 to vector<1x1xf32>
    %c258_246 = arith.constant 258 : index
    %2114 = memref.load %arg5[%c258_246] : memref<376xf32, #tpu.memory_space<smem>>
    %2115 = vector.broadcast %2114 : f32 to vector<1x1xf32>
    %2116 = arith.addf %2113, %2115 : vector<1x1xf32>
    %c232_247 = arith.constant 232 : index
    %2117 = memref.load %arg5[%c232_247] : memref<376xf32, #tpu.memory_space<smem>>
    %2118 = vector.broadcast %2117 : f32 to vector<1x1xf32>
    %2119 = arith.mulf %2118, %2044 : vector<1x1xf32>
    %2120 = arith.addf %2116, %2119 : vector<1x1xf32>
    %c233_248 = arith.constant 233 : index
    %2121 = memref.load %arg5[%c233_248] : memref<376xf32, #tpu.memory_space<smem>>
    %2122 = vector.broadcast %2121 : f32 to vector<1x1xf32>
    %2123 = arith.mulf %2122, %2052 : vector<1x1xf32>
    %2124 = arith.addf %2120, %2123 : vector<1x1xf32>
    %c234_249 = arith.constant 234 : index
    %2125 = memref.load %arg5[%c234_249] : memref<376xf32, #tpu.memory_space<smem>>
    %2126 = vector.broadcast %2125 : f32 to vector<1x1xf32>
    %2127 = arith.mulf %2126, %2060 : vector<1x1xf32>
    %2128 = arith.addf %2124, %2127 : vector<1x1xf32>
    %c235_250 = arith.constant 235 : index
    %2129 = memref.load %arg5[%c235_250] : memref<376xf32, #tpu.memory_space<smem>>
    %2130 = vector.broadcast %2129 : f32 to vector<1x1xf32>
    %2131 = arith.mulf %2130, %2068 : vector<1x1xf32>
    %2132 = arith.addf %2128, %2131 : vector<1x1xf32>
    %cst_251 = arith.constant 0.000000e+00 : f32
    %2133 = vector.broadcast %cst_251 : f32 to vector<1x1xf32>
    %2134 = arith.maximumf %2132, %2133 : vector<1x1xf32>
    %cst_252 = arith.constant 0.000000e+00 : f32
    %2135 = vector.broadcast %cst_252 : f32 to vector<1x1xf32>
    %c259_253 = arith.constant 259 : index
    %2136 = memref.load %arg5[%c259_253] : memref<376xf32, #tpu.memory_space<smem>>
    %2137 = vector.broadcast %2136 : f32 to vector<1x1xf32>
    %2138 = arith.addf %2135, %2137 : vector<1x1xf32>
    %c236_254 = arith.constant 236 : index
    %2139 = memref.load %arg5[%c236_254] : memref<376xf32, #tpu.memory_space<smem>>
    %2140 = vector.broadcast %2139 : f32 to vector<1x1xf32>
    %2141 = arith.mulf %2140, %2044 : vector<1x1xf32>
    %2142 = arith.addf %2138, %2141 : vector<1x1xf32>
    %c237_255 = arith.constant 237 : index
    %2143 = memref.load %arg5[%c237_255] : memref<376xf32, #tpu.memory_space<smem>>
    %2144 = vector.broadcast %2143 : f32 to vector<1x1xf32>
    %2145 = arith.mulf %2144, %2052 : vector<1x1xf32>
    %2146 = arith.addf %2142, %2145 : vector<1x1xf32>
    %c238_256 = arith.constant 238 : index
    %2147 = memref.load %arg5[%c238_256] : memref<376xf32, #tpu.memory_space<smem>>
    %2148 = vector.broadcast %2147 : f32 to vector<1x1xf32>
    %2149 = arith.mulf %2148, %2060 : vector<1x1xf32>
    %2150 = arith.addf %2146, %2149 : vector<1x1xf32>
    %c239_257 = arith.constant 239 : index
    %2151 = memref.load %arg5[%c239_257] : memref<376xf32, #tpu.memory_space<smem>>
    %2152 = vector.broadcast %2151 : f32 to vector<1x1xf32>
    %2153 = arith.mulf %2152, %2068 : vector<1x1xf32>
    %2154 = arith.addf %2150, %2153 : vector<1x1xf32>
    %cst_258 = arith.constant 0.000000e+00 : f32
    %2155 = vector.broadcast %cst_258 : f32 to vector<1x1xf32>
    %2156 = arith.maximumf %2154, %2155 : vector<1x1xf32>
    %cst_259 = arith.constant 0.000000e+00 : f32
    %2157 = vector.broadcast %cst_259 : f32 to vector<1x1xf32>
    %c260_260 = arith.constant 260 : index
    %2158 = memref.load %arg5[%c260_260] : memref<376xf32, #tpu.memory_space<smem>>
    %2159 = vector.broadcast %2158 : f32 to vector<1x1xf32>
    %2160 = arith.addf %2157, %2159 : vector<1x1xf32>
    %c240_261 = arith.constant 240 : index
    %2161 = memref.load %arg5[%c240_261] : memref<376xf32, #tpu.memory_space<smem>>
    %2162 = vector.broadcast %2161 : f32 to vector<1x1xf32>
    %2163 = arith.mulf %2162, %2044 : vector<1x1xf32>
    %2164 = arith.addf %2160, %2163 : vector<1x1xf32>
    %c241_262 = arith.constant 241 : index
    %2165 = memref.load %arg5[%c241_262] : memref<376xf32, #tpu.memory_space<smem>>
    %2166 = vector.broadcast %2165 : f32 to vector<1x1xf32>
    %2167 = arith.mulf %2166, %2052 : vector<1x1xf32>
    %2168 = arith.addf %2164, %2167 : vector<1x1xf32>
    %c242_263 = arith.constant 242 : index
    %2169 = memref.load %arg5[%c242_263] : memref<376xf32, #tpu.memory_space<smem>>
    %2170 = vector.broadcast %2169 : f32 to vector<1x1xf32>
    %2171 = arith.mulf %2170, %2060 : vector<1x1xf32>
    %2172 = arith.addf %2168, %2171 : vector<1x1xf32>
    %c243_264 = arith.constant 243 : index
    %2173 = memref.load %arg5[%c243_264] : memref<376xf32, #tpu.memory_space<smem>>
    %2174 = vector.broadcast %2173 : f32 to vector<1x1xf32>
    %2175 = arith.mulf %2174, %2068 : vector<1x1xf32>
    %2176 = arith.addf %2172, %2175 : vector<1x1xf32>
    %cst_265 = arith.constant 0.000000e+00 : f32
    %2177 = vector.broadcast %cst_265 : f32 to vector<1x1xf32>
    %2178 = arith.maximumf %2176, %2177 : vector<1x1xf32>
    %cst_266 = arith.constant 0.000000e+00 : f32
    %2179 = vector.broadcast %cst_266 : f32 to vector<1x1xf32>
    %c261_267 = arith.constant 261 : index
    %2180 = memref.load %arg5[%c261_267] : memref<376xf32, #tpu.memory_space<smem>>
    %2181 = vector.broadcast %2180 : f32 to vector<1x1xf32>
    %2182 = arith.addf %2179, %2181 : vector<1x1xf32>
    %c244_268 = arith.constant 244 : index
    %2183 = memref.load %arg5[%c244_268] : memref<376xf32, #tpu.memory_space<smem>>
    %2184 = vector.broadcast %2183 : f32 to vector<1x1xf32>
    %2185 = arith.mulf %2184, %2044 : vector<1x1xf32>
    %2186 = arith.addf %2182, %2185 : vector<1x1xf32>
    %c245_269 = arith.constant 245 : index
    %2187 = memref.load %arg5[%c245_269] : memref<376xf32, #tpu.memory_space<smem>>
    %2188 = vector.broadcast %2187 : f32 to vector<1x1xf32>
    %2189 = arith.mulf %2188, %2052 : vector<1x1xf32>
    %2190 = arith.addf %2186, %2189 : vector<1x1xf32>
    %c246_270 = arith.constant 246 : index
    %2191 = memref.load %arg5[%c246_270] : memref<376xf32, #tpu.memory_space<smem>>
    %2192 = vector.broadcast %2191 : f32 to vector<1x1xf32>
    %2193 = arith.mulf %2192, %2060 : vector<1x1xf32>
    %2194 = arith.addf %2190, %2193 : vector<1x1xf32>
    %c247_271 = arith.constant 247 : index
    %2195 = memref.load %arg5[%c247_271] : memref<376xf32, #tpu.memory_space<smem>>
    %2196 = vector.broadcast %2195 : f32 to vector<1x1xf32>
    %2197 = arith.mulf %2196, %2068 : vector<1x1xf32>
    %2198 = arith.addf %2194, %2197 : vector<1x1xf32>
    %cst_272 = arith.constant 0.000000e+00 : f32
    %2199 = vector.broadcast %cst_272 : f32 to vector<1x1xf32>
    %2200 = arith.maximumf %2198, %2199 : vector<1x1xf32>
    %cst_273 = arith.constant 0.000000e+00 : f32
    %2201 = vector.broadcast %cst_273 : f32 to vector<1x1xf32>
    %c262_274 = arith.constant 262 : index
    %2202 = memref.load %arg5[%c262_274] : memref<376xf32, #tpu.memory_space<smem>>
    %2203 = vector.broadcast %2202 : f32 to vector<1x1xf32>
    %2204 = arith.addf %2201, %2203 : vector<1x1xf32>
    %c248_275 = arith.constant 248 : index
    %2205 = memref.load %arg5[%c248_275] : memref<376xf32, #tpu.memory_space<smem>>
    %2206 = vector.broadcast %2205 : f32 to vector<1x1xf32>
    %2207 = arith.mulf %2206, %2044 : vector<1x1xf32>
    %2208 = arith.addf %2204, %2207 : vector<1x1xf32>
    %c249_276 = arith.constant 249 : index
    %2209 = memref.load %arg5[%c249_276] : memref<376xf32, #tpu.memory_space<smem>>
    %2210 = vector.broadcast %2209 : f32 to vector<1x1xf32>
    %2211 = arith.mulf %2210, %2052 : vector<1x1xf32>
    %2212 = arith.addf %2208, %2211 : vector<1x1xf32>
    %c250_277 = arith.constant 250 : index
    %2213 = memref.load %arg5[%c250_277] : memref<376xf32, #tpu.memory_space<smem>>
    %2214 = vector.broadcast %2213 : f32 to vector<1x1xf32>
    %2215 = arith.mulf %2214, %2060 : vector<1x1xf32>
    %2216 = arith.addf %2212, %2215 : vector<1x1xf32>
    %c251_278 = arith.constant 251 : index
    %2217 = memref.load %arg5[%c251_278] : memref<376xf32, #tpu.memory_space<smem>>
    %2218 = vector.broadcast %2217 : f32 to vector<1x1xf32>
    %2219 = arith.mulf %2218, %2068 : vector<1x1xf32>
    %2220 = arith.addf %2216, %2219 : vector<1x1xf32>
    %cst_279 = arith.constant 0.000000e+00 : f32
    %2221 = vector.broadcast %cst_279 : f32 to vector<1x1xf32>
    %2222 = arith.maximumf %2220, %2221 : vector<1x1xf32>
    %cst_280 = arith.constant 0.000000e+00 : f32
    %2223 = vector.broadcast %cst_280 : f32 to vector<1x1xf32>
    %c263_281 = arith.constant 263 : index
    %2224 = memref.load %arg5[%c263_281] : memref<376xf32, #tpu.memory_space<smem>>
    %2225 = vector.broadcast %2224 : f32 to vector<1x1xf32>
    %2226 = arith.addf %2223, %2225 : vector<1x1xf32>
    %c252_282 = arith.constant 252 : index
    %2227 = memref.load %arg5[%c252_282] : memref<376xf32, #tpu.memory_space<smem>>
    %2228 = vector.broadcast %2227 : f32 to vector<1x1xf32>
    %2229 = arith.mulf %2228, %2044 : vector<1x1xf32>
    %2230 = arith.addf %2226, %2229 : vector<1x1xf32>
    %c253_283 = arith.constant 253 : index
    %2231 = memref.load %arg5[%c253_283] : memref<376xf32, #tpu.memory_space<smem>>
    %2232 = vector.broadcast %2231 : f32 to vector<1x1xf32>
    %2233 = arith.mulf %2232, %2052 : vector<1x1xf32>
    %2234 = arith.addf %2230, %2233 : vector<1x1xf32>
    %c254_284 = arith.constant 254 : index
    %2235 = memref.load %arg5[%c254_284] : memref<376xf32, #tpu.memory_space<smem>>
    %2236 = vector.broadcast %2235 : f32 to vector<1x1xf32>
    %2237 = arith.mulf %2236, %2060 : vector<1x1xf32>
    %2238 = arith.addf %2234, %2237 : vector<1x1xf32>
    %c255_285 = arith.constant 255 : index
    %2239 = memref.load %arg5[%c255_285] : memref<376xf32, #tpu.memory_space<smem>>
    %2240 = vector.broadcast %2239 : f32 to vector<1x1xf32>
    %2241 = arith.mulf %2240, %2068 : vector<1x1xf32>
    %2242 = arith.addf %2238, %2241 : vector<1x1xf32>
    %cst_286 = arith.constant 0.000000e+00 : f32
    %2243 = vector.broadcast %cst_286 : f32 to vector<1x1xf32>
    %2244 = arith.maximumf %2242, %2243 : vector<1x1xf32>
    %cst_287 = arith.constant 0.000000e+00 : f32
    %2245 = vector.broadcast %cst_287 : f32 to vector<1x1xf32>
    %c296_288 = arith.constant 296 : index
    %2246 = memref.load %arg5[%c296_288] : memref<376xf32, #tpu.memory_space<smem>>
    %2247 = vector.broadcast %2246 : f32 to vector<1x1xf32>
    %2248 = arith.addf %2245, %2247 : vector<1x1xf32>
    %c264_289 = arith.constant 264 : index
    %2249 = memref.load %arg5[%c264_289] : memref<376xf32, #tpu.memory_space<smem>>
    %2250 = vector.broadcast %2249 : f32 to vector<1x1xf32>
    %2251 = arith.mulf %2250, %2090 : vector<1x1xf32>
    %2252 = arith.addf %2248, %2251 : vector<1x1xf32>
    %c265_290 = arith.constant 265 : index
    %2253 = memref.load %arg5[%c265_290] : memref<376xf32, #tpu.memory_space<smem>>
    %2254 = vector.broadcast %2253 : f32 to vector<1x1xf32>
    %2255 = arith.mulf %2254, %2112 : vector<1x1xf32>
    %2256 = arith.addf %2252, %2255 : vector<1x1xf32>
    %c266_291 = arith.constant 266 : index
    %2257 = memref.load %arg5[%c266_291] : memref<376xf32, #tpu.memory_space<smem>>
    %2258 = vector.broadcast %2257 : f32 to vector<1x1xf32>
    %2259 = arith.mulf %2258, %2134 : vector<1x1xf32>
    %2260 = arith.addf %2256, %2259 : vector<1x1xf32>
    %c267_292 = arith.constant 267 : index
    %2261 = memref.load %arg5[%c267_292] : memref<376xf32, #tpu.memory_space<smem>>
    %2262 = vector.broadcast %2261 : f32 to vector<1x1xf32>
    %2263 = arith.mulf %2262, %2156 : vector<1x1xf32>
    %2264 = arith.addf %2260, %2263 : vector<1x1xf32>
    %c268_293 = arith.constant 268 : index
    %2265 = memref.load %arg5[%c268_293] : memref<376xf32, #tpu.memory_space<smem>>
    %2266 = vector.broadcast %2265 : f32 to vector<1x1xf32>
    %2267 = arith.mulf %2266, %2178 : vector<1x1xf32>
    %2268 = arith.addf %2264, %2267 : vector<1x1xf32>
    %c269_294 = arith.constant 269 : index
    %2269 = memref.load %arg5[%c269_294] : memref<376xf32, #tpu.memory_space<smem>>
    %2270 = vector.broadcast %2269 : f32 to vector<1x1xf32>
    %2271 = arith.mulf %2270, %2200 : vector<1x1xf32>
    %2272 = arith.addf %2268, %2271 : vector<1x1xf32>
    %c270_295 = arith.constant 270 : index
    %2273 = memref.load %arg5[%c270_295] : memref<376xf32, #tpu.memory_space<smem>>
    %2274 = vector.broadcast %2273 : f32 to vector<1x1xf32>
    %2275 = arith.mulf %2274, %2222 : vector<1x1xf32>
    %2276 = arith.addf %2272, %2275 : vector<1x1xf32>
    %c271_296 = arith.constant 271 : index
    %2277 = memref.load %arg5[%c271_296] : memref<376xf32, #tpu.memory_space<smem>>
    %2278 = vector.broadcast %2277 : f32 to vector<1x1xf32>
    %2279 = arith.mulf %2278, %2244 : vector<1x1xf32>
    %2280 = arith.addf %2276, %2279 : vector<1x1xf32>
    %cst_297 = arith.constant 0.000000e+00 : f32
    %2281 = vector.broadcast %cst_297 : f32 to vector<1x1xf32>
    %c297_298 = arith.constant 297 : index
    %2282 = memref.load %arg5[%c297_298] : memref<376xf32, #tpu.memory_space<smem>>
    %2283 = vector.broadcast %2282 : f32 to vector<1x1xf32>
    %2284 = arith.addf %2281, %2283 : vector<1x1xf32>
    %c272_299 = arith.constant 272 : index
    %2285 = memref.load %arg5[%c272_299] : memref<376xf32, #tpu.memory_space<smem>>
    %2286 = vector.broadcast %2285 : f32 to vector<1x1xf32>
    %2287 = arith.mulf %2286, %2090 : vector<1x1xf32>
    %2288 = arith.addf %2284, %2287 : vector<1x1xf32>
    %c273_300 = arith.constant 273 : index
    %2289 = memref.load %arg5[%c273_300] : memref<376xf32, #tpu.memory_space<smem>>
    %2290 = vector.broadcast %2289 : f32 to vector<1x1xf32>
    %2291 = arith.mulf %2290, %2112 : vector<1x1xf32>
    %2292 = arith.addf %2288, %2291 : vector<1x1xf32>
    %c274_301 = arith.constant 274 : index
    %2293 = memref.load %arg5[%c274_301] : memref<376xf32, #tpu.memory_space<smem>>
    %2294 = vector.broadcast %2293 : f32 to vector<1x1xf32>
    %2295 = arith.mulf %2294, %2134 : vector<1x1xf32>
    %2296 = arith.addf %2292, %2295 : vector<1x1xf32>
    %c275_302 = arith.constant 275 : index
    %2297 = memref.load %arg5[%c275_302] : memref<376xf32, #tpu.memory_space<smem>>
    %2298 = vector.broadcast %2297 : f32 to vector<1x1xf32>
    %2299 = arith.mulf %2298, %2156 : vector<1x1xf32>
    %2300 = arith.addf %2296, %2299 : vector<1x1xf32>
    %c276_303 = arith.constant 276 : index
    %2301 = memref.load %arg5[%c276_303] : memref<376xf32, #tpu.memory_space<smem>>
    %2302 = vector.broadcast %2301 : f32 to vector<1x1xf32>
    %2303 = arith.mulf %2302, %2178 : vector<1x1xf32>
    %2304 = arith.addf %2300, %2303 : vector<1x1xf32>
    %c277_304 = arith.constant 277 : index
    %2305 = memref.load %arg5[%c277_304] : memref<376xf32, #tpu.memory_space<smem>>
    %2306 = vector.broadcast %2305 : f32 to vector<1x1xf32>
    %2307 = arith.mulf %2306, %2200 : vector<1x1xf32>
    %2308 = arith.addf %2304, %2307 : vector<1x1xf32>
    %c278_305 = arith.constant 278 : index
    %2309 = memref.load %arg5[%c278_305] : memref<376xf32, #tpu.memory_space<smem>>
    %2310 = vector.broadcast %2309 : f32 to vector<1x1xf32>
    %2311 = arith.mulf %2310, %2222 : vector<1x1xf32>
    %2312 = arith.addf %2308, %2311 : vector<1x1xf32>
    %c279_306 = arith.constant 279 : index
    %2313 = memref.load %arg5[%c279_306] : memref<376xf32, #tpu.memory_space<smem>>
    %2314 = vector.broadcast %2313 : f32 to vector<1x1xf32>
    %2315 = arith.mulf %2314, %2244 : vector<1x1xf32>
    %2316 = arith.addf %2312, %2315 : vector<1x1xf32>
    %cst_307 = arith.constant 0.000000e+00 : f32
    %2317 = vector.broadcast %cst_307 : f32 to vector<1x1xf32>
    %c298_308 = arith.constant 298 : index
    %2318 = memref.load %arg5[%c298_308] : memref<376xf32, #tpu.memory_space<smem>>
    %2319 = vector.broadcast %2318 : f32 to vector<1x1xf32>
    %2320 = arith.addf %2317, %2319 : vector<1x1xf32>
    %c280_309 = arith.constant 280 : index
    %2321 = memref.load %arg5[%c280_309] : memref<376xf32, #tpu.memory_space<smem>>
    %2322 = vector.broadcast %2321 : f32 to vector<1x1xf32>
    %2323 = arith.mulf %2322, %2090 : vector<1x1xf32>
    %2324 = arith.addf %2320, %2323 : vector<1x1xf32>
    %c281_310 = arith.constant 281 : index
    %2325 = memref.load %arg5[%c281_310] : memref<376xf32, #tpu.memory_space<smem>>
    %2326 = vector.broadcast %2325 : f32 to vector<1x1xf32>
    %2327 = arith.mulf %2326, %2112 : vector<1x1xf32>
    %2328 = arith.addf %2324, %2327 : vector<1x1xf32>
    %c282_311 = arith.constant 282 : index
    %2329 = memref.load %arg5[%c282_311] : memref<376xf32, #tpu.memory_space<smem>>
    %2330 = vector.broadcast %2329 : f32 to vector<1x1xf32>
    %2331 = arith.mulf %2330, %2134 : vector<1x1xf32>
    %2332 = arith.addf %2328, %2331 : vector<1x1xf32>
    %c283_312 = arith.constant 283 : index
    %2333 = memref.load %arg5[%c283_312] : memref<376xf32, #tpu.memory_space<smem>>
    %2334 = vector.broadcast %2333 : f32 to vector<1x1xf32>
    %2335 = arith.mulf %2334, %2156 : vector<1x1xf32>
    %2336 = arith.addf %2332, %2335 : vector<1x1xf32>
    %c284_313 = arith.constant 284 : index
    %2337 = memref.load %arg5[%c284_313] : memref<376xf32, #tpu.memory_space<smem>>
    %2338 = vector.broadcast %2337 : f32 to vector<1x1xf32>
    %2339 = arith.mulf %2338, %2178 : vector<1x1xf32>
    %2340 = arith.addf %2336, %2339 : vector<1x1xf32>
    %c285_314 = arith.constant 285 : index
    %2341 = memref.load %arg5[%c285_314] : memref<376xf32, #tpu.memory_space<smem>>
    %2342 = vector.broadcast %2341 : f32 to vector<1x1xf32>
    %2343 = arith.mulf %2342, %2200 : vector<1x1xf32>
    %2344 = arith.addf %2340, %2343 : vector<1x1xf32>
    %c286_315 = arith.constant 286 : index
    %2345 = memref.load %arg5[%c286_315] : memref<376xf32, #tpu.memory_space<smem>>
    %2346 = vector.broadcast %2345 : f32 to vector<1x1xf32>
    %2347 = arith.mulf %2346, %2222 : vector<1x1xf32>
    %2348 = arith.addf %2344, %2347 : vector<1x1xf32>
    %c287_316 = arith.constant 287 : index
    %2349 = memref.load %arg5[%c287_316] : memref<376xf32, #tpu.memory_space<smem>>
    %2350 = vector.broadcast %2349 : f32 to vector<1x1xf32>
    %2351 = arith.mulf %2350, %2244 : vector<1x1xf32>
    %2352 = arith.addf %2348, %2351 : vector<1x1xf32>
    %cst_317 = arith.constant 0.000000e+00 : f32
    %2353 = vector.broadcast %cst_317 : f32 to vector<1x1xf32>
    %c299_318 = arith.constant 299 : index
    %2354 = memref.load %arg5[%c299_318] : memref<376xf32, #tpu.memory_space<smem>>
    %2355 = vector.broadcast %2354 : f32 to vector<1x1xf32>
    %2356 = arith.addf %2353, %2355 : vector<1x1xf32>
    %c288_319 = arith.constant 288 : index
    %2357 = memref.load %arg5[%c288_319] : memref<376xf32, #tpu.memory_space<smem>>
    %2358 = vector.broadcast %2357 : f32 to vector<1x1xf32>
    %2359 = arith.mulf %2358, %2090 : vector<1x1xf32>
    %2360 = arith.addf %2356, %2359 : vector<1x1xf32>
    %c289_320 = arith.constant 289 : index
    %2361 = memref.load %arg5[%c289_320] : memref<376xf32, #tpu.memory_space<smem>>
    %2362 = vector.broadcast %2361 : f32 to vector<1x1xf32>
    %2363 = arith.mulf %2362, %2112 : vector<1x1xf32>
    %2364 = arith.addf %2360, %2363 : vector<1x1xf32>
    %c290_321 = arith.constant 290 : index
    %2365 = memref.load %arg5[%c290_321] : memref<376xf32, #tpu.memory_space<smem>>
    %2366 = vector.broadcast %2365 : f32 to vector<1x1xf32>
    %2367 = arith.mulf %2366, %2134 : vector<1x1xf32>
    %2368 = arith.addf %2364, %2367 : vector<1x1xf32>
    %c291_322 = arith.constant 291 : index
    %2369 = memref.load %arg5[%c291_322] : memref<376xf32, #tpu.memory_space<smem>>
    %2370 = vector.broadcast %2369 : f32 to vector<1x1xf32>
    %2371 = arith.mulf %2370, %2156 : vector<1x1xf32>
    %2372 = arith.addf %2368, %2371 : vector<1x1xf32>
    %c292_323 = arith.constant 292 : index
    %2373 = memref.load %arg5[%c292_323] : memref<376xf32, #tpu.memory_space<smem>>
    %2374 = vector.broadcast %2373 : f32 to vector<1x1xf32>
    %2375 = arith.mulf %2374, %2178 : vector<1x1xf32>
    %2376 = arith.addf %2372, %2375 : vector<1x1xf32>
    %c293_324 = arith.constant 293 : index
    %2377 = memref.load %arg5[%c293_324] : memref<376xf32, #tpu.memory_space<smem>>
    %2378 = vector.broadcast %2377 : f32 to vector<1x1xf32>
    %2379 = arith.mulf %2378, %2200 : vector<1x1xf32>
    %2380 = arith.addf %2376, %2379 : vector<1x1xf32>
    %c294_325 = arith.constant 294 : index
    %2381 = memref.load %arg5[%c294_325] : memref<376xf32, #tpu.memory_space<smem>>
    %2382 = vector.broadcast %2381 : f32 to vector<1x1xf32>
    %2383 = arith.mulf %2382, %2222 : vector<1x1xf32>
    %2384 = arith.addf %2380, %2383 : vector<1x1xf32>
    %c295_326 = arith.constant 295 : index
    %2385 = memref.load %arg5[%c295_326] : memref<376xf32, #tpu.memory_space<smem>>
    %2386 = vector.broadcast %2385 : f32 to vector<1x1xf32>
    %2387 = arith.mulf %2386, %2244 : vector<1x1xf32>
    %2388 = arith.addf %2384, %2387 : vector<1x1xf32>
    %2389 = vector.broadcast %2280 : vector<1x1xf32> to vector<16x22xf32>
    %2390 = arith.addf %1928, %2389 : vector<16x22xf32>
    %2391 = arith.negf %2390 : vector<16x22xf32>
    %2392 = math.exp %2391 : vector<16x22xf32>
    %cst_327 = arith.constant 1.000000e+00 : f32
    %2393 = vector.broadcast %cst_327 : f32 to vector<16x22xf32>
    %2394 = arith.addf %2393, %2392 : vector<16x22xf32>
    %2395 = arith.divf %2393, %2394 : vector<16x22xf32>
    %2396 = vector.broadcast %2316 : vector<1x1xf32> to vector<16x22xf32>
    %2397 = arith.addf %1964, %2396 : vector<16x22xf32>
    %2398 = arith.negf %2397 : vector<16x22xf32>
    %2399 = math.exp %2398 : vector<16x22xf32>
    %cst_328 = arith.constant 1.000000e+00 : f32
    %2400 = vector.broadcast %cst_328 : f32 to vector<16x22xf32>
    %2401 = arith.addf %2400, %2399 : vector<16x22xf32>
    %2402 = arith.divf %2400, %2401 : vector<16x22xf32>
    %2403 = vector.broadcast %2352 : vector<1x1xf32> to vector<16x22xf32>
    %2404 = arith.addf %2000, %2403 : vector<16x22xf32>
    %2405 = arith.negf %2404 : vector<16x22xf32>
    %2406 = math.exp %2405 : vector<16x22xf32>
    %cst_329 = arith.constant 1.000000e+00 : f32
    %2407 = vector.broadcast %cst_329 : f32 to vector<16x22xf32>
    %2408 = arith.addf %2407, %2406 : vector<16x22xf32>
    %2409 = arith.divf %2407, %2408 : vector<16x22xf32>
    %2410 = vector.broadcast %2388 : vector<1x1xf32> to vector<16x22xf32>
    %2411 = arith.addf %2036, %2410 : vector<16x22xf32>
    %2412 = arith.negf %2411 : vector<16x22xf32>
    %2413 = math.exp %2412 : vector<16x22xf32>
    %cst_330 = arith.constant 1.000000e+00 : f32
    %2414 = vector.broadcast %cst_330 : f32 to vector<16x22xf32>
    %2415 = arith.addf %2414, %2413 : vector<16x22xf32>
    %2416 = arith.divf %2414, %2415 : vector<16x22xf32>
    %2417 = arith.mulf %893, %2395 : vector<16x22xf32>
    %cst_331 = arith.constant 1.000000e+00 : f32
    %2418 = vector.broadcast %cst_331 : f32 to vector<16x22xf32>
    %2419 = arith.subf %2418, %2395 : vector<16x22xf32>
    %2420 = arith.mulf %974, %2419 : vector<16x22xf32>
    %2421 = arith.addf %2417, %2420 : vector<16x22xf32>
    %2422 = arith.mulf %900, %2402 : vector<16x22xf32>
    %cst_332 = arith.constant 1.000000e+00 : f32
    %2423 = vector.broadcast %cst_332 : f32 to vector<16x22xf32>
    %2424 = arith.subf %2423, %2402 : vector<16x22xf32>
    %2425 = arith.mulf %980, %2424 : vector<16x22xf32>
    %2426 = arith.addf %2422, %2425 : vector<16x22xf32>
    %2427 = arith.mulf %907, %2409 : vector<16x22xf32>
    %cst_333 = arith.constant 1.000000e+00 : f32
    %2428 = vector.broadcast %cst_333 : f32 to vector<16x22xf32>
    %2429 = arith.subf %2428, %2409 : vector<16x22xf32>
    %2430 = arith.mulf %986, %2429 : vector<16x22xf32>
    %2431 = arith.addf %2427, %2430 : vector<16x22xf32>
    %2432 = arith.mulf %914, %2416 : vector<16x22xf32>
    %cst_334 = arith.constant 1.000000e+00 : f32
    %2433 = vector.broadcast %cst_334 : f32 to vector<16x22xf32>
    %2434 = arith.subf %2433, %2416 : vector<16x22xf32>
    %2435 = arith.mulf %992, %2434 : vector<16x22xf32>
    %2436 = arith.addf %2432, %2435 : vector<16x22xf32>
    %2437 = vector.extract_strided_slice %2421 {offsets = [0, 0], sizes = [2, 22], strides = [1, 1]} : vector<16x22xf32> to vector<2x22xf32>
    %cst_335 = arith.constant dense<0xFF800000> : vector<22xf32>
    %2438 = vector.multi_reduction <maximumf>, %2437, %cst_335 [0] : vector<2x22xf32> to vector<22xf32>
    %2439 = vector.shape_cast %2438 : vector<22xf32> to vector<1x22xf32>
    %2440 = vector.extract_strided_slice %2421 {offsets = [2, 0], sizes = [2, 22], strides = [1, 1]} : vector<16x22xf32> to vector<2x22xf32>
    %cst_336 = arith.constant dense<0xFF800000> : vector<22xf32>
    %2441 = vector.multi_reduction <maximumf>, %2440, %cst_336 [0] : vector<2x22xf32> to vector<22xf32>
    %2442 = vector.shape_cast %2441 : vector<22xf32> to vector<1x22xf32>
    %2443 = vector.extract_strided_slice %2421 {offsets = [4, 0], sizes = [2, 22], strides = [1, 1]} : vector<16x22xf32> to vector<2x22xf32>
    %cst_337 = arith.constant dense<0xFF800000> : vector<22xf32>
    %2444 = vector.multi_reduction <maximumf>, %2443, %cst_337 [0] : vector<2x22xf32> to vector<22xf32>
    %2445 = vector.shape_cast %2444 : vector<22xf32> to vector<1x22xf32>
    %2446 = vector.extract_strided_slice %2421 {offsets = [6, 0], sizes = [2, 22], strides = [1, 1]} : vector<16x22xf32> to vector<2x22xf32>
    %cst_338 = arith.constant dense<0xFF800000> : vector<22xf32>
    %2447 = vector.multi_reduction <maximumf>, %2446, %cst_338 [0] : vector<2x22xf32> to vector<22xf32>
    %2448 = vector.shape_cast %2447 : vector<22xf32> to vector<1x22xf32>
    %2449 = vector.extract_strided_slice %2421 {offsets = [8, 0], sizes = [2, 22], strides = [1, 1]} : vector<16x22xf32> to vector<2x22xf32>
    %cst_339 = arith.constant dense<0xFF800000> : vector<22xf32>
    %2450 = vector.multi_reduction <maximumf>, %2449, %cst_339 [0] : vector<2x22xf32> to vector<22xf32>
    %2451 = vector.shape_cast %2450 : vector<22xf32> to vector<1x22xf32>
    %2452 = vector.extract_strided_slice %2421 {offsets = [10, 0], sizes = [2, 22], strides = [1, 1]} : vector<16x22xf32> to vector<2x22xf32>
    %cst_340 = arith.constant dense<0xFF800000> : vector<22xf32>
    %2453 = vector.multi_reduction <maximumf>, %2452, %cst_340 [0] : vector<2x22xf32> to vector<22xf32>
    %2454 = vector.shape_cast %2453 : vector<22xf32> to vector<1x22xf32>
    %2455 = vector.extract_strided_slice %2421 {offsets = [12, 0], sizes = [2, 22], strides = [1, 1]} : vector<16x22xf32> to vector<2x22xf32>
    %cst_341 = arith.constant dense<0xFF800000> : vector<22xf32>
    %2456 = vector.multi_reduction <maximumf>, %2455, %cst_341 [0] : vector<2x22xf32> to vector<22xf32>
    %2457 = vector.shape_cast %2456 : vector<22xf32> to vector<1x22xf32>
    %2458 = vector.extract_strided_slice %2421 {offsets = [14, 0], sizes = [2, 22], strides = [1, 1]} : vector<16x22xf32> to vector<2x22xf32>
    %cst_342 = arith.constant dense<0xFF800000> : vector<22xf32>
    %2459 = vector.multi_reduction <maximumf>, %2458, %cst_342 [0] : vector<2x22xf32> to vector<22xf32>
    %2460 = vector.shape_cast %2459 : vector<22xf32> to vector<1x22xf32>
    %2461 = tpu.concatenate %2439, %2442, %2445, %2448, %2451, %2454, %2457, %2460 in 0 : vector<1x22xf32>, vector<1x22xf32>, vector<1x22xf32>, vector<1x22xf32>, vector<1x22xf32>, vector<1x22xf32>, vector<1x22xf32>, vector<1x22xf32> -> vector<8x22xf32>
    %2462 = vector.extract_strided_slice %2426 {offsets = [0, 0], sizes = [2, 22], strides = [1, 1]} : vector<16x22xf32> to vector<2x22xf32>
    %cst_343 = arith.constant dense<0xFF800000> : vector<22xf32>
    %2463 = vector.multi_reduction <maximumf>, %2462, %cst_343 [0] : vector<2x22xf32> to vector<22xf32>
    %2464 = vector.shape_cast %2463 : vector<22xf32> to vector<1x22xf32>
    %2465 = vector.extract_strided_slice %2426 {offsets = [2, 0], sizes = [2, 22], strides = [1, 1]} : vector<16x22xf32> to vector<2x22xf32>
    %cst_344 = arith.constant dense<0xFF800000> : vector<22xf32>
    %2466 = vector.multi_reduction <maximumf>, %2465, %cst_344 [0] : vector<2x22xf32> to vector<22xf32>
    %2467 = vector.shape_cast %2466 : vector<22xf32> to vector<1x22xf32>
    %2468 = vector.extract_strided_slice %2426 {offsets = [4, 0], sizes = [2, 22], strides = [1, 1]} : vector<16x22xf32> to vector<2x22xf32>
    %cst_345 = arith.constant dense<0xFF800000> : vector<22xf32>
    %2469 = vector.multi_reduction <maximumf>, %2468, %cst_345 [0] : vector<2x22xf32> to vector<22xf32>
    %2470 = vector.shape_cast %2469 : vector<22xf32> to vector<1x22xf32>
    %2471 = vector.extract_strided_slice %2426 {offsets = [6, 0], sizes = [2, 22], strides = [1, 1]} : vector<16x22xf32> to vector<2x22xf32>
    %cst_346 = arith.constant dense<0xFF800000> : vector<22xf32>
    %2472 = vector.multi_reduction <maximumf>, %2471, %cst_346 [0] : vector<2x22xf32> to vector<22xf32>
    %2473 = vector.shape_cast %2472 : vector<22xf32> to vector<1x22xf32>
    %2474 = vector.extract_strided_slice %2426 {offsets = [8, 0], sizes = [2, 22], strides = [1, 1]} : vector<16x22xf32> to vector<2x22xf32>
    %cst_347 = arith.constant dense<0xFF800000> : vector<22xf32>
    %2475 = vector.multi_reduction <maximumf>, %2474, %cst_347 [0] : vector<2x22xf32> to vector<22xf32>
    %2476 = vector.shape_cast %2475 : vector<22xf32> to vector<1x22xf32>
    %2477 = vector.extract_strided_slice %2426 {offsets = [10, 0], sizes = [2, 22], strides = [1, 1]} : vector<16x22xf32> to vector<2x22xf32>
    %cst_348 = arith.constant dense<0xFF800000> : vector<22xf32>
    %2478 = vector.multi_reduction <maximumf>, %2477, %cst_348 [0] : vector<2x22xf32> to vector<22xf32>
    %2479 = vector.shape_cast %2478 : vector<22xf32> to vector<1x22xf32>
    %2480 = vector.extract_strided_slice %2426 {offsets = [12, 0], sizes = [2, 22], strides = [1, 1]} : vector<16x22xf32> to vector<2x22xf32>
    %cst_349 = arith.constant dense<0xFF800000> : vector<22xf32>
    %2481 = vector.multi_reduction <maximumf>, %2480, %cst_349 [0] : vector<2x22xf32> to vector<22xf32>
    %2482 = vector.shape_cast %2481 : vector<22xf32> to vector<1x22xf32>
    %2483 = vector.extract_strided_slice %2426 {offsets = [14, 0], sizes = [2, 22], strides = [1, 1]} : vector<16x22xf32> to vector<2x22xf32>
    %cst_350 = arith.constant dense<0xFF800000> : vector<22xf32>
    %2484 = vector.multi_reduction <maximumf>, %2483, %cst_350 [0] : vector<2x22xf32> to vector<22xf32>
    %2485 = vector.shape_cast %2484 : vector<22xf32> to vector<1x22xf32>
    %2486 = tpu.concatenate %2464, %2467, %2470, %2473, %2476, %2479, %2482, %2485 in 0 : vector<1x22xf32>, vector<1x22xf32>, vector<1x22xf32>, vector<1x22xf32>, vector<1x22xf32>, vector<1x22xf32>, vector<1x22xf32>, vector<1x22xf32> -> vector<8x22xf32>
    %2487 = vector.extract_strided_slice %2431 {offsets = [0, 0], sizes = [2, 22], strides = [1, 1]} : vector<16x22xf32> to vector<2x22xf32>
    %cst_351 = arith.constant dense<0xFF800000> : vector<22xf32>
    %2488 = vector.multi_reduction <maximumf>, %2487, %cst_351 [0] : vector<2x22xf32> to vector<22xf32>
    %2489 = vector.shape_cast %2488 : vector<22xf32> to vector<1x22xf32>
    %2490 = vector.extract_strided_slice %2431 {offsets = [2, 0], sizes = [2, 22], strides = [1, 1]} : vector<16x22xf32> to vector<2x22xf32>
    %cst_352 = arith.constant dense<0xFF800000> : vector<22xf32>
    %2491 = vector.multi_reduction <maximumf>, %2490, %cst_352 [0] : vector<2x22xf32> to vector<22xf32>
    %2492 = vector.shape_cast %2491 : vector<22xf32> to vector<1x22xf32>
    %2493 = vector.extract_strided_slice %2431 {offsets = [4, 0], sizes = [2, 22], strides = [1, 1]} : vector<16x22xf32> to vector<2x22xf32>
    %cst_353 = arith.constant dense<0xFF800000> : vector<22xf32>
    %2494 = vector.multi_reduction <maximumf>, %2493, %cst_353 [0] : vector<2x22xf32> to vector<22xf32>
    %2495 = vector.shape_cast %2494 : vector<22xf32> to vector<1x22xf32>
    %2496 = vector.extract_strided_slice %2431 {offsets = [6, 0], sizes = [2, 22], strides = [1, 1]} : vector<16x22xf32> to vector<2x22xf32>
    %cst_354 = arith.constant dense<0xFF800000> : vector<22xf32>
    %2497 = vector.multi_reduction <maximumf>, %2496, %cst_354 [0] : vector<2x22xf32> to vector<22xf32>
    %2498 = vector.shape_cast %2497 : vector<22xf32> to vector<1x22xf32>
    %2499 = vector.extract_strided_slice %2431 {offsets = [8, 0], sizes = [2, 22], strides = [1, 1]} : vector<16x22xf32> to vector<2x22xf32>
    %cst_355 = arith.constant dense<0xFF800000> : vector<22xf32>
    %2500 = vector.multi_reduction <maximumf>, %2499, %cst_355 [0] : vector<2x22xf32> to vector<22xf32>
    %2501 = vector.shape_cast %2500 : vector<22xf32> to vector<1x22xf32>
    %2502 = vector.extract_strided_slice %2431 {offsets = [10, 0], sizes = [2, 22], strides = [1, 1]} : vector<16x22xf32> to vector<2x22xf32>
    %cst_356 = arith.constant dense<0xFF800000> : vector<22xf32>
    %2503 = vector.multi_reduction <maximumf>, %2502, %cst_356 [0] : vector<2x22xf32> to vector<22xf32>
    %2504 = vector.shape_cast %2503 : vector<22xf32> to vector<1x22xf32>
    %2505 = vector.extract_strided_slice %2431 {offsets = [12, 0], sizes = [2, 22], strides = [1, 1]} : vector<16x22xf32> to vector<2x22xf32>
    %cst_357 = arith.constant dense<0xFF800000> : vector<22xf32>
    %2506 = vector.multi_reduction <maximumf>, %2505, %cst_357 [0] : vector<2x22xf32> to vector<22xf32>
    %2507 = vector.shape_cast %2506 : vector<22xf32> to vector<1x22xf32>
    %2508 = vector.extract_strided_slice %2431 {offsets = [14, 0], sizes = [2, 22], strides = [1, 1]} : vector<16x22xf32> to vector<2x22xf32>
    %cst_358 = arith.constant dense<0xFF800000> : vector<22xf32>
    %2509 = vector.multi_reduction <maximumf>, %2508, %cst_358 [0] : vector<2x22xf32> to vector<22xf32>
    %2510 = vector.shape_cast %2509 : vector<22xf32> to vector<1x22xf32>
    %2511 = tpu.concatenate %2489, %2492, %2495, %2498, %2501, %2504, %2507, %2510 in 0 : vector<1x22xf32>, vector<1x22xf32>, vector<1x22xf32>, vector<1x22xf32>, vector<1x22xf32>, vector<1x22xf32>, vector<1x22xf32>, vector<1x22xf32> -> vector<8x22xf32>
    %2512 = vector.extract_strided_slice %2436 {offsets = [0, 0], sizes = [2, 22], strides = [1, 1]} : vector<16x22xf32> to vector<2x22xf32>
    %cst_359 = arith.constant dense<0xFF800000> : vector<22xf32>
    %2513 = vector.multi_reduction <maximumf>, %2512, %cst_359 [0] : vector<2x22xf32> to vector<22xf32>
    %2514 = vector.shape_cast %2513 : vector<22xf32> to vector<1x22xf32>
    %2515 = vector.extract_strided_slice %2436 {offsets = [2, 0], sizes = [2, 22], strides = [1, 1]} : vector<16x22xf32> to vector<2x22xf32>
    %cst_360 = arith.constant dense<0xFF800000> : vector<22xf32>
    %2516 = vector.multi_reduction <maximumf>, %2515, %cst_360 [0] : vector<2x22xf32> to vector<22xf32>
    %2517 = vector.shape_cast %2516 : vector<22xf32> to vector<1x22xf32>
    %2518 = vector.extract_strided_slice %2436 {offsets = [4, 0], sizes = [2, 22], strides = [1, 1]} : vector<16x22xf32> to vector<2x22xf32>
    %cst_361 = arith.constant dense<0xFF800000> : vector<22xf32>
    %2519 = vector.multi_reduction <maximumf>, %2518, %cst_361 [0] : vector<2x22xf32> to vector<22xf32>
    %2520 = vector.shape_cast %2519 : vector<22xf32> to vector<1x22xf32>
    %2521 = vector.extract_strided_slice %2436 {offsets = [6, 0], sizes = [2, 22], strides = [1, 1]} : vector<16x22xf32> to vector<2x22xf32>
    %cst_362 = arith.constant dense<0xFF800000> : vector<22xf32>
    %2522 = vector.multi_reduction <maximumf>, %2521, %cst_362 [0] : vector<2x22xf32> to vector<22xf32>
    %2523 = vector.shape_cast %2522 : vector<22xf32> to vector<1x22xf32>
    %2524 = vector.extract_strided_slice %2436 {offsets = [8, 0], sizes = [2, 22], strides = [1, 1]} : vector<16x22xf32> to vector<2x22xf32>
    %cst_363 = arith.constant dense<0xFF800000> : vector<22xf32>
    %2525 = vector.multi_reduction <maximumf>, %2524, %cst_363 [0] : vector<2x22xf32> to vector<22xf32>
    %2526 = vector.shape_cast %2525 : vector<22xf32> to vector<1x22xf32>
    %2527 = vector.extract_strided_slice %2436 {offsets = [10, 0], sizes = [2, 22], strides = [1, 1]} : vector<16x22xf32> to vector<2x22xf32>
    %cst_364 = arith.constant dense<0xFF800000> : vector<22xf32>
    %2528 = vector.multi_reduction <maximumf>, %2527, %cst_364 [0] : vector<2x22xf32> to vector<22xf32>
    %2529 = vector.shape_cast %2528 : vector<22xf32> to vector<1x22xf32>
    %2530 = vector.extract_strided_slice %2436 {offsets = [12, 0], sizes = [2, 22], strides = [1, 1]} : vector<16x22xf32> to vector<2x22xf32>
    %cst_365 = arith.constant dense<0xFF800000> : vector<22xf32>
    %2531 = vector.multi_reduction <maximumf>, %2530, %cst_365 [0] : vector<2x22xf32> to vector<22xf32>
    %2532 = vector.shape_cast %2531 : vector<22xf32> to vector<1x22xf32>
    %2533 = vector.extract_strided_slice %2436 {offsets = [14, 0], sizes = [2, 22], strides = [1, 1]} : vector<16x22xf32> to vector<2x22xf32>
    %cst_366 = arith.constant dense<0xFF800000> : vector<22xf32>
    %2534 = vector.multi_reduction <maximumf>, %2533, %cst_366 [0] : vector<2x22xf32> to vector<22xf32>
    %2535 = vector.shape_cast %2534 : vector<22xf32> to vector<1x22xf32>
    %2536 = tpu.concatenate %2514, %2517, %2520, %2523, %2526, %2529, %2532, %2535 in 0 : vector<1x22xf32>, vector<1x22xf32>, vector<1x22xf32>, vector<1x22xf32>, vector<1x22xf32>, vector<1x22xf32>, vector<1x22xf32>, vector<1x22xf32> -> vector<8x22xf32>
    %2537 = vector.shape_cast %2461 : vector<8x22xf32> to vector<1x8x22xf32>
    %2538 = vector.shape_cast %2486 : vector<8x22xf32> to vector<1x8x22xf32>
    %2539 = vector.shape_cast %2511 : vector<8x22xf32> to vector<1x8x22xf32>
    %2540 = vector.shape_cast %2536 : vector<8x22xf32> to vector<1x8x22xf32>
    %2541 = tpu.concatenate %2537, %2538, %2539, %2540 in 0 : vector<1x8x22xf32>, vector<1x8x22xf32>, vector<1x8x22xf32>, vector<1x8x22xf32> -> vector<4x8x22xf32>
    %c0_367 = arith.constant 0 : index
    %c0_368 = arith.constant 0 : index
    %c0_369 = arith.constant 0 : index
    %c0_370 = arith.constant 0 : index
    %2542 = vector.load %arg6[%c0_367, %c0_368, %c0_369, %c0_370] : memref<1x4x8x22xf32, #tpu.memory_space<vmem>>, vector<1x4x8x22xf32>
    %2543 = vector.shape_cast %2542 : vector<1x4x8x22xf32> to vector<4x8x22xf32>
    %2544 = vector.shape_cast %2541 : vector<4x8x22xf32> to vector<1x4x8x22xf32>
    tpu.vector_store %arg6[%c0_367, %c0_368, %c0_369, %c0_370], %2544 {strides = array<i32>} : memref<1x4x8x22xf32, #tpu.memory_space<vmem>>, vector<1x4x8x22xf32>,
    return
  }
  func.func @transform_0(%arg0: i32) -> (i32, i32, i32, i32) {
    %c0_i32 = arith.constant 0 : i32
    %c0_i32_0 = arith.constant 0 : i32
    %c0_i32_1 = arith.constant 0 : i32
    %c0_i32_2 = arith.constant 0 : i32
    return %arg0, %c0_i32, %c0_i32_0, %c0_i32_1 : i32, i32, i32, i32
  }
  func.func @transform_1(%arg0: i32) -> (i32, i32, i32) {
    %c0_i32 = arith.constant 0 : i32
    %c0_i32_0 = arith.constant 0 : i32
    %c0_i32_1 = arith.constant 0 : i32
    %c0_i32_2 = arith.constant 0 : i32
    return %c0_i32, %c0_i32_0, %c0_i32_1 : i32, i32, i32
  }
  func.func @transform_2(%arg0: i32) -> (i32, i32, i32) {
    %c0_i32 = arith.constant 0 : i32
    %c0_i32_0 = arith.constant 0 : i32
    %c0_i32_1 = arith.constant 0 : i32
    %c0_i32_2 = arith.constant 0 : i32
    return %c0_i32, %c0_i32_0, %c0_i32_1 : i32, i32, i32
  }
  func.func @transform_3(%arg0: i32) -> (i32, i32) {
    %c0_i32 = arith.constant 0 : i32
    %c0_i32_0 = arith.constant 0 : i32
    %c0_i32_1 = arith.constant 0 : i32
    return %c0_i32, %c0_i32_0 : i32, i32
  }
  func.func @transform_4(%arg0: i32) -> i32 {
    %c0_i32 = arith.constant 0 : i32
    %c0_i32_0 = arith.constant 0 : i32
    return %c0_i32 : i32
  }
  func.func @transform_5(%arg0: i32) -> (i32, i32, i32, i32) {
    %c0_i32 = arith.constant 0 : i32
    %c0_i32_0 = arith.constant 0 : i32
    %c0_i32_1 = arith.constant 0 : i32
    %c0_i32_2 = arith.constant 0 : i32
    return %arg0, %c0_i32, %c0_i32_0, %c0_i32_1 : i32, i32, i32, i32
  }
}

</mosaic_0001>

<llo_original>
// kernel: dylan_mt_net_forward.3
$region0: #{dylan_mt_net_forward.3}
  #allocation0 [shape = 'u32[]', space=smem, size = 0x4, offset = 0x4, fixed_abs, tag = 'smem constant byte address 0x4 - core index']
  #allocation1 [shape = 'u32[144,128]{1,0:T(1,128)}', space=vmem, size = 0x12000, scoped, tag = 'internal scratch']
  %s0 = inlined_call_operand.vmem [shape: f32[2,704], index: 0, kind: input, shape index: {}]
  %s1 = inlined_call_operand.hbm [shape: f32[704,512], index: 1, kind: input, shape index: {}]
  %s2 = inlined_call_operand.hbm [shape: f32[1,512], index: 2, kind: input, shape index: {}]
  %s3 = inlined_call_operand.hbm [shape: f32[512,256], index: 3, kind: input, shape index: {}]
  %s4 = inlined_call_operand.hbm [shape: f32[1,256], index: 4, kind: input, shape index: {}]
  %s5 = inlined_call_operand.hbm [shape: f32[256,256], index: 5, kind: input, shape index: {}]
  %s6 = inlined_call_operand.hbm [shape: f32[1,256], index: 6, kind: input, shape index: {}]
  %s7 = inlined_call_operand.vmem [shape: f32[256,10], index: 7, kind: input, shape index: {}]
  %s8 = inlined_call_operand.hbm [shape: f32[1,10], index: 8, kind: input, shape index: {}]
  %s9 = inlined_call_operand.hbm [shape: f32[2,10], index: 9, kind: output, shape index: {}]
  %s10 = sld [smem:[#allocation0]]
  $region74: #{dylan_mt_net_forward.3} parent=0
    _
  %s12 = ssub.s32 1, %s10
  %s13 = scalar_select 0, %s12, %s10
  $region1: #{dylan_mt_net_forward.3} parent=0
    #allocation2 [shape = 'u8[1441792]{0}', space=vmem, size = 0x160000, scoped, tag = 'input window, operand 1, single buffered']
    #allocation3 [shape = 's32[1]{0}', space=sflag, size = 0x4, scoped, tag = 'scoped memory for dylan_mt_net_forward.3']
    #allocation4 [shape = 's32[1]{0}', space=sflag, size = 0x4, scoped, tag = 'scoped memory for dylan_mt_net_forward.3']
    #allocation5 [shape = 'u8[2048]{0}', space=vmem, size = 0x800, scoped, tag = 'input window, operand 2, single buffered']
    #allocation6 [shape = 's32[1]{0}', space=sflag, size = 0x4, scoped, tag = 'scoped memory for dylan_mt_net_forward.3']
    #allocation7 [shape = 'u8[524288]{0}', space=vmem, size = 0x80000, scoped, tag = 'input window, operand 3, single buffered']
    #allocation8 [shape = 'u8[1024]{0}', space=vmem, size = 0x400, scoped, tag = 'input window, operand 4, single buffered']
    #allocation9 [shape = 's32[1]{0}', space=sflag, size = 0x4, scoped, tag = 'scoped memory for dylan_mt_net_forward.3']
    #allocation10 [shape = 'u8[262144]{0}', space=vmem, size = 0x40000, scoped, tag = 'input window, operand 5, single buffered']
    #allocation11 [shape = 'u8[1024]{0}', space=vmem, size = 0x400, scoped, tag = 'input window, operand 6, single buffered']
    #allocation12 [shape = 's32[1]{0}', space=sflag, size = 0x4, scoped, tag = 'scoped memory for dylan_mt_net_forward.3']
    #allocation13 [shape = 'u8[512]{0}', space=vmem, size = 0x400, scoped, tag = 'input window, operand 8, single buffered']
    #allocation14 [shape = 'u8[1024]{0}', space=vmem, size = 0x400, scoped, tag = 'output window, operand 0, single buffered']
    %14 = vsyncpa [#allocation3], 0
    %15 = vsyncpa [#allocation6], 0
    %16 = vsyncpa [#allocation9], 0
    %17 = vsyncpa [#allocation12], 0
    %18 = vsyncpa [#allocation4], 0
    // Predicated region
    $region2: #{dylan_mt_net_forward.3} parent=1 // pred_check
      _
    $region3: #{dylan_mt_net_forward.3} parent=1 // pred_check_branch
      %20 = sbr.rel (0) target = $region5
    $region4: #{dylan_mt_net_forward.3} parent=1 // pred_region
      _
    $region5: #{dylan_mt_net_forward.3} parent=1 // pred_fallthru
      _
    // Predicated region
    $region6: #{dylan_mt_net_forward.3} parent=1 // pred_check
      _
    $region7: #{dylan_mt_net_forward.3} parent=1 // pred_check_branch
      %22 = sbr.rel (0) target = $region9
    $region8: #{dylan_mt_net_forward.3} parent=1 // pred_region
      %s24 = ssub.s32 45056, 45056
      %25 = vsyncadd [#allocation3], %s24
      %s26 = sshll.u32 [#allocation2], 4
      %s27 = int_to_ptr.vmem [resolvable:$true] %s26
      %32 = dma.hbm_to_vmem [thread:$0]  %s1, 45056, %s27, [#allocation3], 512, 512, 32
    $region9: #{dylan_mt_net_forward.3} parent=1 // pred_fallthru
      _
    // Predicated region
    $region10: #{dylan_mt_net_forward.3} parent=1 // pred_check
      _
    $region11: #{dylan_mt_net_forward.3} parent=1 // pred_check_branch
      %34 = sbr.rel (0) target = $region13
    $region12: #{dylan_mt_net_forward.3} parent=1 // pred_region
      %s36 = ssub.s32 64, 64
      %37 = vsyncadd [#allocation6], %s36
      %s39 = sshll.u32 [#allocation5], 4
      %s40 = int_to_ptr.vmem [resolvable:$true] %s39
      %42 = dma.hbm_to_vmem [thread:$0]  %s2, 64, %s40, [#allocation6]
    $region13: #{dylan_mt_net_forward.3} parent=1 // pred_fallthru
      _
    // Predicated region
    $region14: #{dylan_mt_net_forward.3} parent=1 // pred_check
      _
    $region15: #{dylan_mt_net_forward.3} parent=1 // pred_check_branch
      %44 = sbr.rel (0) target = $region17
    $region16: #{dylan_mt_net_forward.3} parent=1 // pred_region
      %s46 = ssub.s32 16384, 16384
      %47 = vsyncadd [#allocation6], %s46
      %s48 = sshll.u32 [#allocation7], 4
      %s49 = int_to_ptr.vmem [resolvable:$true] %s48
      %54 = dma.hbm_to_vmem [thread:$0]  %s3, 16384, %s49, [#allocation6], 256, 256, 16
    $region17: #{dylan_mt_net_forward.3} parent=1 // pred_fallthru
      _
    // Predicated region
    $region18: #{dylan_mt_net_forward.3} parent=1 // pred_check
      _
    $region19: #{dylan_mt_net_forward.3} parent=1 // pred_check_branch
      %56 = sbr.rel (0) target = $region21
    $region20: #{dylan_mt_net_forward.3} parent=1 // pred_region
      %s58 = ssub.s32 32, 32
      %59 = vsyncadd [#allocation9], %s58
      %s61 = sshll.u32 [#allocation8], 4
      %s62 = int_to_ptr.vmem [resolvable:$true] %s61
      %64 = dma.hbm_to_vmem [thread:$0]  %s4, 32, %s62, [#allocation9]
    $region21: #{dylan_mt_net_forward.3} parent=1 // pred_fallthru
      _
    // Predicated region
    $region22: #{dylan_mt_net_forward.3} parent=1 // pred_check
      _
    $region23: #{dylan_mt_net_forward.3} parent=1 // pred_check_branch
      %66 = sbr.rel (0) target = $region25
    $region24: #{dylan_mt_net_forward.3} parent=1 // pred_region
      %s68 = ssub.s32 8192, 8192
      %69 = vsyncadd [#allocation9], %s68
      %s70 = sshll.u32 [#allocation10], 4
      %s71 = int_to_ptr.vmem [resolvable:$true] %s70
      %76 = dma.hbm_to_vmem [thread:$0]  %s5, 8192, %s71, [#allocation9], 256, 256, 16
    $region25: #{dylan_mt_net_forward.3} parent=1 // pred_fallthru
      _
    // Predicated region
    $region26: #{dylan_mt_net_forward.3} parent=1 // pred_check
      _
    $region27: #{dylan_mt_net_forward.3} parent=1 // pred_check_branch
      %78 = sbr.rel (0) target = $region29
    $region28: #{dylan_mt_net_forward.3} parent=1 // pred_region
      %s80 = ssub.s32 32, 32
      %81 = vsyncadd [#allocation12], %s80
      %s83 = sshll.u32 [#allocation11], 4
      %s84 = int_to_ptr.vmem [resolvable:$true] %s83
      %86 = dma.hbm_to_vmem [thread:$0]  %s6, 32, %s84, [#allocation12]
    $region29: #{dylan_mt_net_forward.3} parent=1 // pred_fallthru
      _
    // Predicated region
    $region30: #{dylan_mt_net_forward.3} parent=1 // pred_check
      _
    $region31: #{dylan_mt_net_forward.3} parent=1 // pred_check_branch
      %88 = sbr.rel (0) target = $region33
    $region32: #{dylan_mt_net_forward.3} parent=1 // pred_region
      _
    $region33: #{dylan_mt_net_forward.3} parent=1 // pred_fallthru
      _
    // Predicated region
    $region34: #{dylan_mt_net_forward.3} parent=1 // pred_check
      _
    $region35: #{dylan_mt_net_forward.3} parent=1 // pred_check_branch
      %90 = sbr.rel (0) target = $region37
    $region36: #{dylan_mt_net_forward.3} parent=1 // pred_region
      %s92 = ssub.s32 16, 16
      %93 = vsyncadd [#allocation12], %s92
      %s95 = sshll.u32 [#allocation13], 4
      %s96 = int_to_ptr.vmem [resolvable:$true] %s95
      %98 = dma.hbm_to_vmem [thread:$0]  %s8, 16, %s96, [#allocation12]
    $region37: #{dylan_mt_net_forward.3} parent=1 // pred_fallthru
      _
    // Predicated region
    $region38: #{dylan_mt_net_forward.3} parent=1 // pred_check
      _
    $region39: #{dylan_mt_net_forward.3} parent=1 // pred_check_branch
      %100 = sbr.rel (0) target = $region41
    $region40: #{dylan_mt_net_forward.3} parent=1 // pred_region
      %101 = dma.done [#allocation3], 45056
    $region41: #{dylan_mt_net_forward.3} parent=1 // pred_fallthru
      _
    // Predicated region
    $region42: #{dylan_mt_net_forward.3} parent=1 // pred_check
      _
    $region43: #{dylan_mt_net_forward.3} parent=1 // pred_check_branch
      %103 = sbr.rel (0) target = $region45
    $region44: #{dylan_mt_net_forward.3} parent=1 // pred_region
      %104 = dma.done [#allocation6], 64
    $region45: #{dylan_mt_net_forward.3} parent=1 // pred_fallthru
      _
    // Predicated region
    $region46: #{dylan_mt_net_forward.3} parent=1 // pred_check
      _
    $region47: #{dylan_mt_net_forward.3} parent=1 // pred_check_branch
      %106 = sbr.rel (0) target = $region49
    $region48: #{dylan_mt_net_forward.3} parent=1 // pred_region
      %107 = dma.done [#allocation6], 16384
    $region49: #{dylan_mt_net_forward.3} parent=1 // pred_fallthru
      _
    // Predicated region
    $region50: #{dylan_mt_net_forward.3} parent=1 // pred_check
      _
    $region51: #{dylan_mt_net_forward.3} parent=1 // pred_check_branch
      %109 = sbr.rel (0) target = $region53
    $region52: #{dylan_mt_net_forward.3} parent=1 // pred_region
      %110 = dma.done [#allocation9], 32
    $region53: #{dylan_mt_net_forward.3} parent=1 // pred_fallthru
      _
    // Predicated region
    $region54: #{dylan_mt_net_forward.3} parent=1 // pred_check
      _
    $region55: #{dylan_mt_net_forward.3} parent=1 // pred_check_branch
      %112 = sbr.rel (0) target = $region57
    $region56: #{dylan_mt_net_forward.3} parent=1 // pred_region
      %113 = dma.done [#allocation9], 8192
    $region57: #{dylan_mt_net_forward.3} parent=1 // pred_fallthru
      _
    // Predicated region
    $region58: #{dylan_mt_net_forward.3} parent=1 // pred_check
      _
    $region59: #{dylan_mt_net_forward.3} parent=1 // pred_check_branch
      %115 = sbr.rel (0) target = $region61
    $region60: #{dylan_mt_net_forward.3} parent=1 // pred_region
      %116 = dma.done [#allocation12], 32
    $region61: #{dylan_mt_net_forward.3} parent=1 // pred_fallthru
      _
    // Predicated region
    $region62: #{dylan_mt_net_forward.3} parent=1 // pred_check
      _
    $region63: #{dylan_mt_net_forward.3} parent=1 // pred_check_branch
      %118 = sbr.rel (0) target = $region65
    $region64: #{dylan_mt_net_forward.3} parent=1 // pred_region
      %119 = dma.done [#allocation12], 16
    $region65: #{dylan_mt_net_forward.3} parent=1 // pred_fallthru
      _
    %v120 = vld [vmem:[%s0] sm:$0xff]
    %v121 = vld [vmem:[%s0 + $0x8] sm:$0xf]
    %v122 = vld [vmem:[#allocation2] sm:$0xff]
    %v123 = vld [vmem:[#allocation2 + $0x8] sm:$0xff]
    %v124 = vld [vmem:[#allocation2 + $0x10] sm:$0xff]
    %v125 = vld [vmem:[#allocation2 + $0x18] sm:$0xff]
    %v126 = vld [vmem:[#allocation2 + $0x20] sm:$0xff]
    %v127 = vld [vmem:[#allocation2 + $0x28] sm:$0xff]
    %v128 = vld [vmem:[#allocation2 + $0x30] sm:$0xff]
    %v129 = vld [vmem:[#allocation2 + $0x38] sm:$0xff]
    %v130 = vld [vmem:[#allocation2 + $0x40] sm:$0xff]
    %v131 = vld [vmem:[#allocation2 + $0x48] sm:$0xff]
    %v132 = vld [vmem:[#allocation2 + $0x50] sm:$0xff]
    %v133 = vld [vmem:[#allocation2 + $0x58] sm:$0xff]
    %v134 = vld [vmem:[#allocation2 + $0x60] sm:$0xff]
    %v135 = vld [vmem:[#allocation2 + $0x68] sm:$0xff]
    %v136 = vld [vmem:[#allocation2 + $0x70] sm:$0xff]
    %v137 = vld [vmem:[#allocation2 + $0x78] sm:$0xff]
    %v138 = vld [vmem:[#allocation2 + $0x80] sm:$0xff]
    %v139 = vld [vmem:[#allocation2 + $0x88] sm:$0xff]
    %v140 = vld [vmem:[#allocation2 + $0x90] sm:$0xff]
    %v141 = vld [vmem:[#allocation2 + $0x98] sm:$0xff]
    %v142 = vld [vmem:[#allocation2 + $0xa0] sm:$0xff]
    %v143 = vld [vmem:[#allocation2 + $0xa8] sm:$0xff]
    %v144 = vld [vmem:[#allocation2 + $0xb0] sm:$0xff]
    %v145 = vld [vmem:[#allocation2 + $0xb8] sm:$0xff]
    %v146 = vld [vmem:[#allocation2 + $0xc0] sm:$0xff]
    %v147 = vld [vmem:[#allocation2 + $0xc8] sm:$0xff]
    %v148 = vld [vmem:[#allocation2 + $0xd0] sm:$0xff]
    %v149 = vld [vmem:[#allocation2 + $0xd8] sm:$0xff]
    %v150 = vld [vmem:[#allocation2 + $0xe0] sm:$0xff]
    %v151 = vld [vmem:[#allocation2 + $0xe8] sm:$0xff]
    %v152 = vld [vmem:[#allocation2 + $0xf0] sm:$0xff]
    %v153 = vld [vmem:[#allocation2 + $0xf8] sm:$0xff]
    %v154 = vld [vmem:[#allocation2 + $0x100] sm:$0xff]
    %v155 = vld [vmem:[#allocation2 + $0x108] sm:$0xff]
    %v156 = vld [vmem:[#allocation2 + $0x110] sm:$0xff]
    %v157 = vld [vmem:[#allocation2 + $0x118] sm:$0xff]
    %v158 = vld [vmem:[#allocation2 + $0x120] sm:$0xff]
    %v159 = vld [vmem:[#allocation2 + $0x128] sm:$0xff]
    %v160 = vld [vmem:[#allocation2 + $0x130] sm:$0xff]
    %v161 = vld [vmem:[#allocation2 + $0x138] sm:$0xff]
    %v162 = vld [vmem:[#allocation2 + $0x140] sm:$0xff]
    %v163 = vld [vmem:[#allocation2 + $0x148] sm:$0xff]
    %v164 = vld [vmem:[#allocation2 + $0x150] sm:$0xff]
    %v165 = vld [vmem:[#allocation2 + $0x158] sm:$0xff]
    %v166 = vld [vmem:[#allocation2 + $0x160] sm:$0xff]
    %v167 = vld [vmem:[#allocation2 + $0x168] sm:$0xff]
    %v168 = vld [vmem:[#allocation2 + $0x170] sm:$0xff]
    %v169 = vld [vmem:[#allocation2 + $0x178] sm:$0xff]
    %v170 = vld [vmem:[#allocation2 + $0x180] sm:$0xff]
    %v171 = vld [vmem:[#allocation2 + $0x188] sm:$0xff]
    %v172 = vld [vmem:[#allocation2 + $0x190] sm:$0xff]
    %v173 = vld [vmem:[#allocation2 + $0x198] sm:$0xff]
    %v174 = vld [vmem:[#allocation2 + $0x1a0] sm:$0xff]
    %v175 = vld [vmem:[#allocation2 + $0x1a8] sm:$0xff]
    %v176 = vld [vmem:[#allocation2 + $0x1b0] sm:$0xff]
    %v177 = vld [vmem:[#allocation2 + $0x1b8] sm:$0xff]
    %v178 = vld [vmem:[#allocation2 + $0x1c0] sm:$0xff]
    %v179 = vld [vmem:[#allocation2 + $0x1c8] sm:$0xff]
    %v180 = vld [vmem:[#allocation2 + $0x1d0] sm:$0xff]
    %v181 = vld [vmem:[#allocation2 + $0x1d8] sm:$0xff]
    %v182 = vld [vmem:[#allocation2 + $0x1e0] sm:$0xff]
    %v183 = vld [vmem:[#allocation2 + $0x1e8] sm:$0xff]
    %v184 = vld [vmem:[#allocation2 + $0x1f0] sm:$0xff]
    %v185 = vld [vmem:[#allocation2 + $0x1f8] sm:$0xff]
    %v186 = vld [vmem:[#allocation2 + $0x200] sm:$0xff]
    %v187 = vld [vmem:[#allocation2 + $0x208] sm:$0xff]
    %v188 = vld [vmem:[#allocation2 + $0x210] sm:$0xff]
    %v189 = vld [vmem:[#allocation2 + $0x218] sm:$0xff]
    %v190 = vld [vmem:[#allocation2 + $0x220] sm:$0xff]
    %v191 = vld [vmem:[#allocation2 + $0x228] sm:$0xff]
    %v192 = vld [vmem:[#allocation2 + $0x230] sm:$0xff]
    %v193 = vld [vmem:[#allocation2 + $0x238] sm:$0xff]
    %v194 = vld [vmem:[#allocation2 + $0x240] sm:$0xff]
    %v195 = vld [vmem:[#allocation2 + $0x248] sm:$0xff]
    %v196 = vld [vmem:[#allocation2 + $0x250] sm:$0xff]
    %v197 = vld [vmem:[#allocation2 + $0x258] sm:$0xff]
    %v198 = vld [vmem:[#allocation2 + $0x260] sm:$0xff]
    %v199 = vld [vmem:[#allocation2 + $0x268] sm:$0xff]
    %v200 = vld [vmem:[#allocation2 + $0x270] sm:$0xff]
    %v201 = vld [vmem:[#allocation2 + $0x278] sm:$0xff]
    %v202 = vld [vmem:[#allocation2 + $0x280] sm:$0xff]
    %v203 = vld [vmem:[#allocation2 + $0x288] sm:$0xff]
    %v204 = vld [vmem:[#allocation2 + $0x290] sm:$0xff]
    %v205 = vld [vmem:[#allocation2 + $0x298] sm:$0xff]
    %v206 = vld [vmem:[#allocation2 + $0x2a0] sm:$0xff]
    %v207 = vld [vmem:[#allocation2 + $0x2a8] sm:$0xff]
    %v208 = vld [vmem:[#allocation2 + $0x2b0] sm:$0xff]
    %v209 = vld [vmem:[#allocation2 + $0x2b8] sm:$0xff]
    %v210 = vld [vmem:[#allocation2 + $0x2c0] sm:$0xff]
    %v211 = vld [vmem:[#allocation2 + $0x2c8] sm:$0xff]
    %v212 = vld [vmem:[#allocation2 + $0x2d0] sm:$0xff]
    %v213 = vld [vmem:[#allocation2 + $0x2d8] sm:$0xff]
    %v214 = vld [vmem:[#allocation2 + $0x2e0] sm:$0xff]
    %v215 = vld [vmem:[#allocation2 + $0x2e8] sm:$0xff]
    %v216 = vld [vmem:[#allocation2 + $0x2f0] sm:$0xff]
    %v217 = vld [vmem:[#allocation2 + $0x2f8] sm:$0xff]
    %v218 = vld [vmem:[#allocation2 + $0x300] sm:$0xff]
    %v219 = vld [vmem:[#allocation2 + $0x308] sm:$0xff]
    %v220 = vld [vmem:[#allocation2 + $0x310] sm:$0xff]
    %v221 = vld [vmem:[#allocation2 + $0x318] sm:$0xff]
    %v222 = vld [vmem:[#allocation2 + $0x320] sm:$0xff]
    %v223 = vld [vmem:[#allocation2 + $0x328] sm:$0xff]
    %v224 = vld [vmem:[#allocation2 + $0x330] sm:$0xff]
    %v225 = vld [vmem:[#allocation2 + $0x338] sm:$0xff]
    %v226 = vld [vmem:[#allocation2 + $0x340] sm:$0xff]
    %v227 = vld [vmem:[#allocation2 + $0x348] sm:$0xff]
    %v228 = vld [vmem:[#allocation2 + $0x350] sm:$0xff]
    %v229 = vld [vmem:[#allocation2 + $0x358] sm:$0xff]
    %v230 = vld [vmem:[#allocation2 + $0x360] sm:$0xff]
    %v231 = vld [vmem:[#allocation2 + $0x368] sm:$0xff]
    %v232 = vld [vmem:[#allocation2 + $0x370] sm:$0xff]
    %v233 = vld [vmem:[#allocation2 + $0x378] sm:$0xff]
    %v234 = vld [vmem:[#allocation2 + $0x380] sm:$0xff]
    %v235 = vld [vmem:[#allocation2 + $0x388] sm:$0xff]
    %v236 = vld [vmem:[#allocation2 + $0x390] sm:$0xff]
    %v237 = vld [vmem:[#allocation2 + $0x398] sm:$0xff]
    %v238 = vld [vmem:[#allocation2 + $0x3a0] sm:$0xff]
    %v239 = vld [vmem:[#allocation2 + $0x3a8] sm:$0xff]
    %v240 = vld [vmem:[#allocation2 + $0x3b0] sm:$0xff]
    %v241 = vld [vmem:[#allocation2 + $0x3b8] sm:$0xff]
    %v242 = vld [vmem:[#allocation2 + $0x3c0] sm:$0xff]
    %v243 = vld [vmem:[#allocation2 + $0x3c8] sm:$0xff]
    %v244 = vld [vmem:[#allocation2 + $0x3d0] sm:$0xff]
    %v245 = vld [vmem:[#allocation2 + $0x3d8] sm:$0xff]
    %v246 = vld [vmem:[#allocation2 + $0x3e0] sm:$0xff]
    %v247 = vld [vmem:[#allocation2 + $0x3e8] sm:$0xff]
    %v248 = vld [vmem:[#allocation2 + $0x3f0] sm:$0xff]
    %v249 = vld [vmem:[#allocation2 + $0x3f8] sm:$0xff]
    %v250 = vld [vmem:[#allocation2 + $0x400] sm:$0xff]
    %v251 = vld [vmem:[#allocation2 + $0x408] sm:$0xff]
    %v252 = vld [vmem:[#allocation2 + $0x410] sm:$0xff]
    %v253 = vld [vmem:[#allocation2 + $0x418] sm:$0xff]
    %v254 = vld [vmem:[#allocation2 + $0x420] sm:$0xff]
    %v255 = vld [vmem:[#allocation2 + $0x428] sm:$0xff]
    %v256 = vld [vmem:[#allocation2 + $0x430] sm:$0xff]
    %v257 = vld [vmem:[#allocation2 + $0x438] sm:$0xff]
    %v258 = vld [vmem:[#allocation2 + $0x440] sm:$0xff]
    %v259 = vld [vmem:[#allocation2 + $0x448] sm:$0xff]
    %v260 = vld [vmem:[#allocation2 + $0x450] sm:$0xff]
    %v261 = vld [vmem:[#allocation2 + $0x458] sm:$0xff]
    %v262 = vld [vmem:[#allocation2 + $0x460] sm:$0xff]
    %v263 = vld [vmem:[#allocation2 + $0x468] sm:$0xff]
    %v264 = vld [vmem:[#allocation2 + $0x470] sm:$0xff]
    %v265 = vld [vmem:[#allocation2 + $0x478] sm:$0xff]
    %v266 = vld [vmem:[#allocation2 + $0x480] sm:$0xff]
    %v267 = vld [vmem:[#allocation2 + $0x488] sm:$0xff]
    %v268 = vld [vmem:[#allocation2 + $0x490] sm:$0xff]
    %v269 = vld [vmem:[#allocation2 + $0x498] sm:$0xff]
    %v270 = vld [vmem:[#allocation2 + $0x4a0] sm:$0xff]
    %v271 = vld [vmem:[#allocation2 + $0x4a8] sm:$0xff]
    %v272 = vld [vmem:[#allocation2 + $0x4b0] sm:$0xff]
    %v273 = vld [vmem:[#allocation2 + $0x4b8] sm:$0xff]
    %v274 = vld [vmem:[#allocation2 + $0x4c0] sm:$0xff]
    %v275 = vld [vmem:[#allocation2 + $0x4c8] sm:$0xff]
    %v276 = vld [vmem:[#allocation2 + $0x4d0] sm:$0xff]
    %v277 = vld [vmem:[#allocation2 + $0x4d8] sm:$0xff]
    %v278 = vld [vmem:[#allocation2 + $0x4e0] sm:$0xff]
    %v279 = vld [vmem:[#allocation2 + $0x4e8] sm:$0xff]
    %v280 = vld [vmem:[#allocation2 + $0x4f0] sm:$0xff]
    %v281 = vld [vmem:[#allocation2 + $0x4f8] sm:$0xff]
    %v282 = vld [vmem:[#allocation2 + $0x500] sm:$0xff]
    %v283 = vld [vmem:[#allocation2 + $0x508] sm:$0xff]
    %v284 = vld [vmem:[#allocation2 + $0x510] sm:$0xff]
    %v285 = vld [vmem:[#allocation2 + $0x518] sm:$0xff]
    %v286 = vld [vmem:[#allocation2 + $0x520] sm:$0xff]
    %v287 = vld [vmem:[#allocation2 + $0x528] sm:$0xff]
    %v288 = vld [vmem:[#allocation2 + $0x530] sm:$0xff]
    %v289 = vld [vmem:[#allocation2 + $0x538] sm:$0xff]
    %v290 = vld [vmem:[#allocation2 + $0x540] sm:$0xff]
    %v291 = vld [vmem:[#allocation2 + $0x548] sm:$0xff]
    %v292 = vld [vmem:[#allocation2 + $0x550] sm:$0xff]
    %v293 = vld [vmem:[#allocation2 + $0x558] sm:$0xff]
    %v294 = vld [vmem:[#allocation2 + $0x560] sm:$0xff]
    %v295 = vld [vmem:[#allocation2 + $0x568] sm:$0xff]
    %v296 = vld [vmem:[#allocation2 + $0x570] sm:$0xff]
    %v297 = vld [vmem:[#allocation2 + $0x578] sm:$0xff]
    %v298 = vld [vmem:[#allocation2 + $0x580] sm:$0xff]
    %v299 = vld [vmem:[#allocation2 + $0x588] sm:$0xff]
    %v300 = vld [vmem:[#allocation2 + $0x590] sm:$0xff]
    %v301 = vld [vmem:[#allocation2 + $0x598] sm:$0xff]
    %v302 = vld [vmem:[#allocation2 + $0x5a0] sm:$0xff]
    %v303 = vld [vmem:[#allocation2 + $0x5a8] sm:$0xff]
    %v304 = vld [vmem:[#allocation2 + $0x5b0] sm:$0xff]
    %v305 = vld [vmem:[#allocation2 + $0x5b8] sm:$0xff]
    %v306 = vld [vmem:[#allocation2 + $0x5c0] sm:$0xff]
    %v307 = vld [vmem:[#allocation2 + $0x5c8] sm:$0xff]
    %v308 = vld [vmem:[#allocation2 + $0x5d0] sm:$0xff]
    %v309 = vld [vmem:[#allocation2 + $0x5d8] sm:$0xff]
    %v310 = vld [vmem:[#allocation2 + $0x5e0] sm:$0xff]
    %v311 = vld [vmem:[#allocation2 + $0x5e8] sm:$0xff]
    %v312 = vld [vmem:[#allocation2 + $0x5f0] sm:$0xff]
    %v313 = vld [vmem:[#allocation2 + $0x5f8] sm:$0xff]
    %v314 = vld [vmem:[#allocation2 + $0x600] sm:$0xff]
    %v315 = vld [vmem:[#allocation2 + $0x608] sm:$0xff]
    %v316 = vld [vmem:[#allocation2 + $0x610] sm:$0xff]
    %v317 = vld [vmem:[#allocation2 + $0x618] sm:$0xff]
    %v318 = vld [vmem:[#allocation2 + $0x620] sm:$0xff]
    %v319 = vld [vmem:[#allocation2 + $0x628] sm:$0xff]
    %v320 = vld [vmem:[#allocation2 + $0x630] sm:$0xff]
    %v321 = vld [vmem:[#allocation2 + $0x638] sm:$0xff]
    %v322 = vld [vmem:[#allocation2 + $0x640] sm:$0xff]
    %v323 = vld [vmem:[#allocation2 + $0x648] sm:$0xff]
    %v324 = vld [vmem:[#allocation2 + $0x650] sm:$0xff]
    %v325 = vld [vmem:[#allocation2 + $0x658] sm:$0xff]
    %v326 = vld [vmem:[#allocation2 + $0x660] sm:$0xff]
    %v327 = vld [vmem:[#allocation2 + $0x668] sm:$0xff]
    %v328 = vld [vmem:[#allocation2 + $0x670] sm:$0xff]
    %v329 = vld [vmem:[#allocation2 + $0x678] sm:$0xff]
    %v330 = vld [vmem:[#allocation2 + $0x680] sm:$0xff]
    %v331 = vld [vmem:[#allocation2 + $0x688] sm:$0xff]
    %v332 = vld [vmem:[#allocation2 + $0x690] sm:$0xff]
    %v333 = vld [vmem:[#allocation2 + $0x698] sm:$0xff]
    %v334 = vld [vmem:[#allocation2 + $0x6a0] sm:$0xff]
    %v335 = vld [vmem:[#allocation2 + $0x6a8] sm:$0xff]
    %v336 = vld [vmem:[#allocation2 + $0x6b0] sm:$0xff]
    %v337 = vld [vmem:[#allocation2 + $0x6b8] sm:$0xff]
    %v338 = vld [vmem:[#allocation2 + $0x6c0] sm:$0xff]
    %v339 = vld [vmem:[#allocation2 + $0x6c8] sm:$0xff]
    %v340 = vld [vmem:[#allocation2 + $0x6d0] sm:$0xff]
    %v341 = vld [vmem:[#allocation2 + $0x6d8] sm:$0xff]
    %v342 = vld [vmem:[#allocation2 + $0x6e0] sm:$0xff]
    %v343 = vld [vmem:[#allocation2 + $0x6e8] sm:$0xff]
    %v344 = vld [vmem:[#allocation2 + $0x6f0] sm:$0xff]
    %v345 = vld [vmem:[#allocation2 + $0x6f8] sm:$0xff]
    %v346 = vld [vmem:[#allocation2 + $0x700] sm:$0xff]
    %v347 = vld [vmem:[#allocation2 + $0x708] sm:$0xff]
    %v348 = vld [vmem:[#allocation2 + $0x710] sm:$0xff]
    %v349 = vld [vmem:[#allocation2 + $0x718] sm:$0xff]
    %v350 = vld [vmem:[#allocation2 + $0x720] sm:$0xff]
    %v351 = vld [vmem:[#allocation2 + $0x728] sm:$0xff]
    %v352 = vld [vmem:[#allocation2 + $0x730] sm:$0xff]
    %v353 = vld [vmem:[#allocation2 + $0x738] sm:$0xff]
    %v354 = vld [vmem:[#allocation2 + $0x740] sm:$0xff]
    %v355 = vld [vmem:[#allocation2 + $0x748] sm:$0xff]
    %v356 = vld [vmem:[#allocation2 + $0x750] sm:$0xff]
    %v357 = vld [vmem:[#allocation2 + $0x758] sm:$0xff]
    %v358 = vld [vmem:[#allocation2 + $0x760] sm:$0xff]
    %v359 = vld [vmem:[#allocation2 + $0x768] sm:$0xff]
    %v360 = vld [vmem:[#allocation2 + $0x770] sm:$0xff]
    %v361 = vld [vmem:[#allocation2 + $0x778] sm:$0xff]
    %v362 = vld [vmem:[#allocation2 + $0x780] sm:$0xff]
    %v363 = vld [vmem:[#allocation2 + $0x788] sm:$0xff]
    %v364 = vld [vmem:[#allocation2 + $0x790] sm:$0xff]
    %v365 = vld [vmem:[#allocation2 + $0x798] sm:$0xff]
    %v366 = vld [vmem:[#allocation2 + $0x7a0] sm:$0xff]
    %v367 = vld [vmem:[#allocation2 + $0x7a8] sm:$0xff]
    %v368 = vld [vmem:[#allocation2 + $0x7b0] sm:$0xff]
    %v369 = vld [vmem:[#allocation2 + $0x7b8] sm:$0xff]
    %v370 = vld [vmem:[#allocation2 + $0x7c0] sm:$0xff]
    %v371 = vld [vmem:[#allocation2 + $0x7c8] sm:$0xff]
    %v372 = vld [vmem:[#allocation2 + $0x7d0] sm:$0xff]
    %v373 = vld [vmem:[#allocation2 + $0x7d8] sm:$0xff]
    %v374 = vld [vmem:[#allocation2 + $0x7e0] sm:$0xff]
    %v375 = vld [vmem:[#allocation2 + $0x7e8] sm:$0xff]
    %v376 = vld [vmem:[#allocation2 + $0x7f0] sm:$0xff]
    %v377 = vld [vmem:[#allocation2 + $0x7f8] sm:$0xff]
    %v378 = vld [vmem:[#allocation2 + $0x800] sm:$0xff]
    %v379 = vld [vmem:[#allocation2 + $0x808] sm:$0xff]
    %v380 = vld [vmem:[#allocation2 + $0x810] sm:$0xff]
    %v381 = vld [vmem:[#allocation2 + $0x818] sm:$0xff]
    %v382 = vld [vmem:[#allocation2 + $0x820] sm:$0xff]
    %v383 = vld [vmem:[#allocation2 + $0x828] sm:$0xff]
    %v384 = vld [vmem:[#allocation2 + $0x830] sm:$0xff]
    %v385 = vld [vmem:[#allocation2 + $0x838] sm:$0xff]
    %v386 = vld [vmem:[#allocation2 + $0x840] sm:$0xff]
    %v387 = vld [vmem:[#allocation2 + $0x848] sm:$0xff]
    %v388 = vld [vmem:[#allocation2 + $0x850] sm:$0xff]
    %v389 = vld [vmem:[#allocation2 + $0x858] sm:$0xff]
    %v390 = vld [vmem:[#allocation2 + $0x860] sm:$0xff]
    %v391 = vld [vmem:[#allocation2 + $0x868] sm:$0xff]
    %v392 = vld [vmem:[#allocation2 + $0x870] sm:$0xff]
    %v393 = vld [vmem:[#allocation2 + $0x878] sm:$0xff]
    %v394 = vld [vmem:[#allocation2 + $0x880] sm:$0xff]
    %v395 = vld [vmem:[#allocation2 + $0x888] sm:$0xff]
    %v396 = vld [vmem:[#allocation2 + $0x890] sm:$0xff]
    %v397 = vld [vmem:[#allocation2 + $0x898] sm:$0xff]
    %v398 = vld [vmem:[#allocation2 + $0x8a0] sm:$0xff]
    %v399 = vld [vmem:[#allocation2 + $0x8a8] sm:$0xff]
    %v400 = vld [vmem:[#allocation2 + $0x8b0] sm:$0xff]
    %v401 = vld [vmem:[#allocation2 + $0x8b8] sm:$0xff]
    %v402 = vld [vmem:[#allocation2 + $0x8c0] sm:$0xff]
    %v403 = vld [vmem:[#allocation2 + $0x8c8] sm:$0xff]
    %v404 = vld [vmem:[#allocation2 + $0x8d0] sm:$0xff]
    %v405 = vld [vmem:[#allocation2 + $0x8d8] sm:$0xff]
    %v406 = vld [vmem:[#allocation2 + $0x8e0] sm:$0xff]
    %v407 = vld [vmem:[#allocation2 + $0x8e8] sm:$0xff]
    %v408 = vld [vmem:[#allocation2 + $0x8f0] sm:$0xff]
    %v409 = vld [vmem:[#allocation2 + $0x8f8] sm:$0xff]
    %v410 = vld [vmem:[#allocation2 + $0x900] sm:$0xff]
    %v411 = vld [vmem:[#allocation2 + $0x908] sm:$0xff]
    %v412 = vld [vmem:[#allocation2 + $0x910] sm:$0xff]
    %v413 = vld [vmem:[#allocation2 + $0x918] sm:$0xff]
    %v414 = vld [vmem:[#allocation2 + $0x920] sm:$0xff]
    %v415 = vld [vmem:[#allocation2 + $0x928] sm:$0xff]
    %v416 = vld [vmem:[#allocation2 + $0x930] sm:$0xff]
    %v417 = vld [vmem:[#allocation2 + $0x938] sm:$0xff]
    %v418 = vld [vmem:[#allocation2 + $0x940] sm:$0xff]
    %v419 = vld [vmem:[#allocation2 + $0x948] sm:$0xff]
    %v420 = vld [vmem:[#allocation2 + $0x950] sm:$0xff]
    %v421 = vld [vmem:[#allocation2 + $0x958] sm:$0xff]
    %v422 = vld [vmem:[#allocation2 + $0x960] sm:$0xff]
    %v423 = vld [vmem:[#allocation2 + $0x968] sm:$0xff]
    %v424 = vld [vmem:[#allocation2 + $0x970] sm:$0xff]
    %v425 = vld [vmem:[#allocation2 + $0x978] sm:$0xff]
    %v426 = vld [vmem:[#allocation2 + $0x980] sm:$0xff]
    %v427 = vld [vmem:[#allocation2 + $0x988] sm:$0xff]
    %v428 = vld [vmem:[#allocation2 + $0x990] sm:$0xff]
    %v429 = vld [vmem:[#allocation2 + $0x998] sm:$0xff]
    %v430 = vld [vmem:[#allocation2 + $0x9a0] sm:$0xff]
    %v431 = vld [vmem:[#allocation2 + $0x9a8] sm:$0xff]
    %v432 = vld [vmem:[#allocation2 + $0x9b0] sm:$0xff]
    %v433 = vld [vmem:[#allocation2 + $0x9b8] sm:$0xff]
    %v434 = vld [vmem:[#allocation2 + $0x9c0] sm:$0xff]
    %v435 = vld [vmem:[#allocation2 + $0x9c8] sm:$0xff]
    %v436 = vld [vmem:[#allocation2 + $0x9d0] sm:$0xff]
    %v437 = vld [vmem:[#allocation2 + $0x9d8] sm:$0xff]
    %v438 = vld [vmem:[#allocation2 + $0x9e0] sm:$0xff]
    %v439 = vld [vmem:[#allocation2 + $0x9e8] sm:$0xff]
    %v440 = vld [vmem:[#allocation2 + $0x9f0] sm:$0xff]
    %v441 = vld [vmem:[#allocation2 + $0x9f8] sm:$0xff]
    %v442 = vld [vmem:[#allocation2 + $0xa00] sm:$0xff]
    %v443 = vld [vmem:[#allocation2 + $0xa08] sm:$0xff]
    %v444 = vld [vmem:[#allocation2 + $0xa10] sm:$0xff]
    %v445 = vld [vmem:[#allocation2 + $0xa18] sm:$0xff]
    %v446 = vld [vmem:[#allocation2 + $0xa20] sm:$0xff]
    %v447 = vld [vmem:[#allocation2 + $0xa28] sm:$0xff]
    %v448 = vld [vmem:[#allocation2 + $0xa30] sm:$0xff]
    %v449 = vld [vmem:[#allocation2 + $0xa38] sm:$0xff]
    %v450 = vld [vmem:[#allocation2 + $0xa40] sm:$0xff]
    %v451 = vld [vmem:[#allocation2 + $0xa48] sm:$0xff]
    %v452 = vld [vmem:[#allocation2 + $0xa50] sm:$0xff]
    %v453 = vld [vmem:[#allocation2 + $0xa58] sm:$0xff]
    %v454 = vld [vmem:[#allocation2 + $0xa60] sm:$0xff]
    %v455 = vld [vmem:[#allocation2 + $0xa68] sm:$0xff]
    %v456 = vld [vmem:[#allocation2 + $0xa70] sm:$0xff]
    %v457 = vld [vmem:[#allocation2 + $0xa78] sm:$0xff]
    %v458 = vld [vmem:[#allocation2 + $0xa80] sm:$0xff]
    %v459 = vld [vmem:[#allocation2 + $0xa88] sm:$0xff]
    %v460 = vld [vmem:[#allocation2 + $0xa90] sm:$0xff]
    %v461 = vld [vmem:[#allocation2 + $0xa98] sm:$0xff]
    %v462 = vld [vmem:[#allocation2 + $0xaa0] sm:$0xff]
    %v463 = vld [vmem:[#allocation2 + $0xaa8] sm:$0xff]
    %v464 = vld [vmem:[#allocation2 + $0xab0] sm:$0xff]
    %v465 = vld [vmem:[#allocation2 + $0xab8] sm:$0xff]
    %v466 = vld [vmem:[#allocation2 + $0xac0] sm:$0xff]
    %v467 = vld [vmem:[#allocation2 + $0xac8] sm:$0xff]
    %v468 = vld [vmem:[#allocation2 + $0xad0] sm:$0xff]
    %v469 = vld [vmem:[#allocation2 + $0xad8] sm:$0xff]
    %v470 = vld [vmem:[#allocation2 + $0xae0] sm:$0xff]
    %v471 = vld [vmem:[#allocation2 + $0xae8] sm:$0xff]
    %v472 = vld [vmem:[#allocation2 + $0xaf0] sm:$0xff]
    %v473 = vld [vmem:[#allocation2 + $0xaf8] sm:$0xff]
    %v474 = vld [vmem:[#allocation5] sm:$0xf]
    %v476 = vlaneseq
    %v477 = vshrl.u32 %v476, 7
    %v478 = vsub.s32 0, %v477
    %v479 = vrot.slane %v474, %v478
    %v480 = vlaneseq
    %v481 = vshrl.u32 %v480, 7
    %v482 = vsub.s32 1, %v481
    %v483 = vrot.slane %v474, %v482
    %v484 = vlaneseq
    %v485 = vshrl.u32 %v484, 7
    %v486 = vsub.s32 2, %v485
    %v487 = vrot.slane %v474, %v486
    %v488 = vlaneseq
    %v489 = vshrl.u32 %v488, 7
    %v490 = vsub.s32 3, %v489
    %v491 = vrot.slane %v474, %v490
    %v498 = vcombine.high %v120, %v120
    %v500 = vunpack.c.l.s4 1983009808
    %v501 = vunpack.c.0.s8 %v500
    %v502 = vlaneseq
    %v503 = vshrl.u32 %v502, 7
    %v504 = vsub.s32 %v501, %v503
    %v505 = vrot.slane %v120, %v504
    %v507 = vunpack.c.l.s4 1983009808
    %v508 = vunpack.c.0.s8 %v507
    %v509 = vlaneseq
    %v510 = vshrl.u32 %v509, 7
    %v511 = vsub.s32 %v508, %v510
    %v512 = vrot.slane %v498, %v511
    %v513 = vcombine.high %v505, %v505
    %v514 = vcombine.high %v512, %v512
    %v516 = vunpack.c.l.s4 1983009808
    %v517 = vunpack.c.0.s8 %v516
    %v518 = vlaneseq
    %v519 = vshrl.u32 %v518, 7
    %v520 = vsub.s32 %v517, %v519
    %v521 = vrot.slane %v121, %v520
    %v522 = vcombine.high %v521, %v521
    %vm528 = vcmask 523264
    %v529 = vsel %vm528, %v522, 0
    %531 = vmatprep.subr.mxu0 %v123
    %532 = vmatpush1.msra.mxu0 %v122
    %533 = vmatprep.subr.mxu0 %v127
    %534 = vmatpush1.msra.mxu0 %v126
    %535 = vmatprep.subr.mxu0 %v131
    %536 = vmatpush1.msra.mxu0 %v130
    %537 = vmatprep.subr.mxu0 %v135
    %538 = vmatpush1.msra.mxu0 %v134
    %539 = vmatprep.subr.mxu0 %v139
    %540 = vmatpush1.msra.mxu0 %v138
    %541 = vmatprep.subr.mxu0 %v143
    %542 = vmatpush1.msra.mxu0 %v142
    %543 = vmatprep.subr.mxu0 %v147
    %544 = vmatpush1.msra.mxu0 %v146
    %545 = vmatprep.subr.mxu0 %v151
    %546 = vmatpush1.msra.mxu0 %v150
    %547 = vmatprep.subr.mxu0 %v155
    %548 = vmatpush1.msra.mxu0 %v154
    %549 = vmatprep.subr.mxu0 %v159
    %550 = vmatpush1.msra.mxu0 %v158
    %551 = vmatprep.subr.mxu0 %v163
    %552 = vmatpush1.msra.mxu0 %v162
    %553 = vmatprep.subr.mxu0 %v167
    %554 = vmatpush1.msra.mxu0 %v166
    %555 = vmatprep.subr.mxu0 %v171
    %556 = vmatpush1.msra.mxu0 %v170
    %557 = vmatprep.subr.mxu0 %v175
    %558 = vmatpush1.msra.mxu0 %v174
    %559 = vmatprep.subr.mxu0 %v179
    %560 = vmatpush1.msra.mxu0 %v178
    %561 = vmatprep.subr.mxu0 %v183
    %562 = vmatpush1.msra.mxu0 %v182
    %563 = vmatprep.subr.mxu0 %v187
    %564 = vmatpush1.msra.mxu0 %v186
    %565 = vmatprep.subr.mxu0 %v191
    %566 = vmatpush1.msra.mxu0 %v190
    %567 = vmatprep.subr.mxu0 %v195
    %568 = vmatpush1.msra.mxu0 %v194
    %569 = vmatprep.subr.mxu0 %v199
    %570 = vmatpush1.msra.mxu0 %v198
    %571 = vmatprep.subr.mxu0 %v203
    %572 = vmatpush1.msra.mxu0 %v202
    %573 = vmatprep.subr.mxu0 %v207
    %574 = vmatpush1.msra.mxu0 %v206
    %575 = vmatprep.subr.mxu0 %v211
    %576 = vmatpush1.msra.mxu0 %v210
    %577 = vmatprep.subr.mxu0 %v215
    %578 = vmatpush1.msra.mxu0 %v214
    %579 = vmatprep.subr.mxu0 %v219
    %580 = vmatpush1.msra.mxu0 %v218
    %581 = vmatprep.subr.mxu0 %v223
    %582 = vmatpush1.msra.mxu0 %v222
    %583 = vmatprep.subr.mxu0 %v227
    %584 = vmatpush1.msra.mxu0 %v226
    %585 = vmatprep.subr.mxu0 %v231
    %586 = vmatpush1.msra.mxu0 %v230
    %587 = vmatprep.subr.mxu0 %v235
    %588 = vmatpush1.msra.mxu0 %v234
    %589 = vmatprep.subr.mxu0 %v239
    %590 = vmatpush1.msra.mxu0 %v238
    %591 = vmatprep.subr.mxu0 %v243
    %592 = vmatpush1.msra.mxu0 %v242
    %593 = vmatprep.subr.mxu0 %v247
    %594 = vmatpush1.msra.mxu0 %v246
    %595 = vmatprep.mubr.f32.mxu0 %v513
    %596 = vmatmul.mubr.f32.gmra.mrb[0].mxu0 %v505
    %v597 = vpop.f32.mrb[0].mxu0
    %v598 = vadd.f32 %v479, %v597
    %v599 = vpop.f32.mrb[0].mxu0
    %v600 = vadd.f32 %v483, %v599
    %601 = vdwg.mxu0
    %602 = vmatprep.subr.mxu0 %v251
    %603 = vmatpush1.msra.mxu0 %v250
    %604 = vmatprep.subr.mxu0 %v255
    %605 = vmatpush1.msra.mxu0 %v254
    %606 = vmatprep.subr.mxu0 %v259
    %607 = vmatpush1.msra.mxu0 %v258
    %608 = vmatprep.subr.mxu0 %v263
    %609 = vmatpush1.msra.mxu0 %v262
    %610 = vmatprep.subr.mxu0 %v267
    %611 = vmatpush1.msra.mxu0 %v266
    %612 = vmatprep.subr.mxu0 %v271
    %613 = vmatpush1.msra.mxu0 %v270
    %614 = vmatprep.subr.mxu0 %v275
    %615 = vmatpush1.msra.mxu0 %v274
    %616 = vmatprep.subr.mxu0 %v279
    %617 = vmatpush1.msra.mxu0 %v278
    %618 = vmatprep.subr.mxu0 %v283
    %619 = vmatpush1.msra.mxu0 %v282
    %620 = vmatprep.subr.mxu0 %v287
    %621 = vmatpush1.msra.mxu0 %v286
    %622 = vmatprep.subr.mxu0 %v291
    %623 = vmatpush1.msra.mxu0 %v290
    %624 = vmatprep.subr.mxu0 %v295
    %625 = vmatpush1.msra.mxu0 %v294
    %626 = vmatprep.subr.mxu0 %v299
    %627 = vmatpush1.msra.mxu0 %v298
    %628 = vmatprep.subr.mxu0 %v303
    %629 = vmatpush1.msra.mxu0 %v302
    %630 = vmatprep.subr.mxu0 %v307
    %631 = vmatpush1.msra.mxu0 %v306
    %632 = vmatprep.subr.mxu0 %v311
    %633 = vmatpush1.msra.mxu0 %v310
    %634 = vmatprep.subr.mxu0 %v315
    %635 = vmatpush1.msra.mxu0 %v314
    %636 = vmatprep.subr.mxu0 %v319
    %637 = vmatpush1.msra.mxu0 %v318
    %638 = vmatprep.subr.mxu0 %v323
    %639 = vmatpush1.msra.mxu0 %v322
    %640 = vmatprep.subr.mxu0 %v327
    %641 = vmatpush1.msra.mxu0 %v326
    %642 = vmatprep.subr.mxu0 %v331
    %643 = vmatpush1.msra.mxu0 %v330
    %644 = vmatprep.subr.mxu0 %v335
    %645 = vmatpush1.msra.mxu0 %v334
    %646 = vmatprep.subr.mxu0 %v339
    %647 = vmatpush1.msra.mxu0 %v338
    %648 = vmatprep.subr.mxu0 %v343
    %649 = vmatpush1.msra.mxu0 %v342
    %650 = vmatprep.subr.mxu0 %v347
    %651 = vmatpush1.msra.mxu0 %v346
    %652 = vmatprep.subr.mxu0 %v351
    %653 = vmatpush1.msra.mxu0 %v350
    %654 = vmatprep.subr.mxu0 %v355
    %655 = vmatpush1.msra.mxu0 %v354
    %656 = vmatprep.subr.mxu0 %v359
    %657 = vmatpush1.msra.mxu0 %v358
    %658 = vmatprep.subr.mxu0 %v363
    %659 = vmatpush1.msra.mxu0 %v362
    %660 = vmatprep.subr.mxu0 %v367
    %661 = vmatpush1.msra.mxu0 %v366
    %662 = vmatprep.subr.mxu0 %v371
    %663 = vmatpush1.msra.mxu0 %v370
    %664 = vmatprep.subr.mxu0 %v375
    %665 = vmatpush1.msra.mxu0 %v374
    %666 = vmatprep.mubr.f32.mxu0 %v514
    %667 = vmatmul.mubr.f32.gmra.mrb[0].mxu0 %v512
    %v668 = vpop.f32.mrb[0].mxu0
    %v669 = vadd.f32 %v598, %v668
    %v670 = vpop.f32.mrb[0].mxu0
    %v671 = vadd.f32 %v600, %v670
    %672 = vdwg.mxu0
    %673 = vmatprep.subr.mxu0 %v379
    %674 = vmatpush1.msra.mxu0 %v378
    %675 = vmatprep.subr.mxu0 %v383
    %676 = vmatpush1.msra.mxu0 %v382
    %677 = vmatprep.subr.mxu0 %v387
    %678 = vmatpush1.msra.mxu0 %v386
    %679 = vmatprep.subr.mxu0 %v391
    %680 = vmatpush1.msra.mxu0 %v390
    %681 = vmatprep.subr.mxu0 %v395
    %682 = vmatpush1.msra.mxu0 %v394
    %683 = vmatprep.subr.mxu0 %v399
    %684 = vmatpush1.msra.mxu0 %v398
    %685 = vmatprep.subr.mxu0 %v403
    %686 = vmatpush1.msra.mxu0 %v402
    %687 = vmatprep.subr.mxu0 %v407
    %688 = vmatpush1.msra.mxu0 %v406
    %689 = vmatprep.subr.mxu0 %v411
    %690 = vmatpush1.msra.mxu0 %v410
    %691 = vmatprep.subr.mxu0 %v415
    %692 = vmatpush1.msra.mxu0 %v414
    %693 = vmatprep.subr.mxu0 %v419
    %694 = vmatpush1.msra.mxu0 %v418
    %695 = vmatprep.subr.mxu0 %v423
    %696 = vmatpush1.msra.mxu0 %v422
    %697 = vmatprep.subr.mxu0 %v427
    %698 = vmatpush1.msra.mxu0 %v426
    %699 = vmatprep.subr.mxu0 %v431
    %700 = vmatpush1.msra.mxu0 %v430
    %701 = vmatprep.subr.mxu0 %v435
    %702 = vmatpush1.msra.mxu0 %v434
    %703 = vmatprep.subr.mxu0 %v439
    %704 = vmatpush1.msra.mxu0 %v438
    %705 = vmatprep.subr.mxu0 %v443
    %706 = vmatpush1.msra.mxu0 %v442
    %707 = vmatprep.subr.mxu0 %v447
    %708 = vmatpush1.msra.mxu0 %v446
    %709 = vmatprep.subr.mxu0 %v451
    %710 = vmatpush1.msra.mxu0 %v450
    %711 = vmatprep.subr.mxu0 %v455
    %712 = vmatpush1.msra.mxu0 %v454
    %713 = vmatprep.subr.mxu0 %v459
    %714 = vmatpush1.msra.mxu0 %v458
    %715 = vmatprep.subr.mxu0 %v463
    %716 = vmatpush1.msra.mxu0 %v462
    %717 = vmatprep.subr.mxu0 %v467
    %718 = vmatpush1.msra.mxu0 %v466
    %719 = vmatprep.subr.mxu0 %v471
    %720 = vmatpush1.msra.mxu0 %v470
    %721 = vmatprep.subr.mxu0 0.0
    %722 = vmatpush1.msra.mxu0 0.0
    %723 = vmatprep.subr.mxu0 0.0
    %724 = vmatpush1.msra.mxu0 0.0
    %725 = vmatprep.subr.mxu0 0.0
    %726 = vmatpush1.msra.mxu0 0.0
    %727 = vmatprep.subr.mxu0 0.0
    %728 = vmatpush1.msra.mxu0 0.0
    %729 = vmatprep.subr.mxu0 0.0
    %730 = vmatpush1.msra.mxu0 0.0
    %731 = vmatprep.subr.mxu0 0.0
    %732 = vmatpush1.msra.mxu0 0.0
    %733 = vmatprep.subr.mxu0 0.0
    %734 = vmatpush1.msra.mxu0 0.0
    %735 = vmatprep.subr.mxu0 0.0
    %736 = vmatpush1.msra.mxu0 0.0
    %737 = vmatprep.mubr.f32.mxu0 %v529
    %738 = vmatmul.mubr.f32.gmra.mrb[0].mxu0 %v521
    %v739 = vpop.f32.mrb[0].mxu0
    %v740 = vadd.f32 %v669, %v739
    %v741 = vpop.f32.mrb[0].mxu0
    %v742 = vadd.f32 %v671, %v741
    %743 = vdwg.mxu0
    %744 = vmatprep.subr.mxu0 %v125
    %745 = vmatpush1.msra.mxu0 %v124
    %746 = vmatprep.subr.mxu0 %v129
    %747 = vmatpush1.msra.mxu0 %v128
    %748 = vmatprep.subr.mxu0 %v133
    %749 = vmatpush1.msra.mxu0 %v132
    %750 = vmatprep.subr.mxu0 %v137
    %751 = vmatpush1.msra.mxu0 %v136
    %752 = vmatprep.subr.mxu0 %v141
    %753 = vmatpush1.msra.mxu0 %v140
    %754 = vmatprep.subr.mxu0 %v145
    %755 = vmatpush1.msra.mxu0 %v144
    %756 = vmatprep.subr.mxu0 %v149
    %757 = vmatpush1.msra.mxu0 %v148
    %758 = vmatprep.subr.mxu0 %v153
    %759 = vmatpush1.msra.mxu0 %v152
    %760 = vmatprep.subr.mxu0 %v157
    %761 = vmatpush1.msra.mxu0 %v156
    %762 = vmatprep.subr.mxu0 %v161
    %763 = vmatpush1.msra.mxu0 %v160
    %764 = vmatprep.subr.mxu0 %v165
    %765 = vmatpush1.msra.mxu0 %v164
    %766 = vmatprep.subr.mxu0 %v169
    %767 = vmatpush1.msra.mxu0 %v168
    %768 = vmatprep.subr.mxu0 %v173
    %769 = vmatpush1.msra.mxu0 %v172
    %770 = vmatprep.subr.mxu0 %v177
    %771 = vmatpush1.msra.mxu0 %v176
    %772 = vmatprep.subr.mxu0 %v181
    %773 = vmatpush1.msra.mxu0 %v180
    %774 = vmatprep.subr.mxu0 %v185
    %775 = vmatpush1.msra.mxu0 %v184
    %776 = vmatprep.subr.mxu0 %v189
    %777 = vmatpush1.msra.mxu0 %v188
    %778 = vmatprep.subr.mxu0 %v193
    %779 = vmatpush1.msra.mxu0 %v192
    %780 = vmatprep.subr.mxu0 %v197
    %781 = vmatpush1.msra.mxu0 %v196
    %782 = vmatprep.subr.mxu0 %v201
    %783 = vmatpush1.msra.mxu0 %v200
    %784 = vmatprep.subr.mxu0 %v205
    %785 = vmatpush1.msra.mxu0 %v204
    %786 = vmatprep.subr.mxu0 %v209
    %787 = vmatpush1.msra.mxu0 %v208
    %788 = vmatprep.subr.mxu0 %v213
    %789 = vmatpush1.msra.mxu0 %v212
    %790 = vmatprep.subr.mxu0 %v217
    %791 = vmatpush1.msra.mxu0 %v216
    %792 = vmatprep.subr.mxu0 %v221
    %793 = vmatpush1.msra.mxu0 %v220
    %794 = vmatprep.subr.mxu0 %v225
    %795 = vmatpush1.msra.mxu0 %v224
    %796 = vmatprep.subr.mxu0 %v229
    %797 = vmatpush1.msra.mxu0 %v228
    %798 = vmatprep.subr.mxu0 %v233
    %799 = vmatpush1.msra.mxu0 %v232
    %800 = vmatprep.subr.mxu0 %v237
    %801 = vmatpush1.msra.mxu0 %v236
    %802 = vmatprep.subr.mxu0 %v241
    %803 = vmatpush1.msra.mxu0 %v240
    %804 = vmatprep.subr.mxu0 %v245
    %805 = vmatpush1.msra.mxu0 %v244
    %806 = vmatprep.subr.mxu0 %v249
    %807 = vmatpush1.msra.mxu0 %v248
    %808 = vmatprep.mubr.f32.mxu0 %v513
    %809 = vmatmul.mubr.f32.gmra.mrb[0].mxu0 %v505
    %v810 = vpop.f32.mrb[0].mxu0
    %v811 = vadd.f32 %v487, %v810
    %v812 = vpop.f32.mrb[0].mxu0
    %v813 = vadd.f32 %v491, %v812
    %814 = vdwg.mxu0
    %815 = vmatprep.subr.mxu0 %v253
    %816 = vmatpush1.msra.mxu0 %v252
    %817 = vmatprep.subr.mxu0 %v257
    %818 = vmatpush1.msra.mxu0 %v256
    %819 = vmatprep.subr.mxu0 %v261
    %820 = vmatpush1.msra.mxu0 %v260
    %821 = vmatprep.subr.mxu0 %v265
    %822 = vmatpush1.msra.mxu0 %v264
    %823 = vmatprep.subr.mxu0 %v269
    %824 = vmatpush1.msra.mxu0 %v268
    %825 = vmatprep.subr.mxu0 %v273
    %826 = vmatpush1.msra.mxu0 %v272
    %827 = vmatprep.subr.mxu0 %v277
    %828 = vmatpush1.msra.mxu0 %v276
    %829 = vmatprep.subr.mxu0 %v281
    %830 = vmatpush1.msra.mxu0 %v280
    %831 = vmatprep.subr.mxu0 %v285
    %832 = vmatpush1.msra.mxu0 %v284
    %833 = vmatprep.subr.mxu0 %v289
    %834 = vmatpush1.msra.mxu0 %v288
    %835 = vmatprep.subr.mxu0 %v293
    %836 = vmatpush1.msra.mxu0 %v292
    %837 = vmatprep.subr.mxu0 %v297
    %838 = vmatpush1.msra.mxu0 %v296
    %839 = vmatprep.subr.mxu0 %v301
    %840 = vmatpush1.msra.mxu0 %v300
    %841 = vmatprep.subr.mxu0 %v305
    %842 = vmatpush1.msra.mxu0 %v304
    %843 = vmatprep.subr.mxu0 %v309
    %844 = vmatpush1.msra.mxu0 %v308
    %845 = vmatprep.subr.mxu0 %v313
    %846 = vmatpush1.msra.mxu0 %v312
    %847 = vmatprep.subr.mxu0 %v317
    %848 = vmatpush1.msra.mxu0 %v316
    %849 = vmatprep.subr.mxu0 %v321
    %850 = vmatpush1.msra.mxu0 %v320
    %851 = vmatprep.subr.mxu0 %v325
    %852 = vmatpush1.msra.mxu0 %v324
    %853 = vmatprep.subr.mxu0 %v329
    %854 = vmatpush1.msra.mxu0 %v328
    %855 = vmatprep.subr.mxu0 %v333
    %856 = vmatpush1.msra.mxu0 %v332
    %857 = vmatprep.subr.mxu0 %v337
    %858 = vmatpush1.msra.mxu0 %v336
    %859 = vmatprep.subr.mxu0 %v341
    %860 = vmatpush1.msra.mxu0 %v340
    %861 = vmatprep.subr.mxu0 %v345
    %862 = vmatpush1.msra.mxu0 %v344
    %863 = vmatprep.subr.mxu0 %v349
    %864 = vmatpush1.msra.mxu0 %v348
    %865 = vmatprep.subr.mxu0 %v353
    %866 = vmatpush1.msra.mxu0 %v352
    %867 = vmatprep.subr.mxu0 %v357
    %868 = vmatpush1.msra.mxu0 %v356
    %869 = vmatprep.subr.mxu0 %v361
    %870 = vmatpush1.msra.mxu0 %v360
    %871 = vmatprep.subr.mxu0 %v365
    %872 = vmatpush1.msra.mxu0 %v364
    %873 = vmatprep.subr.mxu0 %v369
    %874 = vmatpush1.msra.mxu0 %v368
    %875 = vmatprep.subr.mxu0 %v373
    %876 = vmatpush1.msra.mxu0 %v372
    %877 = vmatprep.subr.mxu0 %v377
    %878 = vmatpush1.msra.mxu0 %v376
    %879 = vmatprep.mubr.f32.mxu0 %v514
    %880 = vmatmul.mubr.f32.gmra.mrb[0].mxu0 %v512
    %v881 = vpop.f32.mrb[0].mxu0
    %v882 = vadd.f32 %v811, %v881
    %v883 = vpop.f32.mrb[0].mxu0
    %v884 = vadd.f32 %v813, %v883
    %885 = vdwg.mxu0
    %886 = vmatprep.subr.mxu0 %v381
    %887 = vmatpush1.msra.mxu0 %v380
    %888 = vmatprep.subr.mxu0 %v385
    %889 = vmatpush1.msra.mxu0 %v384
    %890 = vmatprep.subr.mxu0 %v389
    %891 = vmatpush1.msra.mxu0 %v388
    %892 = vmatprep.subr.mxu0 %v393
    %893 = vmatpush1.msra.mxu0 %v392
    %894 = vmatprep.subr.mxu0 %v397
    %895 = vmatpush1.msra.mxu0 %v396
    %896 = vmatprep.subr.mxu0 %v401
    %897 = vmatpush1.msra.mxu0 %v400
    %898 = vmatprep.subr.mxu0 %v405
    %899 = vmatpush1.msra.mxu0 %v404
    %900 = vmatprep.subr.mxu0 %v409
    %901 = vmatpush1.msra.mxu0 %v408
    %902 = vmatprep.subr.mxu0 %v413
    %903 = vmatpush1.msra.mxu0 %v412
    %904 = vmatprep.subr.mxu0 %v417
    %905 = vmatpush1.msra.mxu0 %v416
    %906 = vmatprep.subr.mxu0 %v421
    %907 = vmatpush1.msra.mxu0 %v420
    %908 = vmatprep.subr.mxu0 %v425
    %909 = vmatpush1.msra.mxu0 %v424
    %910 = vmatprep.subr.mxu0 %v429
    %911 = vmatpush1.msra.mxu0 %v428
    %912 = vmatprep.subr.mxu0 %v433
    %913 = vmatpush1.msra.mxu0 %v432
    %914 = vmatprep.subr.mxu0 %v437
    %915 = vmatpush1.msra.mxu0 %v436
    %916 = vmatprep.subr.mxu0 %v441
    %917 = vmatpush1.msra.mxu0 %v440
    %918 = vmatprep.subr.mxu0 %v445
    %919 = vmatpush1.msra.mxu0 %v444
    %920 = vmatprep.subr.mxu0 %v449
    %921 = vmatpush1.msra.mxu0 %v448
    %922 = vmatprep.subr.mxu0 %v453
    %923 = vmatpush1.msra.mxu0 %v452
    %924 = vmatprep.subr.mxu0 %v457
    %925 = vmatpush1.msra.mxu0 %v456
    %926 = vmatprep.subr.mxu0 %v461
    %927 = vmatpush1.msra.mxu0 %v460
    %928 = vmatprep.subr.mxu0 %v465
    %929 = vmatpush1.msra.mxu0 %v464
    %930 = vmatprep.subr.mxu0 %v469
    %931 = vmatpush1.msra.mxu0 %v468
    %932 = vmatprep.subr.mxu0 %v473
    %933 = vmatpush1.msra.mxu0 %v472
    %934 = vmatprep.subr.mxu0 0.0
    %935 = vmatpush1.msra.mxu0 0.0
    %936 = vmatprep.subr.mxu0 0.0
    %937 = vmatpush1.msra.mxu0 0.0
    %938 = vmatprep.subr.mxu0 0.0
    %939 = vmatpush1.msra.mxu0 0.0
    %940 = vmatprep.subr.mxu0 0.0
    %941 = vmatpush1.msra.mxu0 0.0
    %942 = vmatprep.subr.mxu0 0.0
    %943 = vmatpush1.msra.mxu0 0.0
    %944 = vmatprep.subr.mxu0 0.0
    %945 = vmatpush1.msra.mxu0 0.0
    %946 = vmatprep.subr.mxu0 0.0
    %947 = vmatpush1.msra.mxu0 0.0
    %948 = vmatprep.subr.mxu0 0.0
    %949 = vmatpush1.msra.mxu0 0.0
    %950 = vmatprep.mubr.f32.mxu0 %v529
    %951 = vmatmul.mubr.f32.gmra.mrb[0].mxu0 %v521
    %v952 = vpop.f32.mrb[0].mxu0
    %v953 = vadd.f32 %v882, %v952
    %v954 = vpop.f32.mrb[0].mxu0
    %v955 = vadd.f32 %v884, %v954
    %956 = vdwg.mxu0
    %vm957 = vcmp.ge.f32.partialorder %v740, 0.0
    %vm958 = vcmp.ge.f32.partialorder %v742, 0.0
    %vm959 = vcmp.ge.f32.partialorder %v953, 0.0
    %vm960 = vcmp.ge.f32.partialorder %v955, 0.0
    %v961 = vmul.f32 %v740, 0.2
    %v962 = vmul.f32 %v742, 0.2
    %v963 = vmul.f32 %v953, 0.2
    %v964 = vmul.f32 %v955, 0.2
    %v965 = vsel %vm957, %v740, %v961
    %v966 = vsel %vm958, %v742, %v962
    %v967 = vsel %vm959, %v953, %v963
    %v968 = vsel %vm960, %v955, %v964
    %v969 = vld [vmem:[#allocation7] sm:$0xff]
    %v970 = vld [vmem:[#allocation7 + $0x8] sm:$0xff]
    %v971 = vld [vmem:[#allocation7 + $0x10] sm:$0xff]
    %v972 = vld [vmem:[#allocation7 + $0x18] sm:$0xff]
    %v973 = vld [vmem:[#allocation7 + $0x20] sm:$0xff]
    %v974 = vld [vmem:[#allocation7 + $0x28] sm:$0xff]
    %v975 = vld [vmem:[#allocation7 + $0x30] sm:$0xff]
    %v976 = vld [vmem:[#allocation7 + $0x38] sm:$0xff]
    %v977 = vld [vmem:[#allocation7 + $0x40] sm:$0xff]
    %v978 = vld [vmem:[#allocation7 + $0x48] sm:$0xff]
    %v979 = vld [vmem:[#allocation7 + $0x50] sm:$0xff]
    %v980 = vld [vmem:[#allocation7 + $0x58] sm:$0xff]
    %v981 = vld [vmem:[#allocation7 + $0x60] sm:$0xff]
    %v982 = vld [vmem:[#allocation7 + $0x68] sm:$0xff]
    %v983 = vld [vmem:[#allocation7 + $0x70] sm:$0xff]
    %v984 = vld [vmem:[#allocation7 + $0x78] sm:$0xff]
    %v985 = vld [vmem:[#allocation7 + $0x80] sm:$0xff]
    %v986 = vld [vmem:[#allocation7 + $0x88] sm:$0xff]
    %v987 = vld [vmem:[#allocation7 + $0x90] sm:$0xff]
    %v988 = vld [vmem:[#allocation7 + $0x98] sm:$0xff]
    %v989 = vld [vmem:[#allocation7 + $0xa0] sm:$0xff]
    %v990 = vld [vmem:[#allocation7 + $0xa8] sm:$0xff]
    %v991 = vld [vmem:[#allocation7 + $0xb0] sm:$0xff]
    %v992 = vld [vmem:[#allocation7 + $0xb8] sm:$0xff]
    %v993 = vld [vmem:[#allocation7 + $0xc0] sm:$0xff]
    %v994 = vld [vmem:[#allocation7 + $0xc8] sm:$0xff]
    %v995 = vld [vmem:[#allocation7 + $0xd0] sm:$0xff]
    %v996 = vld [vmem:[#allocation7 + $0xd8] sm:$0xff]
    %v997 = vld [vmem:[#allocation7 + $0xe0] sm:$0xff]
    %v998 = vld [vmem:[#allocation7 + $0xe8] sm:$0xff]
    %v999 = vld [vmem:[#allocation7 + $0xf0] sm:$0xff]
    %v1000 = vld [vmem:[#allocation7 + $0xf8] sm:$0xff]
    %v1001 = vld [vmem:[#allocation7 + $0x100] sm:$0xff]
    %v1002 = vld [vmem:[#allocation7 + $0x108] sm:$0xff]
    %v1003 = vld [vmem:[#allocation7 + $0x110] sm:$0xff]
    %v1004 = vld [vmem:[#allocation7 + $0x118] sm:$0xff]
    %v1005 = vld [vmem:[#allocation7 + $0x120] sm:$0xff]
    %v1006 = vld [vmem:[#allocation7 + $0x128] sm:$0xff]
    %v1007 = vld [vmem:[#allocation7 + $0x130] sm:$0xff]
    %v1008 = vld [vmem:[#allocation7 + $0x138] sm:$0xff]
    %v1009 = vld [vmem:[#allocation7 + $0x140] sm:$0xff]
    %v1010 = vld [vmem:[#allocation7 + $0x148] sm:$0xff]
    %v1011 = vld [vmem:[#allocation7 + $0x150] sm:$0xff]
    %v1012 = vld [vmem:[#allocation7 + $0x158] sm:$0xff]
    %v1013 = vld [vmem:[#allocation7 + $0x160] sm:$0xff]
    %v1014 = vld [vmem:[#allocation7 + $0x168] sm:$0xff]
    %v1015 = vld [vmem:[#allocation7 + $0x170] sm:$0xff]
    %v1016 = vld [vmem:[#allocation7 + $0x178] sm:$0xff]
    %v1017 = vld [vmem:[#allocation7 + $0x180] sm:$0xff]
    %v1018 = vld [vmem:[#allocation7 + $0x188] sm:$0xff]
    %v1019 = vld [vmem:[#allocation7 + $0x190] sm:$0xff]
    %v1020 = vld [vmem:[#allocation7 + $0x198] sm:$0xff]
    %v1021 = vld [vmem:[#allocation7 + $0x1a0] sm:$0xff]
    %v1022 = vld [vmem:[#allocation7 + $0x1a8] sm:$0xff]
    %v1023 = vld [vmem:[#allocation7 + $0x1b0] sm:$0xff]
    %v1024 = vld [vmem:[#allocation7 + $0x1b8] sm:$0xff]
    %v1025 = vld [vmem:[#allocation7 + $0x1c0] sm:$0xff]
    %v1026 = vld [vmem:[#allocation7 + $0x1c8] sm:$0xff]
    %v1027 = vld [vmem:[#allocation7 + $0x1d0] sm:$0xff]
    %v1028 = vld [vmem:[#allocation7 + $0x1d8] sm:$0xff]
    %v1029 = vld [vmem:[#allocation7 + $0x1e0] sm:$0xff]
    %v1030 = vld [vmem:[#allocation7 + $0x1e8] sm:$0xff]
    %v1031 = vld [vmem:[#allocation7 + $0x1f0] sm:$0xff]
    %v1032 = vld [vmem:[#allocation7 + $0x1f8] sm:$0xff]
    %v1033 = vld [vmem:[#allocation7 + $0x200] sm:$0xff]
    %v1034 = vld [vmem:[#allocation7 + $0x208] sm:$0xff]
    %v1035 = vld [vmem:[#allocation7 + $0x210] sm:$0xff]
    %v1036 = vld [vmem:[#allocation7 + $0x218] sm:$0xff]
    %v1037 = vld [vmem:[#allocation7 + $0x220] sm:$0xff]
    %v1038 = vld [vmem:[#allocation7 + $0x228] sm:$0xff]
    %v1039 = vld [vmem:[#allocation7 + $0x230] sm:$0xff]
    %v1040 = vld [vmem:[#allocation7 + $0x238] sm:$0xff]
    %v1041 = vld [vmem:[#allocation7 + $0x240] sm:$0xff]
    %v1042 = vld [vmem:[#allocation7 + $0x248] sm:$0xff]
    %v1043 = vld [vmem:[#allocation7 + $0x250] sm:$0xff]
    %v1044 = vld [vmem:[#allocation7 + $0x258] sm:$0xff]
    %v1045 = vld [vmem:[#allocation7 + $0x260] sm:$0xff]
    %v1046 = vld [vmem:[#allocation7 + $0x268] sm:$0xff]
    %v1047 = vld [vmem:[#allocation7 + $0x270] sm:$0xff]
    %v1048 = vld [vmem:[#allocation7 + $0x278] sm:$0xff]
    %v1049 = vld [vmem:[#allocation7 + $0x280] sm:$0xff]
    %v1050 = vld [vmem:[#allocation7 + $0x288] sm:$0xff]
    %v1051 = vld [vmem:[#allocation7 + $0x290] sm:$0xff]
    %v1052 = vld [vmem:[#allocation7 + $0x298] sm:$0xff]
    %v1053 = vld [vmem:[#allocation7 + $0x2a0] sm:$0xff]
    %v1054 = vld [vmem:[#allocation7 + $0x2a8] sm:$0xff]
    %v1055 = vld [vmem:[#allocation7 + $0x2b0] sm:$0xff]
    %v1056 = vld [vmem:[#allocation7 + $0x2b8] sm:$0xff]
    %v1057 = vld [vmem:[#allocation7 + $0x2c0] sm:$0xff]
    %v1058 = vld [vmem:[#allocation7 + $0x2c8] sm:$0xff]
    %v1059 = vld [vmem:[#allocation7 + $0x2d0] sm:$0xff]
    %v1060 = vld [vmem:[#allocation7 + $0x2d8] sm:$0xff]
    %v1061 = vld [vmem:[#allocation7 + $0x2e0] sm:$0xff]
    %v1062 = vld [vmem:[#allocation7 + $0x2e8] sm:$0xff]
    %v1063 = vld [vmem:[#allocation7 + $0x2f0] sm:$0xff]
    %v1064 = vld [vmem:[#allocation7 + $0x2f8] sm:$0xff]
    %v1065 = vld [vmem:[#allocation7 + $0x300] sm:$0xff]
    %v1066 = vld [vmem:[#allocation7 + $0x308] sm:$0xff]
    %v1067 = vld [vmem:[#allocation7 + $0x310] sm:$0xff]
    %v1068 = vld [vmem:[#allocation7 + $0x318] sm:$0xff]
    %v1069 = vld [vmem:[#allocation7 + $0x320] sm:$0xff]
    %v1070 = vld [vmem:[#allocation7 + $0x328] sm:$0xff]
    %v1071 = vld [vmem:[#allocation7 + $0x330] sm:$0xff]
    %v1072 = vld [vmem:[#allocation7 + $0x338] sm:$0xff]
    %v1073 = vld [vmem:[#allocation7 + $0x340] sm:$0xff]
    %v1074 = vld [vmem:[#allocation7 + $0x348] sm:$0xff]
    %v1075 = vld [vmem:[#allocation7 + $0x350] sm:$0xff]
    %v1076 = vld [vmem:[#allocation7 + $0x358] sm:$0xff]
    %v1077 = vld [vmem:[#allocation7 + $0x360] sm:$0xff]
    %v1078 = vld [vmem:[#allocation7 + $0x368] sm:$0xff]
    %v1079 = vld [vmem:[#allocation7 + $0x370] sm:$0xff]
    %v1080 = vld [vmem:[#allocation7 + $0x378] sm:$0xff]
    %v1081 = vld [vmem:[#allocation7 + $0x380] sm:$0xff]
    %v1082 = vld [vmem:[#allocation7 + $0x388] sm:$0xff]
    %v1083 = vld [vmem:[#allocation7 + $0x390] sm:$0xff]
    %v1084 = vld [vmem:[#allocation7 + $0x398] sm:$0xff]
    %v1085 = vld [vmem:[#allocation7 + $0x3a0] sm:$0xff]
    %v1086 = vld [vmem:[#allocation7 + $0x3a8] sm:$0xff]
    %v1087 = vld [vmem:[#allocation7 + $0x3b0] sm:$0xff]
    %v1088 = vld [vmem:[#allocation7 + $0x3b8] sm:$0xff]
    %v1089 = vld [vmem:[#allocation7 + $0x3c0] sm:$0xff]
    %v1090 = vld [vmem:[#allocation7 + $0x3c8] sm:$0xff]
    %v1091 = vld [vmem:[#allocation7 + $0x3d0] sm:$0xff]
    %v1092 = vld [vmem:[#allocation7 + $0x3d8] sm:$0xff]
    %v1093 = vld [vmem:[#allocation7 + $0x3e0] sm:$0xff]
    %v1094 = vld [vmem:[#allocation7 + $0x3e8] sm:$0xff]
    %v1095 = vld [vmem:[#allocation7 + $0x3f0] sm:$0xff]
    %v1096 = vld [vmem:[#allocation7 + $0x3f8] sm:$0xff]
    %v1097 = vld [vmem:[#allocation8] sm:$0x3]
    %v1099 = vlaneseq
    %v1100 = vshrl.u32 %v1099, 7
    %v1101 = vsub.s32 0, %v1100
    %v1102 = vrot.slane %v1097, %v1101
    %v1103 = vlaneseq
    %v1104 = vshrl.u32 %v1103, 7
    %v1105 = vsub.s32 1, %v1104
    %v1106 = vrot.slane %v1097, %v1105
    %1109 = vmatprep.subr.mxu0 %v970
    %1110 = vmatpush1.msra.mxu0 %v969
    %1111 = vmatprep.subr.mxu0 %v972
    %1112 = vmatpush1.msra.mxu0 %v971
    %1113 = vmatprep.subr.mxu0 %v974
    %1114 = vmatpush1.msra.mxu0 %v973
    %1115 = vmatprep.subr.mxu0 %v976
    %1116 = vmatpush1.msra.mxu0 %v975
    %1117 = vmatprep.subr.mxu0 %v978
    %1118 = vmatpush1.msra.mxu0 %v977
    %1119 = vmatprep.subr.mxu0 %v980
    %1120 = vmatpush1.msra.mxu0 %v979
    %1121 = vmatprep.subr.mxu0 %v982
    %1122 = vmatpush1.msra.mxu0 %v981
    %1123 = vmatprep.subr.mxu0 %v984
    %1124 = vmatpush1.msra.mxu0 %v983
    %1125 = vmatprep.subr.mxu0 %v986
    %1126 = vmatpush1.msra.mxu0 %v985
    %1127 = vmatprep.subr.mxu0 %v988
    %1128 = vmatpush1.msra.mxu0 %v987
    %1129 = vmatprep.subr.mxu0 %v990
    %1130 = vmatpush1.msra.mxu0 %v989
    %1131 = vmatprep.subr.mxu0 %v992
    %1132 = vmatpush1.msra.mxu0 %v991
    %1133 = vmatprep.subr.mxu0 %v994
    %1134 = vmatpush1.msra.mxu0 %v993
    %1135 = vmatprep.subr.mxu0 %v996
    %1136 = vmatpush1.msra.mxu0 %v995
    %1137 = vmatprep.subr.mxu0 %v998
    %1138 = vmatpush1.msra.mxu0 %v997
    %1139 = vmatprep.subr.mxu0 %v1000
    %1140 = vmatpush1.msra.mxu0 %v999
    %1141 = vmatprep.subr.mxu0 %v1002
    %1142 = vmatpush1.msra.mxu0 %v1001
    %1143 = vmatprep.subr.mxu0 %v1004
    %1144 = vmatpush1.msra.mxu0 %v1003
    %1145 = vmatprep.subr.mxu0 %v1006
    %1146 = vmatpush1.msra.mxu0 %v1005
    %1147 = vmatprep.subr.mxu0 %v1008
    %1148 = vmatpush1.msra.mxu0 %v1007
    %1149 = vmatprep.subr.mxu0 %v1010
    %1150 = vmatpush1.msra.mxu0 %v1009
    %1151 = vmatprep.subr.mxu0 %v1012
    %1152 = vmatpush1.msra.mxu0 %v1011
    %1153 = vmatprep.subr.mxu0 %v1014
    %1154 = vmatpush1.msra.mxu0 %v1013
    %1155 = vmatprep.subr.mxu0 %v1016
    %1156 = vmatpush1.msra.mxu0 %v1015
    %1157 = vmatprep.subr.mxu0 %v1018
    %1158 = vmatpush1.msra.mxu0 %v1017
    %1159 = vmatprep.subr.mxu0 %v1020
    %1160 = vmatpush1.msra.mxu0 %v1019
    %1161 = vmatprep.subr.mxu0 %v1022
    %1162 = vmatpush1.msra.mxu0 %v1021
    %1163 = vmatprep.subr.mxu0 %v1024
    %1164 = vmatpush1.msra.mxu0 %v1023
    %1165 = vmatprep.subr.mxu0 %v1026
    %1166 = vmatpush1.msra.mxu0 %v1025
    %1167 = vmatprep.subr.mxu0 %v1028
    %1168 = vmatpush1.msra.mxu0 %v1027
    %1169 = vmatprep.subr.mxu0 %v1030
    %1170 = vmatpush1.msra.mxu0 %v1029
    %1171 = vmatprep.subr.mxu0 %v1032
    %1172 = vmatpush1.msra.mxu0 %v1031
    %1173 = vmatprep.mubr.f32.mxu0 %v966
    %1174 = vmatmul.mubr.f32.gmra.mrb[0].mxu0 %v965
    %v1175 = vpop.f32.mrb[0].mxu0
    %v1176 = vadd.f32 %v1102, %v1175
    %v1177 = vpop.f32.mrb[0].mxu0
    %v1178 = vadd.f32 %v1106, %v1177
    %1179 = vdwg.mxu0
    %1180 = vmatprep.subr.mxu0 %v1034
    %1181 = vmatpush1.msra.mxu0 %v1033
    %1182 = vmatprep.subr.mxu0 %v1036
    %1183 = vmatpush1.msra.mxu0 %v1035
    %1184 = vmatprep.subr.mxu0 %v1038
    %1185 = vmatpush1.msra.mxu0 %v1037
    %1186 = vmatprep.subr.mxu0 %v1040
    %1187 = vmatpush1.msra.mxu0 %v1039
    %1188 = vmatprep.subr.mxu0 %v1042
    %1189 = vmatpush1.msra.mxu0 %v1041
    %1190 = vmatprep.subr.mxu0 %v1044
    %1191 = vmatpush1.msra.mxu0 %v1043
    %1192 = vmatprep.subr.mxu0 %v1046
    %1193 = vmatpush1.msra.mxu0 %v1045
    %1194 = vmatprep.subr.mxu0 %v1048
    %1195 = vmatpush1.msra.mxu0 %v1047
    %1196 = vmatprep.subr.mxu0 %v1050
    %1197 = vmatpush1.msra.mxu0 %v1049
    %1198 = vmatprep.subr.mxu0 %v1052
    %1199 = vmatpush1.msra.mxu0 %v1051
    %1200 = vmatprep.subr.mxu0 %v1054
    %1201 = vmatpush1.msra.mxu0 %v1053
    %1202 = vmatprep.subr.mxu0 %v1056
    %1203 = vmatpush1.msra.mxu0 %v1055
    %1204 = vmatprep.subr.mxu0 %v1058
    %1205 = vmatpush1.msra.mxu0 %v1057
    %1206 = vmatprep.subr.mxu0 %v1060
    %1207 = vmatpush1.msra.mxu0 %v1059
    %1208 = vmatprep.subr.mxu0 %v1062
    %1209 = vmatpush1.msra.mxu0 %v1061
    %1210 = vmatprep.subr.mxu0 %v1064
    %1211 = vmatpush1.msra.mxu0 %v1063
    %1212 = vmatprep.subr.mxu0 %v1066
    %1213 = vmatpush1.msra.mxu0 %v1065
    %1214 = vmatprep.subr.mxu0 %v1068
    %1215 = vmatpush1.msra.mxu0 %v1067
    %1216 = vmatprep.subr.mxu0 %v1070
    %1217 = vmatpush1.msra.mxu0 %v1069
    %1218 = vmatprep.subr.mxu0 %v1072
    %1219 = vmatpush1.msra.mxu0 %v1071
    %1220 = vmatprep.subr.mxu0 %v1074
    %1221 = vmatpush1.msra.mxu0 %v1073
    %1222 = vmatprep.subr.mxu0 %v1076
    %1223 = vmatpush1.msra.mxu0 %v1075
    %1224 = vmatprep.subr.mxu0 %v1078
    %1225 = vmatpush1.msra.mxu0 %v1077
    %1226 = vmatprep.subr.mxu0 %v1080
    %1227 = vmatpush1.msra.mxu0 %v1079
    %1228 = vmatprep.subr.mxu0 %v1082
    %1229 = vmatpush1.msra.mxu0 %v1081
    %1230 = vmatprep.subr.mxu0 %v1084
    %1231 = vmatpush1.msra.mxu0 %v1083
    %1232 = vmatprep.subr.mxu0 %v1086
    %1233 = vmatpush1.msra.mxu0 %v1085
    %1234 = vmatprep.subr.mxu0 %v1088
    %1235 = vmatpush1.msra.mxu0 %v1087
    %1236 = vmatprep.subr.mxu0 %v1090
    %1237 = vmatpush1.msra.mxu0 %v1089
    %1238 = vmatprep.subr.mxu0 %v1092
    %1239 = vmatpush1.msra.mxu0 %v1091
    %1240 = vmatprep.subr.mxu0 %v1094
    %1241 = vmatpush1.msra.mxu0 %v1093
    %1242 = vmatprep.subr.mxu0 %v1096
    %1243 = vmatpush1.msra.mxu0 %v1095
    %1244 = vmatprep.mubr.f32.mxu0 %v968
    %1245 = vmatmul.mubr.f32.gmra.mrb[0].mxu0 %v967
    %v1246 = vpop.f32.mrb[0].mxu0
    %v1247 = vadd.f32 %v1176, %v1246
    %v1248 = vpop.f32.mrb[0].mxu0
    %v1249 = vadd.f32 %v1178, %v1248
    %1250 = vdwg.mxu0
    %vm1251 = vcmp.ge.f32.partialorder %v1247, 0.0
    %vm1252 = vcmp.ge.f32.partialorder %v1249, 0.0
    %v1253 = vmul.f32 %v1247, 0.2
    %v1254 = vmul.f32 %v1249, 0.2
    %v1255 = vsel %vm1251, %v1247, %v1253
    %v1256 = vsel %vm1252, %v1249, %v1254
    %v1257 = vld [vmem:[#allocation10] sm:$0xff]
    %v1258 = vld [vmem:[#allocation10 + $0x8] sm:$0xff]
    %v1259 = vld [vmem:[#allocation10 + $0x10] sm:$0xff]
    %v1260 = vld [vmem:[#allocation10 + $0x18] sm:$0xff]
    %v1261 = vld [vmem:[#allocation10 + $0x20] sm:$0xff]
    %v1262 = vld [vmem:[#allocation10 + $0x28] sm:$0xff]
    %v1263 = vld [vmem:[#allocation10 + $0x30] sm:$0xff]
    %v1264 = vld [vmem:[#allocation10 + $0x38] sm:$0xff]
    %v1265 = vld [vmem:[#allocation10 + $0x40] sm:$0xff]
    %v1266 = vld [vmem:[#allocation10 + $0x48] sm:$0xff]
    %v1267 = vld [vmem:[#allocation10 + $0x50] sm:$0xff]
    %v1268 = vld [vmem:[#allocation10 + $0x58] sm:$0xff]
    %v1269 = vld [vmem:[#allocation10 + $0x60] sm:$0xff]
    %v1270 = vld [vmem:[#allocation10 + $0x68] sm:$0xff]
    %v1271 = vld [vmem:[#allocation10 + $0x70] sm:$0xff]
    %v1272 = vld [vmem:[#allocation10 + $0x78] sm:$0xff]
    %v1273 = vld [vmem:[#allocation10 + $0x80] sm:$0xff]
    %v1274 = vld [vmem:[#allocation10 + $0x88] sm:$0xff]
    %v1275 = vld [vmem:[#allocation10 + $0x90] sm:$0xff]
    %v1276 = vld [vmem:[#allocation10 + $0x98] sm:$0xff]
    %v1277 = vld [vmem:[#allocation10 + $0xa0] sm:$0xff]
    %v1278 = vld [vmem:[#allocation10 + $0xa8] sm:$0xff]
    %v1279 = vld [vmem:[#allocation10 + $0xb0] sm:$0xff]
    %v1280 = vld [vmem:[#allocation10 + $0xb8] sm:$0xff]
    %v1281 = vld [vmem:[#allocation10 + $0xc0] sm:$0xff]
    %v1282 = vld [vmem:[#allocation10 + $0xc8] sm:$0xff]
    %v1283 = vld [vmem:[#allocation10 + $0xd0] sm:$0xff]
    %v1284 = vld [vmem:[#allocation10 + $0xd8] sm:$0xff]
    %v1285 = vld [vmem:[#allocation10 + $0xe0] sm:$0xff]
    %v1286 = vld [vmem:[#allocation10 + $0xe8] sm:$0xff]
    %v1287 = vld [vmem:[#allocation10 + $0xf0] sm:$0xff]
    %v1288 = vld [vmem:[#allocation10 + $0xf8] sm:$0xff]
    %v1289 = vld [vmem:[#allocation10 + $0x100] sm:$0xff]
    %v1290 = vld [vmem:[#allocation10 + $0x108] sm:$0xff]
    %v1291 = vld [vmem:[#allocation10 + $0x110] sm:$0xff]
    %v1292 = vld [vmem:[#allocation10 + $0x118] sm:$0xff]
    %v1293 = vld [vmem:[#allocation10 + $0x120] sm:$0xff]
    %v1294 = vld [vmem:[#allocation10 + $0x128] sm:$0xff]
    %v1295 = vld [vmem:[#allocation10 + $0x130] sm:$0xff]
    %v1296 = vld [vmem:[#allocation10 + $0x138] sm:$0xff]
    %v1297 = vld [vmem:[#allocation10 + $0x140] sm:$0xff]
    %v1298 = vld [vmem:[#allocation10 + $0x148] sm:$0xff]
    %v1299 = vld [vmem:[#allocation10 + $0x150] sm:$0xff]
    %v1300 = vld [vmem:[#allocation10 + $0x158] sm:$0xff]
    %v1301 = vld [vmem:[#allocation10 + $0x160] sm:$0xff]
    %v1302 = vld [vmem:[#allocation10 + $0x168] sm:$0xff]
    %v1303 = vld [vmem:[#allocation10 + $0x170] sm:$0xff]
    %v1304 = vld [vmem:[#allocation10 + $0x178] sm:$0xff]
    %v1305 = vld [vmem:[#allocation10 + $0x180] sm:$0xff]
    %v1306 = vld [vmem:[#allocation10 + $0x188] sm:$0xff]
    %v1307 = vld [vmem:[#allocation10 + $0x190] sm:$0xff]
    %v1308 = vld [vmem:[#allocation10 + $0x198] sm:$0xff]
    %v1309 = vld [vmem:[#allocation10 + $0x1a0] sm:$0xff]
    %v1310 = vld [vmem:[#allocation10 + $0x1a8] sm:$0xff]
    %v1311 = vld [vmem:[#allocation10 + $0x1b0] sm:$0xff]
    %v1312 = vld [vmem:[#allocation10 + $0x1b8] sm:$0xff]
    %v1313 = vld [vmem:[#allocation10 + $0x1c0] sm:$0xff]
    %v1314 = vld [vmem:[#allocation10 + $0x1c8] sm:$0xff]
    %v1315 = vld [vmem:[#allocation10 + $0x1d0] sm:$0xff]
    %v1316 = vld [vmem:[#allocation10 + $0x1d8] sm:$0xff]
    %v1317 = vld [vmem:[#allocation10 + $0x1e0] sm:$0xff]
    %v1318 = vld [vmem:[#allocation10 + $0x1e8] sm:$0xff]
    %v1319 = vld [vmem:[#allocation10 + $0x1f0] sm:$0xff]
    %v1320 = vld [vmem:[#allocation10 + $0x1f8] sm:$0xff]
    %v1321 = vld [vmem:[#allocation11] sm:$0x3]
    %v1323 = vlaneseq
    %v1324 = vshrl.u32 %v1323, 7
    %v1325 = vsub.s32 0, %v1324
    %v1326 = vrot.slane %v1321, %v1325
    %v1327 = vlaneseq
    %v1328 = vshrl.u32 %v1327, 7
    %v1329 = vsub.s32 1, %v1328
    %v1330 = vrot.slane %v1321, %v1329
    %1333 = vmatprep.subr.mxu0 %v1258
    %1334 = vmatpush1.msra.mxu0 %v1257
    %1335 = vmatprep.subr.mxu0 %v1260
    %1336 = vmatpush1.msra.mxu0 %v1259
    %1337 = vmatprep.subr.mxu0 %v1262
    %1338 = vmatpush1.msra.mxu0 %v1261
    %1339 = vmatprep.subr.mxu0 %v1264
    %1340 = vmatpush1.msra.mxu0 %v1263
    %1341 = vmatprep.subr.mxu0 %v1266
    %1342 = vmatpush1.msra.mxu0 %v1265
    %1343 = vmatprep.subr.mxu0 %v1268
    %1344 = vmatpush1.msra.mxu0 %v1267
    %1345 = vmatprep.subr.mxu0 %v1270
    %1346 = vmatpush1.msra.mxu0 %v1269
    %1347 = vmatprep.subr.mxu0 %v1272
    %1348 = vmatpush1.msra.mxu0 %v1271
    %1349 = vmatprep.subr.mxu0 %v1274
    %1350 = vmatpush1.msra.mxu0 %v1273
    %1351 = vmatprep.subr.mxu0 %v1276
    %1352 = vmatpush1.msra.mxu0 %v1275
    %1353 = vmatprep.subr.mxu0 %v1278
    %1354 = vmatpush1.msra.mxu0 %v1277
    %1355 = vmatprep.subr.mxu0 %v1280
    %1356 = vmatpush1.msra.mxu0 %v1279
    %1357 = vmatprep.subr.mxu0 %v1282
    %1358 = vmatpush1.msra.mxu0 %v1281
    %1359 = vmatprep.subr.mxu0 %v1284
    %1360 = vmatpush1.msra.mxu0 %v1283
    %1361 = vmatprep.subr.mxu0 %v1286
    %1362 = vmatpush1.msra.mxu0 %v1285
    %1363 = vmatprep.subr.mxu0 %v1288
    %1364 = vmatpush1.msra.mxu0 %v1287
    %1365 = vmatprep.subr.mxu0 %v1290
    %1366 = vmatpush1.msra.mxu0 %v1289
    %1367 = vmatprep.subr.mxu0 %v1292
    %1368 = vmatpush1.msra.mxu0 %v1291
    %1369 = vmatprep.subr.mxu0 %v1294
    %1370 = vmatpush1.msra.mxu0 %v1293
    %1371 = vmatprep.subr.mxu0 %v1296
    %1372 = vmatpush1.msra.mxu0 %v1295
    %1373 = vmatprep.subr.mxu0 %v1298
    %1374 = vmatpush1.msra.mxu0 %v1297
    %1375 = vmatprep.subr.mxu0 %v1300
    %1376 = vmatpush1.msra.mxu0 %v1299
    %1377 = vmatprep.subr.mxu0 %v1302
    %1378 = vmatpush1.msra.mxu0 %v1301
    %1379 = vmatprep.subr.mxu0 %v1304
    %1380 = vmatpush1.msra.mxu0 %v1303
    %1381 = vmatprep.subr.mxu0 %v1306
    %1382 = vmatpush1.msra.mxu0 %v1305
    %1383 = vmatprep.subr.mxu0 %v1308
    %1384 = vmatpush1.msra.mxu0 %v1307
    %1385 = vmatprep.subr.mxu0 %v1310
    %1386 = vmatpush1.msra.mxu0 %v1309
    %1387 = vmatprep.subr.mxu0 %v1312
    %1388 = vmatpush1.msra.mxu0 %v1311
    %1389 = vmatprep.subr.mxu0 %v1314
    %1390 = vmatpush1.msra.mxu0 %v1313
    %1391 = vmatprep.subr.mxu0 %v1316
    %1392 = vmatpush1.msra.mxu0 %v1315
    %1393 = vmatprep.subr.mxu0 %v1318
    %1394 = vmatpush1.msra.mxu0 %v1317
    %1395 = vmatprep.subr.mxu0 %v1320
    %1396 = vmatpush1.msra.mxu0 %v1319
    %1397 = vmatprep.mubr.f32.mxu0 %v1256
    %1398 = vmatmul.mubr.f32.gmra.mrb[0].mxu0 %v1255
    %v1399 = vpop.f32.mrb[0].mxu0
    %v1400 = vadd.f32 %v1326, %v1399
    %v1401 = vpop.f32.mrb[0].mxu0
    %v1402 = vadd.f32 %v1330, %v1401
    %1403 = vdwg.mxu0
    %vm1404 = vcmp.ge.f32.partialorder %v1400, 0.0
    %vm1405 = vcmp.ge.f32.partialorder %v1402, 0.0
    %v1406 = vmul.f32 %v1400, 0.2
    %v1407 = vmul.f32 %v1402, 0.2
    %v1408 = vsel %vm1404, %v1400, %v1406
    %v1409 = vsel %vm1405, %v1402, %v1407
    %v1410 = vld [vmem:[%s7] sm:$0xff]
    %v1411 = vld [vmem:[%s7 + $0x8] sm:$0xff]
    %v1412 = vld [vmem:[%s7 + $0x10] sm:$0xff]
    %v1413 = vld [vmem:[%s7 + $0x18] sm:$0xff]
    %v1414 = vld [vmem:[%s7 + $0x20] sm:$0xff]
    %v1415 = vld [vmem:[%s7 + $0x28] sm:$0xff]
    %v1416 = vld [vmem:[%s7 + $0x30] sm:$0xff]
    %v1417 = vld [vmem:[%s7 + $0x38] sm:$0xff]
    %v1418 = vld [vmem:[%s7 + $0x40] sm:$0xff]
    %v1419 = vld [vmem:[%s7 + $0x48] sm:$0xff]
    %v1420 = vld [vmem:[%s7 + $0x50] sm:$0xff]
    %v1421 = vld [vmem:[%s7 + $0x58] sm:$0xff]
    %v1422 = vld [vmem:[%s7 + $0x60] sm:$0xff]
    %v1423 = vld [vmem:[%s7 + $0x68] sm:$0xff]
    %v1424 = vld [vmem:[%s7 + $0x70] sm:$0xff]
    %v1425 = vld [vmem:[%s7 + $0x78] sm:$0xff]
    %v1426 = vld [vmem:[%s7 + $0x80] sm:$0xff]
    %v1427 = vld [vmem:[%s7 + $0x88] sm:$0xff]
    %v1428 = vld [vmem:[%s7 + $0x90] sm:$0xff]
    %v1429 = vld [vmem:[%s7 + $0x98] sm:$0xff]
    %v1430 = vld [vmem:[%s7 + $0xa0] sm:$0xff]
    %v1431 = vld [vmem:[%s7 + $0xa8] sm:$0xff]
    %v1432 = vld [vmem:[%s7 + $0xb0] sm:$0xff]
    %v1433 = vld [vmem:[%s7 + $0xb8] sm:$0xff]
    %v1434 = vld [vmem:[%s7 + $0xc0] sm:$0xff]
    %v1435 = vld [vmem:[%s7 + $0xc8] sm:$0xff]
    %v1436 = vld [vmem:[%s7 + $0xd0] sm:$0xff]
    %v1437 = vld [vmem:[%s7 + $0xd8] sm:$0xff]
    %v1438 = vld [vmem:[%s7 + $0xe0] sm:$0xff]
    %v1439 = vld [vmem:[%s7 + $0xe8] sm:$0xff]
    %v1440 = vld [vmem:[%s7 + $0xf0] sm:$0xff]
    %v1441 = vld [vmem:[%s7 + $0xf8] sm:$0xff]
    %v1442 = vld [vmem:[#allocation13] sm:$0x1]
    %v1444 = vlaneseq
    %v1445 = vshrl.u32 %v1444, 7
    %v1446 = vsub.s32 0, %v1445
    %v1447 = vrot.slane %v1442, %v1446
    %1449 = vmatprep.subr.mxu0 0.0
    %1450 = vmatpush1.msra.mxu0 %v1410
    %1451 = vmatprep.subr.mxu0 0.0
    %1452 = vmatpush1.msra.mxu0 %v1411
    %1453 = vmatprep.subr.mxu0 0.0
    %1454 = vmatpush1.msra.mxu0 %v1412
    %1455 = vmatprep.subr.mxu0 0.0
    %1456 = vmatpush1.msra.mxu0 %v1413
    %1457 = vmatprep.subr.mxu0 0.0
    %1458 = vmatpush1.msra.mxu0 %v1414
    %1459 = vmatprep.subr.mxu0 0.0
    %1460 = vmatpush1.msra.mxu0 %v1415
    %1461 = vmatprep.subr.mxu0 0.0
    %1462 = vmatpush1.msra.mxu0 %v1416
    %1463 = vmatprep.subr.mxu0 0.0
    %1464 = vmatpush1.msra.mxu0 %v1417
    %1465 = vmatprep.subr.mxu0 0.0
    %1466 = vmatpush1.msra.mxu0 %v1418
    %1467 = vmatprep.subr.mxu0 0.0
    %1468 = vmatpush1.msra.mxu0 %v1419
    %1469 = vmatprep.subr.mxu0 0.0
    %1470 = vmatpush1.msra.mxu0 %v1420
    %1471 = vmatprep.subr.mxu0 0.0
    %1472 = vmatpush1.msra.mxu0 %v1421
    %1473 = vmatprep.subr.mxu0 0.0
    %1474 = vmatpush1.msra.mxu0 %v1422
    %1475 = vmatprep.subr.mxu0 0.0
    %1476 = vmatpush1.msra.mxu0 %v1423
    %1477 = vmatprep.subr.mxu0 0.0
    %1478 = vmatpush1.msra.mxu0 %v1424
    %1479 = vmatprep.subr.mxu0 0.0
    %1480 = vmatpush1.msra.mxu0 %v1425
    %1481 = vmatprep.subr.mxu0 0.0
    %1482 = vmatpush1.msra.mxu0 %v1426
    %1483 = vmatprep.subr.mxu0 0.0
    %1484 = vmatpush1.msra.mxu0 %v1427
    %1485 = vmatprep.subr.mxu0 0.0
    %1486 = vmatpush1.msra.mxu0 %v1428
    %1487 = vmatprep.subr.mxu0 0.0
    %1488 = vmatpush1.msra.mxu0 %v1429
    %1489 = vmatprep.subr.mxu0 0.0
    %1490 = vmatpush1.msra.mxu0 %v1430
    %1491 = vmatprep.subr.mxu0 0.0
    %1492 = vmatpush1.msra.mxu0 %v1431
    %1493 = vmatprep.subr.mxu0 0.0
    %1494 = vmatpush1.msra.mxu0 %v1432
    %1495 = vmatprep.subr.mxu0 0.0
    %1496 = vmatpush1.msra.mxu0 %v1433
    %1497 = vmatprep.subr.mxu0 0.0
    %1498 = vmatpush1.msra.mxu0 %v1434
    %1499 = vmatprep.subr.mxu0 0.0
    %1500 = vmatpush1.msra.mxu0 %v1435
    %1501 = vmatprep.subr.mxu0 0.0
    %1502 = vmatpush1.msra.mxu0 %v1436
    %1503 = vmatprep.subr.mxu0 0.0
    %1504 = vmatpush1.msra.mxu0 %v1437
    %1505 = vmatprep.subr.mxu0 0.0
    %1506 = vmatpush1.msra.mxu0 %v1438
    %1507 = vmatprep.subr.mxu0 0.0
    %1508 = vmatpush1.msra.mxu0 %v1439
    %1509 = vmatprep.subr.mxu0 0.0
    %1510 = vmatpush1.msra.mxu0 %v1440
    %1511 = vmatprep.subr.mxu0 0.0
    %1512 = vmatpush1.msra.mxu0 %v1441
    %1513 = vmatprep.mubr.f32.mxu0 %v1409
    %1514 = vmatmul.mubr.f32.gmra.mrb[0].mxu0 %v1408
    %v1515 = vpop.f32.mrb[0].mxu0
    %v1516 = vadd.f32 %v1447, %v1515
    %v1517 = vpop.f32.mrb[0].mxu0
    %1518 = vdwg.mxu0
    %vm1519 = vcmask 74752
    %1520 = vst.msk [vmem:[#allocation14] sm:$0x3] %vm1519, %v1516
    // Predicated region
    $region66: #{dylan_mt_net_forward.3} parent=1 // pred_check
      _
    $region67: #{dylan_mt_net_forward.3} parent=1 // pred_check_branch
      %1522 = sbr.rel (0) target = $region69
    $region68: #{dylan_mt_net_forward.3} parent=1 // pred_region
      %s1524 = ssub.s32 32, 32
      %1525 = vsyncadd [#allocation4], %s1524
      %s1527 = sshll.u32 [#allocation14], 4
      %s1528 = int_to_ptr.vmem [resolvable:$true] %s1527
      %1530 = dma.vmem_to_hbm [thread:$0]  %s1528, 32, %s9, [#allocation4]
    $region69: #{dylan_mt_net_forward.3} parent=1 // pred_fallthru
      _
    // Predicated region
    $region70: #{dylan_mt_net_forward.3} parent=1 // pred_check
      _
    $region71: #{dylan_mt_net_forward.3} parent=1 // pred_check_branch
      %1532 = sbr.rel (0) target = $region73
    $region72: #{dylan_mt_net_forward.3} parent=1 // pred_region
      %1533 = dma.done [#allocation4], 32
    $region73: #{dylan_mt_net_forward.3} parent=1 // pred_fallthru
      _
    %1534 = vsyncpa [#allocation3], 1
    %1535 = vsyncpa [#allocation6], 1
    %1536 = vsyncpa [#allocation9], 1
    %1537 = vsyncpa [#allocation12], 1
    %1538 = vsyncpa [#allocation4], 1

// kernel: dylan_mt_net_forward.2
$region0: #{dylan_mt_net_forward.2}
  #allocation0 [shape = 'u32[]', space=smem, size = 0x4, offset = 0x4, fixed_abs, tag = 'smem constant byte address 0x4 - core index']
  #allocation1 [shape = 'u32[144,128]{1,0:T(1,128)}', space=vmem, size = 0x12000, scoped, tag = 'internal scratch']
  %s0 = inlined_call_operand.hbm [shape: f32[2,3,16,22], index: 0, kind: input, shape index: {}]
  %s1 = inlined_call_operand.hbm [shape: f32[4,16,22], index: 1, kind: input, shape index: {}]
  %s2 = inlined_call_operand.hbm [shape: f32[4,16,22], index: 2, kind: input, shape index: {}]
  %s3 = inlined_call_operand.vmem [shape: f32[16,4], index: 3, kind: input, shape index: {}]
  %s4 = inlined_call_operand.hbm [shape: f32[376], index: 4, kind: input, shape index: {}]
  %s5 = inlined_call_operand.vmem [shape: f32[2,4,8,22], index: 5, kind: output, shape index: {}]
  %s6 = sld [smem:[#allocation0]]
  $region69: #{dylan_mt_net_forward.2} parent=0
    _
  %s8 = ssub.s32 1, %s6
  %s9 = scalar_select 0, %s8, %s6
  $region1: #{dylan_mt_net_forward.2} parent=0
    #allocation2 [shape = 'u8[49152]{0}', space=vmem, size = 0xc000, scoped, tag = 'input window, operand 0']
    #allocation3 [shape = 's32[2]{0}', space=sflag, size = 0x8, scoped, tag = 'scoped memory for dylan_mt_net_forward.2']
    #allocation4 [shape = 's32[2]{0}', space=sflag, size = 0x8, scoped, tag = 'scoped memory for dylan_mt_net_forward.2']
    #allocation5 [shape = 'u8[32768]{0}', space=vmem, size = 0x8000, scoped, tag = 'input window, operand 1, single buffered']
    #allocation6 [shape = 's32[1]{0}', space=sflag, size = 0x4, scoped, tag = 'scoped memory for dylan_mt_net_forward.2']
    #allocation7 [shape = 'u8[32768]{0}', space=vmem, size = 0x8000, scoped, tag = 'input window, operand 2, single buffered']
    #allocation8 [shape = 'u8[1536]{0}', space=smem, size = 0x600, scoped, tag = 'input window, operand 4, single buffered']
    %10 = vsyncpa [#allocation3], 0
    %s11 = scalar_lea.sflag [#allocation3], 1
    %12 = vsyncpa %s11, 0
    %13 = vsyncpa [#allocation6], 0
    %14 = vsyncpa [#allocation4], 0
    loop: start=0, step=1, limit=4
    $region2: #{dylan_mt_net_forward.2} parent=1 // loop_pre_header
      _
    $region3: #{dylan_mt_net_forward.2} parent=1 // loop_header
      %s16 = sphi 0, %s20
      %p17 = scmp.ge.s32.totalorder %s16, 4
      %s26 = sphi 0, %s28
      %s29 = sphi 0, %s26
      %s30 = sphi 0, %s29
      %s46 = sphi 0, %s30
      %s50 = sphi 0, %s50
      %s52 = sphi 0, %s50
      %s53 = sphi 0, %s52
      %s67 = sphi 0, %s53
      %s71 = sphi 0, %s71
      %s73 = sphi 0, %s71
      %s74 = sphi 0, %s73
      %s88 = sphi 0, %s74
      %s92 = sphi 0, %s92
      %s94 = sphi 0, %s92
      %s95 = sphi 0, %s94
      %s109 = sphi 0, %s95
      %s113 = sphi 0, %s113
      %s115 = sphi 0, %s113
      %s116 = sphi 0, %s115
      %s130 = sphi 0, %s116
      %s136 = sphi 0, %s138
      %s139 = sphi 0, %s136
      %s140 = sphi 0, %s139
      %s156 = sphi 0, %s140
    $region4: #{dylan_mt_net_forward.2} parent=1 // loop_header_branch
      %19 = sbr.rel (%p17) target = $region8
    $region5: #{dylan_mt_net_forward.2} parent=1 // loop_body
      %s21 = ssub.s32 %s16, 1
      %s22 = ssub.s32 %s16, 2
      %s23 = sadd.s32 %s16, 1
      %s24 = ssub.s32 %s16, %s23
      %p25 = scmp.eq.s32.totalorder %s24, 0
      %s27 = sadd.s32 %s26, 1
      %s28 = scalar_select %p25, %s26, %s27
      %p31 = pneg %p25
      %p32 = scmp.eq.s32.totalorder %s16, 1
      %p33 = por %p31, %p32
      %p34 = scmp.ne.s32.totalorder %s26, %s29
      %p35 = scmp.eq.s32.totalorder %s16, 0
      %p36 = por %p34, %p35
      %p37 = scmp.ne.s32.totalorder %s26, %s29
      %p38 = scmp.eq.s32.totalorder %s21, 1
      %p39 = por %p37, %p38
      %p40 = scmp.ne.s32.totalorder %s29, %s30
      %p41 = scmp.eq.s32.totalorder %s21, 0
      %p42 = por %p40, %p41
      %p43 = scmp.ne.s32.totalorder %s29, %s30
      %p44 = scmp.eq.s32.totalorder %s22, 1
      %p45 = por %p43, %p44
      %p47 = scmp.ne.s32.totalorder %s30, %s46
      %p48 = scmp.eq.s32.totalorder %s22, 0
      %p49 = por %p47, %p48
      %s51 = sadd.s32 %s50, 1
      %p54 = scmp.eq.s32.totalorder %s16, 1
      %p55 = scmp.ne.s32.totalorder %s50, %s52
      %p56 = scmp.eq.s32.totalorder %s16, 0
      %p57 = por %p55, %p56
      %p58 = scmp.ne.s32.totalorder %s50, %s52
      %p59 = scmp.eq.s32.totalorder %s21, 1
      %p60 = por %p58, %p59
      %p61 = scmp.ne.s32.totalorder %s52, %s53
      %p62 = scmp.eq.s32.totalorder %s21, 0
      %p63 = por %p61, %p62
      %p64 = scmp.ne.s32.totalorder %s52, %s53
      %p65 = scmp.eq.s32.totalorder %s22, 1
      %p66 = por %p64, %p65
      %p68 = scmp.ne.s32.totalorder %s53, %s67
      %p69 = scmp.eq.s32.totalorder %s22, 0
      %p70 = por %p68, %p69
      %s72 = sadd.s32 %s71, 1
      %p75 = scmp.eq.s32.totalorder %s16, 1
      %p76 = scmp.ne.s32.totalorder %s71, %s73
      %p77 = scmp.eq.s32.totalorder %s16, 0
      %p78 = por %p76, %p77
      %p79 = scmp.ne.s32.totalorder %s71, %s73
      %p80 = scmp.eq.s32.totalorder %s21, 1
      %p81 = por %p79, %p80
      %p82 = scmp.ne.s32.totalorder %s73, %s74
      %p83 = scmp.eq.s32.totalorder %s21, 0
      %p84 = por %p82, %p83
      %p85 = scmp.ne.s32.totalorder %s73, %s74
      %p86 = scmp.eq.s32.totalorder %s22, 1
      %p87 = por %p85, %p86
      %p89 = scmp.ne.s32.totalorder %s74, %s88
      %p90 = scmp.eq.s32.totalorder %s22, 0
      %p91 = por %p89, %p90
      %s93 = sadd.s32 %s92, 1
      %p96 = scmp.eq.s32.totalorder %s16, 1
      %p97 = scmp.ne.s32.totalorder %s92, %s94
      %p98 = scmp.eq.s32.totalorder %s16, 0
      %p99 = por %p97, %p98
      %p100 = scmp.ne.s32.totalorder %s92, %s94
      %p101 = scmp.eq.s32.totalorder %s21, 1
      %p102 = por %p100, %p101
      %p103 = scmp.ne.s32.totalorder %s94, %s95
      %p104 = scmp.eq.s32.totalorder %s21, 0
      %p105 = por %p103, %p104
      %p106 = scmp.ne.s32.totalorder %s94, %s95
      %p107 = scmp.eq.s32.totalorder %s22, 1
      %p108 = por %p106, %p107
      %p110 = scmp.ne.s32.totalorder %s95, %s109
      %p111 = scmp.eq.s32.totalorder %s22, 0
      %p112 = por %p110, %p111
      %s114 = sadd.s32 %s113, 1
      %p117 = scmp.eq.s32.totalorder %s16, 1
      %p118 = scmp.ne.s32.totalorder %s113, %s115
      %p119 = scmp.eq.s32.totalorder %s16, 0
      %p120 = por %p118, %p119
      %p121 = scmp.ne.s32.totalorder %s113, %s115
      %p122 = scmp.eq.s32.totalorder %s21, 1
      %p123 = por %p121, %p122
      %p124 = scmp.ne.s32.totalorder %s115, %s116
      %p125 = scmp.eq.s32.totalorder %s21, 0
      %p126 = por %p124, %p125
      %p127 = scmp.ne.s32.totalorder %s115, %s116
      %p128 = scmp.eq.s32.totalorder %s22, 1
      %p129 = por %p127, %p128
      %p131 = scmp.ne.s32.totalorder %s116, %s130
      %p132 = scmp.eq.s32.totalorder %s22, 0
      %p133 = por %p131, %p132
      %s134 = ssub.s32 %s16, %s23
      %p135 = scmp.eq.s32.totalorder %s134, 0
      %s137 = sadd.s32 %s136, 1
      %s138 = scalar_select %p135, %s136, %s137
      %p141 = pneg %p135
      %p142 = scmp.eq.s32.totalorder %s16, 1
      %p143 = por %p141, %p142
      %p144 = scmp.ne.s32.totalorder %s136, %s139
      %p145 = scmp.eq.s32.totalorder %s16, 0
      %p146 = por %p144, %p145
      %p147 = scmp.ne.s32.totalorder %s136, %s139
      %p148 = scmp.eq.s32.totalorder %s21, 1
      %p149 = por %p147, %p148
      %p150 = scmp.ne.s32.totalorder %s139, %s140
      %p151 = scmp.eq.s32.totalorder %s21, 0
      %p152 = por %p150, %p151
      %p153 = scmp.ne.s32.totalorder %s139, %s140
      %p154 = scmp.eq.s32.totalorder %s22, 1
      %p155 = por %p153, %p154
      %p157 = scmp.ne.s32.totalorder %s140, %s156
      %p158 = scmp.eq.s32.totalorder %s22, 0
      %p159 = por %p157, %p158
      %p160 = scmp.le.s32.totalorder 1, %s16
      %p161 = scmp.lt.s32.totalorder %s16, 3
      %p162 = pnand %p160, %p161
      %p163 = pneg %p162
      // Predicated region
      $region9: #{dylan_mt_net_forward.2} parent=5 // pred_check
        _
      $region10: #{dylan_mt_net_forward.2} parent=5 // pred_check_branch
        %165 = sbr.rel (%p162) target = $region12
      $region11: #{dylan_mt_net_forward.2} parent=5 // pred_region
        %s166 = ssub.s32 %s16, 1
        // Predicated region
        $region13: #{dylan_mt_net_forward.2} parent=11 // pred_check
          %p167 = pneg %p63
        $region14: #{dylan_mt_net_forward.2} parent=11 // pred_check_branch
          %169 = sbr.rel (%p167) target = $region16
        $region15: #{dylan_mt_net_forward.2} parent=11 // pred_region
          %s171 = ssub.s32 1024, 1024
          %172 = vsyncadd [#allocation6], %s171
          %s173 = sshll.u32 [#allocation5], 4
          %s174 = int_to_ptr.vmem [resolvable:$true] %s173
          %179 = dma.hbm_to_vmem [thread:$0]  %s1, 1024, %s174, [#allocation6], 128, 128, 8
        $region16: #{dylan_mt_net_forward.2} parent=11 // pred_fallthru
          _
        // Predicated region
        $region17: #{dylan_mt_net_forward.2} parent=11 // pred_check
          %p180 = pneg %p84
        $region18: #{dylan_mt_net_forward.2} parent=11 // pred_check_branch
          %182 = sbr.rel (%p180) target = $region20
        $region19: #{dylan_mt_net_forward.2} parent=11 // pred_region
          %s184 = ssub.s32 1024, 1024
          %185 = vsyncadd [#allocation6], %s184
          %s186 = sshll.u32 [#allocation7], 4
          %s187 = int_to_ptr.vmem [resolvable:$true] %s186
          %192 = dma.hbm_to_vmem [thread:$0]  %s2, 1024, %s187, [#allocation6], 128, 128, 8
        $region20: #{dylan_mt_net_forward.2} parent=11 // pred_fallthru
          _
        // Predicated region
        $region21: #{dylan_mt_net_forward.2} parent=11 // pred_check
          %p193 = pneg %p105
        $region22: #{dylan_mt_net_forward.2} parent=11 // pred_check_branch
          %195 = sbr.rel (%p193) target = $region24
        $region23: #{dylan_mt_net_forward.2} parent=11 // pred_region
          _
        $region24: #{dylan_mt_net_forward.2} parent=11 // pred_fallthru
          _
        // Predicated region
        $region25: #{dylan_mt_net_forward.2} parent=11 // pred_check
          %p196 = pneg %p126
        $region26: #{dylan_mt_net_forward.2} parent=11 // pred_check_branch
          %198 = sbr.rel (%p196) target = $region28
        $region27: #{dylan_mt_net_forward.2} parent=11 // pred_region
          %s200 = ssub.s32 48, 48
          %201 = vsyncadd [#allocation4], %s200
          %204 = dma.hbm_to_smem %s4, 48, [#allocation8], [#allocation4]
        $region28: #{dylan_mt_net_forward.2} parent=11 // pred_fallthru
          _
      $region12: #{dylan_mt_net_forward.2} parent=5 // pred_fallthru
        _
      %p205 = scmp.lt.s32.totalorder %s16, 2
      // Predicated region
      $region29: #{dylan_mt_net_forward.2} parent=5 // pred_check
        %p206 = pneg %p205
      $region30: #{dylan_mt_net_forward.2} parent=5 // pred_check_branch
        %208 = sbr.rel (%p206) target = $region32
      $region31: #{dylan_mt_net_forward.2} parent=5 // pred_region
        // Predicated region
        $region33: #{dylan_mt_net_forward.2} parent=31 // pred_check
          %p209 = pneg %p36
        $region34: #{dylan_mt_net_forward.2} parent=31 // pred_check_branch
          %211 = sbr.rel (%p209) target = $region36
        $region35: #{dylan_mt_net_forward.2} parent=31 // pred_region
          %s212 = sand.u32 %s26, 1
          %s213 = scalar_lea.sflag [#allocation3], %s212
          %s214 = sand.u32 %s26, 1
          %s215 = smul.addr %s214, 48
          %s216 = scalar_lea.vmem [#allocation2], %s215
          %s218 = ssub.s32 768, 768
          %219 = vsyncadd %s213, %s218
          %s220 = smul.addr %s16, 6
          %s221 = smul.addr %s220, 128
          %s222 = scalar_lea.hbm %s0, %s221
          %s223 = sshll.u32 %s216, 4
          %s224 = int_to_ptr.vmem [resolvable:$true] %s223
          %229 = dma.hbm_to_vmem [thread:$0]  %s222, 768, %s224, %s213, 128, 128, 8
        $region36: #{dylan_mt_net_forward.2} parent=31 // pred_fallthru
          _
      $region32: #{dylan_mt_net_forward.2} parent=5 // pred_fallthru
        _
      %p230 = scmp.le.s32.totalorder 1, %s16
      %p231 = scmp.lt.s32.totalorder %s16, 3
      %p232 = pnand %p230, %p231
      %p233 = pneg %p232
      // Predicated region
      $region37: #{dylan_mt_net_forward.2} parent=5 // pred_check
        _
      $region38: #{dylan_mt_net_forward.2} parent=5 // pred_check_branch
        %235 = sbr.rel (%p232) target = $region40
      $region39: #{dylan_mt_net_forward.2} parent=5 // pred_region
        %s236 = ssub.s32 %s16, 1
        %s237 = sand.u32 %s29, 1
        %s238 = scalar_lea.sflag [#allocation3], %s237
        %s239 = sand.u32 %s29, 1
        %s240 = smul.addr %s239, 48
        %s241 = scalar_lea.vmem [#allocation2], %s240
        // Predicated region
        $region41: #{dylan_mt_net_forward.2} parent=39 // pred_check
          %p242 = pneg %p42
        $region42: #{dylan_mt_net_forward.2} parent=39 // pred_check_branch
          %244 = sbr.rel (%p242) target = $region44
        $region43: #{dylan_mt_net_forward.2} parent=39 // pred_region
          %245 = dma.done %s238, 768
        $region44: #{dylan_mt_net_forward.2} parent=39 // pred_fallthru
          _
        // Predicated region
        $region45: #{dylan_mt_net_forward.2} parent=39 // pred_check
          %p246 = pneg %p63
        $region46: #{dylan_mt_net_forward.2} parent=39 // pred_check_branch
          %248 = sbr.rel (%p246) target = $region48
        $region47: #{dylan_mt_net_forward.2} parent=39 // pred_region
          %249 = dma.done [#allocation6], 1024
        $region48: #{dylan_mt_net_forward.2} parent=39 // pred_fallthru
          _
        // Predicated region
        $region49: #{dylan_mt_net_forward.2} parent=39 // pred_check
          %p250 = pneg %p84
        $region50: #{dylan_mt_net_forward.2} parent=39 // pred_check_branch
          %252 = sbr.rel (%p250) target = $region52
        $region51: #{dylan_mt_net_forward.2} parent=39 // pred_region
          %253 = dma.done [#allocation6], 1024
        $region52: #{dylan_mt_net_forward.2} parent=39 // pred_fallthru
          _
        // Predicated region
        $region53: #{dylan_mt_net_forward.2} parent=39 // pred_check
          %p254 = pneg %p126
        $region54: #{dylan_mt_net_forward.2} parent=39 // pred_check_branch
          %256 = sbr.rel (%p254) target = $region56
        $region55: #{dylan_mt_net_forward.2} parent=39 // pred_region
          %257 = dma.done [#allocation4], 48
        $region56: #{dylan_mt_net_forward.2} parent=39 // pred_fallthru
          _
        %258 = sfence
        %s259 = sand.u32 %s29, 1
        %s260 = scalar_lea.sflag [#allocation3], %s259
        %s261 = sand.u32 %s29, 1
        %s262 = smul.addr %s261, 48
        %s263 = scalar_lea.vmem [#allocation2], %s262
        %p264 = pneg %p42
        %p265 = pneg %p39
        %p266 = pneg %p63
        %p267 = pneg %p60
        %p268 = pneg %p84
        %p269 = pneg %p81
        %p270 = pneg %p105
        %p271 = pneg %p102
        %p272 = pneg %p126
        %p273 = pneg %p123
        %p274 = pneg %p152
        %p275 = pneg %p149
        %p276 = scmp.lt.s32.totalorder %s21, 1
        %s277 = scalar_select %p276, %s21, 1
        %s278 = smul.addr %s277, 4
        %s279 = smul.addr %s278, 8
        %s280 = scalar_lea.vmem %s5, %s279
        %p281 = scmp.lt.s32.totalorder %s21, 1
        %s282 = scalar_select %p281, %s21, 1
        %s283 = smul.addr %s282, 4
        %s284 = smul.addr %s283, 8
        %s285 = scalar_lea.vmem %s5, %s284
        %v286 = vld [vmem:[%s241] sm:$0xff]
        %v287 = vld [vmem:[%s241 + $0x8] sm:$0xff]
        %v288 = vld [vmem:[%s241 + $0x10] sm:$0xff]
        %v289 = vld [vmem:[%s241 + $0x18] sm:$0xff]
        %v290 = vld [vmem:[%s241 + $0x20] sm:$0xff]
        %v291 = vld [vmem:[%s241 + $0x28] sm:$0xff]
        %294 = vrot.lane.b32.xlu0 %v286, 1
        %v295 = vpop.permute.xlu0 %294
        %296 = vrot.lane.b32.xlu0 %v287, 1
        %v297 = vpop.permute.xlu0 %296
        %vm300 = vcmask 7168
        %v301 = vsel %vm300, 0.0, %v295
        %v302 = vsel %vm300, 0.0, %v297
        %vm303 = vcmask 187392
        %v304 = vsel %vm303, %v301, 0.0
        %v305 = vsel %vm303, %v302, 0.0
        %vm308 = vcmask 1040384
        %v309 = vrot.slane %v304, 7
        %v310 = vrot.slane %v305, 7
        %v311 = vsel %vm308, %v309, %v310
        %v315 = vsel %vm308, 0.0, %v309
        %v316 = vsel %vm308, %v310, 0.0
        %319 = vrot.lane.b32.xlu0 %v288, 1
        %v320 = vpop.permute.xlu0 %319
        %321 = vrot.lane.b32.xlu0 %v289, 1
        %v322 = vpop.permute.xlu0 %321
        %v325 = vsel %vm300, 0.0, %v320
        %v326 = vsel %vm300, 0.0, %v322
        %v327 = vsel %vm303, %v325, 0.0
        %v328 = vsel %vm303, %v326, 0.0
        %v331 = vrot.slane %v327, 7
        %v332 = vrot.slane %v328, 7
        %v333 = vsel %vm308, %v331, %v332
        %v337 = vsel %vm308, 0.0, %v331
        %v338 = vsel %vm308, %v332, 0.0
        %341 = vrot.lane.b32.xlu0 %v290, 1
        %v342 = vpop.permute.xlu0 %341
        %343 = vrot.lane.b32.xlu0 %v291, 1
        %v344 = vpop.permute.xlu0 %343
        %v347 = vsel %vm300, 0.0, %v342
        %v348 = vsel %vm300, 0.0, %v344
        %v349 = vsel %vm303, %v347, 0.0
        %v350 = vsel %vm303, %v348, 0.0
        %v353 = vrot.slane %v349, 7
        %v354 = vrot.slane %v350, 7
        %v355 = vsel %vm308, %v353, %v354
        %v359 = vsel %vm308, 0.0, %v353
        %v360 = vsel %vm308, %v354, 0.0
        %s361 = sld [smem:[#allocation8 + $0x6c]]
        %v362 = vstv %s361
        %v363 = vadd.f32 %v362, 0.0
        %s364 = sld [smem:[#allocation8 + $0x6d]]
        %v365 = vstv %s364
        %v366 = vadd.f32 %v365, 0.0
        %s367 = sld [smem:[#allocation8 + $0x6e]]
        %v368 = vstv %s367
        %v369 = vadd.f32 %v368, 0.0
        %s370 = sld [smem:[#allocation8 + $0x6f]]
        %v371 = vstv %s370
        %v372 = vadd.f32 %v371, 0.0
        %s373 = sld [smem:[#allocation8]]
        %v374 = vstv %s373
        %v375 = vmul.f32 %v374, %v315
        %v376 = vmul.f32 %v374, %v311
        %v377 = vadd.f32 %v363, %v375
        %v378 = vadd.f32 %v363, %v376
        %s379 = sld [smem:[#allocation8 + $0x1b]]
        %v380 = vstv %s379
        %v381 = vmul.f32 %v380, %v315
        %v382 = vmul.f32 %v380, %v311
        %v383 = vadd.f32 %v366, %v381
        %v384 = vadd.f32 %v366, %v382
        %s385 = sld [smem:[#allocation8 + $0x36]]
        %v386 = vstv %s385
        %v387 = vmul.f32 %v386, %v315
        %v388 = vmul.f32 %v386, %v311
        %v389 = vadd.f32 %v369, %v387
        %v390 = vadd.f32 %v369, %v388
        %s391 = sld [smem:[#allocation8 + $0x51]]
        %v392 = vstv %s391
        %v393 = vmul.f32 %v392, %v315
        %v394 = vmul.f32 %v392, %v311
        %v395 = vadd.f32 %v372, %v393
        %v396 = vadd.f32 %v372, %v394
        %s397 = sld [smem:[#allocation8 + $0x1]]
        %v398 = vstv %s397
        %v399 = vmul.f32 %v398, %v315
        %v400 = vmul.f32 %v398, %v311
        %403 = vrot.lane.b32.xlu0 %v399, 127
        %v404 = vpop.permute.xlu0 %403
        %405 = vrot.lane.b32.xlu0 %v400, 127
        %v406 = vpop.permute.xlu0 %405
        %v409 = vadd.f32 %v377, %v404
        %v410 = vadd.f32 %v378, %v406
        %s411 = sld [smem:[#allocation8 + $0x1c]]
        %v412 = vstv %s411
        %v413 = vmul.f32 %v412, %v315
        %v414 = vmul.f32 %v412, %v311
        %417 = vrot.lane.b32.xlu0 %v413, 127
        %v418 = vpop.permute.xlu0 %417
        %419 = vrot.lane.b32.xlu0 %v414, 127
        %v420 = vpop.permute.xlu0 %419
        %v423 = vadd.f32 %v383, %v418
        %v424 = vadd.f32 %v384, %v420
        %s425 = sld [smem:[#allocation8 + $0x37]]
        %v426 = vstv %s425
        %v427 = vmul.f32 %v426, %v315
        %v428 = vmul.f32 %v426, %v311
        %431 = vrot.lane.b32.xlu0 %v427, 127
        %v432 = vpop.permute.xlu0 %431
        %433 = vrot.lane.b32.xlu0 %v428, 127
        %v434 = vpop.permute.xlu0 %433
        %v437 = vadd.f32 %v389, %v432
        %v438 = vadd.f32 %v390, %v434
        %s439 = sld [smem:[#allocation8 + $0x52]]
        %v440 = vstv %s439
        %v441 = vmul.f32 %v440, %v315
        %v442 = vmul.f32 %v440, %v311
        %445 = vrot.lane.b32.xlu0 %v441, 127
        %v446 = vpop.permute.xlu0 %445
        %447 = vrot.lane.b32.xlu0 %v442, 127
        %v448 = vpop.permute.xlu0 %447
        %v451 = vadd.f32 %v395, %v446
        %v452 = vadd.f32 %v396, %v448
        %s453 = sld [smem:[#allocation8 + $0x2]]
        %v454 = vstv %s453
        %v455 = vmul.f32 %v454, %v315
        %v456 = vmul.f32 %v454, %v311
        %459 = vrot.lane.b32.xlu0 %v455, 126
        %v460 = vpop.permute.xlu0 %459
        %461 = vrot.lane.b32.xlu0 %v456, 126
        %v462 = vpop.permute.xlu0 %461
        %v465 = vadd.f32 %v409, %v460
        %v466 = vadd.f32 %v410, %v462
        %s467 = sld [smem:[#allocation8 + $0x1d]]
        %v468 = vstv %s467
        %v469 = vmul.f32 %v468, %v315
        %v470 = vmul.f32 %v468, %v311
        %473 = vrot.lane.b32.xlu0 %v469, 126
        %v474 = vpop.permute.xlu0 %473
        %475 = vrot.lane.b32.xlu0 %v470, 126
        %v476 = vpop.permute.xlu0 %475
        %v479 = vadd.f32 %v423, %v474
        %v480 = vadd.f32 %v424, %v476
        %s481 = sld [smem:[#allocation8 + $0x38]]
        %v482 = vstv %s481
        %v483 = vmul.f32 %v482, %v315
        %v484 = vmul.f32 %v482, %v311
        %487 = vrot.lane.b32.xlu0 %v483, 126
        %v488 = vpop.permute.xlu0 %487
        %489 = vrot.lane.b32.xlu0 %v484, 126
        %v490 = vpop.permute.xlu0 %489
        %v493 = vadd.f32 %v437, %v488
        %v494 = vadd.f32 %v438, %v490
        %s495 = sld [smem:[#allocation8 + $0x53]]
        %v496 = vstv %s495
        %v497 = vmul.f32 %v496, %v315
        %v498 = vmul.f32 %v496, %v311
        %501 = vrot.lane.b32.xlu0 %v497, 126
        %v502 = vpop.permute.xlu0 %501
        %503 = vrot.lane.b32.xlu0 %v498, 126
        %v504 = vpop.permute.xlu0 %503
        %v507 = vadd.f32 %v451, %v502
        %v508 = vadd.f32 %v452, %v504
        %s509 = sld [smem:[#allocation8 + $0x3]]
        %v510 = vstv %s509
        %v511 = vmul.f32 %v510, %v315
        %v512 = vmul.f32 %v510, %v311
        %v513 = vmul.f32 %v510, %v316
        %vm517 = vcmask 1046528
        %v518 = vrot.slane %v511, 1
        %v519 = vrot.slane %v512, 1
        %v520 = vsel %vm517, %v518, %v519
        %v521 = vrot.slane %v513, 1
        %v522 = vsel %vm517, %v519, %v521
        %v525 = vadd.f32 %v465, %v520
        %v526 = vadd.f32 %v466, %v522
        %s527 = sld [smem:[#allocation8 + $0x1e]]
        %v528 = vstv %s527
        %v529 = vmul.f32 %v528, %v315
        %v530 = vmul.f32 %v528, %v311
        %v531 = vmul.f32 %v528, %v316
        %v535 = vrot.slane %v529, 1
        %v536 = vrot.slane %v530, 1
        %v537 = vsel %vm517, %v535, %v536
        %v538 = vrot.slane %v531, 1
        %v539 = vsel %vm517, %v536, %v538
        %v542 = vadd.f32 %v479, %v537
        %v543 = vadd.f32 %v480, %v539
        %s544 = sld [smem:[#allocation8 + $0x39]]
        %v545 = vstv %s544
        %v546 = vmul.f32 %v545, %v315
        %v547 = vmul.f32 %v545, %v311
        %v548 = vmul.f32 %v545, %v316
        %v552 = vrot.slane %v546, 1
        %v553 = vrot.slane %v547, 1
        %v554 = vsel %vm517, %v552, %v553
        %v555 = vrot.slane %v548, 1
        %v556 = vsel %vm517, %v553, %v555
        %v559 = vadd.f32 %v493, %v554
        %v560 = vadd.f32 %v494, %v556
        %s561 = sld [smem:[#allocation8 + $0x54]]
        %v562 = vstv %s561
        %v563 = vmul.f32 %v562, %v315
        %v564 = vmul.f32 %v562, %v311
        %v565 = vmul.f32 %v562, %v316
        %v569 = vrot.slane %v563, 1
        %v570 = vrot.slane %v564, 1
        %v571 = vsel %vm517, %v569, %v570
        %v572 = vrot.slane %v565, 1
        %v573 = vsel %vm517, %v570, %v572
        %v576 = vadd.f32 %v507, %v571
        %v577 = vadd.f32 %v508, %v573
        %s578 = sld [smem:[#allocation8 + $0x4]]
        %v579 = vstv %s578
        %v580 = vmul.f32 %v579, %v315
        %v581 = vmul.f32 %v579, %v311
        %v582 = vmul.f32 %v579, %v316
        %v586 = vrot.slane %v580, 1
        %v587 = vrot.slane %v581, 1
        %v588 = vsel %vm517, %v586, %v587
        %v589 = vrot.slane %v582, 1
        %v590 = vsel %vm517, %v587, %v589
        %591 = vrot.lane.b32.xlu0 %v588, 127
        %v592 = vpop.permute.xlu0 %591
        %593 = vrot.lane.b32.xlu0 %v590, 127
        %v594 = vpop.permute.xlu0 %593
        %v597 = vadd.f32 %v525, %v592
        %v598 = vadd.f32 %v526, %v594
        %s599 = sld [smem:[#allocation8 + $0x1f]]
        %v600 = vstv %s599
        %v601 = vmul.f32 %v600, %v315
        %v602 = vmul.f32 %v600, %v311
        %v603 = vmul.f32 %v600, %v316
        %v607 = vrot.slane %v601, 1
        %v608 = vrot.slane %v602, 1
        %v609 = vsel %vm517, %v607, %v608
        %v610 = vrot.slane %v603, 1
        %v611 = vsel %vm517, %v608, %v610
        %612 = vrot.lane.b32.xlu0 %v609, 127
        %v613 = vpop.permute.xlu0 %612
        %614 = vrot.lane.b32.xlu0 %v611, 127
        %v615 = vpop.permute.xlu0 %614
        %v618 = vadd.f32 %v542, %v613
        %v619 = vadd.f32 %v543, %v615
        %s620 = sld [smem:[#allocation8 + $0x3a]]
        %v621 = vstv %s620
        %v622 = vmul.f32 %v621, %v315
        %v623 = vmul.f32 %v621, %v311
        %v624 = vmul.f32 %v621, %v316
        %v628 = vrot.slane %v622, 1
        %v629 = vrot.slane %v623, 1
        %v630 = vsel %vm517, %v628, %v629
        %v631 = vrot.slane %v624, 1
        %v632 = vsel %vm517, %v629, %v631
        %633 = vrot.lane.b32.xlu0 %v630, 127
        %v634 = vpop.permute.xlu0 %633
        %635 = vrot.lane.b32.xlu0 %v632, 127
        %v636 = vpop.permute.xlu0 %635
        %v639 = vadd.f32 %v559, %v634
        %v640 = vadd.f32 %v560, %v636
        %s641 = sld [smem:[#allocation8 + $0x55]]
        %v642 = vstv %s641
        %v643 = vmul.f32 %v642, %v315
        %v644 = vmul.f32 %v642, %v311
        %v645 = vmul.f32 %v642, %v316
        %v649 = vrot.slane %v643, 1
        %v650 = vrot.slane %v644, 1
        %v651 = vsel %vm517, %v649, %v650
        %v652 = vrot.slane %v645, 1
        %v653 = vsel %vm517, %v650, %v652
        %654 = vrot.lane.b32.xlu0 %v651, 127
        %v655 = vpop.permute.xlu0 %654
        %656 = vrot.lane.b32.xlu0 %v653, 127
        %v657 = vpop.permute.xlu0 %656
        %v660 = vadd.f32 %v576, %v655
        %v661 = vadd.f32 %v577, %v657
        %s662 = sld [smem:[#allocation8 + $0x5]]
        %v663 = vstv %s662
        %v664 = vmul.f32 %v663, %v315
        %v665 = vmul.f32 %v663, %v311
        %v666 = vmul.f32 %v663, %v316
        %v670 = vrot.slane %v664, 1
        %v671 = vrot.slane %v665, 1
        %v672 = vsel %vm517, %v670, %v671
        %v673 = vrot.slane %v666, 1
        %v674 = vsel %vm517, %v671, %v673
        %675 = vrot.lane.b32.xlu0 %v672, 126
        %v676 = vpop.permute.xlu0 %675
        %677 = vrot.lane.b32.xlu0 %v674, 126
        %v678 = vpop.permute.xlu0 %677
        %v681 = vadd.f32 %v597, %v676
        %v682 = vadd.f32 %v598, %v678
        %s683 = sld [smem:[#allocation8 + $0x20]]
        %v684 = vstv %s683
        %v685 = vmul.f32 %v684, %v315
        %v686 = vmul.f32 %v684, %v311
        %v687 = vmul.f32 %v684, %v316
        %v691 = vrot.slane %v685, 1
        %v692 = vrot.slane %v686, 1
        %v693 = vsel %vm517, %v691, %v692
        %v694 = vrot.slane %v687, 1
        %v695 = vsel %vm517, %v692, %v694
        %696 = vrot.lane.b32.xlu0 %v693, 126
        %v697 = vpop.permute.xlu0 %696
        %698 = vrot.lane.b32.xlu0 %v695, 126
        %v699 = vpop.permute.xlu0 %698
        %v702 = vadd.f32 %v618, %v697
        %v703 = vadd.f32 %v619, %v699
        %s704 = sld [smem:[#allocation8 + $0x3b]]
        %v705 = vstv %s704
        %v706 = vmul.f32 %v705, %v315
        %v707 = vmul.f32 %v705, %v311
        %v708 = vmul.f32 %v705, %v316
        %v712 = vrot.slane %v706, 1
        %v713 = vrot.slane %v707, 1
        %v714 = vsel %vm517, %v712, %v713
        %v715 = vrot.slane %v708, 1
        %v716 = vsel %vm517, %v713, %v715
        %717 = vrot.lane.b32.xlu0 %v714, 126
        %v718 = vpop.permute.xlu0 %717
        %719 = vrot.lane.b32.xlu0 %v716, 126
        %v720 = vpop.permute.xlu0 %719
        %v723 = vadd.f32 %v639, %v718
        %v724 = vadd.f32 %v640, %v720
        %s725 = sld [smem:[#allocation8 + $0x56]]
        %v726 = vstv %s725
        %v727 = vmul.f32 %v726, %v315
        %v728 = vmul.f32 %v726, %v311
        %v729 = vmul.f32 %v726, %v316
        %v733 = vrot.slane %v727, 1
        %v734 = vrot.slane %v728, 1
        %v735 = vsel %vm517, %v733, %v734
        %v736 = vrot.slane %v729, 1
        %v737 = vsel %vm517, %v734, %v736
        %738 = vrot.lane.b32.xlu0 %v735, 126
        %v739 = vpop.permute.xlu0 %738
        %740 = vrot.lane.b32.xlu0 %v737, 126
        %v741 = vpop.permute.xlu0 %740
        %v744 = vadd.f32 %v660, %v739
        %v745 = vadd.f32 %v661, %v741
        %s746 = sld [smem:[#allocation8 + $0x6]]
        %v747 = vstv %s746
        %v748 = vmul.f32 %v747, %v315
        %v749 = vmul.f32 %v747, %v311
        %v750 = vmul.f32 %v747, %v316
        %vm754 = vcmask 1045504
        %v755 = vrot.slane %v748, 2
        %v756 = vrot.slane %v749, 2
        %v757 = vsel %vm754, %v755, %v756
        %v758 = vrot.slane %v750, 2
        %v759 = vsel %vm754, %v756, %v758
        %v762 = vadd.f32 %v681, %v757
        %v763 = vadd.f32 %v682, %v759
        %s764 = sld [smem:[#allocation8 + $0x21]]
        %v765 = vstv %s764
        %v766 = vmul.f32 %v765, %v315
        %v767 = vmul.f32 %v765, %v311
        %v768 = vmul.f32 %v765, %v316
        %v772 = vrot.slane %v766, 2
        %v773 = vrot.slane %v767, 2
        %v774 = vsel %vm754, %v772, %v773
        %v775 = vrot.slane %v768, 2
        %v776 = vsel %vm754, %v773, %v775
        %v779 = vadd.f32 %v702, %v774
        %v780 = vadd.f32 %v703, %v776
        %s781 = sld [smem:[#allocation8 + $0x3c]]
        %v782 = vstv %s781
        %v783 = vmul.f32 %v782, %v315
        %v784 = vmul.f32 %v782, %v311
        %v785 = vmul.f32 %v782, %v316
        %v789 = vrot.slane %v783, 2
        %v790 = vrot.slane %v784, 2
        %v791 = vsel %vm754, %v789, %v790
        %v792 = vrot.slane %v785, 2
        %v793 = vsel %vm754, %v790, %v792
        %v796 = vadd.f32 %v723, %v791
        %v797 = vadd.f32 %v724, %v793
        %s798 = sld [smem:[#allocation8 + $0x57]]
        %v799 = vstv %s798
        %v800 = vmul.f32 %v799, %v315
        %v801 = vmul.f32 %v799, %v311
        %v802 = vmul.f32 %v799, %v316
        %v806 = vrot.slane %v800, 2
        %v807 = vrot.slane %v801, 2
        %v808 = vsel %vm754, %v806, %v807
        %v809 = vrot.slane %v802, 2
        %v810 = vsel %vm754, %v807, %v809
        %v813 = vadd.f32 %v744, %v808
        %v814 = vadd.f32 %v745, %v810
        %s815 = sld [smem:[#allocation8 + $0x7]]
        %v816 = vstv %s815
        %v817 = vmul.f32 %v816, %v315
        %v818 = vmul.f32 %v816, %v311
        %v819 = vmul.f32 %v816, %v316
        %v823 = vrot.slane %v817, 2
        %v824 = vrot.slane %v818, 2
        %v825 = vsel %vm754, %v823, %v824
        %v826 = vrot.slane %v819, 2
        %v827 = vsel %vm754, %v824, %v826
        %828 = vrot.lane.b32.xlu0 %v825, 127
        %v829 = vpop.permute.xlu0 %828
        %830 = vrot.lane.b32.xlu0 %v827, 127
        %v831 = vpop.permute.xlu0 %830
        %v834 = vadd.f32 %v762, %v829
        %v835 = vadd.f32 %v763, %v831
        %s836 = sld [smem:[#allocation8 + $0x22]]
        %v837 = vstv %s836
        %v838 = vmul.f32 %v837, %v315
        %v839 = vmul.f32 %v837, %v311
        %v840 = vmul.f32 %v837, %v316
        %v844 = vrot.slane %v838, 2
        %v845 = vrot.slane %v839, 2
        %v846 = vsel %vm754, %v844, %v845
        %v847 = vrot.slane %v840, 2
        %v848 = vsel %vm754, %v845, %v847
        %849 = vrot.lane.b32.xlu0 %v846, 127
        %v850 = vpop.permute.xlu0 %849
        %851 = vrot.lane.b32.xlu0 %v848, 127
        %v852 = vpop.permute.xlu0 %851
        %v855 = vadd.f32 %v779, %v850
        %v856 = vadd.f32 %v780, %v852
        %s857 = sld [smem:[#allocation8 + $0x3d]]
        %v858 = vstv %s857
        %v859 = vmul.f32 %v858, %v315
        %v860 = vmul.f32 %v858, %v311
        %v861 = vmul.f32 %v858, %v316
        %v865 = vrot.slane %v859, 2
        %v866 = vrot.slane %v860, 2
        %v867 = vsel %vm754, %v865, %v866
        %v868 = vrot.slane %v861, 2
        %v869 = vsel %vm754, %v866, %v868
        %870 = vrot.lane.b32.xlu0 %v867, 127
        %v871 = vpop.permute.xlu0 %870
        %872 = vrot.lane.b32.xlu0 %v869, 127
        %v873 = vpop.permute.xlu0 %872
        %v876 = vadd.f32 %v796, %v871
        %v877 = vadd.f32 %v797, %v873
        %s878 = sld [smem:[#allocation8 + $0x58]]
        %v879 = vstv %s878
        %v880 = vmul.f32 %v879, %v315
        %v881 = vmul.f32 %v879, %v311
        %v882 = vmul.f32 %v879, %v316
        %v886 = vrot.slane %v880, 2
        %v887 = vrot.slane %v881, 2
        %v888 = vsel %vm754, %v886, %v887
        %v889 = vrot.slane %v882, 2
        %v890 = vsel %vm754, %v887, %v889
        %891 = vrot.lane.b32.xlu0 %v888, 127
        %v892 = vpop.permute.xlu0 %891
        %893 = vrot.lane.b32.xlu0 %v890, 127
        %v894 = vpop.permute.xlu0 %893
        %v897 = vadd.f32 %v813, %v892
        %v898 = vadd.f32 %v814, %v894
        %s899 = sld [smem:[#allocation8 + $0x8]]
        %v900 = vstv %s899
        %v901 = vmul.f32 %v900, %v315
        %v902 = vmul.f32 %v900, %v311
        %v903 = vmul.f32 %v900, %v316
        %v907 = vrot.slane %v901, 2
        %v908 = vrot.slane %v902, 2
        %v909 = vsel %vm754, %v907, %v908
        %v910 = vrot.slane %v903, 2
        %v911 = vsel %vm754, %v908, %v910
        %912 = vrot.lane.b32.xlu0 %v909, 126
        %v913 = vpop.permute.xlu0 %912
        %914 = vrot.lane.b32.xlu0 %v911, 126
        %v915 = vpop.permute.xlu0 %914
        %v918 = vadd.f32 %v834, %v913
        %v919 = vadd.f32 %v835, %v915
        %s920 = sld [smem:[#allocation8 + $0x23]]
        %v921 = vstv %s920
        %v922 = vmul.f32 %v921, %v315
        %v923 = vmul.f32 %v921, %v311
        %v924 = vmul.f32 %v921, %v316
        %v928 = vrot.slane %v922, 2
        %v929 = vrot.slane %v923, 2
        %v930 = vsel %vm754, %v928, %v929
        %v931 = vrot.slane %v924, 2
        %v932 = vsel %vm754, %v929, %v931
        %933 = vrot.lane.b32.xlu0 %v930, 126
        %v934 = vpop.permute.xlu0 %933
        %935 = vrot.lane.b32.xlu0 %v932, 126
        %v936 = vpop.permute.xlu0 %935
        %v939 = vadd.f32 %v855, %v934
        %v940 = vadd.f32 %v856, %v936
        %s941 = sld [smem:[#allocation8 + $0x3e]]
        %v942 = vstv %s941
        %v943 = vmul.f32 %v942, %v315
        %v944 = vmul.f32 %v942, %v311
        %v945 = vmul.f32 %v942, %v316
        %v949 = vrot.slane %v943, 2
        %v950 = vrot.slane %v944, 2
        %v951 = vsel %vm754, %v949, %v950
        %v952 = vrot.slane %v945, 2
        %v953 = vsel %vm754, %v950, %v952
        %954 = vrot.lane.b32.xlu0 %v951, 126
        %v955 = vpop.permute.xlu0 %954
        %956 = vrot.lane.b32.xlu0 %v953, 126
        %v957 = vpop.permute.xlu0 %956
        %v960 = vadd.f32 %v876, %v955
        %v961 = vadd.f32 %v877, %v957
        %s962 = sld [smem:[#allocation8 + $0x59]]
        %v963 = vstv %s962
        %v964 = vmul.f32 %v963, %v315
        %v965 = vmul.f32 %v963, %v311
        %v966 = vmul.f32 %v963, %v316
        %v970 = vrot.slane %v964, 2
        %v971 = vrot.slane %v965, 2
        %v972 = vsel %vm754, %v970, %v971
        %v973 = vrot.slane %v966, 2
        %v974 = vsel %vm754, %v971, %v973
        %975 = vrot.lane.b32.xlu0 %v972, 126
        %v976 = vpop.permute.xlu0 %975
        %977 = vrot.lane.b32.xlu0 %v974, 126
        %v978 = vpop.permute.xlu0 %977
        %v981 = vadd.f32 %v897, %v976
        %v982 = vadd.f32 %v898, %v978
        %s983 = sld [smem:[#allocation8 + $0x9]]
        %v984 = vstv %s983
        %v985 = vmul.f32 %v984, %v337
        %v986 = vmul.f32 %v984, %v333
        %v987 = vadd.f32 %v918, %v985
        %v988 = vadd.f32 %v919, %v986
        %s989 = sld [smem:[#allocation8 + $0x24]]
        %v990 = vstv %s989
        %v991 = vmul.f32 %v990, %v337
        %v992 = vmul.f32 %v990, %v333
        %v993 = vadd.f32 %v939, %v991
        %v994 = vadd.f32 %v940, %v992
        %s995 = sld [smem:[#allocation8 + $0x3f]]
        %v996 = vstv %s995
        %v997 = vmul.f32 %v996, %v337
        %v998 = vmul.f32 %v996, %v333
        %v999 = vadd.f32 %v960, %v997
        %v1000 = vadd.f32 %v961, %v998
        %s1001 = sld [smem:[#allocation8 + $0x5a]]
        %v1002 = vstv %s1001
        %v1003 = vmul.f32 %v1002, %v337
        %v1004 = vmul.f32 %v1002, %v333
        %v1005 = vadd.f32 %v981, %v1003
        %v1006 = vadd.f32 %v982, %v1004
        %s1007 = sld [smem:[#allocation8 + $0xa]]
        %v1008 = vstv %s1007
        %v1009 = vmul.f32 %v1008, %v337
        %v1010 = vmul.f32 %v1008, %v333
        %1013 = vrot.lane.b32.xlu0 %v1009, 127
        %v1014 = vpop.permute.xlu0 %1013
        %1015 = vrot.lane.b32.xlu0 %v1010, 127
        %v1016 = vpop.permute.xlu0 %1015
        %v1019 = vadd.f32 %v987, %v1014
        %v1020 = vadd.f32 %v988, %v1016
        %s1021 = sld [smem:[#allocation8 + $0x25]]
        %v1022 = vstv %s1021
        %v1023 = vmul.f32 %v1022, %v337
        %v1024 = vmul.f32 %v1022, %v333
        %1027 = vrot.lane.b32.xlu0 %v1023, 127
        %v1028 = vpop.permute.xlu0 %1027
        %1029 = vrot.lane.b32.xlu0 %v1024, 127
        %v1030 = vpop.permute.xlu0 %1029
        %v1033 = vadd.f32 %v993, %v1028
        %v1034 = vadd.f32 %v994, %v1030
        %s1035 = sld [smem:[#allocation8 + $0x40]]
        %v1036 = vstv %s1035
        %v1037 = vmul.f32 %v1036, %v337
        %v1038 = vmul.f32 %v1036, %v333
        %1041 = vrot.lane.b32.xlu0 %v1037, 127
        %v1042 = vpop.permute.xlu0 %1041
        %1043 = vrot.lane.b32.xlu0 %v1038, 127
        %v1044 = vpop.permute.xlu0 %1043
        %v1047 = vadd.f32 %v999, %v1042
        %v1048 = vadd.f32 %v1000, %v1044
        %s1049 = sld [smem:[#allocation8 + $0x5b]]
        %v1050 = vstv %s1049
        %v1051 = vmul.f32 %v1050, %v337
        %v1052 = vmul.f32 %v1050, %v333
        %1055 = vrot.lane.b32.xlu0 %v1051, 127
        %v1056 = vpop.permute.xlu0 %1055
        %1057 = vrot.lane.b32.xlu0 %v1052, 127
        %v1058 = vpop.permute.xlu0 %1057
        %v1061 = vadd.f32 %v1005, %v1056
        %v1062 = vadd.f32 %v1006, %v1058
        %s1063 = sld [smem:[#allocation8 + $0xb]]
        %v1064 = vstv %s1063
        %v1065 = vmul.f32 %v1064, %v337
        %v1066 = vmul.f32 %v1064, %v333
        %1069 = vrot.lane.b32.xlu0 %v1065, 126
        %v1070 = vpop.permute.xlu0 %1069
        %1071 = vrot.lane.b32.xlu0 %v1066, 126
        %v1072 = vpop.permute.xlu0 %1071
        %v1075 = vadd.f32 %v1019, %v1070
        %v1076 = vadd.f32 %v1020, %v1072
        %s1077 = sld [smem:[#allocation8 + $0x26]]
        %v1078 = vstv %s1077
        %v1079 = vmul.f32 %v1078, %v337
        %v1080 = vmul.f32 %v1078, %v333
        %1083 = vrot.lane.b32.xlu0 %v1079, 126
        %v1084 = vpop.permute.xlu0 %1083
        %1085 = vrot.lane.b32.xlu0 %v1080, 126
        %v1086 = vpop.permute.xlu0 %1085
        %v1089 = vadd.f32 %v1033, %v1084
        %v1090 = vadd.f32 %v1034, %v1086
        %s1091 = sld [smem:[#allocation8 + $0x41]]
        %v1092 = vstv %s1091
        %v1093 = vmul.f32 %v1092, %v337
        %v1094 = vmul.f32 %v1092, %v333
        %1097 = vrot.lane.b32.xlu0 %v1093, 126
        %v1098 = vpop.permute.xlu0 %1097
        %1099 = vrot.lane.b32.xlu0 %v1094, 126
        %v1100 = vpop.permute.xlu0 %1099
        %v1103 = vadd.f32 %v1047, %v1098
        %v1104 = vadd.f32 %v1048, %v1100
        %s1105 = sld [smem:[#allocation8 + $0x5c]]
        %v1106 = vstv %s1105
        %v1107 = vmul.f32 %v1106, %v337
        %v1108 = vmul.f32 %v1106, %v333
        %1111 = vrot.lane.b32.xlu0 %v1107, 126
        %v1112 = vpop.permute.xlu0 %1111
        %1113 = vrot.lane.b32.xlu0 %v1108, 126
        %v1114 = vpop.permute.xlu0 %1113
        %v1117 = vadd.f32 %v1061, %v1112
        %v1118 = vadd.f32 %v1062, %v1114
        %s1119 = sld [smem:[#allocation8 + $0xc]]
        %v1120 = vstv %s1119
        %v1121 = vmul.f32 %v1120, %v337
        %v1122 = vmul.f32 %v1120, %v333
        %v1123 = vmul.f32 %v1120, %v338
        %v1127 = vrot.slane %v1121, 1
        %v1128 = vrot.slane %v1122, 1
        %v1129 = vsel %vm517, %v1127, %v1128
        %v1130 = vrot.slane %v1123, 1
        %v1131 = vsel %vm517, %v1128, %v1130
        %v1134 = vadd.f32 %v1075, %v1129
        %v1135 = vadd.f32 %v1076, %v1131
        %s1136 = sld [smem:[#allocation8 + $0x27]]
        %v1137 = vstv %s1136
        %v1138 = vmul.f32 %v1137, %v337
        %v1139 = vmul.f32 %v1137, %v333
        %v1140 = vmul.f32 %v1137, %v338
        %v1144 = vrot.slane %v1138, 1
        %v1145 = vrot.slane %v1139, 1
        %v1146 = vsel %vm517, %v1144, %v1145
        %v1147 = vrot.slane %v1140, 1
        %v1148 = vsel %vm517, %v1145, %v1147
        %v1151 = vadd.f32 %v1089, %v1146
        %v1152 = vadd.f32 %v1090, %v1148
        %s1153 = sld [smem:[#allocation8 + $0x42]]
        %v1154 = vstv %s1153
        %v1155 = vmul.f32 %v1154, %v337
        %v1156 = vmul.f32 %v1154, %v333
        %v1157 = vmul.f32 %v1154, %v338
        %v1161 = vrot.slane %v1155, 1
        %v1162 = vrot.slane %v1156, 1
        %v1163 = vsel %vm517, %v1161, %v1162
        %v1164 = vrot.slane %v1157, 1
        %v1165 = vsel %vm517, %v1162, %v1164
        %v1168 = vadd.f32 %v1103, %v1163
        %v1169 = vadd.f32 %v1104, %v1165
        %s1170 = sld [smem:[#allocation8 + $0x5d]]
        %v1171 = vstv %s1170
        %v1172 = vmul.f32 %v1171, %v337
        %v1173 = vmul.f32 %v1171, %v333
        %v1174 = vmul.f32 %v1171, %v338
        %v1178 = vrot.slane %v1172, 1
        %v1179 = vrot.slane %v1173, 1
        %v1180 = vsel %vm517, %v1178, %v1179
        %v1181 = vrot.slane %v1174, 1
        %v1182 = vsel %vm517, %v1179, %v1181
        %v1185 = vadd.f32 %v1117, %v1180
        %v1186 = vadd.f32 %v1118, %v1182
        %s1187 = sld [smem:[#allocation8 + $0xd]]
        %v1188 = vstv %s1187
        %v1189 = vmul.f32 %v1188, %v337
        %v1190 = vmul.f32 %v1188, %v333
        %v1191 = vmul.f32 %v1188, %v338
        %v1195 = vrot.slane %v1189, 1
        %v1196 = vrot.slane %v1190, 1
        %v1197 = vsel %vm517, %v1195, %v1196
        %v1198 = vrot.slane %v1191, 1
        %v1199 = vsel %vm517, %v1196, %v1198
        %1200 = vrot.lane.b32.xlu0 %v1197, 127
        %v1201 = vpop.permute.xlu0 %1200
        %1202 = vrot.lane.b32.xlu0 %v1199, 127
        %v1203 = vpop.permute.xlu0 %1202
        %v1206 = vadd.f32 %v1134, %v1201
        %v1207 = vadd.f32 %v1135, %v1203
        %s1208 = sld [smem:[#allocation8 + $0x28]]
        %v1209 = vstv %s1208
        %v1210 = vmul.f32 %v1209, %v337
        %v1211 = vmul.f32 %v1209, %v333
        %v1212 = vmul.f32 %v1209, %v338
        %v1216 = vrot.slane %v1210, 1
        %v1217 = vrot.slane %v1211, 1
        %v1218 = vsel %vm517, %v1216, %v1217
        %v1219 = vrot.slane %v1212, 1
        %v1220 = vsel %vm517, %v1217, %v1219
        %1221 = vrot.lane.b32.xlu0 %v1218, 127
        %v1222 = vpop.permute.xlu0 %1221
        %1223 = vrot.lane.b32.xlu0 %v1220, 127
        %v1224 = vpop.permute.xlu0 %1223
        %v1227 = vadd.f32 %v1151, %v1222
        %v1228 = vadd.f32 %v1152, %v1224
        %s1229 = sld [smem:[#allocation8 + $0x43]]
        %v1230 = vstv %s1229
        %v1231 = vmul.f32 %v1230, %v337
        %v1232 = vmul.f32 %v1230, %v333
        %v1233 = vmul.f32 %v1230, %v338
        %v1237 = vrot.slane %v1231, 1
        %v1238 = vrot.slane %v1232, 1
        %v1239 = vsel %vm517, %v1237, %v1238
        %v1240 = vrot.slane %v1233, 1
        %v1241 = vsel %vm517, %v1238, %v1240
        %1242 = vrot.lane.b32.xlu0 %v1239, 127
        %v1243 = vpop.permute.xlu0 %1242
        %1244 = vrot.lane.b32.xlu0 %v1241, 127
        %v1245 = vpop.permute.xlu0 %1244
        %v1248 = vadd.f32 %v1168, %v1243
        %v1249 = vadd.f32 %v1169, %v1245
        %s1250 = sld [smem:[#allocation8 + $0x5e]]
        %v1251 = vstv %s1250
        %v1252 = vmul.f32 %v1251, %v337
        %v1253 = vmul.f32 %v1251, %v333
        %v1254 = vmul.f32 %v1251, %v338
        %v1258 = vrot.slane %v1252, 1
        %v1259 = vrot.slane %v1253, 1
        %v1260 = vsel %vm517, %v1258, %v1259
        %v1261 = vrot.slane %v1254, 1
        %v1262 = vsel %vm517, %v1259, %v1261
        %1263 = vrot.lane.b32.xlu0 %v1260, 127
        %v1264 = vpop.permute.xlu0 %1263
        %1265 = vrot.lane.b32.xlu0 %v1262, 127
        %v1266 = vpop.permute.xlu0 %1265
        %v1269 = vadd.f32 %v1185, %v1264
        %v1270 = vadd.f32 %v1186, %v1266
        %s1271 = sld [smem:[#allocation8 + $0xe]]
        %v1272 = vstv %s1271
        %v1273 = vmul.f32 %v1272, %v337
        %v1274 = vmul.f32 %v1272, %v333
        %v1275 = vmul.f32 %v1272, %v338
        %v1279 = vrot.slane %v1273, 1
        %v1280 = vrot.slane %v1274, 1
        %v1281 = vsel %vm517, %v1279, %v1280
        %v1282 = vrot.slane %v1275, 1
        %v1283 = vsel %vm517, %v1280, %v1282
        %1284 = vrot.lane.b32.xlu0 %v1281, 126
        %v1285 = vpop.permute.xlu0 %1284
        %1286 = vrot.lane.b32.xlu0 %v1283, 126
        %v1287 = vpop.permute.xlu0 %1286
        %v1290 = vadd.f32 %v1206, %v1285
        %v1291 = vadd.f32 %v1207, %v1287
        %s1292 = sld [smem:[#allocation8 + $0x29]]
        %v1293 = vstv %s1292
        %v1294 = vmul.f32 %v1293, %v337
        %v1295 = vmul.f32 %v1293, %v333
        %v1296 = vmul.f32 %v1293, %v338
        %v1300 = vrot.slane %v1294, 1
        %v1301 = vrot.slane %v1295, 1
        %v1302 = vsel %vm517, %v1300, %v1301
        %v1303 = vrot.slane %v1296, 1
        %v1304 = vsel %vm517, %v1301, %v1303
        %1305 = vrot.lane.b32.xlu0 %v1302, 126
        %v1306 = vpop.permute.xlu0 %1305
        %1307 = vrot.lane.b32.xlu0 %v1304, 126
        %v1308 = vpop.permute.xlu0 %1307
        %v1311 = vadd.f32 %v1227, %v1306
        %v1312 = vadd.f32 %v1228, %v1308
        %s1313 = sld [smem:[#allocation8 + $0x44]]
        %v1314 = vstv %s1313
        %v1315 = vmul.f32 %v1314, %v337
        %v1316 = vmul.f32 %v1314, %v333
        %v1317 = vmul.f32 %v1314, %v338
        %v1321 = vrot.slane %v1315, 1
        %v1322 = vrot.slane %v1316, 1
        %v1323 = vsel %vm517, %v1321, %v1322
        %v1324 = vrot.slane %v1317, 1
        %v1325 = vsel %vm517, %v1322, %v1324
        %1326 = vrot.lane.b32.xlu0 %v1323, 126
        %v1327 = vpop.permute.xlu0 %1326
        %1328 = vrot.lane.b32.xlu0 %v1325, 126
        %v1329 = vpop.permute.xlu0 %1328
        %v1332 = vadd.f32 %v1248, %v1327
        %v1333 = vadd.f32 %v1249, %v1329
        %s1334 = sld [smem:[#allocation8 + $0x5f]]
        %v1335 = vstv %s1334
        %v1336 = vmul.f32 %v1335, %v337
        %v1337 = vmul.f32 %v1335, %v333
        %v1338 = vmul.f32 %v1335, %v338
        %v1342 = vrot.slane %v1336, 1
        %v1343 = vrot.slane %v1337, 1
        %v1344 = vsel %vm517, %v1342, %v1343
        %v1345 = vrot.slane %v1338, 1
        %v1346 = vsel %vm517, %v1343, %v1345
        %1347 = vrot.lane.b32.xlu0 %v1344, 126
        %v1348 = vpop.permute.xlu0 %1347
        %1349 = vrot.lane.b32.xlu0 %v1346, 126
        %v1350 = vpop.permute.xlu0 %1349
        %v1353 = vadd.f32 %v1269, %v1348
        %v1354 = vadd.f32 %v1270, %v1350
        %s1355 = sld [smem:[#allocation8 + $0xf]]
        %v1356 = vstv %s1355
        %v1357 = vmul.f32 %v1356, %v337
        %v1358 = vmul.f32 %v1356, %v333
        %v1359 = vmul.f32 %v1356, %v338
        %v1363 = vrot.slane %v1357, 2
        %v1364 = vrot.slane %v1358, 2
        %v1365 = vsel %vm754, %v1363, %v1364
        %v1366 = vrot.slane %v1359, 2
        %v1367 = vsel %vm754, %v1364, %v1366
        %v1370 = vadd.f32 %v1290, %v1365
        %v1371 = vadd.f32 %v1291, %v1367
        %s1372 = sld [smem:[#allocation8 + $0x2a]]
        %v1373 = vstv %s1372
        %v1374 = vmul.f32 %v1373, %v337
        %v1375 = vmul.f32 %v1373, %v333
        %v1376 = vmul.f32 %v1373, %v338
        %v1380 = vrot.slane %v1374, 2
        %v1381 = vrot.slane %v1375, 2
        %v1382 = vsel %vm754, %v1380, %v1381
        %v1383 = vrot.slane %v1376, 2
        %v1384 = vsel %vm754, %v1381, %v1383
        %v1387 = vadd.f32 %v1311, %v1382
        %v1388 = vadd.f32 %v1312, %v1384
        %s1389 = sld [smem:[#allocation8 + $0x45]]
        %v1390 = vstv %s1389
        %v1391 = vmul.f32 %v1390, %v337
        %v1392 = vmul.f32 %v1390, %v333
        %v1393 = vmul.f32 %v1390, %v338
        %v1397 = vrot.slane %v1391, 2
        %v1398 = vrot.slane %v1392, 2
        %v1399 = vsel %vm754, %v1397, %v1398
        %v1400 = vrot.slane %v1393, 2
        %v1401 = vsel %vm754, %v1398, %v1400
        %v1404 = vadd.f32 %v1332, %v1399
        %v1405 = vadd.f32 %v1333, %v1401
        %s1406 = sld [smem:[#allocation8 + $0x60]]
        %v1407 = vstv %s1406
        %v1408 = vmul.f32 %v1407, %v337
        %v1409 = vmul.f32 %v1407, %v333
        %v1410 = vmul.f32 %v1407, %v338
        %v1414 = vrot.slane %v1408, 2
        %v1415 = vrot.slane %v1409, 2
        %v1416 = vsel %vm754, %v1414, %v1415
        %v1417 = vrot.slane %v1410, 2
        %v1418 = vsel %vm754, %v1415, %v1417
        %v1421 = vadd.f32 %v1353, %v1416
        %v1422 = vadd.f32 %v1354, %v1418
        %s1423 = sld [smem:[#allocation8 + $0x10]]
        %v1424 = vstv %s1423
        %v1425 = vmul.f32 %v1424, %v337
        %v1426 = vmul.f32 %v1424, %v333
        %v1427 = vmul.f32 %v1424, %v338
        %v1431 = vrot.slane %v1425, 2
        %v1432 = vrot.slane %v1426, 2
        %v1433 = vsel %vm754, %v1431, %v1432
        %v1434 = vrot.slane %v1427, 2
        %v1435 = vsel %vm754, %v1432, %v1434
        %1436 = vrot.lane.b32.xlu0 %v1433, 127
        %v1437 = vpop.permute.xlu0 %1436
        %1438 = vrot.lane.b32.xlu0 %v1435, 127
        %v1439 = vpop.permute.xlu0 %1438
        %v1442 = vadd.f32 %v1370, %v1437
        %v1443 = vadd.f32 %v1371, %v1439
        %s1444 = sld [smem:[#allocation8 + $0x2b]]
        %v1445 = vstv %s1444
        %v1446 = vmul.f32 %v1445, %v337
        %v1447 = vmul.f32 %v1445, %v333
        %v1448 = vmul.f32 %v1445, %v338
        %v1452 = vrot.slane %v1446, 2
        %v1453 = vrot.slane %v1447, 2
        %v1454 = vsel %vm754, %v1452, %v1453
        %v1455 = vrot.slane %v1448, 2
        %v1456 = vsel %vm754, %v1453, %v1455
        %1457 = vrot.lane.b32.xlu0 %v1454, 127
        %v1458 = vpop.permute.xlu0 %1457
        %1459 = vrot.lane.b32.xlu0 %v1456, 127
        %v1460 = vpop.permute.xlu0 %1459
        %v1463 = vadd.f32 %v1387, %v1458
        %v1464 = vadd.f32 %v1388, %v1460
        %s1465 = sld [smem:[#allocation8 + $0x46]]
        %v1466 = vstv %s1465
        %v1467 = vmul.f32 %v1466, %v337
        %v1468 = vmul.f32 %v1466, %v333
        %v1469 = vmul.f32 %v1466, %v338
        %v1473 = vrot.slane %v1467, 2
        %v1474 = vrot.slane %v1468, 2
        %v1475 = vsel %vm754, %v1473, %v1474
        %v1476 = vrot.slane %v1469, 2
        %v1477 = vsel %vm754, %v1474, %v1476
        %1478 = vrot.lane.b32.xlu0 %v1475, 127
        %v1479 = vpop.permute.xlu0 %1478
        %1480 = vrot.lane.b32.xlu0 %v1477, 127
        %v1481 = vpop.permute.xlu0 %1480
        %v1484 = vadd.f32 %v1404, %v1479
        %v1485 = vadd.f32 %v1405, %v1481
        %s1486 = sld [smem:[#allocation8 + $0x61]]
        %v1487 = vstv %s1486
        %v1488 = vmul.f32 %v1487, %v337
        %v1489 = vmul.f32 %v1487, %v333
        %v1490 = vmul.f32 %v1487, %v338
        %v1494 = vrot.slane %v1488, 2
        %v1495 = vrot.slane %v1489, 2
        %v1496 = vsel %vm754, %v1494, %v1495
        %v1497 = vrot.slane %v1490, 2
        %v1498 = vsel %vm754, %v1495, %v1497
        %1499 = vrot.lane.b32.xlu0 %v1496, 127
        %v1500 = vpop.permute.xlu0 %1499
        %1501 = vrot.lane.b32.xlu0 %v1498, 127
        %v1502 = vpop.permute.xlu0 %1501
        %v1505 = vadd.f32 %v1421, %v1500
        %v1506 = vadd.f32 %v1422, %v1502
        %s1507 = sld [smem:[#allocation8 + $0x11]]
        %v1508 = vstv %s1507
        %v1509 = vmul.f32 %v1508, %v337
        %v1510 = vmul.f32 %v1508, %v333
        %v1511 = vmul.f32 %v1508, %v338
        %v1515 = vrot.slane %v1509, 2
        %v1516 = vrot.slane %v1510, 2
        %v1517 = vsel %vm754, %v1515, %v1516
        %v1518 = vrot.slane %v1511, 2
        %v1519 = vsel %vm754, %v1516, %v1518
        %1520 = vrot.lane.b32.xlu0 %v1517, 126
        %v1521 = vpop.permute.xlu0 %1520
        %1522 = vrot.lane.b32.xlu0 %v1519, 126
        %v1523 = vpop.permute.xlu0 %1522
        %v1526 = vadd.f32 %v1442, %v1521
        %v1527 = vadd.f32 %v1443, %v1523
        %s1528 = sld [smem:[#allocation8 + $0x2c]]
        %v1529 = vstv %s1528
        %v1530 = vmul.f32 %v1529, %v337
        %v1531 = vmul.f32 %v1529, %v333
        %v1532 = vmul.f32 %v1529, %v338
        %v1536 = vrot.slane %v1530, 2
        %v1537 = vrot.slane %v1531, 2
        %v1538 = vsel %vm754, %v1536, %v1537
        %v1539 = vrot.slane %v1532, 2
        %v1540 = vsel %vm754, %v1537, %v1539
        %1541 = vrot.lane.b32.xlu0 %v1538, 126
        %v1542 = vpop.permute.xlu0 %1541
        %1543 = vrot.lane.b32.xlu0 %v1540, 126
        %v1544 = vpop.permute.xlu0 %1543
        %v1547 = vadd.f32 %v1463, %v1542
        %v1548 = vadd.f32 %v1464, %v1544
        %s1549 = sld [smem:[#allocation8 + $0x47]]
        %v1550 = vstv %s1549
        %v1551 = vmul.f32 %v1550, %v337
        %v1552 = vmul.f32 %v1550, %v333
        %v1553 = vmul.f32 %v1550, %v338
        %v1557 = vrot.slane %v1551, 2
        %v1558 = vrot.slane %v1552, 2
        %v1559 = vsel %vm754, %v1557, %v1558
        %v1560 = vrot.slane %v1553, 2
        %v1561 = vsel %vm754, %v1558, %v1560
        %1562 = vrot.lane.b32.xlu0 %v1559, 126
        %v1563 = vpop.permute.xlu0 %1562
        %1564 = vrot.lane.b32.xlu0 %v1561, 126
        %v1565 = vpop.permute.xlu0 %1564
        %v1568 = vadd.f32 %v1484, %v1563
        %v1569 = vadd.f32 %v1485, %v1565
        %s1570 = sld [smem:[#allocation8 + $0x62]]
        %v1571 = vstv %s1570
        %v1572 = vmul.f32 %v1571, %v337
        %v1573 = vmul.f32 %v1571, %v333
        %v1574 = vmul.f32 %v1571, %v338
        %v1578 = vrot.slane %v1572, 2
        %v1579 = vrot.slane %v1573, 2
        %v1580 = vsel %vm754, %v1578, %v1579
        %v1581 = vrot.slane %v1574, 2
        %v1582 = vsel %vm754, %v1579, %v1581
        %1583 = vrot.lane.b32.xlu0 %v1580, 126
        %v1584 = vpop.permute.xlu0 %1583
        %1585 = vrot.lane.b32.xlu0 %v1582, 126
        %v1586 = vpop.permute.xlu0 %1585
        %v1589 = vadd.f32 %v1505, %v1584
        %v1590 = vadd.f32 %v1506, %v1586
        %s1591 = sld [smem:[#allocation8 + $0x12]]
        %v1592 = vstv %s1591
        %v1593 = vmul.f32 %v1592, %v359
        %v1594 = vmul.f32 %v1592, %v355
        %v1595 = vadd.f32 %v1526, %v1593
        %v1596 = vadd.f32 %v1527, %v1594
        %s1597 = sld [smem:[#allocation8 + $0x2d]]
        %v1598 = vstv %s1597
        %v1599 = vmul.f32 %v1598, %v359
        %v1600 = vmul.f32 %v1598, %v355
        %v1601 = vadd.f32 %v1547, %v1599
        %v1602 = vadd.f32 %v1548, %v1600
        %s1603 = sld [smem:[#allocation8 + $0x48]]
        %v1604 = vstv %s1603
        %v1605 = vmul.f32 %v1604, %v359
        %v1606 = vmul.f32 %v1604, %v355
        %v1607 = vadd.f32 %v1568, %v1605
        %v1608 = vadd.f32 %v1569, %v1606
        %s1609 = sld [smem:[#allocation8 + $0x63]]
        %v1610 = vstv %s1609
        %v1611 = vmul.f32 %v1610, %v359
        %v1612 = vmul.f32 %v1610, %v355
        %v1613 = vadd.f32 %v1589, %v1611
        %v1614 = vadd.f32 %v1590, %v1612
        %s1615 = sld [smem:[#allocation8 + $0x13]]
        %v1616 = vstv %s1615
        %v1617 = vmul.f32 %v1616, %v359
        %v1618 = vmul.f32 %v1616, %v355
        %1621 = vrot.lane.b32.xlu0 %v1617, 127
        %v1622 = vpop.permute.xlu0 %1621
        %1623 = vrot.lane.b32.xlu0 %v1618, 127
        %v1624 = vpop.permute.xlu0 %1623
        %v1627 = vadd.f32 %v1595, %v1622
        %v1628 = vadd.f32 %v1596, %v1624
        %s1629 = sld [smem:[#allocation8 + $0x2e]]
        %v1630 = vstv %s1629
        %v1631 = vmul.f32 %v1630, %v359
        %v1632 = vmul.f32 %v1630, %v355
        %1635 = vrot.lane.b32.xlu0 %v1631, 127
        %v1636 = vpop.permute.xlu0 %1635
        %1637 = vrot.lane.b32.xlu0 %v1632, 127
        %v1638 = vpop.permute.xlu0 %1637
        %v1641 = vadd.f32 %v1601, %v1636
        %v1642 = vadd.f32 %v1602, %v1638
        %s1643 = sld [smem:[#allocation8 + $0x49]]
        %v1644 = vstv %s1643
        %v1645 = vmul.f32 %v1644, %v359
        %v1646 = vmul.f32 %v1644, %v355
        %1649 = vrot.lane.b32.xlu0 %v1645, 127
        %v1650 = vpop.permute.xlu0 %1649
        %1651 = vrot.lane.b32.xlu0 %v1646, 127
        %v1652 = vpop.permute.xlu0 %1651
        %v1655 = vadd.f32 %v1607, %v1650
        %v1656 = vadd.f32 %v1608, %v1652
        %s1657 = sld [smem:[#allocation8 + $0x64]]
        %v1658 = vstv %s1657
        %v1659 = vmul.f32 %v1658, %v359
        %v1660 = vmul.f32 %v1658, %v355
        %1663 = vrot.lane.b32.xlu0 %v1659, 127
        %v1664 = vpop.permute.xlu0 %1663
        %1665 = vrot.lane.b32.xlu0 %v1660, 127
        %v1666 = vpop.permute.xlu0 %1665
        %v1669 = vadd.f32 %v1613, %v1664
        %v1670 = vadd.f32 %v1614, %v1666
        %s1671 = sld [smem:[#allocation8 + $0x14]]
        %v1672 = vstv %s1671
        %v1673 = vmul.f32 %v1672, %v359
        %v1674 = vmul.f32 %v1672, %v355
        %1677 = vrot.lane.b32.xlu0 %v1673, 126
        %v1678 = vpop.permute.xlu0 %1677
        %1679 = vrot.lane.b32.xlu0 %v1674, 126
        %v1680 = vpop.permute.xlu0 %1679
        %v1683 = vadd.f32 %v1627, %v1678
        %v1684 = vadd.f32 %v1628, %v1680
        %s1685 = sld [smem:[#allocation8 + $0x2f]]
        %v1686 = vstv %s1685
        %v1687 = vmul.f32 %v1686, %v359
        %v1688 = vmul.f32 %v1686, %v355
        %1691 = vrot.lane.b32.xlu0 %v1687, 126
        %v1692 = vpop.permute.xlu0 %1691
        %1693 = vrot.lane.b32.xlu0 %v1688, 126
        %v1694 = vpop.permute.xlu0 %1693
        %v1697 = vadd.f32 %v1641, %v1692
        %v1698 = vadd.f32 %v1642, %v1694
        %s1699 = sld [smem:[#allocation8 + $0x4a]]
        %v1700 = vstv %s1699
        %v1701 = vmul.f32 %v1700, %v359
        %v1702 = vmul.f32 %v1700, %v355
        %1705 = vrot.lane.b32.xlu0 %v1701, 126
        %v1706 = vpop.permute.xlu0 %1705
        %1707 = vrot.lane.b32.xlu0 %v1702, 126
        %v1708 = vpop.permute.xlu0 %1707
        %v1711 = vadd.f32 %v1655, %v1706
        %v1712 = vadd.f32 %v1656, %v1708
        %s1713 = sld [smem:[#allocation8 + $0x65]]
        %v1714 = vstv %s1713
        %v1715 = vmul.f32 %v1714, %v359
        %v1716 = vmul.f32 %v1714, %v355
        %1719 = vrot.lane.b32.xlu0 %v1715, 126
        %v1720 = vpop.permute.xlu0 %1719
        %1721 = vrot.lane.b32.xlu0 %v1716, 126
        %v1722 = vpop.permute.xlu0 %1721
        %v1725 = vadd.f32 %v1669, %v1720
        %v1726 = vadd.f32 %v1670, %v1722
        %s1727 = sld [smem:[#allocation8 + $0x15]]
        %v1728 = vstv %s1727
        %v1729 = vmul.f32 %v1728, %v359
        %v1730 = vmul.f32 %v1728, %v355
        %v1731 = vmul.f32 %v1728, %v360
        %v1735 = vrot.slane %v1729, 1
        %v1736 = vrot.slane %v1730, 1
        %v1737 = vsel %vm517, %v1735, %v1736
        %v1738 = vrot.slane %v1731, 1
        %v1739 = vsel %vm517, %v1736, %v1738
        %v1742 = vadd.f32 %v1683, %v1737
        %v1743 = vadd.f32 %v1684, %v1739
        %s1744 = sld [smem:[#allocation8 + $0x30]]
        %v1745 = vstv %s1744
        %v1746 = vmul.f32 %v1745, %v359
        %v1747 = vmul.f32 %v1745, %v355
        %v1748 = vmul.f32 %v1745, %v360
        %v1752 = vrot.slane %v1746, 1
        %v1753 = vrot.slane %v1747, 1
        %v1754 = vsel %vm517, %v1752, %v1753
        %v1755 = vrot.slane %v1748, 1
        %v1756 = vsel %vm517, %v1753, %v1755
        %v1759 = vadd.f32 %v1697, %v1754
        %v1760 = vadd.f32 %v1698, %v1756
        %s1761 = sld [smem:[#allocation8 + $0x4b]]
        %v1762 = vstv %s1761
        %v1763 = vmul.f32 %v1762, %v359
        %v1764 = vmul.f32 %v1762, %v355
        %v1765 = vmul.f32 %v1762, %v360
        %v1769 = vrot.slane %v1763, 1
        %v1770 = vrot.slane %v1764, 1
        %v1771 = vsel %vm517, %v1769, %v1770
        %v1772 = vrot.slane %v1765, 1
        %v1773 = vsel %vm517, %v1770, %v1772
        %v1776 = vadd.f32 %v1711, %v1771
        %v1777 = vadd.f32 %v1712, %v1773
        %s1778 = sld [smem:[#allocation8 + $0x66]]
        %v1779 = vstv %s1778
        %v1780 = vmul.f32 %v1779, %v359
        %v1781 = vmul.f32 %v1779, %v355
        %v1782 = vmul.f32 %v1779, %v360
        %v1786 = vrot.slane %v1780, 1
        %v1787 = vrot.slane %v1781, 1
        %v1788 = vsel %vm517, %v1786, %v1787
        %v1789 = vrot.slane %v1782, 1
        %v1790 = vsel %vm517, %v1787, %v1789
        %v1793 = vadd.f32 %v1725, %v1788
        %v1794 = vadd.f32 %v1726, %v1790
        %s1795 = sld [smem:[#allocation8 + $0x16]]
        %v1796 = vstv %s1795
        %v1797 = vmul.f32 %v1796, %v359
        %v1798 = vmul.f32 %v1796, %v355
        %v1799 = vmul.f32 %v1796, %v360
        %v1803 = vrot.slane %v1797, 1
        %v1804 = vrot.slane %v1798, 1
        %v1805 = vsel %vm517, %v1803, %v1804
        %v1806 = vrot.slane %v1799, 1
        %v1807 = vsel %vm517, %v1804, %v1806
        %1808 = vrot.lane.b32.xlu0 %v1805, 127
        %v1809 = vpop.permute.xlu0 %1808
        %1810 = vrot.lane.b32.xlu0 %v1807, 127
        %v1811 = vpop.permute.xlu0 %1810
        %v1814 = vadd.f32 %v1742, %v1809
        %v1815 = vadd.f32 %v1743, %v1811
        %s1816 = sld [smem:[#allocation8 + $0x31]]
        %v1817 = vstv %s1816
        %v1818 = vmul.f32 %v1817, %v359
        %v1819 = vmul.f32 %v1817, %v355
        %v1820 = vmul.f32 %v1817, %v360
        %v1824 = vrot.slane %v1818, 1
        %v1825 = vrot.slane %v1819, 1
        %v1826 = vsel %vm517, %v1824, %v1825
        %v1827 = vrot.slane %v1820, 1
        %v1828 = vsel %vm517, %v1825, %v1827
        %1829 = vrot.lane.b32.xlu0 %v1826, 127
        %v1830 = vpop.permute.xlu0 %1829
        %1831 = vrot.lane.b32.xlu0 %v1828, 127
        %v1832 = vpop.permute.xlu0 %1831
        %v1835 = vadd.f32 %v1759, %v1830
        %v1836 = vadd.f32 %v1760, %v1832
        %s1837 = sld [smem:[#allocation8 + $0x4c]]
        %v1838 = vstv %s1837
        %v1839 = vmul.f32 %v1838, %v359
        %v1840 = vmul.f32 %v1838, %v355
        %v1841 = vmul.f32 %v1838, %v360
        %v1845 = vrot.slane %v1839, 1
        %v1846 = vrot.slane %v1840, 1
        %v1847 = vsel %vm517, %v1845, %v1846
        %v1848 = vrot.slane %v1841, 1
        %v1849 = vsel %vm517, %v1846, %v1848
        %1850 = vrot.lane.b32.xlu0 %v1847, 127
        %v1851 = vpop.permute.xlu0 %1850
        %1852 = vrot.lane.b32.xlu0 %v1849, 127
        %v1853 = vpop.permute.xlu0 %1852
        %v1856 = vadd.f32 %v1776, %v1851
        %v1857 = vadd.f32 %v1777, %v1853
        %s1858 = sld [smem:[#allocation8 + $0x67]]
        %v1859 = vstv %s1858
        %v1860 = vmul.f32 %v1859, %v359
        %v1861 = vmul.f32 %v1859, %v355
        %v1862 = vmul.f32 %v1859, %v360
        %v1866 = vrot.slane %v1860, 1
        %v1867 = vrot.slane %v1861, 1
        %v1868 = vsel %vm517, %v1866, %v1867
        %v1869 = vrot.slane %v1862, 1
        %v1870 = vsel %vm517, %v1867, %v1869
        %1871 = vrot.lane.b32.xlu0 %v1868, 127
        %v1872 = vpop.permute.xlu0 %1871
        %1873 = vrot.lane.b32.xlu0 %v1870, 127
        %v1874 = vpop.permute.xlu0 %1873
        %v1877 = vadd.f32 %v1793, %v1872
        %v1878 = vadd.f32 %v1794, %v1874
        %s1879 = sld [smem:[#allocation8 + $0x17]]
        %v1880 = vstv %s1879
        %v1881 = vmul.f32 %v1880, %v359
        %v1882 = vmul.f32 %v1880, %v355
        %v1883 = vmul.f32 %v1880, %v360
        %v1887 = vrot.slane %v1881, 1
        %v1888 = vrot.slane %v1882, 1
        %v1889 = vsel %vm517, %v1887, %v1888
        %v1890 = vrot.slane %v1883, 1
        %v1891 = vsel %vm517, %v1888, %v1890
        %1892 = vrot.lane.b32.xlu0 %v1889, 126
        %v1893 = vpop.permute.xlu0 %1892
        %1894 = vrot.lane.b32.xlu0 %v1891, 126
        %v1895 = vpop.permute.xlu0 %1894
        %v1898 = vadd.f32 %v1814, %v1893
        %v1899 = vadd.f32 %v1815, %v1895
        %s1900 = sld [smem:[#allocation8 + $0x32]]
        %v1901 = vstv %s1900
        %v1902 = vmul.f32 %v1901, %v359
        %v1903 = vmul.f32 %v1901, %v355
        %v1904 = vmul.f32 %v1901, %v360
        %v1908 = vrot.slane %v1902, 1
        %v1909 = vrot.slane %v1903, 1
        %v1910 = vsel %vm517, %v1908, %v1909
        %v1911 = vrot.slane %v1904, 1
        %v1912 = vsel %vm517, %v1909, %v1911
        %1913 = vrot.lane.b32.xlu0 %v1910, 126
        %v1914 = vpop.permute.xlu0 %1913
        %1915 = vrot.lane.b32.xlu0 %v1912, 126
        %v1916 = vpop.permute.xlu0 %1915
        %v1919 = vadd.f32 %v1835, %v1914
        %v1920 = vadd.f32 %v1836, %v1916
        %s1921 = sld [smem:[#allocation8 + $0x4d]]
        %v1922 = vstv %s1921
        %v1923 = vmul.f32 %v1922, %v359
        %v1924 = vmul.f32 %v1922, %v355
        %v1925 = vmul.f32 %v1922, %v360
        %v1929 = vrot.slane %v1923, 1
        %v1930 = vrot.slane %v1924, 1
        %v1931 = vsel %vm517, %v1929, %v1930
        %v1932 = vrot.slane %v1925, 1
        %v1933 = vsel %vm517, %v1930, %v1932
        %1934 = vrot.lane.b32.xlu0 %v1931, 126
        %v1935 = vpop.permute.xlu0 %1934
        %1936 = vrot.lane.b32.xlu0 %v1933, 126
        %v1937 = vpop.permute.xlu0 %1936
        %v1940 = vadd.f32 %v1856, %v1935
        %v1941 = vadd.f32 %v1857, %v1937
        %s1942 = sld [smem:[#allocation8 + $0x68]]
        %v1943 = vstv %s1942
        %v1944 = vmul.f32 %v1943, %v359
        %v1945 = vmul.f32 %v1943, %v355
        %v1946 = vmul.f32 %v1943, %v360
        %v1950 = vrot.slane %v1944, 1
        %v1951 = vrot.slane %v1945, 1
        %v1952 = vsel %vm517, %v1950, %v1951
        %v1953 = vrot.slane %v1946, 1
        %v1954 = vsel %vm517, %v1951, %v1953
        %1955 = vrot.lane.b32.xlu0 %v1952, 126
        %v1956 = vpop.permute.xlu0 %1955
        %1957 = vrot.lane.b32.xlu0 %v1954, 126
        %v1958 = vpop.permute.xlu0 %1957
        %v1961 = vadd.f32 %v1877, %v1956
        %v1962 = vadd.f32 %v1878, %v1958
        %s1963 = sld [smem:[#allocation8 + $0x18]]
        %v1964 = vstv %s1963
        %v1965 = vmul.f32 %v1964, %v359
        %v1966 = vmul.f32 %v1964, %v355
        %v1967 = vmul.f32 %v1964, %v360
        %v1971 = vrot.slane %v1965, 2
        %v1972 = vrot.slane %v1966, 2
        %v1973 = vsel %vm754, %v1971, %v1972
        %v1974 = vrot.slane %v1967, 2
        %v1975 = vsel %vm754, %v1972, %v1974
        %v1978 = vadd.f32 %v1898, %v1973
        %v1979 = vadd.f32 %v1899, %v1975
        %s1980 = sld [smem:[#allocation8 + $0x33]]
        %v1981 = vstv %s1980
        %v1982 = vmul.f32 %v1981, %v359
        %v1983 = vmul.f32 %v1981, %v355
        %v1984 = vmul.f32 %v1981, %v360
        %v1988 = vrot.slane %v1982, 2
        %v1989 = vrot.slane %v1983, 2
        %v1990 = vsel %vm754, %v1988, %v1989
        %v1991 = vrot.slane %v1984, 2
        %v1992 = vsel %vm754, %v1989, %v1991
        %v1995 = vadd.f32 %v1919, %v1990
        %v1996 = vadd.f32 %v1920, %v1992
        %s1997 = sld [smem:[#allocation8 + $0x4e]]
        %v1998 = vstv %s1997
        %v1999 = vmul.f32 %v1998, %v359
        %v2000 = vmul.f32 %v1998, %v355
        %v2001 = vmul.f32 %v1998, %v360
        %v2005 = vrot.slane %v1999, 2
        %v2006 = vrot.slane %v2000, 2
        %v2007 = vsel %vm754, %v2005, %v2006
        %v2008 = vrot.slane %v2001, 2
        %v2009 = vsel %vm754, %v2006, %v2008
        %v2012 = vadd.f32 %v1940, %v2007
        %v2013 = vadd.f32 %v1941, %v2009
        %s2014 = sld [smem:[#allocation8 + $0x69]]
        %v2015 = vstv %s2014
        %v2016 = vmul.f32 %v2015, %v359
        %v2017 = vmul.f32 %v2015, %v355
        %v2018 = vmul.f32 %v2015, %v360
        %v2022 = vrot.slane %v2016, 2
        %v2023 = vrot.slane %v2017, 2
        %v2024 = vsel %vm754, %v2022, %v2023
        %v2025 = vrot.slane %v2018, 2
        %v2026 = vsel %vm754, %v2023, %v2025
        %v2029 = vadd.f32 %v1961, %v2024
        %v2030 = vadd.f32 %v1962, %v2026
        %s2031 = sld [smem:[#allocation8 + $0x19]]
        %v2032 = vstv %s2031
        %v2033 = vmul.f32 %v2032, %v359
        %v2034 = vmul.f32 %v2032, %v355
        %v2035 = vmul.f32 %v2032, %v360
        %v2039 = vrot.slane %v2033, 2
        %v2040 = vrot.slane %v2034, 2
        %v2041 = vsel %vm754, %v2039, %v2040
        %v2042 = vrot.slane %v2035, 2
        %v2043 = vsel %vm754, %v2040, %v2042
        %2044 = vrot.lane.b32.xlu0 %v2041, 127
        %v2045 = vpop.permute.xlu0 %2044
        %2046 = vrot.lane.b32.xlu0 %v2043, 127
        %v2047 = vpop.permute.xlu0 %2046
        %v2050 = vadd.f32 %v1978, %v2045
        %v2051 = vadd.f32 %v1979, %v2047
        %s2052 = sld [smem:[#allocation8 + $0x34]]
        %v2053 = vstv %s2052
        %v2054 = vmul.f32 %v2053, %v359
        %v2055 = vmul.f32 %v2053, %v355
        %v2056 = vmul.f32 %v2053, %v360
        %v2060 = vrot.slane %v2054, 2
        %v2061 = vrot.slane %v2055, 2
        %v2062 = vsel %vm754, %v2060, %v2061
        %v2063 = vrot.slane %v2056, 2
        %v2064 = vsel %vm754, %v2061, %v2063
        %2065 = vrot.lane.b32.xlu0 %v2062, 127
        %v2066 = vpop.permute.xlu0 %2065
        %2067 = vrot.lane.b32.xlu0 %v2064, 127
        %v2068 = vpop.permute.xlu0 %2067
        %v2071 = vadd.f32 %v1995, %v2066
        %v2072 = vadd.f32 %v1996, %v2068
        %s2073 = sld [smem:[#allocation8 + $0x4f]]
        %v2074 = vstv %s2073
        %v2075 = vmul.f32 %v2074, %v359
        %v2076 = vmul.f32 %v2074, %v355
        %v2077 = vmul.f32 %v2074, %v360
        %v2081 = vrot.slane %v2075, 2
        %v2082 = vrot.slane %v2076, 2
        %v2083 = vsel %vm754, %v2081, %v2082
        %v2084 = vrot.slane %v2077, 2
        %v2085 = vsel %vm754, %v2082, %v2084
        %2086 = vrot.lane.b32.xlu0 %v2083, 127
        %v2087 = vpop.permute.xlu0 %2086
        %2088 = vrot.lane.b32.xlu0 %v2085, 127
        %v2089 = vpop.permute.xlu0 %2088
        %v2092 = vadd.f32 %v2012, %v2087
        %v2093 = vadd.f32 %v2013, %v2089
        %s2094 = sld [smem:[#allocation8 + $0x6a]]
        %v2095 = vstv %s2094
        %v2096 = vmul.f32 %v2095, %v359
        %v2097 = vmul.f32 %v2095, %v355
        %v2098 = vmul.f32 %v2095, %v360
        %v2102 = vrot.slane %v2096, 2
        %v2103 = vrot.slane %v2097, 2
        %v2104 = vsel %vm754, %v2102, %v2103
        %v2105 = vrot.slane %v2098, 2
        %v2106 = vsel %vm754, %v2103, %v2105
        %2107 = vrot.lane.b32.xlu0 %v2104, 127
        %v2108 = vpop.permute.xlu0 %2107
        %2109 = vrot.lane.b32.xlu0 %v2106, 127
        %v2110 = vpop.permute.xlu0 %2109
        %v2113 = vadd.f32 %v2029, %v2108
        %v2114 = vadd.f32 %v2030, %v2110
        %s2115 = sld [smem:[#allocation8 + $0x1a]]
        %v2116 = vstv %s2115
        %v2117 = vmul.f32 %v2116, %v359
        %v2118 = vmul.f32 %v2116, %v355
        %v2119 = vmul.f32 %v2116, %v360
        %v2123 = vrot.slane %v2117, 2
        %v2124 = vrot.slane %v2118, 2
        %v2125 = vsel %vm754, %v2123, %v2124
        %v2126 = vrot.slane %v2119, 2
        %v2127 = vsel %vm754, %v2124, %v2126
        %2128 = vrot.lane.b32.xlu0 %v2125, 126
        %v2129 = vpop.permute.xlu0 %2128
        %2130 = vrot.lane.b32.xlu0 %v2127, 126
        %v2131 = vpop.permute.xlu0 %2130
        %v2134 = vadd.f32 %v2050, %v2129
        %v2135 = vadd.f32 %v2051, %v2131
        %s2136 = sld [smem:[#allocation8 + $0x35]]
        %v2137 = vstv %s2136
        %v2138 = vmul.f32 %v2137, %v359
        %v2139 = vmul.f32 %v2137, %v355
        %v2140 = vmul.f32 %v2137, %v360
        %v2144 = vrot.slane %v2138, 2
        %v2145 = vrot.slane %v2139, 2
        %v2146 = vsel %vm754, %v2144, %v2145
        %v2147 = vrot.slane %v2140, 2
        %v2148 = vsel %vm754, %v2145, %v2147
        %2149 = vrot.lane.b32.xlu0 %v2146, 126
        %v2150 = vpop.permute.xlu0 %2149
        %2151 = vrot.lane.b32.xlu0 %v2148, 126
        %v2152 = vpop.permute.xlu0 %2151
        %v2155 = vadd.f32 %v2071, %v2150
        %v2156 = vadd.f32 %v2072, %v2152
        %s2157 = sld [smem:[#allocation8 + $0x50]]
        %v2158 = vstv %s2157
        %v2159 = vmul.f32 %v2158, %v359
        %v2160 = vmul.f32 %v2158, %v355
        %v2161 = vmul.f32 %v2158, %v360
        %v2165 = vrot.slane %v2159, 2
        %v2166 = vrot.slane %v2160, 2
        %v2167 = vsel %vm754, %v2165, %v2166
        %v2168 = vrot.slane %v2161, 2
        %v2169 = vsel %vm754, %v2166, %v2168
        %2170 = vrot.lane.b32.xlu0 %v2167, 126
        %v2171 = vpop.permute.xlu0 %2170
        %2172 = vrot.lane.b32.xlu0 %v2169, 126
        %v2173 = vpop.permute.xlu0 %2172
        %v2176 = vadd.f32 %v2092, %v2171
        %v2177 = vadd.f32 %v2093, %v2173
        %s2178 = sld [smem:[#allocation8 + $0x6b]]
        %v2179 = vstv %s2178
        %v2180 = vmul.f32 %v2179, %v359
        %v2181 = vmul.f32 %v2179, %v355
        %v2182 = vmul.f32 %v2179, %v360
        %v2186 = vrot.slane %v2180, 2
        %v2187 = vrot.slane %v2181, 2
        %v2188 = vsel %vm754, %v2186, %v2187
        %v2189 = vrot.slane %v2182, 2
        %v2190 = vsel %vm754, %v2187, %v2189
        %2191 = vrot.lane.b32.xlu0 %v2188, 126
        %v2192 = vpop.permute.xlu0 %2191
        %2193 = vrot.lane.b32.xlu0 %v2190, 126
        %v2194 = vpop.permute.xlu0 %2193
        %v2197 = vadd.f32 %v2113, %v2192
        %v2198 = vadd.f32 %v2114, %v2194
        %v2199 = vld [vmem:[#allocation5] sm:$0xff]
        %v2200 = vld [vmem:[#allocation5 + $0x8] sm:$0xff]
        %v2201 = vld [vmem:[#allocation5 + $0x10] sm:$0xff]
        %v2202 = vld [vmem:[#allocation5 + $0x18] sm:$0xff]
        %v2203 = vld [vmem:[#allocation5 + $0x20] sm:$0xff]
        %v2204 = vld [vmem:[#allocation5 + $0x28] sm:$0xff]
        %v2205 = vld [vmem:[#allocation5 + $0x30] sm:$0xff]
        %v2206 = vld [vmem:[#allocation5 + $0x38] sm:$0xff]
        %v2207 = vld [vmem:[#allocation7] sm:$0xff]
        %v2208 = vld [vmem:[#allocation7 + $0x8] sm:$0xff]
        %v2209 = vld [vmem:[#allocation7 + $0x10] sm:$0xff]
        %v2210 = vld [vmem:[#allocation7 + $0x18] sm:$0xff]
        %v2211 = vld [vmem:[#allocation7 + $0x20] sm:$0xff]
        %v2212 = vld [vmem:[#allocation7 + $0x28] sm:$0xff]
        %v2213 = vld [vmem:[#allocation7 + $0x30] sm:$0xff]
        %v2214 = vld [vmem:[#allocation7 + $0x38] sm:$0xff]
        %v2215 = vadd.f32 %v2134, %v2199
        %v2216 = vadd.f32 %v2135, %v2200
        %v2217 = vadd.f32 %v2155, %v2201
        %v2218 = vadd.f32 %v2156, %v2202
        %v2219 = vadd.f32 %v2176, %v2203
        %v2220 = vadd.f32 %v2177, %v2204
        %v2221 = vadd.f32 %v2197, %v2205
        %v2222 = vadd.f32 %v2198, %v2206
        %v2223 = vadd.f32 %v2215, %v2207
        %v2224 = vadd.f32 %v2216, %v2208
        %v2225 = vadd.f32 %v2217, %v2209
        %v2226 = vadd.f32 %v2218, %v2210
        %v2227 = vadd.f32 %v2219, %v2211
        %v2228 = vadd.f32 %v2220, %v2212
        %v2229 = vadd.f32 %v2221, %v2213
        %v2230 = vadd.f32 %v2222, %v2214
        %vm2231 = vcmask 179200
        %v2232 = vsel %vm2231, %v2215, 0.0
        %v2233 = vsel %vm2231, %v2216, 0.0
        %v2234 = vadd.f32 %v2232, %v2233
        %v2235 = vrot.slane %v2234, 4
        %v2236 = vadd.f32 %v2234, %v2235
        %v2237 = vrot.slane %v2236, 2
        %v2238 = vadd.f32 %v2236, %v2237
        %v2239 = vrot.slane %v2238, 1
        %v2240 = vadd.f32 %v2238, %v2239
        %v2241 = vrcp.pop 16.0
        %v2242 = vmul.f32 %v2240, %v2241
        %v2243 = vsel %vm2231, %v2217, 0.0
        %v2244 = vsel %vm2231, %v2218, 0.0
        %v2245 = vadd.f32 %v2243, %v2244
        %v2246 = vrot.slane %v2245, 4
        %v2247 = vadd.f32 %v2245, %v2246
        %v2248 = vrot.slane %v2247, 2
        %v2249 = vadd.f32 %v2247, %v2248
        %v2250 = vrot.slane %v2249, 1
        %v2251 = vadd.f32 %v2249, %v2250
        %v2252 = vmul.f32 %v2251, %v2241
        %v2253 = vsel %vm2231, %v2219, 0.0
        %v2254 = vsel %vm2231, %v2220, 0.0
        %v2255 = vadd.f32 %v2253, %v2254
        %v2256 = vrot.slane %v2255, 4
        %v2257 = vadd.f32 %v2255, %v2256
        %v2258 = vrot.slane %v2257, 2
        %v2259 = vadd.f32 %v2257, %v2258
        %v2260 = vrot.slane %v2259, 1
        %v2261 = vadd.f32 %v2259, %v2260
        %v2262 = vmul.f32 %v2261, %v2241
        %v2263 = vsel %vm2231, %v2221, 0.0
        %v2264 = vsel %vm2231, %v2222, 0.0
        %v2265 = vadd.f32 %v2263, %v2264
        %v2266 = vrot.slane %v2265, 4
        %v2267 = vadd.f32 %v2265, %v2266
        %v2268 = vrot.slane %v2267, 2
        %v2269 = vadd.f32 %v2267, %v2268
        %v2270 = vrot.slane %v2269, 1
        %v2271 = vadd.f32 %v2269, %v2270
        %v2272 = vmul.f32 %v2271, %v2241
        %v2273 = vsel %vm308, %v2242, %v2252
        %vm2274 = vcmask 1041408
        %v2275 = vsel %vm2274, %v2273, %v2262
        %vm2276 = vcmask 1042432
        %v2277 = vsel %vm2276, %v2275, %v2272
        %v2278 = vsel %vm2231, %v2215, -inf
        %v2279 = vsel %vm2231, %v2216, -inf
        %v2280 = vmax.f32 %v2278, %v2279
        %v2281 = vrot.slane %v2280, 4
        %v2282 = vmax.f32 %v2280, %v2281
        %v2283 = vrot.slane %v2282, 2
        %v2284 = vmax.f32 %v2282, %v2283
        %v2285 = vrot.slane %v2284, 1
        %v2286 = vmax.f32 %v2284, %v2285
        %v2287 = vsel %vm2231, %v2217, -inf
        %v2288 = vsel %vm2231, %v2218, -inf
        %v2289 = vmax.f32 %v2287, %v2288
        %v2290 = vrot.slane %v2289, 4
        %v2291 = vmax.f32 %v2289, %v2290
        %v2292 = vrot.slane %v2291, 2
        %v2293 = vmax.f32 %v2291, %v2292
        %v2294 = vrot.slane %v2293, 1
        %v2295 = vmax.f32 %v2293, %v2294
        %v2296 = vsel %vm2231, %v2219, -inf
        %v2297 = vsel %vm2231, %v2220, -inf
        %v2298 = vmax.f32 %v2296, %v2297
        %v2299 = vrot.slane %v2298, 4
        %v2300 = vmax.f32 %v2298, %v2299
        %v2301 = vrot.slane %v2300, 2
        %v2302 = vmax.f32 %v2300, %v2301
        %v2303 = vrot.slane %v2302, 1
        %v2304 = vmax.f32 %v2302, %v2303
        %v2305 = vsel %vm2231, %v2221, -inf
        %v2306 = vsel %vm2231, %v2222, -inf
        %v2307 = vmax.f32 %v2305, %v2306
        %v2308 = vrot.slane %v2307, 4
        %v2309 = vmax.f32 %v2307, %v2308
        %v2310 = vrot.slane %v2309, 2
        %v2311 = vmax.f32 %v2309, %v2310
        %v2312 = vrot.slane %v2311, 1
        %v2313 = vmax.f32 %v2311, %v2312
        %v2314 = vsel %vm308, %v2286, %v2295
        %v2315 = vsel %vm2274, %v2314, %v2304
        %v2316 = vsel %vm2276, %v2315, %v2313
        %2318 = vrot.lane.b32.xlu0 %v2277, 1
        %v2319 = vpop.permute.xlu0 %2318
        %v2321 = vsel %vm300, 0.0, %v2319
        %v2322 = vsel %vm303, %v2321, 0.0
        %v2324 = vrot.slane %v2322, 7
        %v2326 = vsel %vm308, 0.0, %v2324
        %vm2327 = vcmask 1044480
        %v2328 = vsel %vm2327, %v2326, 0.0
        %2330 = vrot.lane.b32.xlu0 %v2316, 1
        %v2331 = vpop.permute.xlu0 %2330
        %v2333 = vsel %vm300, 0.0, %v2331
        %v2334 = vsel %vm303, %v2333, 0.0
        %v2336 = vrot.slane %v2334, 7
        %v2338 = vsel %vm308, 0.0, %v2336
        %v2339 = vsel %vm2327, %v2338, 0.0
        %s2340 = sld [smem:[#allocation8 + $0x70]]
        %v2341 = vstv %s2340
        %v2342 = vmul.f32 %v2341, %v2328
        %v2343 = vadd.f32 %v2342, 0.0
        %s2344 = sld [smem:[#allocation8 + $0x79]]
        %v2345 = vstv %s2344
        %v2346 = vmul.f32 %v2345, %v2339
        %v2347 = vadd.f32 %v2343, %v2346
        %s2348 = sld [smem:[#allocation8 + $0x71]]
        %v2349 = vstv %s2348
        %v2350 = vmul.f32 %v2349, %v2328
        %v2352 = vrot.slane %v2350, 1
        %v2354 = vadd.f32 %v2347, %v2352
        %s2355 = sld [smem:[#allocation8 + $0x7a]]
        %v2356 = vstv %s2355
        %v2357 = vmul.f32 %v2356, %v2339
        %v2359 = vrot.slane %v2357, 1
        %v2361 = vadd.f32 %v2354, %v2359
        %s2362 = sld [smem:[#allocation8 + $0x72]]
        %v2363 = vstv %s2362
        %v2364 = vmul.f32 %v2363, %v2328
        %v2366 = vrot.slane %v2364, 2
        %v2368 = vadd.f32 %v2361, %v2366
        %s2369 = sld [smem:[#allocation8 + $0x7b]]
        %v2370 = vstv %s2369
        %v2371 = vmul.f32 %v2370, %v2339
        %v2373 = vrot.slane %v2371, 2
        %v2375 = vadd.f32 %v2368, %v2373
        %s2376 = sld [smem:[#allocation8 + $0x73]]
        %v2377 = vstv %s2376
        %v2378 = vmul.f32 %v2377, %v2328
        %2380 = vrot.lane.b32.xlu0 %v2378, 127
        %v2381 = vpop.permute.xlu0 %2380
        %v2383 = vadd.f32 %v2375, %v2381
        %s2384 = sld [smem:[#allocation8 + $0x7c]]
        %v2385 = vstv %s2384
        %v2386 = vmul.f32 %v2385, %v2339
        %2388 = vrot.lane.b32.xlu0 %v2386, 127
        %v2389 = vpop.permute.xlu0 %2388
        %v2391 = vadd.f32 %v2383, %v2389
        %s2392 = sld [smem:[#allocation8 + $0x74]]
        %v2393 = vstv %s2392
        %v2394 = vmul.f32 %v2393, %v2328
        %v2396 = vrot.slane %v2394, 1
        %2397 = vrot.lane.b32.xlu0 %v2396, 127
        %v2398 = vpop.permute.xlu0 %2397
        %v2400 = vadd.f32 %v2391, %v2398
        %s2401 = sld [smem:[#allocation8 + $0x7d]]
        %v2402 = vstv %s2401
        %v2403 = vmul.f32 %v2402, %v2339
        %v2405 = vrot.slane %v2403, 1
        %2406 = vrot.lane.b32.xlu0 %v2405, 127
        %v2407 = vpop.permute.xlu0 %2406
        %v2409 = vadd.f32 %v2400, %v2407
        %s2410 = sld [smem:[#allocation8 + $0x75]]
        %v2411 = vstv %s2410
        %v2412 = vmul.f32 %v2411, %v2328
        %v2414 = vrot.slane %v2412, 2
        %2415 = vrot.lane.b32.xlu0 %v2414, 127
        %v2416 = vpop.permute.xlu0 %2415
        %v2418 = vadd.f32 %v2409, %v2416
        %s2419 = sld [smem:[#allocation8 + $0x7e]]
        %v2420 = vstv %s2419
        %v2421 = vmul.f32 %v2420, %v2339
        %v2423 = vrot.slane %v2421, 2
        %2424 = vrot.lane.b32.xlu0 %v2423, 127
        %v2425 = vpop.permute.xlu0 %2424
        %v2427 = vadd.f32 %v2418, %v2425
        %s2428 = sld [smem:[#allocation8 + $0x76]]
        %v2429 = vstv %s2428
        %v2430 = vmul.f32 %v2429, %v2328
        %2432 = vrot.lane.b32.xlu0 %v2430, 126
        %v2433 = vpop.permute.xlu0 %2432
        %v2435 = vadd.f32 %v2427, %v2433
        %s2436 = sld [smem:[#allocation8 + $0x7f]]
        %v2437 = vstv %s2436
        %v2438 = vmul.f32 %v2437, %v2339
        %2440 = vrot.lane.b32.xlu0 %v2438, 126
        %v2441 = vpop.permute.xlu0 %2440
        %v2443 = vadd.f32 %v2435, %v2441
        %s2444 = sld [smem:[#allocation8 + $0x77]]
        %v2445 = vstv %s2444
        %v2446 = vmul.f32 %v2445, %v2328
        %v2448 = vrot.slane %v2446, 1
        %2449 = vrot.lane.b32.xlu0 %v2448, 126
        %v2450 = vpop.permute.xlu0 %2449
        %v2452 = vadd.f32 %v2443, %v2450
        %s2453 = sld [smem:[#allocation8 + $0x80]]
        %v2454 = vstv %s2453
        %v2455 = vmul.f32 %v2454, %v2339
        %v2457 = vrot.slane %v2455, 1
        %2458 = vrot.lane.b32.xlu0 %v2457, 126
        %v2459 = vpop.permute.xlu0 %2458
        %v2461 = vadd.f32 %v2452, %v2459
        %s2462 = sld [smem:[#allocation8 + $0x78]]
        %v2463 = vstv %s2462
        %v2464 = vmul.f32 %v2463, %v2328
        %v2466 = vrot.slane %v2464, 2
        %2467 = vrot.lane.b32.xlu0 %v2466, 126
        %v2468 = vpop.permute.xlu0 %2467
        %v2470 = vadd.f32 %v2461, %v2468
        %s2471 = sld [smem:[#allocation8 + $0x81]]
        %v2472 = vstv %s2471
        %v2473 = vmul.f32 %v2472, %v2339
        %v2475 = vrot.slane %v2473, 2
        %2476 = vrot.lane.b32.xlu0 %v2475, 126
        %v2477 = vpop.permute.xlu0 %2476
        %v2479 = vadd.f32 %v2470, %v2477
        %v2480 = vxor.u32 %v2479, 2147483648
        %v2481 = vmul.f32 %v2480, 1.442695
        %v2482 = vpow.pop %v2481
        %v2483 = vadd.f32 %v2482, 1.0
        %v2484 = vrcp.pop %v2483
        %v2485 = vmul.f32 1.0, %v2484
        %v2486 = vadd.f32 %v2485, 1.0
        %v2487 = vlaneseq
        %v2488 = vshrl.u32 %v2487, 7
        %v2489 = vsub.s32 0, %v2488
        %v2490 = vrot.slane %v2486, %v2489
        %v2491 = vmul.f32 %v2215, %v2490
        %v2492 = vmul.f32 %v2216, %v2490
        %v2493 = vmax.f32 %v2491, 0.0
        %v2494 = vmax.f32 %v2492, 0.0
        %v2495 = vlaneseq
        %v2496 = vshrl.u32 %v2495, 7
        %v2497 = vsub.s32 1, %v2496
        %v2498 = vrot.slane %v2486, %v2497
        %v2499 = vmul.f32 %v2217, %v2498
        %v2500 = vmul.f32 %v2218, %v2498
        %v2501 = vmax.f32 %v2499, 0.0
        %v2502 = vmax.f32 %v2500, 0.0
        %v2503 = vlaneseq
        %v2504 = vshrl.u32 %v2503, 7
        %v2505 = vsub.s32 2, %v2504
        %v2506 = vrot.slane %v2486, %v2505
        %v2507 = vmul.f32 %v2219, %v2506
        %v2508 = vmul.f32 %v2220, %v2506
        %v2509 = vmax.f32 %v2507, 0.0
        %v2510 = vmax.f32 %v2508, 0.0
        %v2511 = vlaneseq
        %v2512 = vshrl.u32 %v2511, 7
        %v2513 = vsub.s32 3, %v2512
        %v2514 = vrot.slane %v2486, %v2513
        %v2515 = vmul.f32 %v2221, %v2514
        %v2516 = vmul.f32 %v2222, %v2514
        %v2517 = vmax.f32 %v2515, 0.0
        %v2518 = vmax.f32 %v2516, 0.0
        %v2519 = vsel %vm2231, %v2223, 0.0
        %2520 = vadd.xlane.f32.xlu0 %v2519
        %v2521 = vpop.xlane.xlu0 %2520
        %v2522 = vsel %vm2231, %v2224, 0.0
        %2523 = vadd.xlane.f32.xlu0 %v2522
        %v2524 = vpop.xlane.xlu0 %2523
        %v2525 = vrcp.pop 22.0
        %v2526 = vmul.f32 %v2521, %v2525
        %v2527 = vmul.f32 %v2524, %v2525
        %v2528 = vsel %vm2231, %v2225, 0.0
        %2529 = vadd.xlane.f32.xlu0 %v2528
        %v2530 = vpop.xlane.xlu0 %2529
        %v2531 = vsel %vm2231, %v2226, 0.0
        %2532 = vadd.xlane.f32.xlu0 %v2531
        %v2533 = vpop.xlane.xlu0 %2532
        %v2534 = vmul.f32 %v2530, %v2525
        %v2535 = vmul.f32 %v2533, %v2525
        %v2536 = vadd.f32 %v2526, %v2534
        %v2537 = vadd.f32 %v2527, %v2535
        %v2538 = vsel %vm2231, %v2227, 0.0
        %2539 = vadd.xlane.f32.xlu0 %v2538
        %v2540 = vpop.xlane.xlu0 %2539
        %v2541 = vsel %vm2231, %v2228, 0.0
        %2542 = vadd.xlane.f32.xlu0 %v2541
        %v2543 = vpop.xlane.xlu0 %2542
        %v2544 = vmul.f32 %v2540, %v2525
        %v2545 = vmul.f32 %v2543, %v2525
        %v2546 = vadd.f32 %v2536, %v2544
        %v2547 = vadd.f32 %v2537, %v2545
        %v2548 = vsel %vm2231, %v2229, 0.0
        %2549 = vadd.xlane.f32.xlu0 %v2548
        %v2550 = vpop.xlane.xlu0 %2549
        %v2551 = vsel %vm2231, %v2230, 0.0
        %2552 = vadd.xlane.f32.xlu0 %v2551
        %v2553 = vpop.xlane.xlu0 %2552
        %v2554 = vmul.f32 %v2550, %v2525
        %v2555 = vmul.f32 %v2553, %v2525
        %v2556 = vadd.f32 %v2546, %v2554
        %v2557 = vadd.f32 %v2547, %v2555
        %v2558 = vmul.f32 %v2556, 0.25
        %v2559 = vmul.f32 %v2557, 0.25
        %v2560 = vsel %vm2231, %v2223, -inf
        %2561 = vmax.xlane.f32.xlu0 %v2560
        %v2562 = vpop.xlane.xlu0 %2561
        %v2563 = vsel %vm2231, %v2224, -inf
        %2564 = vmax.xlane.f32.xlu0 %v2563
        %v2565 = vpop.xlane.xlu0 %2564
        %v2566 = vsel %vm2231, %v2225, -inf
        %2567 = vmax.xlane.f32.xlu0 %v2566
        %v2568 = vpop.xlane.xlu0 %2567
        %v2569 = vsel %vm2231, %v2226, -inf
        %2570 = vmax.xlane.f32.xlu0 %v2569
        %v2571 = vpop.xlane.xlu0 %2570
        %v2572 = vmax.f32 %v2562, %v2568
        %v2573 = vmax.f32 %v2565, %v2571
        %v2574 = vsel %vm2231, %v2227, -inf
        %2575 = vmax.xlane.f32.xlu0 %v2574
        %v2576 = vpop.xlane.xlu0 %2575
        %v2577 = vsel %vm2231, %v2228, -inf
        %2578 = vmax.xlane.f32.xlu0 %v2577
        %v2579 = vpop.xlane.xlu0 %2578
        %v2580 = vmax.f32 %v2572, %v2576
        %v2581 = vmax.f32 %v2573, %v2579
        %v2582 = vsel %vm2231, %v2229, -inf
        %2583 = vmax.xlane.f32.xlu0 %v2582
        %v2584 = vpop.xlane.xlu0 %2583
        %v2585 = vsel %vm2231, %v2230, -inf
        %2586 = vmax.xlane.f32.xlu0 %v2585
        %v2587 = vpop.xlane.xlu0 %2586
        %v2588 = vmax.f32 %v2580, %v2584
        %v2589 = vmax.f32 %v2581, %v2587
        %v2590 = vld [vmem:[%s3] sm:$0xff]
        %v2591 = vld [vmem:[%s3 + $0x8] sm:$0xff]
        %v2592 = vmul.f32 %v2558, %v2590
        %v2593 = vmul.f32 %v2559, %v2591
        %v2594 = vsel %vm300, %v2592, 0.0
        %v2595 = vsel %vm300, %v2593, 0.0
        %v2596 = vadd.f32 %v2594, %v2595
        %v2597 = vrot.slane %v2596, 4
        %v2598 = vadd.f32 %v2596, %v2597
        %v2599 = vrot.slane %v2598, 2
        %v2600 = vadd.f32 %v2598, %v2599
        %v2601 = vrot.slane %v2600, 1
        %v2602 = vadd.f32 %v2600, %v2601
        %v2603 = vmax.f32 %v2602, 0.0
        %2605 = vrot.lane.b32.xlu0 %v2603, 1
        %v2606 = vpop.permute.xlu0 %2605
        %v2608 = vmul.f32 %v2590, %v2606
        %v2609 = vmul.f32 %v2591, %v2606
        %v2610 = vmul.f32 %v2588, %v2590
        %v2611 = vmul.f32 %v2589, %v2591
        %v2612 = vsel %vm300, %v2610, 0.0
        %v2613 = vsel %vm300, %v2611, 0.0
        %v2614 = vadd.f32 %v2612, %v2613
        %v2615 = vrot.slane %v2614, 4
        %v2616 = vadd.f32 %v2614, %v2615
        %v2617 = vrot.slane %v2616, 2
        %v2618 = vadd.f32 %v2616, %v2617
        %v2619 = vrot.slane %v2618, 1
        %v2620 = vadd.f32 %v2618, %v2619
        %v2621 = vmax.f32 %v2620, 0.0
        %2623 = vrot.lane.b32.xlu0 %v2621, 1
        %v2624 = vpop.permute.xlu0 %2623
        %v2626 = vmul.f32 %v2590, %v2624
        %v2627 = vmul.f32 %v2591, %v2624
        %v2628 = vadd.f32 %v2608, %v2626
        %v2629 = vadd.f32 %v2609, %v2627
        %v2630 = vxor.u32 %v2628, 2147483648
        %v2631 = vxor.u32 %v2629, 2147483648
        %v2632 = vmul.f32 %v2630, 1.442695
        %v2633 = vpow.pop %v2632
        %v2634 = vmul.f32 %v2631, 1.442695
        %v2635 = vpow.pop %v2634
        %v2636 = vadd.f32 %v2633, 1.0
        %v2637 = vadd.f32 %v2635, 1.0
        %v2638 = vrcp.pop %v2636
        %v2639 = vmul.f32 1.0, %v2638
        %v2640 = vrcp.pop %v2637
        %v2641 = vmul.f32 1.0, %v2640
        %v2642 = vadd.f32 %v2639, 1.0
        %v2643 = vadd.f32 %v2641, 1.0
        %2645 = vset.pattern.permute.xlu0 1
        %2646 = vperm.xlu0 %2645, %v2642
        %v2647 = vpop.permute.xlu0 %2646
        %2650 = vset.pattern.permute.xlu0 1
        %2651 = vperm.xlu0 %2650, %v2643
        %v2652 = vpop.permute.xlu0 %2651
        %v2654 = vmul.f32 %v2223, %v2647
        %v2655 = vmul.f32 %v2224, %v2652
        %v2656 = vmax.f32 %v2654, 0.0
        %v2657 = vmax.f32 %v2655, 0.0
        %v2658 = vmul.f32 %v2225, %v2647
        %v2659 = vmul.f32 %v2226, %v2652
        %v2660 = vmax.f32 %v2658, 0.0
        %v2661 = vmax.f32 %v2659, 0.0
        %v2662 = vmul.f32 %v2227, %v2647
        %v2663 = vmul.f32 %v2228, %v2652
        %v2664 = vmax.f32 %v2662, 0.0
        %v2665 = vmax.f32 %v2663, 0.0
        %v2666 = vmul.f32 %v2229, %v2647
        %v2667 = vmul.f32 %v2230, %v2652
        %v2668 = vmax.f32 %v2666, 0.0
        %v2669 = vmax.f32 %v2667, 0.0
        %v2670 = vsel %vm2231, %v2493, 0.0
        %v2671 = vsel %vm2231, %v2494, 0.0
        %v2672 = vadd.f32 %v2670, %v2671
        %v2673 = vrot.slane %v2672, 4
        %v2674 = vadd.f32 %v2672, %v2673
        %v2675 = vrot.slane %v2674, 2
        %v2676 = vadd.f32 %v2674, %v2675
        %v2677 = vrot.slane %v2676, 1
        %v2678 = vadd.f32 %v2676, %v2677
        %v2679 = vmul.f32 %v2678, %v2241
        %v2680 = vsel %vm2231, %v2501, 0.0
        %v2681 = vsel %vm2231, %v2502, 0.0
        %v2682 = vadd.f32 %v2680, %v2681
        %v2683 = vrot.slane %v2682, 4
        %v2684 = vadd.f32 %v2682, %v2683
        %v2685 = vrot.slane %v2684, 2
        %v2686 = vadd.f32 %v2684, %v2685
        %v2687 = vrot.slane %v2686, 1
        %v2688 = vadd.f32 %v2686, %v2687
        %v2689 = vmul.f32 %v2688, %v2241
        %v2690 = vsel %vm2231, %v2509, 0.0
        %v2691 = vsel %vm2231, %v2510, 0.0
        %v2692 = vadd.f32 %v2690, %v2691
        %v2693 = vrot.slane %v2692, 4
        %v2694 = vadd.f32 %v2692, %v2693
        %v2695 = vrot.slane %v2694, 2
        %v2696 = vadd.f32 %v2694, %v2695
        %v2697 = vrot.slane %v2696, 1
        %v2698 = vadd.f32 %v2696, %v2697
        %v2699 = vmul.f32 %v2698, %v2241
        %v2700 = vsel %vm2231, %v2517, 0.0
        %v2701 = vsel %vm2231, %v2518, 0.0
        %v2702 = vadd.f32 %v2700, %v2701
        %v2703 = vrot.slane %v2702, 4
        %v2704 = vadd.f32 %v2702, %v2703
        %v2705 = vrot.slane %v2704, 2
        %v2706 = vadd.f32 %v2704, %v2705
        %v2707 = vrot.slane %v2706, 1
        %v2708 = vadd.f32 %v2706, %v2707
        %v2709 = vmul.f32 %v2708, %v2241
        %v2710 = vsel %vm308, %v2679, %v2689
        %v2711 = vsel %vm2274, %v2710, %v2699
        %v2712 = vsel %vm2276, %v2711, %v2709
        %v2713 = vsel %vm2231, %v2493, -inf
        %v2714 = vsel %vm2231, %v2494, -inf
        %v2715 = vmax.f32 %v2713, %v2714
        %v2716 = vrot.slane %v2715, 4
        %v2717 = vmax.f32 %v2715, %v2716
        %v2718 = vrot.slane %v2717, 2
        %v2719 = vmax.f32 %v2717, %v2718
        %v2720 = vrot.slane %v2719, 1
        %v2721 = vmax.f32 %v2719, %v2720
        %v2722 = vsel %vm2231, %v2501, -inf
        %v2723 = vsel %vm2231, %v2502, -inf
        %v2724 = vmax.f32 %v2722, %v2723
        %v2725 = vrot.slane %v2724, 4
        %v2726 = vmax.f32 %v2724, %v2725
        %v2727 = vrot.slane %v2726, 2
        %v2728 = vmax.f32 %v2726, %v2727
        %v2729 = vrot.slane %v2728, 1
        %v2730 = vmax.f32 %v2728, %v2729
        %v2731 = vsel %vm2231, %v2509, -inf
        %v2732 = vsel %vm2231, %v2510, -inf
        %v2733 = vmax.f32 %v2731, %v2732
        %v2734 = vrot.slane %v2733, 4
        %v2735 = vmax.f32 %v2733, %v2734
        %v2736 = vrot.slane %v2735, 2
        %v2737 = vmax.f32 %v2735, %v2736
        %v2738 = vrot.slane %v2737, 1
        %v2739 = vmax.f32 %v2737, %v2738
        %v2740 = vsel %vm2231, %v2517, -inf
        %v2741 = vsel %vm2231, %v2518, -inf
        %v2742 = vmax.f32 %v2740, %v2741
        %v2743 = vrot.slane %v2742, 4
        %v2744 = vmax.f32 %v2742, %v2743
        %v2745 = vrot.slane %v2744, 2
        %v2746 = vmax.f32 %v2744, %v2745
        %v2747 = vrot.slane %v2746, 1
        %v2748 = vmax.f32 %v2746, %v2747
        %v2749 = vsel %vm308, %v2721, %v2730
        %v2750 = vsel %vm2274, %v2749, %v2739
        %v2751 = vsel %vm2276, %v2750, %v2748
        %2753 = vrot.lane.b32.xlu0 %v2712, 1
        %v2754 = vpop.permute.xlu0 %2753
        %v2756 = vsel %vm300, 0.0, %v2754
        %v2757 = vsel %vm303, %v2756, 0.0
        %v2759 = vrot.slane %v2757, 7
        %v2761 = vsel %vm308, 0.0, %v2759
        %v2762 = vsel %vm2327, %v2761, 0.0
        %2764 = vrot.lane.b32.xlu0 %v2751, 1
        %v2765 = vpop.permute.xlu0 %2764
        %v2767 = vsel %vm300, 0.0, %v2765
        %v2768 = vsel %vm303, %v2767, 0.0
        %v2770 = vrot.slane %v2768, 7
        %v2772 = vsel %vm308, 0.0, %v2770
        %v2773 = vsel %vm2327, %v2772, 0.0
        %s2774 = sld [smem:[#allocation8 + $0x82]]
        %v2775 = vstv %s2774
        %v2776 = vmul.f32 %v2775, %v2762
        %v2777 = vadd.f32 %v2776, 0.0
        %s2778 = sld [smem:[#allocation8 + $0x8b]]
        %v2779 = vstv %s2778
        %v2780 = vmul.f32 %v2779, %v2773
        %v2781 = vadd.f32 %v2777, %v2780
        %s2782 = sld [smem:[#allocation8 + $0x83]]
        %v2783 = vstv %s2782
        %v2784 = vmul.f32 %v2783, %v2762
        %v2786 = vrot.slane %v2784, 1
        %v2788 = vadd.f32 %v2781, %v2786
        %s2789 = sld [smem:[#allocation8 + $0x8c]]
        %v2790 = vstv %s2789
        %v2791 = vmul.f32 %v2790, %v2773
        %v2793 = vrot.slane %v2791, 1
        %v2795 = vadd.f32 %v2788, %v2793
        %s2796 = sld [smem:[#allocation8 + $0x84]]
        %v2797 = vstv %s2796
        %v2798 = vmul.f32 %v2797, %v2762
        %v2800 = vrot.slane %v2798, 2
        %v2802 = vadd.f32 %v2795, %v2800
        %s2803 = sld [smem:[#allocation8 + $0x8d]]
        %v2804 = vstv %s2803
        %v2805 = vmul.f32 %v2804, %v2773
        %v2807 = vrot.slane %v2805, 2
        %v2809 = vadd.f32 %v2802, %v2807
        %s2810 = sld [smem:[#allocation8 + $0x85]]
        %v2811 = vstv %s2810
        %v2812 = vmul.f32 %v2811, %v2762
        %2814 = vrot.lane.b32.xlu0 %v2812, 127
        %v2815 = vpop.permute.xlu0 %2814
        %v2817 = vadd.f32 %v2809, %v2815
        %s2818 = sld [smem:[#allocation8 + $0x8e]]
        %v2819 = vstv %s2818
        %v2820 = vmul.f32 %v2819, %v2773
        %2822 = vrot.lane.b32.xlu0 %v2820, 127
        %v2823 = vpop.permute.xlu0 %2822
        %v2825 = vadd.f32 %v2817, %v2823
        %s2826 = sld [smem:[#allocation8 + $0x86]]
        %v2827 = vstv %s2826
        %v2828 = vmul.f32 %v2827, %v2762
        %v2830 = vrot.slane %v2828, 1
        %2831 = vrot.lane.b32.xlu0 %v2830, 127
        %v2832 = vpop.permute.xlu0 %2831
        %v2834 = vadd.f32 %v2825, %v2832
        %s2835 = sld [smem:[#allocation8 + $0x8f]]
        %v2836 = vstv %s2835
        %v2837 = vmul.f32 %v2836, %v2773
        %v2839 = vrot.slane %v2837, 1
        %2840 = vrot.lane.b32.xlu0 %v2839, 127
        %v2841 = vpop.permute.xlu0 %2840
        %v2843 = vadd.f32 %v2834, %v2841
        %s2844 = sld [smem:[#allocation8 + $0x87]]
        %v2845 = vstv %s2844
        %v2846 = vmul.f32 %v2845, %v2762
        %v2848 = vrot.slane %v2846, 2
        %2849 = vrot.lane.b32.xlu0 %v2848, 127
        %v2850 = vpop.permute.xlu0 %2849
        %v2852 = vadd.f32 %v2843, %v2850
        %s2853 = sld [smem:[#allocation8 + $0x90]]
        %v2854 = vstv %s2853
        %v2855 = vmul.f32 %v2854, %v2773
        %v2857 = vrot.slane %v2855, 2
        %2858 = vrot.lane.b32.xlu0 %v2857, 127
        %v2859 = vpop.permute.xlu0 %2858
        %v2861 = vadd.f32 %v2852, %v2859
        %s2862 = sld [smem:[#allocation8 + $0x88]]
        %v2863 = vstv %s2862
        %v2864 = vmul.f32 %v2863, %v2762
        %2866 = vrot.lane.b32.xlu0 %v2864, 126
        %v2867 = vpop.permute.xlu0 %2866
        %v2869 = vadd.f32 %v2861, %v2867
        %s2870 = sld [smem:[#allocation8 + $0x91]]
        %v2871 = vstv %s2870
        %v2872 = vmul.f32 %v2871, %v2773
        %2874 = vrot.lane.b32.xlu0 %v2872, 126
        %v2875 = vpop.permute.xlu0 %2874
        %v2877 = vadd.f32 %v2869, %v2875
        %s2878 = sld [smem:[#allocation8 + $0x89]]
        %v2879 = vstv %s2878
        %v2880 = vmul.f32 %v2879, %v2762
        %v2882 = vrot.slane %v2880, 1
        %2883 = vrot.lane.b32.xlu0 %v2882, 126
        %v2884 = vpop.permute.xlu0 %2883
        %v2886 = vadd.f32 %v2877, %v2884
        %s2887 = sld [smem:[#allocation8 + $0x92]]
        %v2888 = vstv %s2887
        %v2889 = vmul.f32 %v2888, %v2773
        %v2891 = vrot.slane %v2889, 1
        %2892 = vrot.lane.b32.xlu0 %v2891, 126
        %v2893 = vpop.permute.xlu0 %2892
        %v2895 = vadd.f32 %v2886, %v2893
        %s2896 = sld [smem:[#allocation8 + $0x8a]]
        %v2897 = vstv %s2896
        %v2898 = vmul.f32 %v2897, %v2762
        %v2900 = vrot.slane %v2898, 2
        %2901 = vrot.lane.b32.xlu0 %v2900, 126
        %v2902 = vpop.permute.xlu0 %2901
        %v2904 = vadd.f32 %v2895, %v2902
        %s2905 = sld [smem:[#allocation8 + $0x93]]
        %v2906 = vstv %s2905
        %v2907 = vmul.f32 %v2906, %v2773
        %v2909 = vrot.slane %v2907, 2
        %2910 = vrot.lane.b32.xlu0 %v2909, 126
        %v2911 = vpop.permute.xlu0 %2910
        %v2913 = vadd.f32 %v2904, %v2911
        %v2914 = vxor.u32 %v2913, 2147483648
        %v2915 = vmul.f32 %v2914, 1.442695
        %v2916 = vpow.pop %v2915
        %v2917 = vadd.f32 %v2916, 1.0
        %v2918 = vrcp.pop %v2917
        %v2919 = vmul.f32 1.0, %v2918
        %v2920 = vadd.f32 %v2919, 1.0
        %v2921 = vlaneseq
        %v2922 = vshrl.u32 %v2921, 7
        %v2923 = vsub.s32 0, %v2922
        %v2924 = vrot.slane %v2920, %v2923
        %v2925 = vmul.f32 %v2493, %v2924
        %v2926 = vmul.f32 %v2494, %v2924
        %v2927 = vmax.f32 %v2925, 0.0
        %v2928 = vmax.f32 %v2926, 0.0
        %v2929 = vlaneseq
        %v2930 = vshrl.u32 %v2929, 7
        %v2931 = vsub.s32 1, %v2930
        %v2932 = vrot.slane %v2920, %v2931
        %v2933 = vmul.f32 %v2501, %v2932
        %v2934 = vmul.f32 %v2502, %v2932
        %v2935 = vmax.f32 %v2933, 0.0
        %v2936 = vmax.f32 %v2934, 0.0
        %v2937 = vlaneseq
        %v2938 = vshrl.u32 %v2937, 7
        %v2939 = vsub.s32 2, %v2938
        %v2940 = vrot.slane %v2920, %v2939
        %v2941 = vmul.f32 %v2509, %v2940
        %v2942 = vmul.f32 %v2510, %v2940
        %v2943 = vmax.f32 %v2941, 0.0
        %v2944 = vmax.f32 %v2942, 0.0
        %v2945 = vlaneseq
        %v2946 = vshrl.u32 %v2945, 7
        %v2947 = vsub.s32 3, %v2946
        %v2948 = vrot.slane %v2920, %v2947
        %v2949 = vmul.f32 %v2517, %v2948
        %v2950 = vmul.f32 %v2518, %v2948
        %v2951 = vmax.f32 %v2949, 0.0
        %v2952 = vmax.f32 %v2950, 0.0
        %v2953 = vsel %vm2231, %v2656, 0.0
        %2954 = vadd.xlane.f32.xlu0 %v2953
        %v2955 = vpop.xlane.xlu0 %2954
        %v2956 = vsel %vm2231, %v2657, 0.0
        %2957 = vadd.xlane.f32.xlu0 %v2956
        %v2958 = vpop.xlane.xlu0 %2957
        %v2959 = vmul.f32 %v2955, %v2525
        %v2960 = vmul.f32 %v2958, %v2525
        %v2961 = vsel %vm2231, %v2660, 0.0
        %2962 = vadd.xlane.f32.xlu0 %v2961
        %v2963 = vpop.xlane.xlu0 %2962
        %v2964 = vsel %vm2231, %v2661, 0.0
        %2965 = vadd.xlane.f32.xlu0 %v2964
        %v2966 = vpop.xlane.xlu0 %2965
        %v2967 = vmul.f32 %v2963, %v2525
        %v2968 = vmul.f32 %v2966, %v2525
        %v2969 = vadd.f32 %v2959, %v2967
        %v2970 = vadd.f32 %v2960, %v2968
        %v2971 = vsel %vm2231, %v2664, 0.0
        %2972 = vadd.xlane.f32.xlu0 %v2971
        %v2973 = vpop.xlane.xlu0 %2972
        %v2974 = vsel %vm2231, %v2665, 0.0
        %2975 = vadd.xlane.f32.xlu0 %v2974
        %v2976 = vpop.xlane.xlu0 %2975
        %v2977 = vmul.f32 %v2973, %v2525
        %v2978 = vmul.f32 %v2976, %v2525
        %v2979 = vadd.f32 %v2969, %v2977
        %v2980 = vadd.f32 %v2970, %v2978
        %v2981 = vsel %vm2231, %v2668, 0.0
        %2982 = vadd.xlane.f32.xlu0 %v2981
        %v2983 = vpop.xlane.xlu0 %2982
        %v2984 = vsel %vm2231, %v2669, 0.0
        %2985 = vadd.xlane.f32.xlu0 %v2984
        %v2986 = vpop.xlane.xlu0 %2985
        %v2987 = vmul.f32 %v2983, %v2525
        %v2988 = vmul.f32 %v2986, %v2525
        %v2989 = vadd.f32 %v2979, %v2987
        %v2990 = vadd.f32 %v2980, %v2988
        %v2991 = vmul.f32 %v2989, 0.25
        %v2992 = vmul.f32 %v2990, 0.25
        %v2993 = vsel %vm2231, %v2656, -inf
        %2994 = vmax.xlane.f32.xlu0 %v2993
        %v2995 = vpop.xlane.xlu0 %2994
        %v2996 = vsel %vm2231, %v2657, -inf
        %2997 = vmax.xlane.f32.xlu0 %v2996
        %v2998 = vpop.xlane.xlu0 %2997
        %v2999 = vsel %vm2231, %v2660, -inf
        %3000 = vmax.xlane.f32.xlu0 %v2999
        %v3001 = vpop.xlane.xlu0 %3000
        %v3002 = vsel %vm2231, %v2661, -inf
        %3003 = vmax.xlane.f32.xlu0 %v3002
        %v3004 = vpop.xlane.xlu0 %3003
        %v3005 = vmax.f32 %v2995, %v3001
        %v3006 = vmax.f32 %v2998, %v3004
        %v3007 = vsel %vm2231, %v2664, -inf
        %3008 = vmax.xlane.f32.xlu0 %v3007
        %v3009 = vpop.xlane.xlu0 %3008
        %v3010 = vsel %vm2231, %v2665, -inf
        %3011 = vmax.xlane.f32.xlu0 %v3010
        %v3012 = vpop.xlane.xlu0 %3011
        %v3013 = vmax.f32 %v3005, %v3009
        %v3014 = vmax.f32 %v3006, %v3012
        %v3015 = vsel %vm2231, %v2668, -inf
        %3016 = vmax.xlane.f32.xlu0 %v3015
        %v3017 = vpop.xlane.xlu0 %3016
        %v3018 = vsel %vm2231, %v2669, -inf
        %3019 = vmax.xlane.f32.xlu0 %v3018
        %v3020 = vpop.xlane.xlu0 %3019
        %v3021 = vmax.f32 %v3013, %v3017
        %v3022 = vmax.f32 %v3014, %v3020
        %v3023 = vmul.f32 %v2991, %v2590
        %v3024 = vmul.f32 %v2992, %v2591
        %vm3025 = vcmask 23568
        %v3026 = vsel %vm3025, %v3023, 0.0
        %v3027 = vsel %vm3025, %v3024, 0.0
        %v3028 = vadd.f32 %v3026, %v3027
        %v3029 = vrot.slane %v3028, 4
        %v3030 = vadd.f32 %v3028, %v3029
        %v3031 = vrot.slane %v3030, 2
        %v3032 = vadd.f32 %v3030, %v3031
        %v3033 = vrot.slane %v3032, 1
        %v3034 = vadd.f32 %v3032, %v3033
        %v3035 = vmax.f32 %v3034, 0.0
        %3037 = vrot.lane.b32.xlu0 %v3035, 1
        %v3038 = vpop.permute.xlu0 %3037
        %v3040 = vmul.f32 %v2590, %v3038
        %v3041 = vmul.f32 %v2591, %v3038
        %v3042 = vmul.f32 %v3021, %v2590
        %v3043 = vmul.f32 %v3022, %v2591
        %v3044 = vsel %vm3025, %v3042, 0.0
        %v3045 = vsel %vm3025, %v3043, 0.0
        %v3046 = vadd.f32 %v3044, %v3045
        %v3047 = vrot.slane %v3046, 4
        %v3048 = vadd.f32 %v3046, %v3047
        %v3049 = vrot.slane %v3048, 2
        %v3050 = vadd.f32 %v3048, %v3049
        %v3051 = vrot.slane %v3050, 1
        %v3052 = vadd.f32 %v3050, %v3051
        %v3053 = vmax.f32 %v3052, 0.0
        %3055 = vrot.lane.b32.xlu0 %v3053, 1
        %v3056 = vpop.permute.xlu0 %3055
        %v3058 = vmul.f32 %v2590, %v3056
        %v3059 = vmul.f32 %v2591, %v3056
        %v3060 = vadd.f32 %v3040, %v3058
        %v3061 = vadd.f32 %v3041, %v3059
        %v3062 = vxor.u32 %v3060, 2147483648
        %v3063 = vxor.u32 %v3061, 2147483648
        %v3064 = vmul.f32 %v3062, 1.442695
        %v3065 = vpow.pop %v3064
        %v3066 = vmul.f32 %v3063, 1.442695
        %v3067 = vpow.pop %v3066
        %v3068 = vadd.f32 %v3065, 1.0
        %v3069 = vadd.f32 %v3067, 1.0
        %v3070 = vrcp.pop %v3068
        %v3071 = vmul.f32 1.0, %v3070
        %v3072 = vrcp.pop %v3069
        %v3073 = vmul.f32 1.0, %v3072
        %v3074 = vadd.f32 %v3071, 1.0
        %v3075 = vadd.f32 %v3073, 1.0
        %3077 = vset.pattern.permute.xlu0 3
        %3078 = vperm.xlu0 %3077, %v3074
        %v3079 = vpop.permute.xlu0 %3078
        %3082 = vset.pattern.permute.xlu0 3
        %3083 = vperm.xlu0 %3082, %v3075
        %v3084 = vpop.permute.xlu0 %3083
        %v3086 = vmul.f32 %v2656, %v3079
        %v3087 = vmul.f32 %v2657, %v3084
        %v3088 = vmax.f32 %v3086, 0.0
        %v3089 = vmax.f32 %v3087, 0.0
        %v3090 = vmul.f32 %v2660, %v3079
        %v3091 = vmul.f32 %v2661, %v3084
        %v3092 = vmax.f32 %v3090, 0.0
        %v3093 = vmax.f32 %v3091, 0.0
        %v3094 = vmul.f32 %v2664, %v3079
        %v3095 = vmul.f32 %v2665, %v3084
        %v3096 = vmax.f32 %v3094, 0.0
        %v3097 = vmax.f32 %v3095, 0.0
        %v3098 = vmul.f32 %v2668, %v3079
        %v3099 = vmul.f32 %v2669, %v3084
        %v3100 = vmax.f32 %v3098, 0.0
        %v3101 = vmax.f32 %v3099, 0.0
        %v3102 = vadd.f32 %v2927, %v3088
        %v3103 = vadd.f32 %v2928, %v3089
        %v3104 = vadd.f32 %v2935, %v3092
        %v3105 = vadd.f32 %v2936, %v3093
        %v3106 = vadd.f32 %v2943, %v3096
        %v3107 = vadd.f32 %v2944, %v3097
        %v3108 = vadd.f32 %v2951, %v3100
        %v3109 = vadd.f32 %v2952, %v3101
        %s3110 = sld [smem:[#allocation8 + $0xb4]]
        %v3111 = vstv %s3110
        %v3112 = vadd.f32 %v3111, 0.0
        %s3113 = sld [smem:[#allocation8 + $0x94]]
        %v3114 = vstv %s3113
        %v3115 = vmul.f32 %v3114, %v3102
        %v3116 = vmul.f32 %v3114, %v3103
        %v3117 = vadd.f32 %v3112, %v3115
        %v3118 = vadd.f32 %v3112, %v3116
        %s3119 = sld [smem:[#allocation8 + $0x95]]
        %v3120 = vstv %s3119
        %v3121 = vmul.f32 %v3120, %v3104
        %v3122 = vmul.f32 %v3120, %v3105
        %v3123 = vadd.f32 %v3117, %v3121
        %v3124 = vadd.f32 %v3118, %v3122
        %s3125 = sld [smem:[#allocation8 + $0x96]]
        %v3126 = vstv %s3125
        %v3127 = vmul.f32 %v3126, %v3106
        %v3128 = vmul.f32 %v3126, %v3107
        %v3129 = vadd.f32 %v3123, %v3127
        %v3130 = vadd.f32 %v3124, %v3128
        %s3131 = sld [smem:[#allocation8 + $0x97]]
        %v3132 = vstv %s3131
        %v3133 = vmul.f32 %v3132, %v3108
        %v3134 = vmul.f32 %v3132, %v3109
        %v3135 = vadd.f32 %v3129, %v3133
        %v3136 = vadd.f32 %v3130, %v3134
        %v3137 = vmax.f32 %v3135, 0.0
        %v3138 = vmax.f32 %v3136, 0.0
        %s3139 = sld [smem:[#allocation8 + $0xb5]]
        %v3140 = vstv %s3139
        %v3141 = vadd.f32 %v3140, 0.0
        %s3142 = sld [smem:[#allocation8 + $0x98]]
        %v3143 = vstv %s3142
        %v3144 = vmul.f32 %v3143, %v3102
        %v3145 = vmul.f32 %v3143, %v3103
        %v3146 = vadd.f32 %v3141, %v3144
        %v3147 = vadd.f32 %v3141, %v3145
        %s3148 = sld [smem:[#allocation8 + $0x99]]
        %v3149 = vstv %s3148
        %v3150 = vmul.f32 %v3149, %v3104
        %v3151 = vmul.f32 %v3149, %v3105
        %v3152 = vadd.f32 %v3146, %v3150
        %v3153 = vadd.f32 %v3147, %v3151
        %s3154 = sld [smem:[#allocation8 + $0x9a]]
        %v3155 = vstv %s3154
        %v3156 = vmul.f32 %v3155, %v3106
        %v3157 = vmul.f32 %v3155, %v3107
        %v3158 = vadd.f32 %v3152, %v3156
        %v3159 = vadd.f32 %v3153, %v3157
        %s3160 = sld [smem:[#allocation8 + $0x9b]]
        %v3161 = vstv %s3160
        %v3162 = vmul.f32 %v3161, %v3108
        %v3163 = vmul.f32 %v3161, %v3109
        %v3164 = vadd.f32 %v3158, %v3162
        %v3165 = vadd.f32 %v3159, %v3163
        %v3166 = vmax.f32 %v3164, 0.0
        %v3167 = vmax.f32 %v3165, 0.0
        %s3168 = sld [smem:[#allocation8 + $0xb6]]
        %v3169 = vstv %s3168
        %v3170 = vadd.f32 %v3169, 0.0
        %s3171 = sld [smem:[#allocation8 + $0x9c]]
        %v3172 = vstv %s3171
        %v3173 = vmul.f32 %v3172, %v3102
        %v3174 = vmul.f32 %v3172, %v3103
        %v3175 = vadd.f32 %v3170, %v3173
        %v3176 = vadd.f32 %v3170, %v3174
        %s3177 = sld [smem:[#allocation8 + $0x9d]]
        %v3178 = vstv %s3177
        %v3179 = vmul.f32 %v3178, %v3104
        %v3180 = vmul.f32 %v3178, %v3105
        %v3181 = vadd.f32 %v3175, %v3179
        %v3182 = vadd.f32 %v3176, %v3180
        %s3183 = sld [smem:[#allocation8 + $0x9e]]
        %v3184 = vstv %s3183
        %v3185 = vmul.f32 %v3184, %v3106
        %v3186 = vmul.f32 %v3184, %v3107
        %v3187 = vadd.f32 %v3181, %v3185
        %v3188 = vadd.f32 %v3182, %v3186
        %s3189 = sld [smem:[#allocation8 + $0x9f]]
        %v3190 = vstv %s3189
        %v3191 = vmul.f32 %v3190, %v3108
        %v3192 = vmul.f32 %v3190, %v3109
        %v3193 = vadd.f32 %v3187, %v3191
        %v3194 = vadd.f32 %v3188, %v3192
        %v3195 = vmax.f32 %v3193, 0.0
        %v3196 = vmax.f32 %v3194, 0.0
        %s3197 = sld [smem:[#allocation8 + $0xb7]]
        %v3198 = vstv %s3197
        %v3199 = vadd.f32 %v3198, 0.0
        %s3200 = sld [smem:[#allocation8 + $0xa0]]
        %v3201 = vstv %s3200
        %v3202 = vmul.f32 %v3201, %v3102
        %v3203 = vmul.f32 %v3201, %v3103
        %v3204 = vadd.f32 %v3199, %v3202
        %v3205 = vadd.f32 %v3199, %v3203
        %s3206 = sld [smem:[#allocation8 + $0xa1]]
        %v3207 = vstv %s3206
        %v3208 = vmul.f32 %v3207, %v3104
        %v3209 = vmul.f32 %v3207, %v3105
        %v3210 = vadd.f32 %v3204, %v3208
        %v3211 = vadd.f32 %v3205, %v3209
        %s3212 = sld [smem:[#allocation8 + $0xa2]]
        %v3213 = vstv %s3212
        %v3214 = vmul.f32 %v3213, %v3106
        %v3215 = vmul.f32 %v3213, %v3107
        %v3216 = vadd.f32 %v3210, %v3214
        %v3217 = vadd.f32 %v3211, %v3215
        %s3218 = sld [smem:[#allocation8 + $0xa3]]
        %v3219 = vstv %s3218
        %v3220 = vmul.f32 %v3219, %v3108
        %v3221 = vmul.f32 %v3219, %v3109
        %v3222 = vadd.f32 %v3216, %v3220
        %v3223 = vadd.f32 %v3217, %v3221
        %v3224 = vmax.f32 %v3222, 0.0
        %v3225 = vmax.f32 %v3223, 0.0
        %s3226 = sld [smem:[#allocation8 + $0xb8]]
        %v3227 = vstv %s3226
        %v3228 = vadd.f32 %v3227, 0.0
        %s3229 = sld [smem:[#allocation8 + $0xa4]]
        %v3230 = vstv %s3229
        %v3231 = vmul.f32 %v3230, %v3102
        %v3232 = vmul.f32 %v3230, %v3103
        %v3233 = vadd.f32 %v3228, %v3231
        %v3234 = vadd.f32 %v3228, %v3232
        %s3235 = sld [smem:[#allocation8 + $0xa5]]
        %v3236 = vstv %s3235
        %v3237 = vmul.f32 %v3236, %v3104
        %v3238 = vmul.f32 %v3236, %v3105
        %v3239 = vadd.f32 %v3233, %v3237
        %v3240 = vadd.f32 %v3234, %v3238
        %s3241 = sld [smem:[#allocation8 + $0xa6]]
        %v3242 = vstv %s3241
        %v3243 = vmul.f32 %v3242, %v3106
        %v3244 = vmul.f32 %v3242, %v3107
        %v3245 = vadd.f32 %v3239, %v3243
        %v3246 = vadd.f32 %v3240, %v3244
        %s3247 = sld [smem:[#allocation8 + $0xa7]]
        %v3248 = vstv %s3247
        %v3249 = vmul.f32 %v3248, %v3108
        %v3250 = vmul.f32 %v3248, %v3109
        %v3251 = vadd.f32 %v3245, %v3249
        %v3252 = vadd.f32 %v3246, %v3250
        %v3253 = vmax.f32 %v3251, 0.0
        %v3254 = vmax.f32 %v3252, 0.0
        %s3255 = sld [smem:[#allocation8 + $0xb9]]
        %v3256 = vstv %s3255
        %v3257 = vadd.f32 %v3256, 0.0
        %s3258 = sld [smem:[#allocation8 + $0xa8]]
        %v3259 = vstv %s3258
        %v3260 = vmul.f32 %v3259, %v3102
        %v3261 = vmul.f32 %v3259, %v3103
        %v3262 = vadd.f32 %v3257, %v3260
        %v3263 = vadd.f32 %v3257, %v3261
        %s3264 = sld [smem:[#allocation8 + $0xa9]]
        %v3265 = vstv %s3264
        %v3266 = vmul.f32 %v3265, %v3104
        %v3267 = vmul.f32 %v3265, %v3105
        %v3268 = vadd.f32 %v3262, %v3266
        %v3269 = vadd.f32 %v3263, %v3267
        %s3270 = sld [smem:[#allocation8 + $0xaa]]
        %v3271 = vstv %s3270
        %v3272 = vmul.f32 %v3271, %v3106
        %v3273 = vmul.f32 %v3271, %v3107
        %v3274 = vadd.f32 %v3268, %v3272
        %v3275 = vadd.f32 %v3269, %v3273
        %s3276 = sld [smem:[#allocation8 + $0xab]]
        %v3277 = vstv %s3276
        %v3278 = vmul.f32 %v3277, %v3108
        %v3279 = vmul.f32 %v3277, %v3109
        %v3280 = vadd.f32 %v3274, %v3278
        %v3281 = vadd.f32 %v3275, %v3279
        %v3282 = vmax.f32 %v3280, 0.0
        %v3283 = vmax.f32 %v3281, 0.0
        %s3284 = sld [smem:[#allocation8 + $0xba]]
        %v3285 = vstv %s3284
        %v3286 = vadd.f32 %v3285, 0.0
        %s3287 = sld [smem:[#allocation8 + $0xac]]
        %v3288 = vstv %s3287
        %v3289 = vmul.f32 %v3288, %v3102
        %v3290 = vmul.f32 %v3288, %v3103
        %v3291 = vadd.f32 %v3286, %v3289
        %v3292 = vadd.f32 %v3286, %v3290
        %s3293 = sld [smem:[#allocation8 + $0xad]]
        %v3294 = vstv %s3293
        %v3295 = vmul.f32 %v3294, %v3104
        %v3296 = vmul.f32 %v3294, %v3105
        %v3297 = vadd.f32 %v3291, %v3295
        %v3298 = vadd.f32 %v3292, %v3296
        %s3299 = sld [smem:[#allocation8 + $0xae]]
        %v3300 = vstv %s3299
        %v3301 = vmul.f32 %v3300, %v3106
        %v3302 = vmul.f32 %v3300, %v3107
        %v3303 = vadd.f32 %v3297, %v3301
        %v3304 = vadd.f32 %v3298, %v3302
        %s3305 = sld [smem:[#allocation8 + $0xaf]]
        %v3306 = vstv %s3305
        %v3307 = vmul.f32 %v3306, %v3108
        %v3308 = vmul.f32 %v3306, %v3109
        %v3309 = vadd.f32 %v3303, %v3307
        %v3310 = vadd.f32 %v3304, %v3308
        %v3311 = vmax.f32 %v3309, 0.0
        %v3312 = vmax.f32 %v3310, 0.0
        %s3313 = sld [smem:[#allocation8 + $0xbb]]
        %v3314 = vstv %s3313
        %v3315 = vadd.f32 %v3314, 0.0
        %s3316 = sld [smem:[#allocation8 + $0xb0]]
        %v3317 = vstv %s3316
        %v3318 = vmul.f32 %v3317, %v3102
        %v3319 = vmul.f32 %v3317, %v3103
        %v3320 = vadd.f32 %v3315, %v3318
        %v3321 = vadd.f32 %v3315, %v3319
        %s3322 = sld [smem:[#allocation8 + $0xb1]]
        %v3323 = vstv %s3322
        %v3324 = vmul.f32 %v3323, %v3104
        %v3325 = vmul.f32 %v3323, %v3105
        %v3326 = vadd.f32 %v3320, %v3324
        %v3327 = vadd.f32 %v3321, %v3325
        %s3328 = sld [smem:[#allocation8 + $0xb2]]
        %v3329 = vstv %s3328
        %v3330 = vmul.f32 %v3329, %v3106
        %v3331 = vmul.f32 %v3329, %v3107
        %v3332 = vadd.f32 %v3326, %v3330
        %v3333 = vadd.f32 %v3327, %v3331
        %s3334 = sld [smem:[#allocation8 + $0xb3]]
        %v3335 = vstv %s3334
        %v3336 = vmul.f32 %v3335, %v3108
        %v3337 = vmul.f32 %v3335, %v3109
        %v3338 = vadd.f32 %v3332, %v3336
        %v3339 = vadd.f32 %v3333, %v3337
        %v3340 = vmax.f32 %v3338, 0.0
        %v3341 = vmax.f32 %v3339, 0.0
        %s3342 = sld [smem:[#allocation8 + $0xdc]]
        %v3343 = vstv %s3342
        %v3344 = vadd.f32 %v3343, 0.0
        %s3345 = sld [smem:[#allocation8 + $0xbc]]
        %v3346 = vstv %s3345
        %v3347 = vmul.f32 %v3346, %v3137
        %v3348 = vmul.f32 %v3346, %v3138
        %v3349 = vadd.f32 %v3344, %v3347
        %v3350 = vadd.f32 %v3344, %v3348
        %s3351 = sld [smem:[#allocation8 + $0xbd]]
        %v3352 = vstv %s3351
        %v3353 = vmul.f32 %v3352, %v3166
        %v3354 = vmul.f32 %v3352, %v3167
        %v3355 = vadd.f32 %v3349, %v3353
        %v3356 = vadd.f32 %v3350, %v3354
        %s3357 = sld [smem:[#allocation8 + $0xbe]]
        %v3358 = vstv %s3357
        %v3359 = vmul.f32 %v3358, %v3195
        %v3360 = vmul.f32 %v3358, %v3196
        %v3361 = vadd.f32 %v3355, %v3359
        %v3362 = vadd.f32 %v3356, %v3360
        %s3363 = sld [smem:[#allocation8 + $0xbf]]
        %v3364 = vstv %s3363
        %v3365 = vmul.f32 %v3364, %v3224
        %v3366 = vmul.f32 %v3364, %v3225
        %v3367 = vadd.f32 %v3361, %v3365
        %v3368 = vadd.f32 %v3362, %v3366
        %s3369 = sld [smem:[#allocation8 + $0xc0]]
        %v3370 = vstv %s3369
        %v3371 = vmul.f32 %v3370, %v3253
        %v3372 = vmul.f32 %v3370, %v3254
        %v3373 = vadd.f32 %v3367, %v3371
        %v3374 = vadd.f32 %v3368, %v3372
        %s3375 = sld [smem:[#allocation8 + $0xc1]]
        %v3376 = vstv %s3375
        %v3377 = vmul.f32 %v3376, %v3282
        %v3378 = vmul.f32 %v3376, %v3283
        %v3379 = vadd.f32 %v3373, %v3377
        %v3380 = vadd.f32 %v3374, %v3378
        %s3381 = sld [smem:[#allocation8 + $0xc2]]
        %v3382 = vstv %s3381
        %v3383 = vmul.f32 %v3382, %v3311
        %v3384 = vmul.f32 %v3382, %v3312
        %v3385 = vadd.f32 %v3379, %v3383
        %v3386 = vadd.f32 %v3380, %v3384
        %s3387 = sld [smem:[#allocation8 + $0xc3]]
        %v3388 = vstv %s3387
        %v3389 = vmul.f32 %v3388, %v3340
        %v3390 = vmul.f32 %v3388, %v3341
        %v3391 = vadd.f32 %v3385, %v3389
        %v3392 = vadd.f32 %v3386, %v3390
        %s3393 = sld [smem:[#allocation8 + $0xdd]]
        %v3394 = vstv %s3393
        %v3395 = vadd.f32 %v3394, 0.0
        %s3396 = sld [smem:[#allocation8 + $0xc4]]
        %v3397 = vstv %s3396
        %v3398 = vmul.f32 %v3397, %v3137
        %v3399 = vmul.f32 %v3397, %v3138
        %v3400 = vadd.f32 %v3395, %v3398
        %v3401 = vadd.f32 %v3395, %v3399
        %s3402 = sld [smem:[#allocation8 + $0xc5]]
        %v3403 = vstv %s3402
        %v3404 = vmul.f32 %v3403, %v3166
        %v3405 = vmul.f32 %v3403, %v3167
        %v3406 = vadd.f32 %v3400, %v3404
        %v3407 = vadd.f32 %v3401, %v3405
        %s3408 = sld [smem:[#allocation8 + $0xc6]]
        %v3409 = vstv %s3408
        %v3410 = vmul.f32 %v3409, %v3195
        %v3411 = vmul.f32 %v3409, %v3196
        %v3412 = vadd.f32 %v3406, %v3410
        %v3413 = vadd.f32 %v3407, %v3411
        %s3414 = sld [smem:[#allocation8 + $0xc7]]
        %v3415 = vstv %s3414
        %v3416 = vmul.f32 %v3415, %v3224
        %v3417 = vmul.f32 %v3415, %v3225
        %v3418 = vadd.f32 %v3412, %v3416
        %v3419 = vadd.f32 %v3413, %v3417
        %s3420 = sld [smem:[#allocation8 + $0xc8]]
        %v3421 = vstv %s3420
        %v3422 = vmul.f32 %v3421, %v3253
        %v3423 = vmul.f32 %v3421, %v3254
        %v3424 = vadd.f32 %v3418, %v3422
        %v3425 = vadd.f32 %v3419, %v3423
        %s3426 = sld [smem:[#allocation8 + $0xc9]]
        %v3427 = vstv %s3426
        %v3428 = vmul.f32 %v3427, %v3282
        %v3429 = vmul.f32 %v3427, %v3283
        %v3430 = vadd.f32 %v3424, %v3428
        %v3431 = vadd.f32 %v3425, %v3429
        %s3432 = sld [smem:[#allocation8 + $0xca]]
        %v3433 = vstv %s3432
        %v3434 = vmul.f32 %v3433, %v3311
        %v3435 = vmul.f32 %v3433, %v3312
        %v3436 = vadd.f32 %v3430, %v3434
        %v3437 = vadd.f32 %v3431, %v3435
        %s3438 = sld [smem:[#allocation8 + $0xcb]]
        %v3439 = vstv %s3438
        %v3440 = vmul.f32 %v3439, %v3340
        %v3441 = vmul.f32 %v3439, %v3341
        %v3442 = vadd.f32 %v3436, %v3440
        %v3443 = vadd.f32 %v3437, %v3441
        %s3444 = sld [smem:[#allocation8 + $0xde]]
        %v3445 = vstv %s3444
        %v3446 = vadd.f32 %v3445, 0.0
        %s3447 = sld [smem:[#allocation8 + $0xcc]]
        %v3448 = vstv %s3447
        %v3449 = vmul.f32 %v3448, %v3137
        %v3450 = vmul.f32 %v3448, %v3138
        %v3451 = vadd.f32 %v3446, %v3449
        %v3452 = vadd.f32 %v3446, %v3450
        %s3453 = sld [smem:[#allocation8 + $0xcd]]
        %v3454 = vstv %s3453
        %v3455 = vmul.f32 %v3454, %v3166
        %v3456 = vmul.f32 %v3454, %v3167
        %v3457 = vadd.f32 %v3451, %v3455
        %v3458 = vadd.f32 %v3452, %v3456
        %s3459 = sld [smem:[#allocation8 + $0xce]]
        %v3460 = vstv %s3459
        %v3461 = vmul.f32 %v3460, %v3195
        %v3462 = vmul.f32 %v3460, %v3196
        %v3463 = vadd.f32 %v3457, %v3461
        %v3464 = vadd.f32 %v3458, %v3462
        %s3465 = sld [smem:[#allocation8 + $0xcf]]
        %v3466 = vstv %s3465
        %v3467 = vmul.f32 %v3466, %v3224
        %v3468 = vmul.f32 %v3466, %v3225
        %v3469 = vadd.f32 %v3463, %v3467
        %v3470 = vadd.f32 %v3464, %v3468
        %s3471 = sld [smem:[#allocation8 + $0xd0]]
        %v3472 = vstv %s3471
        %v3473 = vmul.f32 %v3472, %v3253
        %v3474 = vmul.f32 %v3472, %v3254
        %v3475 = vadd.f32 %v3469, %v3473
        %v3476 = vadd.f32 %v3470, %v3474
        %s3477 = sld [smem:[#allocation8 + $0xd1]]
        %v3478 = vstv %s3477
        %v3479 = vmul.f32 %v3478, %v3282
        %v3480 = vmul.f32 %v3478, %v3283
        %v3481 = vadd.f32 %v3475, %v3479
        %v3482 = vadd.f32 %v3476, %v3480
        %s3483 = sld [smem:[#allocation8 + $0xd2]]
        %v3484 = vstv %s3483
        %v3485 = vmul.f32 %v3484, %v3311
        %v3486 = vmul.f32 %v3484, %v3312
        %v3487 = vadd.f32 %v3481, %v3485
        %v3488 = vadd.f32 %v3482, %v3486
        %s3489 = sld [smem:[#allocation8 + $0xd3]]
        %v3490 = vstv %s3489
        %v3491 = vmul.f32 %v3490, %v3340
        %v3492 = vmul.f32 %v3490, %v3341
        %v3493 = vadd.f32 %v3487, %v3491
        %v3494 = vadd.f32 %v3488, %v3492
        %s3495 = sld [smem:[#allocation8 + $0xdf]]
        %v3496 = vstv %s3495
        %v3497 = vadd.f32 %v3496, 0.0
        %s3498 = sld [smem:[#allocation8 + $0xd4]]
        %v3499 = vstv %s3498
        %v3500 = vmul.f32 %v3499, %v3137
        %v3501 = vmul.f32 %v3499, %v3138
        %v3502 = vadd.f32 %v3497, %v3500
        %v3503 = vadd.f32 %v3497, %v3501
        %s3504 = sld [smem:[#allocation8 + $0xd5]]
        %v3505 = vstv %s3504
        %v3506 = vmul.f32 %v3505, %v3166
        %v3507 = vmul.f32 %v3505, %v3167
        %v3508 = vadd.f32 %v3502, %v3506
        %v3509 = vadd.f32 %v3503, %v3507
        %s3510 = sld [smem:[#allocation8 + $0xd6]]
        %v3511 = vstv %s3510
        %v3512 = vmul.f32 %v3511, %v3195
        %v3513 = vmul.f32 %v3511, %v3196
        %v3514 = vadd.f32 %v3508, %v3512
        %v3515 = vadd.f32 %v3509, %v3513
        %s3516 = sld [smem:[#allocation8 + $0xd7]]
        %v3517 = vstv %s3516
        %v3518 = vmul.f32 %v3517, %v3224
        %v3519 = vmul.f32 %v3517, %v3225
        %v3520 = vadd.f32 %v3514, %v3518
        %v3521 = vadd.f32 %v3515, %v3519
        %s3522 = sld [smem:[#allocation8 + $0xd8]]
        %v3523 = vstv %s3522
        %v3524 = vmul.f32 %v3523, %v3253
        %v3525 = vmul.f32 %v3523, %v3254
        %v3526 = vadd.f32 %v3520, %v3524
        %v3527 = vadd.f32 %v3521, %v3525
        %s3528 = sld [smem:[#allocation8 + $0xd9]]
        %v3529 = vstv %s3528
        %v3530 = vmul.f32 %v3529, %v3282
        %v3531 = vmul.f32 %v3529, %v3283
        %v3532 = vadd.f32 %v3526, %v3530
        %v3533 = vadd.f32 %v3527, %v3531
        %s3534 = sld [smem:[#allocation8 + $0xda]]
        %v3535 = vstv %s3534
        %v3536 = vmul.f32 %v3535, %v3311
        %v3537 = vmul.f32 %v3535, %v3312
        %v3538 = vadd.f32 %v3532, %v3536
        %v3539 = vadd.f32 %v3533, %v3537
        %s3540 = sld [smem:[#allocation8 + $0xdb]]
        %v3541 = vstv %s3540
        %v3542 = vmul.f32 %v3541, %v3340
        %v3543 = vmul.f32 %v3541, %v3341
        %v3544 = vadd.f32 %v3538, %v3542
        %v3545 = vadd.f32 %v3539, %v3543
        %v3546 = vsel %vm2231, %v3102, 0.0
        %3547 = vadd.xlane.f32.xlu0 %v3546
        %v3548 = vpop.xlane.xlu0 %3547
        %v3549 = vsel %vm2231, %v3103, 0.0
        %3550 = vadd.xlane.f32.xlu0 %v3549
        %v3551 = vpop.xlane.xlu0 %3550
        %v3552 = vmul.f32 %v3548, %v2525
        %v3553 = vmul.f32 %v3551, %v2525
        %v3554 = vadd.f32 %v3552, %v3553
        %v3555 = vrot.slane %v3554, 4
        %v3556 = vadd.f32 %v3554, %v3555
        %v3557 = vrot.slane %v3556, 2
        %v3558 = vadd.f32 %v3556, %v3557
        %v3559 = vrot.slane %v3558, 1
        %v3560 = vadd.f32 %v3558, %v3559
        %v3561 = vmul.f32 %v3560, %v2241
        %v3562 = vsel %vm2231, %v3104, 0.0
        %3563 = vadd.xlane.f32.xlu0 %v3562
        %v3564 = vpop.xlane.xlu0 %3563
        %v3565 = vsel %vm2231, %v3105, 0.0
        %3566 = vadd.xlane.f32.xlu0 %v3565
        %v3567 = vpop.xlane.xlu0 %3566
        %v3568 = vmul.f32 %v3564, %v2525
        %v3569 = vmul.f32 %v3567, %v2525
        %v3570 = vadd.f32 %v3568, %v3569
        %v3571 = vrot.slane %v3570, 4
        %v3572 = vadd.f32 %v3570, %v3571
        %v3573 = vrot.slane %v3572, 2
        %v3574 = vadd.f32 %v3572, %v3573
        %v3575 = vrot.slane %v3574, 1
        %v3576 = vadd.f32 %v3574, %v3575
        %v3577 = vmul.f32 %v3576, %v2241
        %v3578 = vsel %vm2231, %v3106, 0.0
        %3579 = vadd.xlane.f32.xlu0 %v3578
        %v3580 = vpop.xlane.xlu0 %3579
        %v3581 = vsel %vm2231, %v3107, 0.0
        %3582 = vadd.xlane.f32.xlu0 %v3581
        %v3583 = vpop.xlane.xlu0 %3582
        %v3584 = vmul.f32 %v3580, %v2525
        %v3585 = vmul.f32 %v3583, %v2525
        %v3586 = vadd.f32 %v3584, %v3585
        %v3587 = vrot.slane %v3586, 4
        %v3588 = vadd.f32 %v3586, %v3587
        %v3589 = vrot.slane %v3588, 2
        %v3590 = vadd.f32 %v3588, %v3589
        %v3591 = vrot.slane %v3590, 1
        %v3592 = vadd.f32 %v3590, %v3591
        %v3593 = vmul.f32 %v3592, %v2241
        %v3594 = vsel %vm2231, %v3108, 0.0
        %3595 = vadd.xlane.f32.xlu0 %v3594
        %v3596 = vpop.xlane.xlu0 %3595
        %v3597 = vsel %vm2231, %v3109, 0.0
        %3598 = vadd.xlane.f32.xlu0 %v3597
        %v3599 = vpop.xlane.xlu0 %3598
        %v3600 = vmul.f32 %v3596, %v2525
        %v3601 = vmul.f32 %v3599, %v2525
        %v3602 = vadd.f32 %v3600, %v3601
        %v3603 = vrot.slane %v3602, 4
        %v3604 = vadd.f32 %v3602, %v3603
        %v3605 = vrot.slane %v3604, 2
        %v3606 = vadd.f32 %v3604, %v3605
        %v3607 = vrot.slane %v3606, 1
        %v3608 = vadd.f32 %v3606, %v3607
        %v3609 = vmul.f32 %v3608, %v2241
        %s3610 = sld [smem:[#allocation8 + $0x100]]
        %v3611 = vstv %s3610
        %v3612 = vadd.f32 %v3611, 0.0
        %s3613 = sld [smem:[#allocation8 + $0xe0]]
        %v3614 = vstv %s3613
        %v3615 = vmul.f32 %v3614, %v3561
        %v3616 = vadd.f32 %v3612, %v3615
        %s3617 = sld [smem:[#allocation8 + $0xe1]]
        %v3618 = vstv %s3617
        %v3619 = vmul.f32 %v3618, %v3577
        %v3620 = vadd.f32 %v3616, %v3619
        %s3621 = sld [smem:[#allocation8 + $0xe2]]
        %v3622 = vstv %s3621
        %v3623 = vmul.f32 %v3622, %v3593
        %v3624 = vadd.f32 %v3620, %v3623
        %s3625 = sld [smem:[#allocation8 + $0xe3]]
        %v3626 = vstv %s3625
        %v3627 = vmul.f32 %v3626, %v3609
        %v3628 = vadd.f32 %v3624, %v3627
        %v3629 = vmax.f32 %v3628, 0.0
        %s3630 = sld [smem:[#allocation8 + $0x101]]
        %v3631 = vstv %s3630
        %v3632 = vadd.f32 %v3631, 0.0
        %s3633 = sld [smem:[#allocation8 + $0xe4]]
        %v3634 = vstv %s3633
        %v3635 = vmul.f32 %v3634, %v3561
        %v3636 = vadd.f32 %v3632, %v3635
        %s3637 = sld [smem:[#allocation8 + $0xe5]]
        %v3638 = vstv %s3637
        %v3639 = vmul.f32 %v3638, %v3577
        %v3640 = vadd.f32 %v3636, %v3639
        %s3641 = sld [smem:[#allocation8 + $0xe6]]
        %v3642 = vstv %s3641
        %v3643 = vmul.f32 %v3642, %v3593
        %v3644 = vadd.f32 %v3640, %v3643
        %s3645 = sld [smem:[#allocation8 + $0xe7]]
        %v3646 = vstv %s3645
        %v3647 = vmul.f32 %v3646, %v3609
        %v3648 = vadd.f32 %v3644, %v3647
        %v3649 = vmax.f32 %v3648, 0.0
        %s3650 = sld [smem:[#allocation8 + $0x102]]
        %v3651 = vstv %s3650
        %v3652 = vadd.f32 %v3651, 0.0
        %s3653 = sld [smem:[#allocation8 + $0xe8]]
        %v3654 = vstv %s3653
        %v3655 = vmul.f32 %v3654, %v3561
        %v3656 = vadd.f32 %v3652, %v3655
        %s3657 = sld [smem:[#allocation8 + $0xe9]]
        %v3658 = vstv %s3657
        %v3659 = vmul.f32 %v3658, %v3577
        %v3660 = vadd.f32 %v3656, %v3659
        %s3661 = sld [smem:[#allocation8 + $0xea]]
        %v3662 = vstv %s3661
        %v3663 = vmul.f32 %v3662, %v3593
        %v3664 = vadd.f32 %v3660, %v3663
        %s3665 = sld [smem:[#allocation8 + $0xeb]]
        %v3666 = vstv %s3665
        %v3667 = vmul.f32 %v3666, %v3609
        %v3668 = vadd.f32 %v3664, %v3667
        %v3669 = vmax.f32 %v3668, 0.0
        %s3670 = sld [smem:[#allocation8 + $0x103]]
        %v3671 = vstv %s3670
        %v3672 = vadd.f32 %v3671, 0.0
        %s3673 = sld [smem:[#allocation8 + $0xec]]
        %v3674 = vstv %s3673
        %v3675 = vmul.f32 %v3674, %v3561
        %v3676 = vadd.f32 %v3672, %v3675
        %s3677 = sld [smem:[#allocation8 + $0xed]]
        %v3678 = vstv %s3677
        %v3679 = vmul.f32 %v3678, %v3577
        %v3680 = vadd.f32 %v3676, %v3679
        %s3681 = sld [smem:[#allocation8 + $0xee]]
        %v3682 = vstv %s3681
        %v3683 = vmul.f32 %v3682, %v3593
        %v3684 = vadd.f32 %v3680, %v3683
        %s3685 = sld [smem:[#allocation8 + $0xef]]
        %v3686 = vstv %s3685
        %v3687 = vmul.f32 %v3686, %v3609
        %v3688 = vadd.f32 %v3684, %v3687
        %v3689 = vmax.f32 %v3688, 0.0
        %s3690 = sld [smem:[#allocation8 + $0x104]]
        %v3691 = vstv %s3690
        %v3692 = vadd.f32 %v3691, 0.0
        %s3693 = sld [smem:[#allocation8 + $0xf0]]
        %v3694 = vstv %s3693
        %v3695 = vmul.f32 %v3694, %v3561
        %v3696 = vadd.f32 %v3692, %v3695
        %s3697 = sld [smem:[#allocation8 + $0xf1]]
        %v3698 = vstv %s3697
        %v3699 = vmul.f32 %v3698, %v3577
        %v3700 = vadd.f32 %v3696, %v3699
        %s3701 = sld [smem:[#allocation8 + $0xf2]]
        %v3702 = vstv %s3701
        %v3703 = vmul.f32 %v3702, %v3593
        %v3704 = vadd.f32 %v3700, %v3703
        %s3705 = sld [smem:[#allocation8 + $0xf3]]
        %v3706 = vstv %s3705
        %v3707 = vmul.f32 %v3706, %v3609
        %v3708 = vadd.f32 %v3704, %v3707
        %v3709 = vmax.f32 %v3708, 0.0
        %s3710 = sld [smem:[#allocation8 + $0x105]]
        %v3711 = vstv %s3710
        %v3712 = vadd.f32 %v3711, 0.0
        %s3713 = sld [smem:[#allocation8 + $0xf4]]
        %v3714 = vstv %s3713
        %v3715 = vmul.f32 %v3714, %v3561
        %v3716 = vadd.f32 %v3712, %v3715
        %s3717 = sld [smem:[#allocation8 + $0xf5]]
        %v3718 = vstv %s3717
        %v3719 = vmul.f32 %v3718, %v3577
        %v3720 = vadd.f32 %v3716, %v3719
        %s3721 = sld [smem:[#allocation8 + $0xf6]]
        %v3722 = vstv %s3721
        %v3723 = vmul.f32 %v3722, %v3593
        %v3724 = vadd.f32 %v3720, %v3723
        %s3725 = sld [smem:[#allocation8 + $0xf7]]
        %v3726 = vstv %s3725
        %v3727 = vmul.f32 %v3726, %v3609
        %v3728 = vadd.f32 %v3724, %v3727
        %v3729 = vmax.f32 %v3728, 0.0
        %s3730 = sld [smem:[#allocation8 + $0x106]]
        %v3731 = vstv %s3730
        %v3732 = vadd.f32 %v3731, 0.0
        %s3733 = sld [smem:[#allocation8 + $0xf8]]
        %v3734 = vstv %s3733
        %v3735 = vmul.f32 %v3734, %v3561
        %v3736 = vadd.f32 %v3732, %v3735
        %s3737 = sld [smem:[#allocation8 + $0xf9]]
        %v3738 = vstv %s3737
        %v3739 = vmul.f32 %v3738, %v3577
        %v3740 = vadd.f32 %v3736, %v3739
        %s3741 = sld [smem:[#allocation8 + $0xfa]]
        %v3742 = vstv %s3741
        %v3743 = vmul.f32 %v3742, %v3593
        %v3744 = vadd.f32 %v3740, %v3743
        %s3745 = sld [smem:[#allocation8 + $0xfb]]
        %v3746 = vstv %s3745
        %v3747 = vmul.f32 %v3746, %v3609
        %v3748 = vadd.f32 %v3744, %v3747
        %v3749 = vmax.f32 %v3748, 0.0
        %s3750 = sld [smem:[#allocation8 + $0x107]]
        %v3751 = vstv %s3750
        %v3752 = vadd.f32 %v3751, 0.0
        %s3753 = sld [smem:[#allocation8 + $0xfc]]
        %v3754 = vstv %s3753
        %v3755 = vmul.f32 %v3754, %v3561
        %v3756 = vadd.f32 %v3752, %v3755
        %s3757 = sld [smem:[#allocation8 + $0xfd]]
        %v3758 = vstv %s3757
        %v3759 = vmul.f32 %v3758, %v3577
        %v3760 = vadd.f32 %v3756, %v3759
        %s3761 = sld [smem:[#allocation8 + $0xfe]]
        %v3762 = vstv %s3761
        %v3763 = vmul.f32 %v3762, %v3593
        %v3764 = vadd.f32 %v3760, %v3763
        %s3765 = sld [smem:[#allocation8 + $0xff]]
        %v3766 = vstv %s3765
        %v3767 = vmul.f32 %v3766, %v3609
        %v3768 = vadd.f32 %v3764, %v3767
        %v3769 = vmax.f32 %v3768, 0.0
        %s3770 = sld [smem:[#allocation8 + $0x128]]
        %v3771 = vstv %s3770
        %v3772 = vadd.f32 %v3771, 0.0
        %s3773 = sld [smem:[#allocation8 + $0x108]]
        %v3774 = vstv %s3773
        %v3775 = vmul.f32 %v3774, %v3629
        %v3776 = vadd.f32 %v3772, %v3775
        %s3777 = sld [smem:[#allocation8 + $0x109]]
        %v3778 = vstv %s3777
        %v3779 = vmul.f32 %v3778, %v3649
        %v3780 = vadd.f32 %v3776, %v3779
        %s3781 = sld [smem:[#allocation8 + $0x10a]]
        %v3782 = vstv %s3781
        %v3783 = vmul.f32 %v3782, %v3669
        %v3784 = vadd.f32 %v3780, %v3783
        %s3785 = sld [smem:[#allocation8 + $0x10b]]
        %v3786 = vstv %s3785
        %v3787 = vmul.f32 %v3786, %v3689
        %v3788 = vadd.f32 %v3784, %v3787
        %s3789 = sld [smem:[#allocation8 + $0x10c]]
        %v3790 = vstv %s3789
        %v3791 = vmul.f32 %v3790, %v3709
        %v3792 = vadd.f32 %v3788, %v3791
        %s3793 = sld [smem:[#allocation8 + $0x10d]]
        %v3794 = vstv %s3793
        %v3795 = vmul.f32 %v3794, %v3729
        %v3796 = vadd.f32 %v3792, %v3795
        %s3797 = sld [smem:[#allocation8 + $0x10e]]
        %v3798 = vstv %s3797
        %v3799 = vmul.f32 %v3798, %v3749
        %v3800 = vadd.f32 %v3796, %v3799
        %s3801 = sld [smem:[#allocation8 + $0x10f]]
        %v3802 = vstv %s3801
        %v3803 = vmul.f32 %v3802, %v3769
        %v3804 = vadd.f32 %v3800, %v3803
        %s3805 = sld [smem:[#allocation8 + $0x129]]
        %v3806 = vstv %s3805
        %v3807 = vadd.f32 %v3806, 0.0
        %s3808 = sld [smem:[#allocation8 + $0x110]]
        %v3809 = vstv %s3808
        %v3810 = vmul.f32 %v3809, %v3629
        %v3811 = vadd.f32 %v3807, %v3810
        %s3812 = sld [smem:[#allocation8 + $0x111]]
        %v3813 = vstv %s3812
        %v3814 = vmul.f32 %v3813, %v3649
        %v3815 = vadd.f32 %v3811, %v3814
        %s3816 = sld [smem:[#allocation8 + $0x112]]
        %v3817 = vstv %s3816
        %v3818 = vmul.f32 %v3817, %v3669
        %v3819 = vadd.f32 %v3815, %v3818
        %s3820 = sld [smem:[#allocation8 + $0x113]]
        %v3821 = vstv %s3820
        %v3822 = vmul.f32 %v3821, %v3689
        %v3823 = vadd.f32 %v3819, %v3822
        %s3824 = sld [smem:[#allocation8 + $0x114]]
        %v3825 = vstv %s3824
        %v3826 = vmul.f32 %v3825, %v3709
        %v3827 = vadd.f32 %v3823, %v3826
        %s3828 = sld [smem:[#allocation8 + $0x115]]
        %v3829 = vstv %s3828
        %v3830 = vmul.f32 %v3829, %v3729
        %v3831 = vadd.f32 %v3827, %v3830
        %s3832 = sld [smem:[#allocation8 + $0x116]]
        %v3833 = vstv %s3832
        %v3834 = vmul.f32 %v3833, %v3749
        %v3835 = vadd.f32 %v3831, %v3834
        %s3836 = sld [smem:[#allocation8 + $0x117]]
        %v3837 = vstv %s3836
        %v3838 = vmul.f32 %v3837, %v3769
        %v3839 = vadd.f32 %v3835, %v3838
        %s3840 = sld [smem:[#allocation8 + $0x12a]]
        %v3841 = vstv %s3840
        %v3842 = vadd.f32 %v3841, 0.0
        %s3843 = sld [smem:[#allocation8 + $0x118]]
        %v3844 = vstv %s3843
        %v3845 = vmul.f32 %v3844, %v3629
        %v3846 = vadd.f32 %v3842, %v3845
        %s3847 = sld [smem:[#allocation8 + $0x119]]
        %v3848 = vstv %s3847
        %v3849 = vmul.f32 %v3848, %v3649
        %v3850 = vadd.f32 %v3846, %v3849
        %s3851 = sld [smem:[#allocation8 + $0x11a]]
        %v3852 = vstv %s3851
        %v3853 = vmul.f32 %v3852, %v3669
        %v3854 = vadd.f32 %v3850, %v3853
        %s3855 = sld [smem:[#allocation8 + $0x11b]]
        %v3856 = vstv %s3855
        %v3857 = vmul.f32 %v3856, %v3689
        %v3858 = vadd.f32 %v3854, %v3857
        %s3859 = sld [smem:[#allocation8 + $0x11c]]
        %v3860 = vstv %s3859
        %v3861 = vmul.f32 %v3860, %v3709
        %v3862 = vadd.f32 %v3858, %v3861
        %s3863 = sld [smem:[#allocation8 + $0x11d]]
        %v3864 = vstv %s3863
        %v3865 = vmul.f32 %v3864, %v3729
        %v3866 = vadd.f32 %v3862, %v3865
        %s3867 = sld [smem:[#allocation8 + $0x11e]]
        %v3868 = vstv %s3867
        %v3869 = vmul.f32 %v3868, %v3749
        %v3870 = vadd.f32 %v3866, %v3869
        %s3871 = sld [smem:[#allocation8 + $0x11f]]
        %v3872 = vstv %s3871
        %v3873 = vmul.f32 %v3872, %v3769
        %v3874 = vadd.f32 %v3870, %v3873
        %s3875 = sld [smem:[#allocation8 + $0x12b]]
        %v3876 = vstv %s3875
        %v3877 = vadd.f32 %v3876, 0.0
        %s3878 = sld [smem:[#allocation8 + $0x120]]
        %v3879 = vstv %s3878
        %v3880 = vmul.f32 %v3879, %v3629
        %v3881 = vadd.f32 %v3877, %v3880
        %s3882 = sld [smem:[#allocation8 + $0x121]]
        %v3883 = vstv %s3882
        %v3884 = vmul.f32 %v3883, %v3649
        %v3885 = vadd.f32 %v3881, %v3884
        %s3886 = sld [smem:[#allocation8 + $0x122]]
        %v3887 = vstv %s3886
        %v3888 = vmul.f32 %v3887, %v3669
        %v3889 = vadd.f32 %v3885, %v3888
        %s3890 = sld [smem:[#allocation8 + $0x123]]
        %v3891 = vstv %s3890
        %v3892 = vmul.f32 %v3891, %v3689
        %v3893 = vadd.f32 %v3889, %v3892
        %s3894 = sld [smem:[#allocation8 + $0x124]]
        %v3895 = vstv %s3894
        %v3896 = vmul.f32 %v3895, %v3709
        %v3897 = vadd.f32 %v3893, %v3896
        %s3898 = sld [smem:[#allocation8 + $0x125]]
        %v3899 = vstv %s3898
        %v3900 = vmul.f32 %v3899, %v3729
        %v3901 = vadd.f32 %v3897, %v3900
        %s3902 = sld [smem:[#allocation8 + $0x126]]
        %v3903 = vstv %s3902
        %v3904 = vmul.f32 %v3903, %v3749
        %v3905 = vadd.f32 %v3901, %v3904
        %s3906 = sld [smem:[#allocation8 + $0x127]]
        %v3907 = vstv %s3906
        %v3908 = vmul.f32 %v3907, %v3769
        %v3909 = vadd.f32 %v3905, %v3908
        %v3910 = vadd.f32 %v3391, %v3804
        %v3911 = vadd.f32 %v3392, %v3804
        %v3912 = vxor.u32 %v3910, 2147483648
        %v3913 = vxor.u32 %v3911, 2147483648
        %v3914 = vmul.f32 %v3912, 1.442695
        %v3915 = vpow.pop %v3914
        %v3916 = vmul.f32 %v3913, 1.442695
        %v3917 = vpow.pop %v3916
        %v3918 = vadd.f32 %v3915, 1.0
        %v3919 = vadd.f32 %v3917, 1.0
        %v3920 = vrcp.pop %v3918
        %v3921 = vmul.f32 1.0, %v3920
        %v3922 = vrcp.pop %v3919
        %v3923 = vmul.f32 1.0, %v3922
        %v3924 = vadd.f32 %v3442, %v3839
        %v3925 = vadd.f32 %v3443, %v3839
        %v3926 = vxor.u32 %v3924, 2147483648
        %v3927 = vxor.u32 %v3925, 2147483648
        %v3928 = vmul.f32 %v3926, 1.442695
        %v3929 = vpow.pop %v3928
        %v3930 = vmul.f32 %v3927, 1.442695
        %v3931 = vpow.pop %v3930
        %v3932 = vadd.f32 %v3929, 1.0
        %v3933 = vadd.f32 %v3931, 1.0
        %v3934 = vrcp.pop %v3932
        %v3935 = vmul.f32 1.0, %v3934
        %v3936 = vrcp.pop %v3933
        %v3937 = vmul.f32 1.0, %v3936
        %v3938 = vadd.f32 %v3493, %v3874
        %v3939 = vadd.f32 %v3494, %v3874
        %v3940 = vxor.u32 %v3938, 2147483648
        %v3941 = vxor.u32 %v3939, 2147483648
        %v3942 = vmul.f32 %v3940, 1.442695
        %v3943 = vpow.pop %v3942
        %v3944 = vmul.f32 %v3941, 1.442695
        %v3945 = vpow.pop %v3944
        %v3946 = vadd.f32 %v3943, 1.0
        %v3947 = vadd.f32 %v3945, 1.0
        %v3948 = vrcp.pop %v3946
        %v3949 = vmul.f32 1.0, %v3948
        %v3950 = vrcp.pop %v3947
        %v3951 = vmul.f32 1.0, %v3950
        %v3952 = vadd.f32 %v3544, %v3909
        %v3953 = vadd.f32 %v3545, %v3909
        %v3954 = vxor.u32 %v3952, 2147483648
        %v3955 = vxor.u32 %v3953, 2147483648
        %v3956 = vmul.f32 %v3954, 1.442695
        %v3957 = vpow.pop %v3956
        %v3958 = vmul.f32 %v3955, 1.442695
        %v3959 = vpow.pop %v3958
        %v3960 = vadd.f32 %v3957, 1.0
        %v3961 = vadd.f32 %v3959, 1.0
        %v3962 = vrcp.pop %v3960
        %v3963 = vmul.f32 1.0, %v3962
        %v3964 = vrcp.pop %v3961
        %v3965 = vmul.f32 1.0, %v3964
        %v3966 = vmul.f32 %v2927, %v3921
        %v3967 = vmul.f32 %v2928, %v3923
        %v3968 = vsub.f32 1.0, %v3921
        %v3969 = vsub.f32 1.0, %v3923
        %v3970 = vmul.f32 %v3088, %v3968
        %v3971 = vmul.f32 %v3089, %v3969
        %v3972 = vadd.f32 %v3966, %v3970
        %v3973 = vadd.f32 %v3967, %v3971
        %v3974 = vmul.f32 %v2935, %v3935
        %v3975 = vmul.f32 %v2936, %v3937
        %v3976 = vsub.f32 1.0, %v3935
        %v3977 = vsub.f32 1.0, %v3937
        %v3978 = vmul.f32 %v3092, %v3976
        %v3979 = vmul.f32 %v3093, %v3977
        %v3980 = vadd.f32 %v3974, %v3978
        %v3981 = vadd.f32 %v3975, %v3979
        %v3982 = vmul.f32 %v2943, %v3949
        %v3983 = vmul.f32 %v2944, %v3951
        %v3984 = vsub.f32 1.0, %v3949
        %v3985 = vsub.f32 1.0, %v3951
        %v3986 = vmul.f32 %v3096, %v3984
        %v3987 = vmul.f32 %v3097, %v3985
        %v3988 = vadd.f32 %v3982, %v3986
        %v3989 = vadd.f32 %v3983, %v3987
        %v3990 = vmul.f32 %v2951, %v3963
        %v3991 = vmul.f32 %v2952, %v3965
        %v3992 = vsub.f32 1.0, %v3963
        %v3993 = vsub.f32 1.0, %v3965
        %v3994 = vmul.f32 %v3100, %v3992
        %v3995 = vmul.f32 %v3101, %v3993
        %v3996 = vadd.f32 %v3990, %v3994
        %v3997 = vadd.f32 %v3991, %v3995
        %s3998 = sld [smem:[#allocation8 + $0x14c]]
        %v3999 = vstv %s3998
        %v4000 = vadd.f32 %v3999, 0.0
        %s4001 = sld [smem:[#allocation8 + $0x12c]]
        %v4002 = vstv %s4001
        %v4003 = vmul.f32 %v4002, %v3972
        %v4004 = vmul.f32 %v4002, %v3973
        %v4005 = vadd.f32 %v4000, %v4003
        %v4006 = vadd.f32 %v4000, %v4004
        %s4007 = sld [smem:[#allocation8 + $0x12d]]
        %v4008 = vstv %s4007
        %v4009 = vmul.f32 %v4008, %v3980
        %v4010 = vmul.f32 %v4008, %v3981
        %v4011 = vadd.f32 %v4005, %v4009
        %v4012 = vadd.f32 %v4006, %v4010
        %s4013 = sld [smem:[#allocation8 + $0x12e]]
        %v4014 = vstv %s4013
        %v4015 = vmul.f32 %v4014, %v3988
        %v4016 = vmul.f32 %v4014, %v3989
        %v4017 = vadd.f32 %v4011, %v4015
        %v4018 = vadd.f32 %v4012, %v4016
        %s4019 = sld [smem:[#allocation8 + $0x12f]]
        %v4020 = vstv %s4019
        %v4021 = vmul.f32 %v4020, %v3996
        %v4022 = vmul.f32 %v4020, %v3997
        %v4023 = vadd.f32 %v4017, %v4021
        %v4024 = vadd.f32 %v4018, %v4022
        %v4025 = vmax.f32 %v4023, 0.0
        %v4026 = vmax.f32 %v4024, 0.0
        %s4027 = sld [smem:[#allocation8 + $0x14d]]
        %v4028 = vstv %s4027
        %v4029 = vadd.f32 %v4028, 0.0
        %s4030 = sld [smem:[#allocation8 + $0x130]]
        %v4031 = vstv %s4030
        %v4032 = vmul.f32 %v4031, %v3972
        %v4033 = vmul.f32 %v4031, %v3973
        %v4034 = vadd.f32 %v4029, %v4032
        %v4035 = vadd.f32 %v4029, %v4033
        %s4036 = sld [smem:[#allocation8 + $0x131]]
        %v4037 = vstv %s4036
        %v4038 = vmul.f32 %v4037, %v3980
        %v4039 = vmul.f32 %v4037, %v3981
        %v4040 = vadd.f32 %v4034, %v4038
        %v4041 = vadd.f32 %v4035, %v4039
        %s4042 = sld [smem:[#allocation8 + $0x132]]
        %v4043 = vstv %s4042
        %v4044 = vmul.f32 %v4043, %v3988
        %v4045 = vmul.f32 %v4043, %v3989
        %v4046 = vadd.f32 %v4040, %v4044
        %v4047 = vadd.f32 %v4041, %v4045
        %s4048 = sld [smem:[#allocation8 + $0x133]]
        %v4049 = vstv %s4048
        %v4050 = vmul.f32 %v4049, %v3996
        %v4051 = vmul.f32 %v4049, %v3997
        %v4052 = vadd.f32 %v4046, %v4050
        %v4053 = vadd.f32 %v4047, %v4051
        %v4054 = vmax.f32 %v4052, 0.0
        %v4055 = vmax.f32 %v4053, 0.0
        %s4056 = sld [smem:[#allocation8 + $0x14e]]
        %v4057 = vstv %s4056
        %v4058 = vadd.f32 %v4057, 0.0
        %s4059 = sld [smem:[#allocation8 + $0x134]]
        %v4060 = vstv %s4059
        %v4061 = vmul.f32 %v4060, %v3972
        %v4062 = vmul.f32 %v4060, %v3973
        %v4063 = vadd.f32 %v4058, %v4061
        %v4064 = vadd.f32 %v4058, %v4062
        %s4065 = sld [smem:[#allocation8 + $0x135]]
        %v4066 = vstv %s4065
        %v4067 = vmul.f32 %v4066, %v3980
        %v4068 = vmul.f32 %v4066, %v3981
        %v4069 = vadd.f32 %v4063, %v4067
        %v4070 = vadd.f32 %v4064, %v4068
        %s4071 = sld [smem:[#allocation8 + $0x136]]
        %v4072 = vstv %s4071
        %v4073 = vmul.f32 %v4072, %v3988
        %v4074 = vmul.f32 %v4072, %v3989
        %v4075 = vadd.f32 %v4069, %v4073
        %v4076 = vadd.f32 %v4070, %v4074
        %s4077 = sld [smem:[#allocation8 + $0x137]]
        %v4078 = vstv %s4077
        %v4079 = vmul.f32 %v4078, %v3996
        %v4080 = vmul.f32 %v4078, %v3997
        %v4081 = vadd.f32 %v4075, %v4079
        %v4082 = vadd.f32 %v4076, %v4080
        %v4083 = vmax.f32 %v4081, 0.0
        %v4084 = vmax.f32 %v4082, 0.0
        %s4085 = sld [smem:[#allocation8 + $0x14f]]
        %v4086 = vstv %s4085
        %v4087 = vadd.f32 %v4086, 0.0
        %s4088 = sld [smem:[#allocation8 + $0x138]]
        %v4089 = vstv %s4088
        %v4090 = vmul.f32 %v4089, %v3972
        %v4091 = vmul.f32 %v4089, %v3973
        %v4092 = vadd.f32 %v4087, %v4090
        %v4093 = vadd.f32 %v4087, %v4091
        %s4094 = sld [smem:[#allocation8 + $0x139]]
        %v4095 = vstv %s4094
        %v4096 = vmul.f32 %v4095, %v3980
        %v4097 = vmul.f32 %v4095, %v3981
        %v4098 = vadd.f32 %v4092, %v4096
        %v4099 = vadd.f32 %v4093, %v4097
        %s4100 = sld [smem:[#allocation8 + $0x13a]]
        %v4101 = vstv %s4100
        %v4102 = vmul.f32 %v4101, %v3988
        %v4103 = vmul.f32 %v4101, %v3989
        %v4104 = vadd.f32 %v4098, %v4102
        %v4105 = vadd.f32 %v4099, %v4103
        %s4106 = sld [smem:[#allocation8 + $0x13b]]
        %v4107 = vstv %s4106
        %v4108 = vmul.f32 %v4107, %v3996
        %v4109 = vmul.f32 %v4107, %v3997
        %v4110 = vadd.f32 %v4104, %v4108
        %v4111 = vadd.f32 %v4105, %v4109
        %v4112 = vmax.f32 %v4110, 0.0
        %v4113 = vmax.f32 %v4111, 0.0
        %s4114 = sld [smem:[#allocation8 + $0x150]]
        %v4115 = vstv %s4114
        %v4116 = vadd.f32 %v4115, 0.0
        %s4117 = sld [smem:[#allocation8 + $0x13c]]
        %v4118 = vstv %s4117
        %v4119 = vmul.f32 %v4118, %v3972
        %v4120 = vmul.f32 %v4118, %v3973
        %v4121 = vadd.f32 %v4116, %v4119
        %v4122 = vadd.f32 %v4116, %v4120
        %s4123 = sld [smem:[#allocation8 + $0x13d]]
        %v4124 = vstv %s4123
        %v4125 = vmul.f32 %v4124, %v3980
        %v4126 = vmul.f32 %v4124, %v3981
        %v4127 = vadd.f32 %v4121, %v4125
        %v4128 = vadd.f32 %v4122, %v4126
        %s4129 = sld [smem:[#allocation8 + $0x13e]]
        %v4130 = vstv %s4129
        %v4131 = vmul.f32 %v4130, %v3988
        %v4132 = vmul.f32 %v4130, %v3989
        %v4133 = vadd.f32 %v4127, %v4131
        %v4134 = vadd.f32 %v4128, %v4132
        %s4135 = sld [smem:[#allocation8 + $0x13f]]
        %v4136 = vstv %s4135
        %v4137 = vmul.f32 %v4136, %v3996
        %v4138 = vmul.f32 %v4136, %v3997
        %v4139 = vadd.f32 %v4133, %v4137
        %v4140 = vadd.f32 %v4134, %v4138
        %v4141 = vmax.f32 %v4139, 0.0
        %v4142 = vmax.f32 %v4140, 0.0
        %s4143 = sld [smem:[#allocation8 + $0x151]]
        %v4144 = vstv %s4143
        %v4145 = vadd.f32 %v4144, 0.0
        %s4146 = sld [smem:[#allocation8 + $0x140]]
        %v4147 = vstv %s4146
        %v4148 = vmul.f32 %v4147, %v3972
        %v4149 = vmul.f32 %v4147, %v3973
        %v4150 = vadd.f32 %v4145, %v4148
        %v4151 = vadd.f32 %v4145, %v4149
        %s4152 = sld [smem:[#allocation8 + $0x141]]
        %v4153 = vstv %s4152
        %v4154 = vmul.f32 %v4153, %v3980
        %v4155 = vmul.f32 %v4153, %v3981
        %v4156 = vadd.f32 %v4150, %v4154
        %v4157 = vadd.f32 %v4151, %v4155
        %s4158 = sld [smem:[#allocation8 + $0x142]]
        %v4159 = vstv %s4158
        %v4160 = vmul.f32 %v4159, %v3988
        %v4161 = vmul.f32 %v4159, %v3989
        %v4162 = vadd.f32 %v4156, %v4160
        %v4163 = vadd.f32 %v4157, %v4161
        %s4164 = sld [smem:[#allocation8 + $0x143]]
        %v4165 = vstv %s4164
        %v4166 = vmul.f32 %v4165, %v3996
        %v4167 = vmul.f32 %v4165, %v3997
        %v4168 = vadd.f32 %v4162, %v4166
        %v4169 = vadd.f32 %v4163, %v4167
        %v4170 = vmax.f32 %v4168, 0.0
        %v4171 = vmax.f32 %v4169, 0.0
        %s4172 = sld [smem:[#allocation8 + $0x152]]
        %v4173 = vstv %s4172
        %v4174 = vadd.f32 %v4173, 0.0
        %s4175 = sld [smem:[#allocation8 + $0x144]]
        %v4176 = vstv %s4175
        %v4177 = vmul.f32 %v4176, %v3972
        %v4178 = vmul.f32 %v4176, %v3973
        %v4179 = vadd.f32 %v4174, %v4177
        %v4180 = vadd.f32 %v4174, %v4178
        %s4181 = sld [smem:[#allocation8 + $0x145]]
        %v4182 = vstv %s4181
        %v4183 = vmul.f32 %v4182, %v3980
        %v4184 = vmul.f32 %v4182, %v3981
        %v4185 = vadd.f32 %v4179, %v4183
        %v4186 = vadd.f32 %v4180, %v4184
        %s4187 = sld [smem:[#allocation8 + $0x146]]
        %v4188 = vstv %s4187
        %v4189 = vmul.f32 %v4188, %v3988
        %v4190 = vmul.f32 %v4188, %v3989
        %v4191 = vadd.f32 %v4185, %v4189
        %v4192 = vadd.f32 %v4186, %v4190
        %s4193 = sld [smem:[#allocation8 + $0x147]]
        %v4194 = vstv %s4193
        %v4195 = vmul.f32 %v4194, %v3996
        %v4196 = vmul.f32 %v4194, %v3997
        %v4197 = vadd.f32 %v4191, %v4195
        %v4198 = vadd.f32 %v4192, %v4196
        %v4199 = vmax.f32 %v4197, 0.0
        %v4200 = vmax.f32 %v4198, 0.0
        %s4201 = sld [smem:[#allocation8 + $0x153]]
        %v4202 = vstv %s4201
        %v4203 = vadd.f32 %v4202, 0.0
        %s4204 = sld [smem:[#allocation8 + $0x148]]
        %v4205 = vstv %s4204
        %v4206 = vmul.f32 %v4205, %v3972
        %v4207 = vmul.f32 %v4205, %v3973
        %v4208 = vadd.f32 %v4203, %v4206
        %v4209 = vadd.f32 %v4203, %v4207
        %s4210 = sld [smem:[#allocation8 + $0x149]]
        %v4211 = vstv %s4210
        %v4212 = vmul.f32 %v4211, %v3980
        %v4213 = vmul.f32 %v4211, %v3981
        %v4214 = vadd.f32 %v4208, %v4212
        %v4215 = vadd.f32 %v4209, %v4213
        %s4216 = sld [smem:[#allocation8 + $0x14a]]
        %v4217 = vstv %s4216
        %v4218 = vmul.f32 %v4217, %v3988
        %v4219 = vmul.f32 %v4217, %v3989
        %v4220 = vadd.f32 %v4214, %v4218
        %v4221 = vadd.f32 %v4215, %v4219
        %s4222 = sld [smem:[#allocation8 + $0x14b]]
        %v4223 = vstv %s4222
        %v4224 = vmul.f32 %v4223, %v3996
        %v4225 = vmul.f32 %v4223, %v3997
        %v4226 = vadd.f32 %v4220, %v4224
        %v4227 = vadd.f32 %v4221, %v4225
        %v4228 = vmax.f32 %v4226, 0.0
        %v4229 = vmax.f32 %v4227, 0.0
        %s4230 = sld [smem:[#allocation8 + $0x174]]
        %v4231 = vstv %s4230
        %v4232 = vadd.f32 %v4231, 0.0
        %s4233 = sld [smem:[#allocation8 + $0x154]]
        %v4234 = vstv %s4233
        %v4235 = vmul.f32 %v4234, %v4025
        %v4236 = vmul.f32 %v4234, %v4026
        %v4237 = vadd.f32 %v4232, %v4235
        %v4238 = vadd.f32 %v4232, %v4236
        %s4239 = sld [smem:[#allocation8 + $0x155]]
        %v4240 = vstv %s4239
        %v4241 = vmul.f32 %v4240, %v4054
        %v4242 = vmul.f32 %v4240, %v4055
        %v4243 = vadd.f32 %v4237, %v4241
        %v4244 = vadd.f32 %v4238, %v4242
        %s4245 = sld [smem:[#allocation8 + $0x156]]
        %v4246 = vstv %s4245
        %v4247 = vmul.f32 %v4246, %v4083
        %v4248 = vmul.f32 %v4246, %v4084
        %v4249 = vadd.f32 %v4243, %v4247
        %v4250 = vadd.f32 %v4244, %v4248
        %s4251 = sld [smem:[#allocation8 + $0x157]]
        %v4252 = vstv %s4251
        %v4253 = vmul.f32 %v4252, %v4112
        %v4254 = vmul.f32 %v4252, %v4113
        %v4255 = vadd.f32 %v4249, %v4253
        %v4256 = vadd.f32 %v4250, %v4254
        %s4257 = sld [smem:[#allocation8 + $0x158]]
        %v4258 = vstv %s4257
        %v4259 = vmul.f32 %v4258, %v4141
        %v4260 = vmul.f32 %v4258, %v4142
        %v4261 = vadd.f32 %v4255, %v4259
        %v4262 = vadd.f32 %v4256, %v4260
        %s4263 = sld [smem:[#allocation8 + $0x159]]
        %v4264 = vstv %s4263
        %v4265 = vmul.f32 %v4264, %v4170
        %v4266 = vmul.f32 %v4264, %v4171
        %v4267 = vadd.f32 %v4261, %v4265
        %v4268 = vadd.f32 %v4262, %v4266
        %s4269 = sld [smem:[#allocation8 + $0x15a]]
        %v4270 = vstv %s4269
        %v4271 = vmul.f32 %v4270, %v4199
        %v4272 = vmul.f32 %v4270, %v4200
        %v4273 = vadd.f32 %v4267, %v4271
        %v4274 = vadd.f32 %v4268, %v4272
        %s4275 = sld [smem:[#allocation8 + $0x15b]]
        %v4276 = vstv %s4275
        %v4277 = vmul.f32 %v4276, %v4228
        %v4278 = vmul.f32 %v4276, %v4229
        %v4279 = vadd.f32 %v4273, %v4277
        %v4280 = vadd.f32 %v4274, %v4278
        %s4281 = sld [smem:[#allocation8 + $0x175]]
        %v4282 = vstv %s4281
        %v4283 = vadd.f32 %v4282, 0.0
        %s4284 = sld [smem:[#allocation8 + $0x15c]]
        %v4285 = vstv %s4284
        %v4286 = vmul.f32 %v4285, %v4025
        %v4287 = vmul.f32 %v4285, %v4026
        %v4288 = vadd.f32 %v4283, %v4286
        %v4289 = vadd.f32 %v4283, %v4287
        %s4290 = sld [smem:[#allocation8 + $0x15d]]
        %v4291 = vstv %s4290
        %v4292 = vmul.f32 %v4291, %v4054
        %v4293 = vmul.f32 %v4291, %v4055
        %v4294 = vadd.f32 %v4288, %v4292
        %v4295 = vadd.f32 %v4289, %v4293
        %s4296 = sld [smem:[#allocation8 + $0x15e]]
        %v4297 = vstv %s4296
        %v4298 = vmul.f32 %v4297, %v4083
        %v4299 = vmul.f32 %v4297, %v4084
        %v4300 = vadd.f32 %v4294, %v4298
        %v4301 = vadd.f32 %v4295, %v4299
        %s4302 = sld [smem:[#allocation8 + $0x15f]]
        %v4303 = vstv %s4302
        %v4304 = vmul.f32 %v4303, %v4112
        %v4305 = vmul.f32 %v4303, %v4113
        %v4306 = vadd.f32 %v4300, %v4304
        %v4307 = vadd.f32 %v4301, %v4305
        %s4308 = sld [smem:[#allocation8 + $0x160]]
        %v4309 = vstv %s4308
        %v4310 = vmul.f32 %v4309, %v4141
        %v4311 = vmul.f32 %v4309, %v4142
        %v4312 = vadd.f32 %v4306, %v4310
        %v4313 = vadd.f32 %v4307, %v4311
        %s4314 = sld [smem:[#allocation8 + $0x161]]
        %v4315 = vstv %s4314
        %v4316 = vmul.f32 %v4315, %v4170
        %v4317 = vmul.f32 %v4315, %v4171
        %v4318 = vadd.f32 %v4312, %v4316
        %v4319 = vadd.f32 %v4313, %v4317
        %s4320 = sld [smem:[#allocation8 + $0x162]]
        %v4321 = vstv %s4320
        %v4322 = vmul.f32 %v4321, %v4199
        %v4323 = vmul.f32 %v4321, %v4200
        %v4324 = vadd.f32 %v4318, %v4322
        %v4325 = vadd.f32 %v4319, %v4323
        %s4326 = sld [smem:[#allocation8 + $0x163]]
        %v4327 = vstv %s4326
        %v4328 = vmul.f32 %v4327, %v4228
        %v4329 = vmul.f32 %v4327, %v4229
        %v4330 = vadd.f32 %v4324, %v4328
        %v4331 = vadd.f32 %v4325, %v4329
        %s4332 = sld [smem:[#allocation8 + $0x176]]
        %v4333 = vstv %s4332
        %v4334 = vadd.f32 %v4333, 0.0
        %s4335 = sld [smem:[#allocation8 + $0x164]]
        %v4336 = vstv %s4335
        %v4337 = vmul.f32 %v4336, %v4025
        %v4338 = vmul.f32 %v4336, %v4026
        %v4339 = vadd.f32 %v4334, %v4337
        %v4340 = vadd.f32 %v4334, %v4338
        %s4341 = sld [smem:[#allocation8 + $0x165]]
        %v4342 = vstv %s4341
        %v4343 = vmul.f32 %v4342, %v4054
        %v4344 = vmul.f32 %v4342, %v4055
        %v4345 = vadd.f32 %v4339, %v4343
        %v4346 = vadd.f32 %v4340, %v4344
        %s4347 = sld [smem:[#allocation8 + $0x166]]
        %v4348 = vstv %s4347
        %v4349 = vmul.f32 %v4348, %v4083
        %v4350 = vmul.f32 %v4348, %v4084
        %v4351 = vadd.f32 %v4345, %v4349
        %v4352 = vadd.f32 %v4346, %v4350
        %s4353 = sld [smem:[#allocation8 + $0x167]]
        %v4354 = vstv %s4353
        %v4355 = vmul.f32 %v4354, %v4112
        %v4356 = vmul.f32 %v4354, %v4113
        %v4357 = vadd.f32 %v4351, %v4355
        %v4358 = vadd.f32 %v4352, %v4356
        %s4359 = sld [smem:[#allocation8 + $0x168]]
        %v4360 = vstv %s4359
        %v4361 = vmul.f32 %v4360, %v4141
        %v4362 = vmul.f32 %v4360, %v4142
        %v4363 = vadd.f32 %v4357, %v4361
        %v4364 = vadd.f32 %v4358, %v4362
        %s4365 = sld [smem:[#allocation8 + $0x169]]
        %v4366 = vstv %s4365
        %v4367 = vmul.f32 %v4366, %v4170
        %v4368 = vmul.f32 %v4366, %v4171
        %v4369 = vadd.f32 %v4363, %v4367
        %v4370 = vadd.f32 %v4364, %v4368
        %s4371 = sld [smem:[#allocation8 + $0x16a]]
        %v4372 = vstv %s4371
        %v4373 = vmul.f32 %v4372, %v4199
        %v4374 = vmul.f32 %v4372, %v4200
        %v4375 = vadd.f32 %v4369, %v4373
        %v4376 = vadd.f32 %v4370, %v4374
        %s4377 = sld [smem:[#allocation8 + $0x16b]]
        %v4378 = vstv %s4377
        %v4379 = vmul.f32 %v4378, %v4228
        %v4380 = vmul.f32 %v4378, %v4229
        %v4381 = vadd.f32 %v4375, %v4379
        %v4382 = vadd.f32 %v4376, %v4380
        %s4383 = sld [smem:[#allocation8 + $0x177]]
        %v4384 = vstv %s4383
        %v4385 = vadd.f32 %v4384, 0.0
        %s4386 = sld [smem:[#allocation8 + $0x16c]]
        %v4387 = vstv %s4386
        %v4388 = vmul.f32 %v4387, %v4025
        %v4389 = vmul.f32 %v4387, %v4026
        %v4390 = vadd.f32 %v4385, %v4388
        %v4391 = vadd.f32 %v4385, %v4389
        %s4392 = sld [smem:[#allocation8 + $0x16d]]
        %v4393 = vstv %s4392
        %v4394 = vmul.f32 %v4393, %v4054
        %v4395 = vmul.f32 %v4393, %v4055
        %v4396 = vadd.f32 %v4390, %v4394
        %v4397 = vadd.f32 %v4391, %v4395
        %s4398 = sld [smem:[#allocation8 + $0x16e]]
        %v4399 = vstv %s4398
        %v4400 = vmul.f32 %v4399, %v4083
        %v4401 = vmul.f32 %v4399, %v4084
        %v4402 = vadd.f32 %v4396, %v4400
        %v4403 = vadd.f32 %v4397, %v4401
        %s4404 = sld [smem:[#allocation8 + $0x16f]]
        %v4405 = vstv %s4404
        %v4406 = vmul.f32 %v4405, %v4112
        %v4407 = vmul.f32 %v4405, %v4113
        %v4408 = vadd.f32 %v4402, %v4406
        %v4409 = vadd.f32 %v4403, %v4407
        %s4410 = sld [smem:[#allocation8 + $0x170]]
        %v4411 = vstv %s4410
        %v4412 = vmul.f32 %v4411, %v4141
        %v4413 = vmul.f32 %v4411, %v4142
        %v4414 = vadd.f32 %v4408, %v4412
        %v4415 = vadd.f32 %v4409, %v4413
        %s4416 = sld [smem:[#allocation8 + $0x171]]
        %v4417 = vstv %s4416
        %v4418 = vmul.f32 %v4417, %v4170
        %v4419 = vmul.f32 %v4417, %v4171
        %v4420 = vadd.f32 %v4414, %v4418
        %v4421 = vadd.f32 %v4415, %v4419
        %s4422 = sld [smem:[#allocation8 + $0x172]]
        %v4423 = vstv %s4422
        %v4424 = vmul.f32 %v4423, %v4199
        %v4425 = vmul.f32 %v4423, %v4200
        %v4426 = vadd.f32 %v4420, %v4424
        %v4427 = vadd.f32 %v4421, %v4425
        %s4428 = sld [smem:[#allocation8 + $0x173]]
        %v4429 = vstv %s4428
        %v4430 = vmul.f32 %v4429, %v4228
        %v4431 = vmul.f32 %v4429, %v4229
        %v4432 = vadd.f32 %v4426, %v4430
        %v4433 = vadd.f32 %v4427, %v4431
        %v4434 = vsel %vm2231, %v3972, 0.0
        %4435 = vadd.xlane.f32.xlu0 %v4434
        %v4436 = vpop.xlane.xlu0 %4435
        %v4437 = vsel %vm2231, %v3973, 0.0
        %4438 = vadd.xlane.f32.xlu0 %v4437
        %v4439 = vpop.xlane.xlu0 %4438
        %v4440 = vmul.f32 %v4436, %v2525
        %v4441 = vmul.f32 %v4439, %v2525
        %v4442 = vadd.f32 %v4440, %v4441
        %v4443 = vrot.slane %v4442, 4
        %v4444 = vadd.f32 %v4442, %v4443
        %v4445 = vrot.slane %v4444, 2
        %v4446 = vadd.f32 %v4444, %v4445
        %v4447 = vrot.slane %v4446, 1
        %v4448 = vadd.f32 %v4446, %v4447
        %v4449 = vmul.f32 %v4448, %v2241
        %v4450 = vsel %vm2231, %v3980, 0.0
        %4451 = vadd.xlane.f32.xlu0 %v4450
        %v4452 = vpop.xlane.xlu0 %4451
        %v4453 = vsel %vm2231, %v3981, 0.0
        %4454 = vadd.xlane.f32.xlu0 %v4453
        %v4455 = vpop.xlane.xlu0 %4454
        %v4456 = vmul.f32 %v4452, %v2525
        %v4457 = vmul.f32 %v4455, %v2525
        %v4458 = vadd.f32 %v4456, %v4457
        %v4459 = vrot.slane %v4458, 4
        %v4460 = vadd.f32 %v4458, %v4459
        %v4461 = vrot.slane %v4460, 2
        %v4462 = vadd.f32 %v4460, %v4461
        %v4463 = vrot.slane %v4462, 1
        %v4464 = vadd.f32 %v4462, %v4463
        %v4465 = vmul.f32 %v4464, %v2241
        %v4466 = vsel %vm2231, %v3988, 0.0
        %4467 = vadd.xlane.f32.xlu0 %v4466
        %v4468 = vpop.xlane.xlu0 %4467
        %v4469 = vsel %vm2231, %v3989, 0.0
        %4470 = vadd.xlane.f32.xlu0 %v4469
        %v4471 = vpop.xlane.xlu0 %4470
        %v4472 = vmul.f32 %v4468, %v2525
        %v4473 = vmul.f32 %v4471, %v2525
        %v4474 = vadd.f32 %v4472, %v4473
        %v4475 = vrot.slane %v4474, 4
        %v4476 = vadd.f32 %v4474, %v4475
        %v4477 = vrot.slane %v4476, 2
        %v4478 = vadd.f32 %v4476, %v4477
        %v4479 = vrot.slane %v4478, 1
        %v4480 = vadd.f32 %v4478, %v4479
        %v4481 = vmul.f32 %v4480, %v2241
        %v4482 = vsel %vm2231, %v3996, 0.0
        %4483 = vadd.xlane.f32.xlu0 %v4482
        %v4484 = vpop.xlane.xlu0 %4483
        %v4485 = vsel %vm2231, %v3997, 0.0
        %4486 = vadd.xlane.f32.xlu0 %v4485
        %v4487 = vpop.xlane.xlu0 %4486
        %v4488 = vmul.f32 %v4484, %v2525
        %v4489 = vmul.f32 %v4487, %v2525
        %v4490 = vadd.f32 %v4488, %v4489
        %v4491 = vrot.slane %v4490, 4
        %v4492 = vadd.f32 %v4490, %v4491
        %v4493 = vrot.slane %v4492, 2
        %v4494 = vadd.f32 %v4492, %v4493
        %v4495 = vrot.slane %v4494, 1
        %v4496 = vadd.f32 %v4494, %v4495
        %v4497 = vmul.f32 %v4496, %v2241
        %v4498 = vmul.f32 %v3614, %v4449
        %v4499 = vadd.f32 %v3612, %v4498
        %v4500 = vmul.f32 %v3618, %v4465
        %v4501 = vadd.f32 %v4499, %v4500
        %v4502 = vmul.f32 %v3622, %v4481
        %v4503 = vadd.f32 %v4501, %v4502
        %v4504 = vmul.f32 %v3626, %v4497
        %v4505 = vadd.f32 %v4503, %v4504
        %v4506 = vmax.f32 %v4505, 0.0
        %v4507 = vmul.f32 %v3634, %v4449
        %v4508 = vadd.f32 %v3632, %v4507
        %v4509 = vmul.f32 %v3638, %v4465
        %v4510 = vadd.f32 %v4508, %v4509
        %v4511 = vmul.f32 %v3642, %v4481
        %v4512 = vadd.f32 %v4510, %v4511
        %v4513 = vmul.f32 %v3646, %v4497
        %v4514 = vadd.f32 %v4512, %v4513
        %v4515 = vmax.f32 %v4514, 0.0
        %v4516 = vmul.f32 %v3654, %v4449
        %v4517 = vadd.f32 %v3652, %v4516
        %v4518 = vmul.f32 %v3658, %v4465
        %v4519 = vadd.f32 %v4517, %v4518
        %v4520 = vmul.f32 %v3662, %v4481
        %v4521 = vadd.f32 %v4519, %v4520
        %v4522 = vmul.f32 %v3666, %v4497
        %v4523 = vadd.f32 %v4521, %v4522
        %v4524 = vmax.f32 %v4523, 0.0
        %v4525 = vmul.f32 %v3674, %v4449
        %v4526 = vadd.f32 %v3672, %v4525
        %v4527 = vmul.f32 %v3678, %v4465
        %v4528 = vadd.f32 %v4526, %v4527
        %v4529 = vmul.f32 %v3682, %v4481
        %v4530 = vadd.f32 %v4528, %v4529
        %v4531 = vmul.f32 %v3686, %v4497
        %v4532 = vadd.f32 %v4530, %v4531
        %v4533 = vmax.f32 %v4532, 0.0
        %v4534 = vmul.f32 %v3694, %v4449
        %v4535 = vadd.f32 %v3692, %v4534
        %v4536 = vmul.f32 %v3698, %v4465
        %v4537 = vadd.f32 %v4535, %v4536
        %v4538 = vmul.f32 %v3702, %v4481
        %v4539 = vadd.f32 %v4537, %v4538
        %v4540 = vmul.f32 %v3706, %v4497
        %v4541 = vadd.f32 %v4539, %v4540
        %v4542 = vmax.f32 %v4541, 0.0
        %v4543 = vmul.f32 %v3714, %v4449
        %v4544 = vadd.f32 %v3712, %v4543
        %v4545 = vmul.f32 %v3718, %v4465
        %v4546 = vadd.f32 %v4544, %v4545
        %v4547 = vmul.f32 %v3722, %v4481
        %v4548 = vadd.f32 %v4546, %v4547
        %v4549 = vmul.f32 %v3726, %v4497
        %v4550 = vadd.f32 %v4548, %v4549
        %v4551 = vmax.f32 %v4550, 0.0
        %v4552 = vmul.f32 %v3734, %v4449
        %v4553 = vadd.f32 %v3732, %v4552
        %v4554 = vmul.f32 %v3738, %v4465
        %v4555 = vadd.f32 %v4553, %v4554
        %v4556 = vmul.f32 %v3742, %v4481
        %v4557 = vadd.f32 %v4555, %v4556
        %v4558 = vmul.f32 %v3746, %v4497
        %v4559 = vadd.f32 %v4557, %v4558
        %v4560 = vmax.f32 %v4559, 0.0
        %v4561 = vmul.f32 %v3754, %v4449
        %v4562 = vadd.f32 %v3752, %v4561
        %v4563 = vmul.f32 %v3758, %v4465
        %v4564 = vadd.f32 %v4562, %v4563
        %v4565 = vmul.f32 %v3762, %v4481
        %v4566 = vadd.f32 %v4564, %v4565
        %v4567 = vmul.f32 %v3766, %v4497
        %v4568 = vadd.f32 %v4566, %v4567
        %v4569 = vmax.f32 %v4568, 0.0
        %v4570 = vmul.f32 %v3774, %v4506
        %v4571 = vadd.f32 %v3772, %v4570
        %v4572 = vmul.f32 %v3778, %v4515
        %v4573 = vadd.f32 %v4571, %v4572
        %v4574 = vmul.f32 %v3782, %v4524
        %v4575 = vadd.f32 %v4573, %v4574
        %v4576 = vmul.f32 %v3786, %v4533
        %v4577 = vadd.f32 %v4575, %v4576
        %v4578 = vmul.f32 %v3790, %v4542
        %v4579 = vadd.f32 %v4577, %v4578
        %v4580 = vmul.f32 %v3794, %v4551
        %v4581 = vadd.f32 %v4579, %v4580
        %v4582 = vmul.f32 %v3798, %v4560
        %v4583 = vadd.f32 %v4581, %v4582
        %v4584 = vmul.f32 %v3802, %v4569
        %v4585 = vadd.f32 %v4583, %v4584
        %v4586 = vmul.f32 %v3809, %v4506
        %v4587 = vadd.f32 %v3807, %v4586
        %v4588 = vmul.f32 %v3813, %v4515
        %v4589 = vadd.f32 %v4587, %v4588
        %v4590 = vmul.f32 %v3817, %v4524
        %v4591 = vadd.f32 %v4589, %v4590
        %v4592 = vmul.f32 %v3821, %v4533
        %v4593 = vadd.f32 %v4591, %v4592
        %v4594 = vmul.f32 %v3825, %v4542
        %v4595 = vadd.f32 %v4593, %v4594
        %v4596 = vmul.f32 %v3829, %v4551
        %v4597 = vadd.f32 %v4595, %v4596
        %v4598 = vmul.f32 %v3833, %v4560
        %v4599 = vadd.f32 %v4597, %v4598
        %v4600 = vmul.f32 %v3837, %v4569
        %v4601 = vadd.f32 %v4599, %v4600
        %v4602 = vmul.f32 %v3844, %v4506
        %v4603 = vadd.f32 %v3842, %v4602
        %v4604 = vmul.f32 %v3848, %v4515
        %v4605 = vadd.f32 %v4603, %v4604
        %v4606 = vmul.f32 %v3852, %v4524
        %v4607 = vadd.f32 %v4605, %v4606
        %v4608 = vmul.f32 %v3856, %v4533
        %v4609 = vadd.f32 %v4607, %v4608
        %v4610 = vmul.f32 %v3860, %v4542
        %v4611 = vadd.f32 %v4609, %v4610
        %v4612 = vmul.f32 %v3864, %v4551
        %v4613 = vadd.f32 %v4611, %v4612
        %v4614 = vmul.f32 %v3868, %v4560
        %v4615 = vadd.f32 %v4613, %v4614
        %v4616 = vmul.f32 %v3872, %v4569
        %v4617 = vadd.f32 %v4615, %v4616
        %v4618 = vmul.f32 %v3879, %v4506
        %v4619 = vadd.f32 %v3877, %v4618
        %v4620 = vmul.f32 %v3883, %v4515
        %v4621 = vadd.f32 %v4619, %v4620
        %v4622 = vmul.f32 %v3887, %v4524
        %v4623 = vadd.f32 %v4621, %v4622
        %v4624 = vmul.f32 %v3891, %v4533
        %v4625 = vadd.f32 %v4623, %v4624
        %v4626 = vmul.f32 %v3895, %v4542
        %v4627 = vadd.f32 %v4625, %v4626
        %v4628 = vmul.f32 %v3899, %v4551
        %v4629 = vadd.f32 %v4627, %v4628
        %v4630 = vmul.f32 %v3903, %v4560
        %v4631 = vadd.f32 %v4629, %v4630
        %v4632 = vmul.f32 %v3907, %v4569
        %v4633 = vadd.f32 %v4631, %v4632
        %v4634 = vadd.f32 %v4279, %v4585
        %v4635 = vadd.f32 %v4280, %v4585
        %v4636 = vxor.u32 %v4634, 2147483648
        %v4637 = vxor.u32 %v4635, 2147483648
        %v4638 = vmul.f32 %v4636, 1.442695
        %v4639 = vpow.pop %v4638
        %v4640 = vmul.f32 %v4637, 1.442695
        %v4641 = vpow.pop %v4640
        %v4642 = vadd.f32 %v4639, 1.0
        %v4643 = vadd.f32 %v4641, 1.0
        %v4644 = vrcp.pop %v4642
        %v4645 = vmul.f32 1.0, %v4644
        %v4646 = vrcp.pop %v4643
        %v4647 = vmul.f32 1.0, %v4646
        %v4648 = vadd.f32 %v4330, %v4601
        %v4649 = vadd.f32 %v4331, %v4601
        %v4650 = vxor.u32 %v4648, 2147483648
        %v4651 = vxor.u32 %v4649, 2147483648
        %v4652 = vmul.f32 %v4650, 1.442695
        %v4653 = vpow.pop %v4652
        %v4654 = vmul.f32 %v4651, 1.442695
        %v4655 = vpow.pop %v4654
        %v4656 = vadd.f32 %v4653, 1.0
        %v4657 = vadd.f32 %v4655, 1.0
        %v4658 = vrcp.pop %v4656
        %v4659 = vmul.f32 1.0, %v4658
        %v4660 = vrcp.pop %v4657
        %v4661 = vmul.f32 1.0, %v4660
        %v4662 = vadd.f32 %v4381, %v4617
        %v4663 = vadd.f32 %v4382, %v4617
        %v4664 = vxor.u32 %v4662, 2147483648
        %v4665 = vxor.u32 %v4663, 2147483648
        %v4666 = vmul.f32 %v4664, 1.442695
        %v4667 = vpow.pop %v4666
        %v4668 = vmul.f32 %v4665, 1.442695
        %v4669 = vpow.pop %v4668
        %v4670 = vadd.f32 %v4667, 1.0
        %v4671 = vadd.f32 %v4669, 1.0
        %v4672 = vrcp.pop %v4670
        %v4673 = vmul.f32 1.0, %v4672
        %v4674 = vrcp.pop %v4671
        %v4675 = vmul.f32 1.0, %v4674
        %v4676 = vadd.f32 %v4432, %v4633
        %v4677 = vadd.f32 %v4433, %v4633
        %v4678 = vxor.u32 %v4676, 2147483648
        %v4679 = vxor.u32 %v4677, 2147483648
        %v4680 = vmul.f32 %v4678, 1.442695
        %v4681 = vpow.pop %v4680
        %v4682 = vmul.f32 %v4679, 1.442695
        %v4683 = vpow.pop %v4682
        %v4684 = vadd.f32 %v4681, 1.0
        %v4685 = vadd.f32 %v4683, 1.0
        %v4686 = vrcp.pop %v4684
        %v4687 = vmul.f32 1.0, %v4686
        %v4688 = vrcp.pop %v4685
        %v4689 = vmul.f32 1.0, %v4688
        %v4690 = vmul.f32 %v2927, %v4645
        %v4691 = vmul.f32 %v2928, %v4647
        %v4692 = vsub.f32 1.0, %v4645
        %v4693 = vsub.f32 1.0, %v4647
        %v4694 = vmul.f32 %v3088, %v4692
        %v4695 = vmul.f32 %v3089, %v4693
        %v4696 = vadd.f32 %v4690, %v4694
        %v4697 = vadd.f32 %v4691, %v4695
        %v4698 = vmul.f32 %v2935, %v4659
        %v4699 = vmul.f32 %v2936, %v4661
        %v4700 = vsub.f32 1.0, %v4659
        %v4701 = vsub.f32 1.0, %v4661
        %v4702 = vmul.f32 %v3092, %v4700
        %v4703 = vmul.f32 %v3093, %v4701
        %v4704 = vadd.f32 %v4698, %v4702
        %v4705 = vadd.f32 %v4699, %v4703
        %v4706 = vmul.f32 %v2943, %v4673
        %v4707 = vmul.f32 %v2944, %v4675
        %v4708 = vsub.f32 1.0, %v4673
        %v4709 = vsub.f32 1.0, %v4675
        %v4710 = vmul.f32 %v3096, %v4708
        %v4711 = vmul.f32 %v3097, %v4709
        %v4712 = vadd.f32 %v4706, %v4710
        %v4713 = vadd.f32 %v4707, %v4711
        %v4714 = vmul.f32 %v2951, %v4687
        %v4715 = vmul.f32 %v2952, %v4689
        %v4716 = vsub.f32 1.0, %v4687
        %v4717 = vsub.f32 1.0, %v4689
        %v4718 = vmul.f32 %v3100, %v4716
        %v4719 = vmul.f32 %v3101, %v4717
        %v4720 = vadd.f32 %v4714, %v4718
        %v4721 = vadd.f32 %v4715, %v4719
        %vm4722 = vcmask 173056
        %v4723 = vsel %vm4722, %v4696, -inf
        %v4724 = vrot.slane %v4723, 4
        %v4725 = vmax.f32 %v4723, %v4724
        %v4726 = vrot.slane %v4725, 2
        %v4727 = vmax.f32 %v4725, %v4726
        %v4728 = vrot.slane %v4727, 1
        %v4729 = vmax.f32 %v4727, %v4728
        %vm4730 = vcmask 175106
        %v4731 = vsel %vm4730, %v4696, -inf
        %v4732 = vrot.slane %v4731, 4
        %v4733 = vmax.f32 %v4731, %v4732
        %v4734 = vrot.slane %v4733, 2
        %v4735 = vmax.f32 %v4733, %v4734
        %v4736 = vrot.slane %v4735, 1
        %v4737 = vmax.f32 %v4735, %v4736
        %vm4738 = vcmask 177156
        %v4739 = vsel %vm4738, %v4696, -inf
        %v4740 = vrot.slane %v4739, 4
        %v4741 = vmax.f32 %v4739, %v4740
        %v4742 = vrot.slane %v4741, 2
        %v4743 = vmax.f32 %v4741, %v4742
        %v4744 = vrot.slane %v4743, 1
        %v4745 = vmax.f32 %v4743, %v4744
        %vm4746 = vcmask 179206
        %v4747 = vsel %vm4746, %v4696, -inf
        %v4748 = vrot.slane %v4747, 4
        %v4749 = vmax.f32 %v4747, %v4748
        %v4750 = vrot.slane %v4749, 2
        %v4751 = vmax.f32 %v4749, %v4750
        %v4752 = vrot.slane %v4751, 1
        %v4753 = vmax.f32 %v4751, %v4752
        %v4754 = vsel %vm4722, %v4697, -inf
        %v4755 = vrot.slane %v4754, 4
        %v4756 = vmax.f32 %v4754, %v4755
        %v4757 = vrot.slane %v4756, 2
        %v4758 = vmax.f32 %v4756, %v4757
        %v4759 = vrot.slane %v4758, 1
        %v4760 = vmax.f32 %v4758, %v4759
        %v4761 = vsel %vm4730, %v4697, -inf
        %v4762 = vrot.slane %v4761, 4
        %v4763 = vmax.f32 %v4761, %v4762
        %v4764 = vrot.slane %v4763, 2
        %v4765 = vmax.f32 %v4763, %v4764
        %v4766 = vrot.slane %v4765, 1
        %v4767 = vmax.f32 %v4765, %v4766
        %v4768 = vsel %vm4738, %v4697, -inf
        %v4769 = vrot.slane %v4768, 4
        %v4770 = vmax.f32 %v4768, %v4769
        %v4771 = vrot.slane %v4770, 2
        %v4772 = vmax.f32 %v4770, %v4771
        %v4773 = vrot.slane %v4772, 1
        %v4774 = vmax.f32 %v4772, %v4773
        %v4775 = vsel %vm4746, %v4697, -inf
        %v4776 = vrot.slane %v4775, 4
        %v4777 = vmax.f32 %v4775, %v4776
        %v4778 = vrot.slane %v4777, 2
        %v4779 = vmax.f32 %v4777, %v4778
        %v4780 = vrot.slane %v4779, 1
        %v4781 = vmax.f32 %v4779, %v4780
        %v4782 = vsel %vm308, %v4729, %v4737
        %v4783 = vsel %vm2274, %v4782, %v4745
        %v4784 = vsel %vm2276, %v4783, %v4753
        %vm4785 = vcmask 1043456
        %v4786 = vsel %vm4785, %v4784, %v4760
        %v4787 = vsel %vm2327, %v4786, %v4767
        %v4788 = vsel %vm754, %v4787, %v4774
        %v4789 = vsel %vm517, %v4788, %v4781
        %v4790 = vsel %vm4722, %v4704, -inf
        %v4791 = vrot.slane %v4790, 4
        %v4792 = vmax.f32 %v4790, %v4791
        %v4793 = vrot.slane %v4792, 2
        %v4794 = vmax.f32 %v4792, %v4793
        %v4795 = vrot.slane %v4794, 1
        %v4796 = vmax.f32 %v4794, %v4795
        %v4797 = vsel %vm4730, %v4704, -inf
        %v4798 = vrot.slane %v4797, 4
        %v4799 = vmax.f32 %v4797, %v4798
        %v4800 = vrot.slane %v4799, 2
        %v4801 = vmax.f32 %v4799, %v4800
        %v4802 = vrot.slane %v4801, 1
        %v4803 = vmax.f32 %v4801, %v4802
        %v4804 = vsel %vm4738, %v4704, -inf
        %v4805 = vrot.slane %v4804, 4
        %v4806 = vmax.f32 %v4804, %v4805
        %v4807 = vrot.slane %v4806, 2
        %v4808 = vmax.f32 %v4806, %v4807
        %v4809 = vrot.slane %v4808, 1
        %v4810 = vmax.f32 %v4808, %v4809
        %v4811 = vsel %vm4746, %v4704, -inf
        %v4812 = vrot.slane %v4811, 4
        %v4813 = vmax.f32 %v4811, %v4812
        %v4814 = vrot.slane %v4813, 2
        %v4815 = vmax.f32 %v4813, %v4814
        %v4816 = vrot.slane %v4815, 1
        %v4817 = vmax.f32 %v4815, %v4816
        %v4818 = vsel %vm4722, %v4705, -inf
        %v4819 = vrot.slane %v4818, 4
        %v4820 = vmax.f32 %v4818, %v4819
        %v4821 = vrot.slane %v4820, 2
        %v4822 = vmax.f32 %v4820, %v4821
        %v4823 = vrot.slane %v4822, 1
        %v4824 = vmax.f32 %v4822, %v4823
        %v4825 = vsel %vm4730, %v4705, -inf
        %v4826 = vrot.slane %v4825, 4
        %v4827 = vmax.f32 %v4825, %v4826
        %v4828 = vrot.slane %v4827, 2
        %v4829 = vmax.f32 %v4827, %v4828
        %v4830 = vrot.slane %v4829, 1
        %v4831 = vmax.f32 %v4829, %v4830
        %v4832 = vsel %vm4738, %v4705, -inf
        %v4833 = vrot.slane %v4832, 4
        %v4834 = vmax.f32 %v4832, %v4833
        %v4835 = vrot.slane %v4834, 2
        %v4836 = vmax.f32 %v4834, %v4835
        %v4837 = vrot.slane %v4836, 1
        %v4838 = vmax.f32 %v4836, %v4837
        %v4839 = vsel %vm4746, %v4705, -inf
        %v4840 = vrot.slane %v4839, 4
        %v4841 = vmax.f32 %v4839, %v4840
        %v4842 = vrot.slane %v4841, 2
        %v4843 = vmax.f32 %v4841, %v4842
        %v4844 = vrot.slane %v4843, 1
        %v4845 = vmax.f32 %v4843, %v4844
        %v4846 = vsel %vm308, %v4796, %v4803
        %v4847 = vsel %vm2274, %v4846, %v4810
        %v4848 = vsel %vm2276, %v4847, %v4817
        %v4849 = vsel %vm4785, %v4848, %v4824
        %v4850 = vsel %vm2327, %v4849, %v4831
        %v4851 = vsel %vm754, %v4850, %v4838
        %v4852 = vsel %vm517, %v4851, %v4845
        %v4853 = vsel %vm4722, %v4712, -inf
        %v4854 = vrot.slane %v4853, 4
        %v4855 = vmax.f32 %v4853, %v4854
        %v4856 = vrot.slane %v4855, 2
        %v4857 = vmax.f32 %v4855, %v4856
        %v4858 = vrot.slane %v4857, 1
        %v4859 = vmax.f32 %v4857, %v4858
        %v4860 = vsel %vm4730, %v4712, -inf
        %v4861 = vrot.slane %v4860, 4
        %v4862 = vmax.f32 %v4860, %v4861
        %v4863 = vrot.slane %v4862, 2
        %v4864 = vmax.f32 %v4862, %v4863
        %v4865 = vrot.slane %v4864, 1
        %v4866 = vmax.f32 %v4864, %v4865
        %v4867 = vsel %vm4738, %v4712, -inf
        %v4868 = vrot.slane %v4867, 4
        %v4869 = vmax.f32 %v4867, %v4868
        %v4870 = vrot.slane %v4869, 2
        %v4871 = vmax.f32 %v4869, %v4870
        %v4872 = vrot.slane %v4871, 1
        %v4873 = vmax.f32 %v4871, %v4872
        %v4874 = vsel %vm4746, %v4712, -inf
        %v4875 = vrot.slane %v4874, 4
        %v4876 = vmax.f32 %v4874, %v4875
        %v4877 = vrot.slane %v4876, 2
        %v4878 = vmax.f32 %v4876, %v4877
        %v4879 = vrot.slane %v4878, 1
        %v4880 = vmax.f32 %v4878, %v4879
        %v4881 = vsel %vm4722, %v4713, -inf
        %v4882 = vrot.slane %v4881, 4
        %v4883 = vmax.f32 %v4881, %v4882
        %v4884 = vrot.slane %v4883, 2
        %v4885 = vmax.f32 %v4883, %v4884
        %v4886 = vrot.slane %v4885, 1
        %v4887 = vmax.f32 %v4885, %v4886
        %v4888 = vsel %vm4730, %v4713, -inf
        %v4889 = vrot.slane %v4888, 4
        %v4890 = vmax.f32 %v4888, %v4889
        %v4891 = vrot.slane %v4890, 2
        %v4892 = vmax.f32 %v4890, %v4891
        %v4893 = vrot.slane %v4892, 1
        %v4894 = vmax.f32 %v4892, %v4893
        %v4895 = vsel %vm4738, %v4713, -inf
        %v4896 = vrot.slane %v4895, 4
        %v4897 = vmax.f32 %v4895, %v4896
        %v4898 = vrot.slane %v4897, 2
        %v4899 = vmax.f32 %v4897, %v4898
        %v4900 = vrot.slane %v4899, 1
        %v4901 = vmax.f32 %v4899, %v4900
        %v4902 = vsel %vm4746, %v4713, -inf
        %v4903 = vrot.slane %v4902, 4
        %v4904 = vmax.f32 %v4902, %v4903
        %v4905 = vrot.slane %v4904, 2
        %v4906 = vmax.f32 %v4904, %v4905
        %v4907 = vrot.slane %v4906, 1
        %v4908 = vmax.f32 %v4906, %v4907
        %v4909 = vsel %vm308, %v4859, %v4866
        %v4910 = vsel %vm2274, %v4909, %v4873
        %v4911 = vsel %vm2276, %v4910, %v4880
        %v4912 = vsel %vm4785, %v4911, %v4887
        %v4913 = vsel %vm2327, %v4912, %v4894
        %v4914 = vsel %vm754, %v4913, %v4901
        %v4915 = vsel %vm517, %v4914, %v4908
        %v4916 = vsel %vm4722, %v4720, -inf
        %v4917 = vrot.slane %v4916, 4
        %v4918 = vmax.f32 %v4916, %v4917
        %v4919 = vrot.slane %v4918, 2
        %v4920 = vmax.f32 %v4918, %v4919
        %v4921 = vrot.slane %v4920, 1
        %v4922 = vmax.f32 %v4920, %v4921
        %v4923 = vsel %vm4730, %v4720, -inf
        %v4924 = vrot.slane %v4923, 4
        %v4925 = vmax.f32 %v4923, %v4924
        %v4926 = vrot.slane %v4925, 2
        %v4927 = vmax.f32 %v4925, %v4926
        %v4928 = vrot.slane %v4927, 1
        %v4929 = vmax.f32 %v4927, %v4928
        %v4930 = vsel %vm4738, %v4720, -inf
        %v4931 = vrot.slane %v4930, 4
        %v4932 = vmax.f32 %v4930, %v4931
        %v4933 = vrot.slane %v4932, 2
        %v4934 = vmax.f32 %v4932, %v4933
        %v4935 = vrot.slane %v4934, 1
        %v4936 = vmax.f32 %v4934, %v4935
        %v4937 = vsel %vm4746, %v4720, -inf
        %v4938 = vrot.slane %v4937, 4
        %v4939 = vmax.f32 %v4937, %v4938
        %v4940 = vrot.slane %v4939, 2
        %v4941 = vmax.f32 %v4939, %v4940
        %v4942 = vrot.slane %v4941, 1
        %v4943 = vmax.f32 %v4941, %v4942
        %v4944 = vsel %vm4722, %v4721, -inf
        %v4945 = vrot.slane %v4944, 4
        %v4946 = vmax.f32 %v4944, %v4945
        %v4947 = vrot.slane %v4946, 2
        %v4948 = vmax.f32 %v4946, %v4947
        %v4949 = vrot.slane %v4948, 1
        %v4950 = vmax.f32 %v4948, %v4949
        %v4951 = vsel %vm4730, %v4721, -inf
        %v4952 = vrot.slane %v4951, 4
        %v4953 = vmax.f32 %v4951, %v4952
        %v4954 = vrot.slane %v4953, 2
        %v4955 = vmax.f32 %v4953, %v4954
        %v4956 = vrot.slane %v4955, 1
        %v4957 = vmax.f32 %v4955, %v4956
        %v4958 = vsel %vm4738, %v4721, -inf
        %v4959 = vrot.slane %v4958, 4
        %v4960 = vmax.f32 %v4958, %v4959
        %v4961 = vrot.slane %v4960, 2
        %v4962 = vmax.f32 %v4960, %v4961
        %v4963 = vrot.slane %v4962, 1
        %v4964 = vmax.f32 %v4962, %v4963
        %v4965 = vsel %vm4746, %v4721, -inf
        %v4966 = vrot.slane %v4965, 4
        %v4967 = vmax.f32 %v4965, %v4966
        %v4968 = vrot.slane %v4967, 2
        %v4969 = vmax.f32 %v4967, %v4968
        %v4970 = vrot.slane %v4969, 1
        %v4971 = vmax.f32 %v4969, %v4970
        %v4972 = vsel %vm308, %v4922, %v4929
        %v4973 = vsel %vm2274, %v4972, %v4936
        %v4974 = vsel %vm2276, %v4973, %v4943
        %v4975 = vsel %vm4785, %v4974, %v4950
        %v4976 = vsel %vm2327, %v4975, %v4957
        %v4977 = vsel %vm754, %v4976, %v4964
        %v4978 = vsel %vm517, %v4977, %v4971
        %4979 = vst.msk [vmem:[%s285] sm:$0xff] %vm2231, %v4789
        %4980 = vst.msk [vmem:[%s285 + $0x8] sm:$0xff] %vm2231, %v4852
        %4981 = vst.msk [vmem:[%s285 + $0x10] sm:$0xff] %vm2231, %v4915
        %4982 = vst.msk [vmem:[%s285 + $0x18] sm:$0xff] %vm2231, %v4978
        %p4983 = scmp.lt.s32.totalorder %s21, 1
        %s4984 = scalar_select %p4983, %s21, 1
        %s4985 = smul.addr %s4984, 4
        %s4986 = smul.addr %s4985, 8
        %s4987 = scalar_lea.vmem %s5, %s4986
        // Predicated region
        $region57: #{dylan_mt_net_forward.2} parent=39 // pred_check
          %p4988 = pneg %p149
        $region58: #{dylan_mt_net_forward.2} parent=39 // pred_check_branch
          %4990 = sbr.rel (%p4988) target = $region60
        $region59: #{dylan_mt_net_forward.2} parent=39 // pred_region
          _
        $region60: #{dylan_mt_net_forward.2} parent=39 // pred_fallthru
          _
      $region40: #{dylan_mt_net_forward.2} parent=5 // pred_fallthru
        _
      %p4991 = scmp.le.s32.totalorder 2, %s16
      // Predicated region
      $region61: #{dylan_mt_net_forward.2} parent=5 // pred_check
        %p4992 = pneg %p4991
      $region62: #{dylan_mt_net_forward.2} parent=5 // pred_check_branch
        %4994 = sbr.rel (%p4992) target = $region64
      $region63: #{dylan_mt_net_forward.2} parent=5 // pred_region
        %s4995 = ssub.s32 %s16, 2
        // Predicated region
        $region65: #{dylan_mt_net_forward.2} parent=63 // pred_check
          %p4996 = pneg %p155
        $region66: #{dylan_mt_net_forward.2} parent=63 // pred_check_branch
          %4998 = sbr.rel (%p4996) target = $region68
        $region67: #{dylan_mt_net_forward.2} parent=63 // pred_region
          %p4999 = scmp.lt.s32.totalorder %s22, 1
          %s5000 = scalar_select %p4999, %s22, 1
          %s5001 = smul.addr %s5000, 4
          %s5002 = smul.addr %s5001, 8
          %s5003 = scalar_lea.vmem %s5, %s5002
        $region68: #{dylan_mt_net_forward.2} parent=63 // pred_fallthru
          _
      $region64: #{dylan_mt_net_forward.2} parent=5 // pred_fallthru
        _
    $region6: #{dylan_mt_net_forward.2} parent=1 // loop_footer
      %s20 = sadd.s32 1, %s16
    $region7: #{dylan_mt_net_forward.2} parent=1 // loop_footer_branch
      %15 = sbr.rel target = $region3
    $region8: #{dylan_mt_net_forward.2} parent=1 // loop_exit
      _
    %5004 = vsyncpa [#allocation3], 1
    %s5005 = scalar_lea.sflag [#allocation3], 1
    %5006 = vsyncpa %s5005, 1
    %5007 = vsyncpa [#allocation6], 1
    %5008 = vsyncpa [#allocation4], 1
    %s5009 = scalar_lea.sflag [#allocation4], 1
    %5010 = vsyncpa %s5009, 1

</llo_original>
